<compile_context>
chip_gen: v6e
topology: v6e:2x2x1
jax: 0.10.0
libtpu: 0.0.40
codegen_flags: <defaults>
</compile_context>

<pallas_src>
import functools

import jax
import jax.numpy as jnp
from jax import lax
from jax.experimental import pallas as pl
from jax.experimental.pallas import tpu as pltpu

# ---------------- small config consistent with the module's structure --------
IMG_SIZE = 128         # (module: 224)
PATCH = 16             # same patch size as the module
IN_CHANS = 3
EMBED = 32             # (module: 768)
DEPTH = 2              # (module: 12)
HEADS = 4              # (module: 12)
MLP_RATIO = 4
WINDOW_SIZE = 4        # (module: 14)
WINDOW_BLOCK_INDEXES = (0,)   # scaled-down analogue of [0,1,3,4,6,7,9,10]
LN_EPS = 1e-6          # norm_layer=partial(nn.LayerNorm, eps=1e-6)
HP = IMG_SIZE // PATCH               # 8
HEAD_DIM = EMBED // HEADS            # 8
PATCH_K = IN_CHANS * PATCH * PATCH   # 768

MATMUL_DTYPE = jnp.bfloat16   # MXU-native operand dtype; accumulation is f32.


# ---------------------------- small helpers ----------------------------------
def _row_tile(m):
    """Largest half-split row tile (gives >=2 parallel grid steps for v7x 2 TCs)."""
    half = m // 2
    if m % 2 == 0 and half % 8 == 0:
        return half
    return m


def _parallel():
    return pltpu.CompilerParams(dimension_semantics=("parallel",))


# ============================ Pallas kernels =================================
def _patch_embed_kernel(x_ref, w_ref, b_ref, pos_ref, o_ref):
    # fused patch-matmul (== conv k=s=PATCH) + bias + absolute pos embed
    x = x_ref[...].astype(MATMUL_DTYPE)
    y = jnp.dot(x, w_ref[...], preferred_element_type=jnp.float32)
    y = y + b_ref[...].astype(jnp.float32) + pos_ref[...].astype(jnp.float32)
    o_ref[...] = y.astype(o_ref.dtype)


def patch_embed(images, w_kn, b, pos):
    """images NCHW -> tokens (B*Hp*Wp, EMBED); one fused kernel, grid over batch."""
    B = images.shape[0]
    ntok = HP * HP
    x = images.reshape(B, IN_CHANS, HP, PATCH, HP, PATCH)
    x = jnp.transpose(x, (0, 2, 4, 1, 3, 5)).reshape(B * ntok, PATCH_K)
    return pl.pallas_call(
        _patch_embed_kernel,
        out_shape=jax.ShapeDtypeStruct((B * ntok, EMBED), jnp.float32),
        grid=(B,),
        in_specs=[pl.BlockSpec((ntok, PATCH_K), lambda i: (i, 0)),
                  pl.BlockSpec((PATCH_K, EMBED), lambda i: (0, 0)),
                  pl.BlockSpec((1, EMBED), lambda i: (0, 0)),
                  pl.BlockSpec((ntok, EMBED), lambda i: (0, 0))],
        out_specs=pl.BlockSpec((ntok, EMBED), lambda i: (i, 0)),
        compiler_params=_parallel(),
    )(x, w_kn, b.reshape(1, EMBED), pos.reshape(ntok, EMBED))


def _ln_linear_kernel(x_ref, lnw_ref, lnb_ref, w_ref, b_ref, o_ref, *, eps):
    # fused LayerNorm(eps) -> matmul -> +bias   (LN math in f32, MXU in bf16)
    x = x_ref[...].astype(jnp.float32)
    mu = jnp.mean(x, axis=-1, keepdims=True)
    var = jnp.mean(jnp.square(x - mu), axis=-1, keepdims=True)
    xn = (x - mu) * lax.rsqrt(var + eps)
    xn = xn * lnw_ref[...].astype(jnp.float32) + lnb_ref[...].astype(jnp.float32)
    y = jnp.dot(xn.astype(MATMUL_DTYPE), w_ref[...], preferred_element_type=jnp.float32)
    o_ref[...] = (y + b_ref[...].astype(jnp.float32)).astype(o_ref.dtype)


def ln_linear(x, lnw, lnb, w_kn, b, eps=LN_EPS):
    M, K = x.shape
    N = w_kn.shape[1]
    tm = _row_tile(M)
    return pl.pallas_call(
        functools.partial(_ln_linear_kernel, eps=eps),
        out_shape=jax.ShapeDtypeStruct((M, N), jnp.float32),
        grid=(M // tm,),
        in_specs=[pl.BlockSpec((tm, K), lambda i: (i, 0)),
                  pl.BlockSpec((1, K), lambda i: (0, 0)),
                  pl.BlockSpec((1, K), lambda i: (0, 0)),
                  pl.BlockSpec((K, N), lambda i: (0, 0)),
                  pl.BlockSpec((1, N), lambda i: (0, 0))],
        out_specs=pl.BlockSpec((tm, N), lambda i: (i, 0)),
        compiler_params=_parallel(),
    )(x, lnw.reshape(1, K), lnb.reshape(1, K), w_kn, b.reshape(1, N))


def _linear_residual_kernel(x_ref, w_ref, b_ref, res_ref, o_ref):
    # fused output projection + bias + residual add
    y = jnp.dot(x_ref[...].astype(MATMUL_DTYPE), w_ref[...],
                preferred_element_type=jnp.float32)
    y = y + b_ref[...].astype(jnp.float32) + res_ref[...].astype(jnp.float32)
    o_ref[...] = y.astype(o_ref.dtype)


def linear_residual(x, w_kn, b, res):
    M, K = x.shape
    N = w_kn.shape[1]
    tm = _row_tile(M)
    return pl.pallas_call(
        _linear_residual_kernel,
        out_shape=jax.ShapeDtypeStruct((M, N), jnp.float32),
        grid=(M // tm,),
        in_specs=[pl.BlockSpec((tm, K), lambda i: (i, 0)),
                  pl.BlockSpec((K, N), lambda i: (0, 0)),
                  pl.BlockSpec((1, N), lambda i: (0, 0)),
                  pl.BlockSpec((tm, N), lambda i: (i, 0))],
        out_specs=pl.BlockSpec((tm, N), lambda i: (i, 0)),
        compiler_params=_parallel(),
    )(x, w_kn, b.reshape(1, N), res)


def _ln_mlp_kernel(x_ref, lnw_ref, lnb_ref, w1_ref, b1_ref, w2_ref, b2_ref, o_ref, *, eps):
    # fused LN2 -> fc1 -> GELU -> fc2 -> +residual ; MLP hidden never touches HBM
    x = x_ref[...].astype(jnp.float32)
    mu = jnp.mean(x, axis=-1, keepdims=True)
    var = jnp.mean(jnp.square(x - mu), axis=-1, keepdims=True)
    xn = (x - mu) * lax.rsqrt(var + eps)
    xn = xn * lnw_ref[...].astype(jnp.float32) + lnb_ref[...].astype(jnp.float32)
    h = jnp.dot(xn.astype(MATMUL_DTYPE), w1_ref[...], preferred_element_type=jnp.float32)
    h = h + b1_ref[...].astype(jnp.float32)
    # TODO(synk): tanh-approx GELU in-kernel; PyTorch nn.GELU default is exact erf
    # (numeric delta ~1e-3 relative on typical activations).
    h = jax.nn.gelu(h, approximate=True)
    y = jnp.dot(h.astype(MATMUL_DTYPE), w2_ref[...], preferred_element_type=jnp.float32)
    y = y + b2_ref[...].astype(jnp.float32)
    o_ref[...] = (x + y).astype(o_ref.dtype)


def ln_mlp_residual(x, lnw, lnb, w1_kn, b1, w2_kn, b2, eps=LN_EPS):
    M, C = x.shape
    Hd = w1_kn.shape[1]
    tm = _row_tile(M)
    return pl.pallas_call(
        functools.partial(_ln_mlp_kernel, eps=eps),
        out_shape=jax.ShapeDtypeStruct((M, C), jnp.float32),
        grid=(M // tm,),
        in_specs=[pl.BlockSpec((tm, C), lambda i: (i, 0)),
                  pl.BlockSpec((1, C), lambda i: (0, 0)),
                  pl.BlockSpec((1, C), lambda i: (0, 0)),
                  pl.BlockSpec((C, Hd), lambda i: (0, 0)),
                  pl.BlockSpec((1, Hd), lambda i: (0, 0)),
                  pl.BlockSpec((Hd, C), lambda i: (0, 0)),
                  pl.BlockSpec((1, C), lambda i: (0, 0))],
        out_specs=pl.BlockSpec((tm, C), lambda i: (i, 0)),
        compiler_params=_parallel(),
    )(x, lnw.reshape(1, C), lnb.reshape(1, C), w1_kn, b1.reshape(1, Hd),
      w2_kn, b2.reshape(1, C))


def _attn_kernel(q_ref, k_ref, v_ref, bias_ref, o_ref, *, scale):
    # batched multi-head attention core: softmax(scale*q@k^T + bias) @ v
    q = q_ref[...].astype(MATMUL_DTYPE)
    k = k_ref[...].astype(MATMUL_DTYPE)
    v = v_ref[...].astype(MATMUL_DTYPE)
    s = jnp.einsum("bqd,bkd->bqk", q, k, preferred_element_type=jnp.float32)
    s = s * scale + bias_ref[...].astype(jnp.float32)
    s = s - jnp.max(s, axis=-1, keepdims=True)
    p = jnp.exp(s)
    denom = jnp.sum(p, axis=-1, keepdims=True)
    o = jnp.einsum("bqk,bkd->bqd", p.astype(MATMUL_DTYPE), v,
                   preferred_element_type=jnp.float32)
    o = o * pl.reciprocal(denom, approx=True)
    o_ref[...] = o.astype(o_ref.dtype)


def attention_core(q, k, v, bias, scale):
    """All (batch*window*head) slices processed in large chunks (2 parallel steps)."""
    BH, N, D = q.shape
    chunk = BH // 2 if BH % 2 == 0 else BH
    return pl.pallas_call(
        functools.partial(_attn_kernel, scale=scale),
        out_shape=jax.ShapeDtypeStruct((BH, N, D), jnp.float32),
        grid=(BH // chunk,),
        in_specs=[pl.BlockSpec((chunk, N, D), lambda i: (i, 0, 0)),
                  pl.BlockSpec((chunk, N, D), lambda i: (i, 0, 0)),
                  pl.BlockSpec((chunk, N, D), lambda i: (i, 0, 0)),
                  pl.BlockSpec((chunk, N, N), lambda i: (i, 0, 0))],
        out_specs=pl.BlockSpec((chunk, N, D), lambda i: (i, 0, 0)),
        compiler_params=_parallel(),
    )(q, k, v, bias)


# ============================ JAX glue (model) ===============================
def get_rel_pos(q_size, k_size, rel_pos):
    # rel_pos is sized exactly 2*max(q,k)-1 here, so no interpolation needed.
    q_coords = jnp.arange(q_size)[:, None] * max(k_size / q_size, 1.0)
    k_coords = jnp.arange(k_size)[None, :] * max(q_size / k_size, 1.0)
    rel = (q_coords - k_coords) + (k_size - 1) * max(q_size / k_size, 1.0)
    return rel_pos[rel.astype(jnp.int32)]


def decomposed_rel_pos_bias(q, rel_pos_h, rel_pos_w, q_hw, k_hw):
    # TODO(synk): at production scale pass Rh/Rw into the attention kernel and
    # build the bias in VMEM instead of materializing the (BH, N, N) tensor here.
    q_h, q_w = q_hw
    k_h, k_w = k_hw
    Rh = get_rel_pos(q_h, k_h, rel_pos_h)
    Rw = get_rel_pos(q_w, k_w, rel_pos_w)
    Bq, _, dim = q.shape
    r_q = q.reshape(Bq, q_h, q_w, dim)
    rel_h = jnp.einsum("bhwc,hkc->bhwk", r_q, Rh)
    rel_w = jnp.einsum("bhwc,wkc->bhwk", r_q, Rw)
    bias = rel_h[:, :, :, :, None] + rel_w[:, :, :, None, :]
    return bias.reshape(Bq, q_h * q_w, k_h * k_w)


def attention(x_tok, B, H, W, p, num_heads, window_size):
    """Windowed/global multi-head attention with decomposed rel-pos bias.

    x_tok: (B*H*W, C) tokens (row-major over B, H, W)."""
    C = EMBED
    hd = C // num_heads
    scale = hd ** -0.5

    # fused LN1 -> QKV (per-token, so applied before window partition)
    qkv = ln_linear(x_tok, p["norm1_w"], p["norm1_b"], p["qkv_w"], p["qkv_b"])

    if window_size > 0:
        ws = window_size
        # TODO(synk): the padded window_partition path is omitted — never taken
        # here (H % ws == 0), nor at the real UNINEXT config (14 % 14 == 0).
        assert H % ws == 0 and W % ws == 0
        nwh, nww = H // ws, W // ws
        qkv = qkv.reshape(B, nwh, ws, nww, ws, 3, num_heads, hd)
        qkv = jnp.transpose(qkv, (5, 0, 1, 3, 6, 2, 4, 7))
        qkv = qkv.reshape(3, B * nwh * nww * num_heads, ws * ws, hd)
        q_hw = (ws, ws)
    else:
        qkv = qkv.reshape(B, H * W, 3, num_heads, hd)
        qkv = jnp.transpose(qkv, (2, 0, 3, 1, 4)).reshape(3, B * num_heads, H * W, hd)
        q_hw = (H, W)

    q, k, v = qkv[0], qkv[1], qkv[2]
    bias = decomposed_rel_pos_bias(q, p["rel_pos_h"], p["rel_pos_w"], q_hw, q_hw)
    o = attention_core(q, k, v, bias, scale)                    # (BH, N, hd)

    if window_size > 0:
        ws = window_size
        nwh, nww = H // ws, W // ws
        o = o.reshape(B, nwh, nww, num_heads, ws, ws, hd)
        o = jnp.transpose(o, (0, 1, 4, 2, 5, 3, 6)).reshape(B * H * W, C)
    else:
        o = o.reshape(B, num_heads, H * W, hd)
        o = jnp.transpose(o, (0, 2, 1, 3)).reshape(B * H * W, C)

    # output projection fused with residual add (shortcut = block input tokens)
    return linear_residual(o, p["proj_w"], p["proj_b"], x_tok)


def transformer_block(x_tok, B, H, W, p, num_heads, window_size):
    x_tok = attention(x_tok, B, H, W, p, num_heads, window_size)   # drop_path==id
    x_tok = ln_mlp_residual(x_tok, p["norm2_w"], p["norm2_b"],
                            p["fc1_w"], p["fc1_b"], p["fc2_w"], p["fc2_b"])
    return x_tok


def uninext_forward(params, images):
    """Equivalent of UNINEXT.forward: returns the backbone's last feature map (NCHW)."""
    B = images.shape[0]
    x = patch_embed(images, params["patch_w"], params["patch_b"], params["pos_embed"])
    for i, blk in enumerate(params["blocks"]):
        ws = WINDOW_SIZE if i in WINDOW_BLOCK_INDEXES else 0
        x = transformer_block(x, B, HP, HP, blk, HEADS, ws)
    x = x.reshape(B, HP, HP, EMBED)
    return jnp.transpose(x, (0, 3, 1, 2))                          # NCHW last_feat


# ============================ parameter init =================================
def init_params(key):
    def nrm(k, shape, scale=0.02, dtype=jnp.float32):
        return (scale * jax.random.normal(k, shape, dtype=jnp.float32)).astype(dtype)

    keys = jax.random.split(key, 2 + DEPTH)
    params = {
        # matmul weights are stored pre-transposed (K, N) in bf16 (MXU operand dtype)
        "patch_w": nrm(keys[0], (PATCH_K, EMBED), dtype=MATMUL_DTYPE),
        "patch_b": jnp.zeros((EMBED,), jnp.float32),
        "pos_embed": nrm(keys[1], (1, HP * HP, EMBED)),
        "blocks": [],
    }
    for i in range(DEPTH):
        bk = jax.random.split(keys[2 + i], 6)
        ws = WINDOW_SIZE if i in WINDOW_BLOCK_INDEXES else 0
        rel_size = ws if ws > 0 else HP
        params["blocks"].append({
            "norm1_w": jnp.ones((EMBED,), jnp.float32),
            "norm1_b": jnp.zeros((EMBED,), jnp.float32),
            "qkv_w": nrm(bk[0], (EMBED, 3 * EMBED), dtype=MATMUL_DTYPE),
            "qkv_b": jnp.zeros((3 * EMBED,), jnp.float32),
            "proj_w": nrm(bk[1], (EMBED, EMBED), dtype=MATMUL_DTYPE),
            "proj_b": jnp.zeros((EMBED,), jnp.float32),
            "rel_pos_h": nrm(bk[2], (2 * rel_size - 1, HEAD_DIM)),
            "rel_pos_w": nrm(bk[3], (2 * rel_size - 1, HEAD_DIM)),
            "norm2_w": jnp.ones((EMBED,), jnp.float32),
            "norm2_b": jnp.zeros((EMBED,), jnp.float32),
            "fc1_w": nrm(bk[4], (EMBED, MLP_RATIO * EMBED), dtype=MATMUL_DTYPE),
            "fc1_b": jnp.zeros((MLP_RATIO * EMBED,), jnp.float32),
            "fc2_w": nrm(bk[5], (MLP_RATIO * EMBED, EMBED), dtype=MATMUL_DTYPE),
            "fc2_b": jnp.zeros((EMBED,), jnp.float32),
        })
    return params


if __name__ == "__main__":
    key = jax.random.PRNGKey(0)
    pkey, xkey = jax.random.split(key)
    params = init_params(pkey)
    images = jax.random.normal(xkey, (2, IN_CHANS, IMG_SIZE, IMG_SIZE), dtype=jnp.float32)

    out = jax.jit(uninext_forward)(params, images)
    out = jax.block_until_ready(out)

    assert out.shape == (2, EMBED, HP, HP), out.shape
    assert bool(jnp.all(jnp.isfinite(out)))
    print("KERNEL_OK")
</pallas_src>

<mosaic_0001>
module attributes {stable_mosaic.version = 11 : i64} {
  func.func @_patch_embed_kernel(%arg0: i32, %arg1: memref<64x768xf32, #tpu.memory_space<vmem>>, %arg2: memref<768x32xbf16, #tpu.memory_space<vmem>>, %arg3: memref<1x32xf32, #tpu.memory_space<vmem>>, %arg4: memref<64x32xf32, #tpu.memory_space<vmem>>, %arg5: memref<64x32xf32, #tpu.memory_space<vmem>>) attributes {dimension_semantics = [#tpu.dimension_semantics<parallel>], iteration_bounds = array<i64: 2>, scalar_prefetch = 0 : i64, scratch_operands = 0 : i64, tpu.core_type = #tpu.core_type<tc>, window_params = [{transform_indices = @transform_0, window_bounds = array<i64: 64, 768>}, {pipeline_mode = #tpu.pipeline_mode<synchronous>, transform_indices = @transform_1, window_bounds = array<i64: 768, 32>}, {pipeline_mode = #tpu.pipeline_mode<synchronous>, transform_indices = @transform_2, window_bounds = array<i64: 1, 32>}, {pipeline_mode = #tpu.pipeline_mode<synchronous>, transform_indices = @transform_3, window_bounds = array<i64: 64, 32>}, {transform_indices = @transform_4, window_bounds = array<i64: 64, 32>}]} {
    %c0 = arith.constant 0 : index
    %c0_0 = arith.constant 0 : index
    %0 = vector.load %arg1[%c0, %c0_0] : memref<64x768xf32, #tpu.memory_space<vmem>>, vector<64x768xf32>
    %1 = arith.truncf %0 : vector<64x768xf32> to vector<64x768xbf16>
    %c0_1 = arith.constant 0 : index
    %c0_2 = arith.constant 0 : index
    %2 = vector.load %arg2[%c0_1, %c0_2] : memref<768x32xbf16, #tpu.memory_space<vmem>>, vector<768x32xbf16>
    %cst = arith.constant dense<0.000000e+00> : vector<64x32xf32>
    %3 = tpu.matmul %1, %2, %cst {dimension_numbers = #tpu.dot_dimension_numbers<[1], [0], [0], [1], [0, 0, 1, 1], [], []>} : vector<64x768xbf16>, vector<768x32xbf16>, vector<64x32xf32> -> vector<64x32xf32>
    %c0_3 = arith.constant 0 : index
    %c0_4 = arith.constant 0 : index
    %4 = vector.load %arg3[%c0_3, %c0_4] : memref<1x32xf32, #tpu.memory_space<vmem>>, vector<1x32xf32>
    %5 = vector.broadcast %4 : vector<1x32xf32> to vector<64x32xf32>
    %6 = arith.addf %3, %5 : vector<64x32xf32>
    %c0_5 = arith.constant 0 : index
    %c0_6 = arith.constant 0 : index
    %7 = vector.load %arg4[%c0_5, %c0_6] : memref<64x32xf32, #tpu.memory_space<vmem>>, vector<64x32xf32>
    %8 = arith.addf %6, %7 : vector<64x32xf32>
    %c0_7 = arith.constant 0 : index
    %c0_8 = arith.constant 0 : index
    %9 = vector.load %arg5[%c0_7, %c0_8] : memref<64x32xf32, #tpu.memory_space<vmem>>, vector<64x32xf32>
    tpu.vector_store %arg5[%c0_7, %c0_8], %8 {strides = array<i32>} : memref<64x32xf32, #tpu.memory_space<vmem>>, vector<64x32xf32>,
    return
  }
  func.func @transform_0(%arg0: i32) -> (i32, i32) {
    %c0_i32 = arith.constant 0 : i32
    %c0_i32_0 = arith.constant 0 : i32
    return %arg0, %c0_i32 : i32, i32
  }
  func.func @transform_1(%arg0: i32) -> (i32, i32) {
    %c0_i32 = arith.constant 0 : i32
    %c0_i32_0 = arith.constant 0 : i32
    %c0_i32_1 = arith.constant 0 : i32
    return %c0_i32, %c0_i32_0 : i32, i32
  }
  func.func @transform_2(%arg0: i32) -> (i32, i32) {
    %c0_i32 = arith.constant 0 : i32
    %c0_i32_0 = arith.constant 0 : i32
    %c0_i32_1 = arith.constant 0 : i32
    return %c0_i32, %c0_i32_0 : i32, i32
  }
  func.func @transform_3(%arg0: i32) -> (i32, i32) {
    %c0_i32 = arith.constant 0 : i32
    %c0_i32_0 = arith.constant 0 : i32
    %c0_i32_1 = arith.constant 0 : i32
    return %c0_i32, %c0_i32_0 : i32, i32
  }
  func.func @transform_4(%arg0: i32) -> (i32, i32) {
    %c0_i32 = arith.constant 0 : i32
    %c0_i32_0 = arith.constant 0 : i32
    return %arg0, %c0_i32 : i32, i32
  }
}

module attributes {stable_mosaic.version = 11 : i64} {
  func.func @_ln_linear_kernel(%arg0: i32, %arg1: memref<64x32xf32, #tpu.memory_space<vmem>>, %arg2: memref<1x32xf32, #tpu.memory_space<vmem>>, %arg3: memref<1x32xf32, #tpu.memory_space<vmem>>, %arg4: memref<32x96xbf16, #tpu.memory_space<vmem>>, %arg5: memref<1x96xf32, #tpu.memory_space<vmem>>, %arg6: memref<64x96xf32, #tpu.memory_space<vmem>>) attributes {dimension_semantics = [#tpu.dimension_semantics<parallel>], iteration_bounds = array<i64: 2>, scalar_prefetch = 0 : i64, scratch_operands = 0 : i64, tpu.core_type = #tpu.core_type<tc>, window_params = [{transform_indices = @transform_0, window_bounds = array<i64: 64, 32>}, {pipeline_mode = #tpu.pipeline_mode<synchronous>, transform_indices = @transform_1, window_bounds = array<i64: 1, 32>}, {pipeline_mode = #tpu.pipeline_mode<synchronous>, transform_indices = @transform_2, window_bounds = array<i64: 1, 32>}, {pipeline_mode = #tpu.pipeline_mode<synchronous>, transform_indices = @transform_3, window_bounds = array<i64: 32, 96>}, {pipeline_mode = #tpu.pipeline_mode<synchronous>, transform_indices = @transform_4, window_bounds = array<i64: 1, 96>}, {transform_indices = @transform_5, window_bounds = array<i64: 64, 96>}]} {
    %c0 = arith.constant 0 : index
    %c0_0 = arith.constant 0 : index
    %0 = vector.load %arg1[%c0, %c0_0] : memref<64x32xf32, #tpu.memory_space<vmem>>, vector<64x32xf32>
    %cst = arith.constant dense<0.000000e+00> : vector<64xf32>
    %1 = vector.multi_reduction <add>, %0, %cst [1] : vector<64x32xf32> to vector<64xf32>
    %2 = vector.shape_cast %1 : vector<64xf32> to vector<64x1xf32>
    %cst_1 = arith.constant 3.200000e+01 : f32
    %3 = vector.broadcast %cst_1 : f32 to vector<64x1xf32>
    %4 = arith.divf %2, %3 : vector<64x1xf32>
    %5 = vector.broadcast %4 : vector<64x1xf32> to vector<64x32xf32>
    %6 = arith.subf %0, %5 : vector<64x32xf32>
    %7 = arith.mulf %6, %6 : vector<64x32xf32>
    %cst_2 = arith.constant dense<0.000000e+00> : vector<64xf32>
    %8 = vector.multi_reduction <add>, %7, %cst_2 [1] : vector<64x32xf32> to vector<64xf32>
    %9 = vector.shape_cast %8 : vector<64xf32> to vector<64x1xf32>
    %cst_3 = arith.constant 3.200000e+01 : f32
    %10 = vector.broadcast %cst_3 : f32 to vector<64x1xf32>
    %11 = arith.divf %9, %10 : vector<64x1xf32>
    %12 = vector.broadcast %4 : vector<64x1xf32> to vector<64x32xf32>
    %13 = arith.subf %0, %12 : vector<64x32xf32>
    %cst_4 = arith.constant 9.99999997E-7 : f32
    %14 = vector.broadcast %cst_4 : f32 to vector<64x1xf32>
    %15 = arith.addf %11, %14 : vector<64x1xf32>
    %16 = math.rsqrt %15 : vector<64x1xf32>
    %17 = vector.broadcast %16 : vector<64x1xf32> to vector<64x32xf32>
    %18 = arith.mulf %13, %17 : vector<64x32xf32>
    %c0_5 = arith.constant 0 : index
    %c0_6 = arith.constant 0 : index
    %19 = vector.load %arg2[%c0_5, %c0_6] : memref<1x32xf32, #tpu.memory_space<vmem>>, vector<1x32xf32>
    %20 = vector.broadcast %19 : vector<1x32xf32> to vector<64x32xf32>
    %21 = arith.mulf %18, %20 : vector<64x32xf32>
    %c0_7 = arith.constant 0 : index
    %c0_8 = arith.constant 0 : index
    %22 = vector.load %arg3[%c0_7, %c0_8] : memref<1x32xf32, #tpu.memory_space<vmem>>, vector<1x32xf32>
    %23 = vector.broadcast %22 : vector<1x32xf32> to vector<64x32xf32>
    %24 = arith.addf %21, %23 : vector<64x32xf32>
    %25 = arith.truncf %24 : vector<64x32xf32> to vector<64x32xbf16>
    %c0_9 = arith.constant 0 : index
    %c0_10 = arith.constant 0 : index
    %26 = vector.load %arg4[%c0_9, %c0_10] : memref<32x96xbf16, #tpu.memory_space<vmem>>, vector<32x96xbf16>
    %cst_11 = arith.constant dense<0.000000e+00> : vector<64x96xf32>
    %27 = tpu.matmul %25, %26, %cst_11 {dimension_numbers = #tpu.dot_dimension_numbers<[1], [0], [0], [1], [0, 0, 1, 1], [], []>} : vector<64x32xbf16>, vector<32x96xbf16>, vector<64x96xf32> -> vector<64x96xf32>
    %c0_12 = arith.constant 0 : index
    %c0_13 = arith.constant 0 : index
    %28 = vector.load %arg5[%c0_12, %c0_13] : memref<1x96xf32, #tpu.memory_space<vmem>>, vector<1x96xf32>
    %29 = vector.broadcast %28 : vector<1x96xf32> to vector<64x96xf32>
    %30 = arith.addf %27, %29 : vector<64x96xf32>
    %c0_14 = arith.constant 0 : index
    %c0_15 = arith.constant 0 : index
    %31 = vector.load %arg6[%c0_14, %c0_15] : memref<64x96xf32, #tpu.memory_space<vmem>>, vector<64x96xf32>
    tpu.vector_store %arg6[%c0_14, %c0_15], %30 {strides = array<i32>} : memref<64x96xf32, #tpu.memory_space<vmem>>, vector<64x96xf32>,
    return
  }
  func.func @transform_0(%arg0: i32) -> (i32, i32) {
    %c0_i32 = arith.constant 0 : i32
    %c0_i32_0 = arith.constant 0 : i32
    return %arg0, %c0_i32 : i32, i32
  }
  func.func @transform_1(%arg0: i32) -> (i32, i32) {
    %c0_i32 = arith.constant 0 : i32
    %c0_i32_0 = arith.constant 0 : i32
    %c0_i32_1 = arith.constant 0 : i32
    return %c0_i32, %c0_i32_0 : i32, i32
  }
  func.func @transform_2(%arg0: i32) -> (i32, i32) {
    %c0_i32 = arith.constant 0 : i32
    %c0_i32_0 = arith.constant 0 : i32
    %c0_i32_1 = arith.constant 0 : i32
    return %c0_i32, %c0_i32_0 : i32, i32
  }
  func.func @transform_3(%arg0: i32) -> (i32, i32) {
    %c0_i32 = arith.constant 0 : i32
    %c0_i32_0 = arith.constant 0 : i32
    %c0_i32_1 = arith.constant 0 : i32
    return %c0_i32, %c0_i32_0 : i32, i32
  }
  func.func @transform_4(%arg0: i32) -> (i32, i32) {
    %c0_i32 = arith.constant 0 : i32
    %c0_i32_0 = arith.constant 0 : i32
    %c0_i32_1 = arith.constant 0 : i32
    return %c0_i32, %c0_i32_0 : i32, i32
  }
  func.func @transform_5(%arg0: i32) -> (i32, i32) {
    %c0_i32 = arith.constant 0 : i32
    %c0_i32_0 = arith.constant 0 : i32
    return %arg0, %c0_i32 : i32, i32
  }
}

module attributes {stable_mosaic.version = 11 : i64} {
  func.func @_attn_kernel(%arg0: i32, %arg1: memref<16x16x8xf32, #tpu.memory_space<vmem>>, %arg2: memref<16x16x8xf32, #tpu.memory_space<vmem>>, %arg3: memref<16x16x8xf32, #tpu.memory_space<vmem>>, %arg4: memref<16x16x16xf32, #tpu.memory_space<vmem>>, %arg5: memref<16x16x8xf32, #tpu.memory_space<vmem>>) attributes {dimension_semantics = [#tpu.dimension_semantics<parallel>], iteration_bounds = array<i64: 2>, scalar_prefetch = 0 : i64, scratch_operands = 0 : i64, tpu.core_type = #tpu.core_type<tc>, window_params = [{transform_indices = @transform_0, window_bounds = array<i64: 16, 16, 8>}, {transform_indices = @transform_1, window_bounds = array<i64: 16, 16, 8>}, {transform_indices = @transform_2, window_bounds = array<i64: 16, 16, 8>}, {transform_indices = @transform_3, window_bounds = array<i64: 16, 16, 16>}, {transform_indices = @transform_4, window_bounds = array<i64: 16, 16, 8>}]} {
    %c0 = arith.constant 0 : index
    %c0_0 = arith.constant 0 : index
    %c0_1 = arith.constant 0 : index
    %0 = vector.load %arg1[%c0, %c0_0, %c0_1] : memref<16x16x8xf32, #tpu.memory_space<vmem>>, vector<16x16x8xf32>
    %1 = arith.truncf %0 : vector<16x16x8xf32> to vector<16x16x8xbf16>
    %c0_2 = arith.constant 0 : index
    %c0_3 = arith.constant 0 : index
    %c0_4 = arith.constant 0 : index
    %2 = vector.load %arg2[%c0_2, %c0_3, %c0_4] : memref<16x16x8xf32, #tpu.memory_space<vmem>>, vector<16x16x8xf32>
    %3 = arith.truncf %2 : vector<16x16x8xf32> to vector<16x16x8xbf16>
    %c0_5 = arith.constant 0 : index
    %c0_6 = arith.constant 0 : index
    %c0_7 = arith.constant 0 : index
    %4 = vector.load %arg3[%c0_5, %c0_6, %c0_7] : memref<16x16x8xf32, #tpu.memory_space<vmem>>, vector<16x16x8xf32>
    %5 = arith.truncf %4 : vector<16x16x8xf32> to vector<16x16x8xbf16>
    "tpu.trace_start"() <{level = 10 : i32, message = "bqd,bkd->bqk"}> : () -> ()
    %cst = arith.constant dense<0.000000e+00> : vector<16x16x16xf32>
    %6 = tpu.matmul %1, %3, %cst {dimension_numbers = #tpu.dot_dimension_numbers<[2], [2], [1], [1], [0, 0, 0, 1, 1, 1], [0], [0]>} : vector<16x16x8xbf16>, vector<16x16x8xbf16>, vector<16x16x16xf32> -> vector<16x16x16xf32>
    "tpu.trace_stop"() : () -> ()
    %cst_8 = arith.constant 0.353553385 : f32
    %7 = vector.broadcast %cst_8 : f32 to vector<16x16x16xf32>
    %8 = arith.mulf %6, %7 : vector<16x16x16xf32>
    %c0_9 = arith.constant 0 : index
    %c0_10 = arith.constant 0 : index
    %c0_11 = arith.constant 0 : index
    %9 = vector.load %arg4[%c0_9, %c0_10, %c0_11] : memref<16x16x16xf32, #tpu.memory_space<vmem>>, vector<16x16x16xf32>
    %10 = arith.addf %8, %9 : vector<16x16x16xf32>
    %cst_12 = arith.constant dense<0xFF800000> : vector<16x16xf32>
    %11 = vector.multi_reduction <maximumf>, %10, %cst_12 [2] : vector<16x16x16xf32> to vector<16x16xf32>
    %12 = vector.shape_cast %11 : vector<16x16xf32> to vector<16x16x1xf32>
    %13 = vector.broadcast %12 : vector<16x16x1xf32> to vector<16x16x16xf32>
    %14 = arith.subf %10, %13 : vector<16x16x16xf32>
    %15 = math.exp %14 : vector<16x16x16xf32>
    %cst_13 = arith.constant dense<0.000000e+00> : vector<16x16xf32>
    %16 = vector.multi_reduction <add>, %15, %cst_13 [2] : vector<16x16x16xf32> to vector<16x16xf32>
    %17 = vector.shape_cast %16 : vector<16x16xf32> to vector<16x16x1xf32>
    %18 = arith.truncf %15 : vector<16x16x16xf32> to vector<16x16x16xbf16>
    "tpu.trace_start"() <{level = 10 : i32, message = "bqk,bkd->bqd"}> : () -> ()
    %cst_14 = arith.constant dense<0.000000e+00> : vector<16x16x8xf32>
    %19 = tpu.matmul %18, %5, %cst_14 {dimension_numbers = #tpu.dot_dimension_numbers<[2], [1], [1], [2], [0, 0, 0, 1, 1, 2], [0], [0]>} : vector<16x16x16xbf16>, vector<16x16x8xbf16>, vector<16x16x8xf32> -> vector<16x16x8xf32>
    "tpu.trace_stop"() : () -> ()
    %20 = tpu.reciprocal %17 {approx = true} : vector<16x16x1xf32> -> vector<16x16x1xf32>
    %21 = vector.broadcast %20 : vector<16x16x1xf32> to vector<16x16x8xf32>
    %22 = arith.mulf %19, %21 : vector<16x16x8xf32>
    %c0_15 = arith.constant 0 : index
    %c0_16 = arith.constant 0 : index
    %c0_17 = arith.constant 0 : index
    %23 = vector.load %arg5[%c0_15, %c0_16, %c0_17] : memref<16x16x8xf32, #tpu.memory_space<vmem>>, vector<16x16x8xf32>
    tpu.vector_store %arg5[%c0_15, %c0_16, %c0_17], %22 {strides = array<i32>} : memref<16x16x8xf32, #tpu.memory_space<vmem>>, vector<16x16x8xf32>,
    return
  }
  func.func @transform_0(%arg0: i32) -> (i32, i32, i32) {
    %c0_i32 = arith.constant 0 : i32
    %c0_i32_0 = arith.constant 0 : i32
    %c0_i32_1 = arith.constant 0 : i32
    return %arg0, %c0_i32, %c0_i32_0 : i32, i32, i32
  }
  func.func @transform_1(%arg0: i32) -> (i32, i32, i32) {
    %c0_i32 = arith.constant 0 : i32
    %c0_i32_0 = arith.constant 0 : i32
    %c0_i32_1 = arith.constant 0 : i32
    return %arg0, %c0_i32, %c0_i32_0 : i32, i32, i32
  }
  func.func @transform_2(%arg0: i32) -> (i32, i32, i32) {
    %c0_i32 = arith.constant 0 : i32
    %c0_i32_0 = arith.constant 0 : i32
    %c0_i32_1 = arith.constant 0 : i32
    return %arg0, %c0_i32, %c0_i32_0 : i32, i32, i32
  }
  func.func @transform_3(%arg0: i32) -> (i32, i32, i32) {
    %c0_i32 = arith.constant 0 : i32
    %c0_i32_0 = arith.constant 0 : i32
    %c0_i32_1 = arith.constant 0 : i32
    return %arg0, %c0_i32, %c0_i32_0 : i32, i32, i32
  }
  func.func @transform_4(%arg0: i32) -> (i32, i32, i32) {
    %c0_i32 = arith.constant 0 : i32
    %c0_i32_0 = arith.constant 0 : i32
    %c0_i32_1 = arith.constant 0 : i32
    return %arg0, %c0_i32, %c0_i32_0 : i32, i32, i32
  }
}

module attributes {stable_mosaic.version = 11 : i64} {
  func.func @_linear_residual_kernel(%arg0: i32, %arg1: memref<64x32xf32, #tpu.memory_space<vmem>>, %arg2: memref<32x32xbf16, #tpu.memory_space<vmem>>, %arg3: memref<1x32xf32, #tpu.memory_space<vmem>>, %arg4: memref<64x32xf32, #tpu.memory_space<vmem>>, %arg5: memref<64x32xf32, #tpu.memory_space<vmem>>) attributes {dimension_semantics = [#tpu.dimension_semantics<parallel>], iteration_bounds = array<i64: 2>, scalar_prefetch = 0 : i64, scratch_operands = 0 : i64, tpu.core_type = #tpu.core_type<tc>, window_params = [{transform_indices = @transform_0, window_bounds = array<i64: 64, 32>}, {pipeline_mode = #tpu.pipeline_mode<synchronous>, transform_indices = @transform_1, window_bounds = array<i64: 32, 32>}, {pipeline_mode = #tpu.pipeline_mode<synchronous>, transform_indices = @transform_2, window_bounds = array<i64: 1, 32>}, {transform_indices = @transform_3, window_bounds = array<i64: 64, 32>}, {transform_indices = @transform_4, window_bounds = array<i64: 64, 32>}]} {
    %c0 = arith.constant 0 : index
    %c0_0 = arith.constant 0 : index
    %0 = vector.load %arg1[%c0, %c0_0] : memref<64x32xf32, #tpu.memory_space<vmem>>, vector<64x32xf32>
    %1 = arith.truncf %0 : vector<64x32xf32> to vector<64x32xbf16>
    %c0_1 = arith.constant 0 : index
    %c0_2 = arith.constant 0 : index
    %2 = vector.load %arg2[%c0_1, %c0_2] : memref<32x32xbf16, #tpu.memory_space<vmem>>, vector<32x32xbf16>
    %cst = arith.constant dense<0.000000e+00> : vector<64x32xf32>
    %3 = tpu.matmul %1, %2, %cst {dimension_numbers = #tpu.dot_dimension_numbers<[1], [0], [0], [1], [0, 0, 1, 1], [], []>} : vector<64x32xbf16>, vector<32x32xbf16>, vector<64x32xf32> -> vector<64x32xf32>
    %c0_3 = arith.constant 0 : index
    %c0_4 = arith.constant 0 : index
    %4 = vector.load %arg3[%c0_3, %c0_4] : memref<1x32xf32, #tpu.memory_space<vmem>>, vector<1x32xf32>
    %5 = vector.broadcast %4 : vector<1x32xf32> to vector<64x32xf32>
    %6 = arith.addf %3, %5 : vector<64x32xf32>
    %c0_5 = arith.constant 0 : index
    %c0_6 = arith.constant 0 : index
    %7 = vector.load %arg4[%c0_5, %c0_6] : memref<64x32xf32, #tpu.memory_space<vmem>>, vector<64x32xf32>
    %8 = arith.addf %6, %7 : vector<64x32xf32>
    %c0_7 = arith.constant 0 : index
    %c0_8 = arith.constant 0 : index
    %9 = vector.load %arg5[%c0_7, %c0_8] : memref<64x32xf32, #tpu.memory_space<vmem>>, vector<64x32xf32>
    tpu.vector_store %arg5[%c0_7, %c0_8], %8 {strides = array<i32>} : memref<64x32xf32, #tpu.memory_space<vmem>>, vector<64x32xf32>,
    return
  }
  func.func @transform_0(%arg0: i32) -> (i32, i32) {
    %c0_i32 = arith.constant 0 : i32
    %c0_i32_0 = arith.constant 0 : i32
    return %arg0, %c0_i32 : i32, i32
  }
  func.func @transform_1(%arg0: i32) -> (i32, i32) {
    %c0_i32 = arith.constant 0 : i32
    %c0_i32_0 = arith.constant 0 : i32
    %c0_i32_1 = arith.constant 0 : i32
    return %c0_i32, %c0_i32_0 : i32, i32
  }
  func.func @transform_2(%arg0: i32) -> (i32, i32) {
    %c0_i32 = arith.constant 0 : i32
    %c0_i32_0 = arith.constant 0 : i32
    %c0_i32_1 = arith.constant 0 : i32
    return %c0_i32, %c0_i32_0 : i32, i32
  }
  func.func @transform_3(%arg0: i32) -> (i32, i32) {
    %c0_i32 = arith.constant 0 : i32
    %c0_i32_0 = arith.constant 0 : i32
    return %arg0, %c0_i32 : i32, i32
  }
  func.func @transform_4(%arg0: i32) -> (i32, i32) {
    %c0_i32 = arith.constant 0 : i32
    %c0_i32_0 = arith.constant 0 : i32
    return %arg0, %c0_i32 : i32, i32
  }
}

module attributes {stable_mosaic.version = 11 : i64} {
  func.func @_ln_mlp_kernel(%arg0: i32, %arg1: memref<64x32xf32, #tpu.memory_space<vmem>>, %arg2: memref<1x32xf32, #tpu.memory_space<vmem>>, %arg3: memref<1x32xf32, #tpu.memory_space<vmem>>, %arg4: memref<32x128xbf16, #tpu.memory_space<vmem>>, %arg5: memref<1x128xf32, #tpu.memory_space<vmem>>, %arg6: memref<128x32xbf16, #tpu.memory_space<vmem>>, %arg7: memref<1x32xf32, #tpu.memory_space<vmem>>, %arg8: memref<64x32xf32, #tpu.memory_space<vmem>>) attributes {dimension_semantics = [#tpu.dimension_semantics<parallel>], iteration_bounds = array<i64: 2>, scalar_prefetch = 0 : i64, scratch_operands = 0 : i64, tpu.core_type = #tpu.core_type<tc>, window_params = [{transform_indices = @transform_0, window_bounds = array<i64: 64, 32>}, {pipeline_mode = #tpu.pipeline_mode<synchronous>, transform_indices = @transform_1, window_bounds = array<i64: 1, 32>}, {pipeline_mode = #tpu.pipeline_mode<synchronous>, transform_indices = @transform_2, window_bounds = array<i64: 1, 32>}, {pipeline_mode = #tpu.pipeline_mode<synchronous>, transform_indices = @transform_3, window_bounds = array<i64: 32, 128>}, {pipeline_mode = #tpu.pipeline_mode<synchronous>, transform_indices = @transform_4, window_bounds = array<i64: 1, 128>}, {pipeline_mode = #tpu.pipeline_mode<synchronous>, transform_indices = @transform_5, window_bounds = array<i64: 128, 32>}, {pipeline_mode = #tpu.pipeline_mode<synchronous>, transform_indices = @transform_6, window_bounds = array<i64: 1, 32>}, {transform_indices = @transform_7, window_bounds = array<i64: 64, 32>}]} {
    %c0 = arith.constant 0 : index
    %c0_0 = arith.constant 0 : index
    %0 = vector.load %arg1[%c0, %c0_0] : memref<64x32xf32, #tpu.memory_space<vmem>>, vector<64x32xf32>
    %cst = arith.constant dense<0.000000e+00> : vector<64xf32>
    %1 = vector.multi_reduction <add>, %0, %cst [1] : vector<64x32xf32> to vector<64xf32>
    %2 = vector.shape_cast %1 : vector<64xf32> to vector<64x1xf32>
    %cst_1 = arith.constant 3.200000e+01 : f32
    %3 = vector.broadcast %cst_1 : f32 to vector<64x1xf32>
    %4 = arith.divf %2, %3 : vector<64x1xf32>
    %5 = vector.broadcast %4 : vector<64x1xf32> to vector<64x32xf32>
    %6 = arith.subf %0, %5 : vector<64x32xf32>
    %7 = arith.mulf %6, %6 : vector<64x32xf32>
    %cst_2 = arith.constant dense<0.000000e+00> : vector<64xf32>
    %8 = vector.multi_reduction <add>, %7, %cst_2 [1] : vector<64x32xf32> to vector<64xf32>
    %9 = vector.shape_cast %8 : vector<64xf32> to vector<64x1xf32>
    %cst_3 = arith.constant 3.200000e+01 : f32
    %10 = vector.broadcast %cst_3 : f32 to vector<64x1xf32>
    %11 = arith.divf %9, %10 : vector<64x1xf32>
    %12 = vector.broadcast %4 : vector<64x1xf32> to vector<64x32xf32>
    %13 = arith.subf %0, %12 : vector<64x32xf32>
    %cst_4 = arith.constant 9.99999997E-7 : f32
    %14 = vector.broadcast %cst_4 : f32 to vector<64x1xf32>
    %15 = arith.addf %11, %14 : vector<64x1xf32>
    %16 = math.rsqrt %15 : vector<64x1xf32>
    %17 = vector.broadcast %16 : vector<64x1xf32> to vector<64x32xf32>
    %18 = arith.mulf %13, %17 : vector<64x32xf32>
    %c0_5 = arith.constant 0 : index
    %c0_6 = arith.constant 0 : index
    %19 = vector.load %arg2[%c0_5, %c0_6] : memref<1x32xf32, #tpu.memory_space<vmem>>, vector<1x32xf32>
    %20 = vector.broadcast %19 : vector<1x32xf32> to vector<64x32xf32>
    %21 = arith.mulf %18, %20 : vector<64x32xf32>
    %c0_7 = arith.constant 0 : index
    %c0_8 = arith.constant 0 : index
    %22 = vector.load %arg3[%c0_7, %c0_8] : memref<1x32xf32, #tpu.memory_space<vmem>>, vector<1x32xf32>
    %23 = vector.broadcast %22 : vector<1x32xf32> to vector<64x32xf32>
    %24 = arith.addf %21, %23 : vector<64x32xf32>
    %25 = arith.truncf %24 : vector<64x32xf32> to vector<64x32xbf16>
    %c0_9 = arith.constant 0 : index
    %c0_10 = arith.constant 0 : index
    %26 = vector.load %arg4[%c0_9, %c0_10] : memref<32x128xbf16, #tpu.memory_space<vmem>>, vector<32x128xbf16>
    %cst_11 = arith.constant dense<0.000000e+00> : vector<64x128xf32>
    %27 = tpu.matmul %25, %26, %cst_11 {dimension_numbers = #tpu.dot_dimension_numbers<[1], [0], [0], [1], [0, 0, 1, 1], [], []>} : vector<64x32xbf16>, vector<32x128xbf16>, vector<64x128xf32> -> vector<64x128xf32>
    %c0_12 = arith.constant 0 : index
    %c0_13 = arith.constant 0 : index
    %28 = vector.load %arg5[%c0_12, %c0_13] : memref<1x128xf32, #tpu.memory_space<vmem>>, vector<1x128xf32>
    %29 = vector.broadcast %28 : vector<1x128xf32> to vector<64x128xf32>
    %30 = arith.addf %27, %29 : vector<64x128xf32>
    %31 = arith.mulf %30, %30 : vector<64x128xf32>
    %32 = arith.mulf %30, %31 : vector<64x128xf32>
    %cst_14 = arith.constant 4.471500e-02 : f32
    %33 = vector.broadcast %cst_14 : f32 to vector<64x128xf32>
    %34 = arith.mulf %33, %32 : vector<64x128xf32>
    %35 = arith.addf %30, %34 : vector<64x128xf32>
    %cst_15 = arith.constant 0.797884583 : f32
    %36 = vector.broadcast %cst_15 : f32 to vector<64x128xf32>
    %37 = arith.mulf %36, %35 : vector<64x128xf32>
    %38 = math.tanh %37 : vector<64x128xf32>
    %cst_16 = arith.constant 1.000000e+00 : f32
    %39 = vector.broadcast %cst_16 : f32 to vector<64x128xf32>
    %40 = arith.addf %39, %38 : vector<64x128xf32>
    %cst_17 = arith.constant 5.000000e-01 : f32
    %41 = vector.broadcast %cst_17 : f32 to vector<64x128xf32>
    %42 = arith.mulf %41, %40 : vector<64x128xf32>
    %43 = arith.mulf %30, %42 : vector<64x128xf32>
    %44 = arith.truncf %43 : vector<64x128xf32> to vector<64x128xbf16>
    %c0_18 = arith.constant 0 : index
    %c0_19 = arith.constant 0 : index
    %45 = vector.load %arg6[%c0_18, %c0_19] : memref<128x32xbf16, #tpu.memory_space<vmem>>, vector<128x32xbf16>
    %cst_20 = arith.constant dense<0.000000e+00> : vector<64x32xf32>
    %46 = tpu.matmul %44, %45, %cst_20 {dimension_numbers = #tpu.dot_dimension_numbers<[1], [0], [0], [1], [0, 0, 1, 1], [], []>} : vector<64x128xbf16>, vector<128x32xbf16>, vector<64x32xf32> -> vector<64x32xf32>
    %c0_21 = arith.constant 0 : index
    %c0_22 = arith.constant 0 : index
    %47 = vector.load %arg7[%c0_21, %c0_22] : memref<1x32xf32, #tpu.memory_space<vmem>>, vector<1x32xf32>
    %48 = vector.broadcast %47 : vector<1x32xf32> to vector<64x32xf32>
    %49 = arith.addf %46, %48 : vector<64x32xf32>
    %50 = arith.addf %0, %49 : vector<64x32xf32>
    %c0_23 = arith.constant 0 : index
    %c0_24 = arith.constant 0 : index
    %51 = vector.load %arg8[%c0_23, %c0_24] : memref<64x32xf32, #tpu.memory_space<vmem>>, vector<64x32xf32>
    tpu.vector_store %arg8[%c0_23, %c0_24], %50 {strides = array<i32>} : memref<64x32xf32, #tpu.memory_space<vmem>>, vector<64x32xf32>,
    return
  }
  func.func @transform_0(%arg0: i32) -> (i32, i32) {
    %c0_i32 = arith.constant 0 : i32
    %c0_i32_0 = arith.constant 0 : i32
    return %arg0, %c0_i32 : i32, i32
  }
  func.func @transform_1(%arg0: i32) -> (i32, i32) {
    %c0_i32 = arith.constant 0 : i32
    %c0_i32_0 = arith.constant 0 : i32
    %c0_i32_1 = arith.constant 0 : i32
    return %c0_i32, %c0_i32_0 : i32, i32
  }
  func.func @transform_2(%arg0: i32) -> (i32, i32) {
    %c0_i32 = arith.constant 0 : i32
    %c0_i32_0 = arith.constant 0 : i32
    %c0_i32_1 = arith.constant 0 : i32
    return %c0_i32, %c0_i32_0 : i32, i32
  }
  func.func @transform_3(%arg0: i32) -> (i32, i32) {
    %c0_i32 = arith.constant 0 : i32
    %c0_i32_0 = arith.constant 0 : i32
    %c0_i32_1 = arith.constant 0 : i32
    return %c0_i32, %c0_i32_0 : i32, i32
  }
  func.func @transform_4(%arg0: i32) -> (i32, i32) {
    %c0_i32 = arith.constant 0 : i32
    %c0_i32_0 = arith.constant 0 : i32
    %c0_i32_1 = arith.constant 0 : i32
    return %c0_i32, %c0_i32_0 : i32, i32
  }
  func.func @transform_5(%arg0: i32) -> (i32, i32) {
    %c0_i32 = arith.constant 0 : i32
    %c0_i32_0 = arith.constant 0 : i32
    %c0_i32_1 = arith.constant 0 : i32
    return %c0_i32, %c0_i32_0 : i32, i32
  }
  func.func @transform_6(%arg0: i32) -> (i32, i32) {
    %c0_i32 = arith.constant 0 : i32
    %c0_i32_0 = arith.constant 0 : i32
    %c0_i32_1 = arith.constant 0 : i32
    return %c0_i32, %c0_i32_0 : i32, i32
  }
  func.func @transform_7(%arg0: i32) -> (i32, i32) {
    %c0_i32 = arith.constant 0 : i32
    %c0_i32_0 = arith.constant 0 : i32
    return %arg0, %c0_i32 : i32, i32
  }
}

module attributes {stable_mosaic.version = 11 : i64} {
  func.func @_attn_kernel(%arg0: i32, %arg1: memref<4x64x8xf32, #tpu.memory_space<vmem>>, %arg2: memref<4x64x8xf32, #tpu.memory_space<vmem>>, %arg3: memref<4x64x8xf32, #tpu.memory_space<vmem>>, %arg4: memref<4x64x64xf32, #tpu.memory_space<vmem>>, %arg5: memref<4x64x8xf32, #tpu.memory_space<vmem>>) attributes {dimension_semantics = [#tpu.dimension_semantics<parallel>], iteration_bounds = array<i64: 2>, scalar_prefetch = 0 : i64, scratch_operands = 0 : i64, tpu.core_type = #tpu.core_type<tc>, window_params = [{transform_indices = @transform_0, window_bounds = array<i64: 4, 64, 8>}, {transform_indices = @transform_1, window_bounds = array<i64: 4, 64, 8>}, {transform_indices = @transform_2, window_bounds = array<i64: 4, 64, 8>}, {transform_indices = @transform_3, window_bounds = array<i64: 4, 64, 64>}, {transform_indices = @transform_4, window_bounds = array<i64: 4, 64, 8>}]} {
    %c0 = arith.constant 0 : index
    %c0_0 = arith.constant 0 : index
    %c0_1 = arith.constant 0 : index
    %0 = vector.load %arg1[%c0, %c0_0, %c0_1] : memref<4x64x8xf32, #tpu.memory_space<vmem>>, vector<4x64x8xf32>
    %1 = arith.truncf %0 : vector<4x64x8xf32> to vector<4x64x8xbf16>
    %c0_2 = arith.constant 0 : index
    %c0_3 = arith.constant 0 : index
    %c0_4 = arith.constant 0 : index
    %2 = vector.load %arg2[%c0_2, %c0_3, %c0_4] : memref<4x64x8xf32, #tpu.memory_space<vmem>>, vector<4x64x8xf32>
    %3 = arith.truncf %2 : vector<4x64x8xf32> to vector<4x64x8xbf16>
    %c0_5 = arith.constant 0 : index
    %c0_6 = arith.constant 0 : index
    %c0_7 = arith.constant 0 : index
    %4 = vector.load %arg3[%c0_5, %c0_6, %c0_7] : memref<4x64x8xf32, #tpu.memory_space<vmem>>, vector<4x64x8xf32>
    %5 = arith.truncf %4 : vector<4x64x8xf32> to vector<4x64x8xbf16>
    "tpu.trace_start"() <{level = 10 : i32, message = "bqd,bkd->bqk"}> : () -> ()
    %cst = arith.constant dense<0.000000e+00> : vector<4x64x64xf32>
    %6 = tpu.matmul %1, %3, %cst {dimension_numbers = #tpu.dot_dimension_numbers<[2], [2], [1], [1], [0, 0, 0, 1, 1, 1], [0], [0]>} : vector<4x64x8xbf16>, vector<4x64x8xbf16>, vector<4x64x64xf32> -> vector<4x64x64xf32>
    "tpu.trace_stop"() : () -> ()
    %cst_8 = arith.constant 0.353553385 : f32
    %7 = vector.broadcast %cst_8 : f32 to vector<4x64x64xf32>
    %8 = arith.mulf %6, %7 : vector<4x64x64xf32>
    %c0_9 = arith.constant 0 : index
    %c0_10 = arith.constant 0 : index
    %c0_11 = arith.constant 0 : index
    %9 = vector.load %arg4[%c0_9, %c0_10, %c0_11] : memref<4x64x64xf32, #tpu.memory_space<vmem>>, vector<4x64x64xf32>
    %10 = arith.addf %8, %9 : vector<4x64x64xf32>
    %cst_12 = arith.constant dense<0xFF800000> : vector<4x64xf32>
    %11 = vector.multi_reduction <maximumf>, %10, %cst_12 [2] : vector<4x64x64xf32> to vector<4x64xf32>
    %12 = vector.shape_cast %11 : vector<4x64xf32> to vector<4x64x1xf32>
    %13 = vector.broadcast %12 : vector<4x64x1xf32> to vector<4x64x64xf32>
    %14 = arith.subf %10, %13 : vector<4x64x64xf32>
    %15 = math.exp %14 : vector<4x64x64xf32>
    %cst_13 = arith.constant dense<0.000000e+00> : vector<4x64xf32>
    %16 = vector.multi_reduction <add>, %15, %cst_13 [2] : vector<4x64x64xf32> to vector<4x64xf32>
    %17 = vector.shape_cast %16 : vector<4x64xf32> to vector<4x64x1xf32>
    %18 = arith.truncf %15 : vector<4x64x64xf32> to vector<4x64x64xbf16>
    "tpu.trace_start"() <{level = 10 : i32, message = "bqk,bkd->bqd"}> : () -> ()
    %cst_14 = arith.constant dense<0.000000e+00> : vector<4x64x8xf32>
    %19 = tpu.matmul %18, %5, %cst_14 {dimension_numbers = #tpu.dot_dimension_numbers<[2], [1], [1], [2], [0, 0, 0, 1, 1, 2], [0], [0]>} : vector<4x64x64xbf16>, vector<4x64x8xbf16>, vector<4x64x8xf32> -> vector<4x64x8xf32>
    "tpu.trace_stop"() : () -> ()
    %20 = tpu.reciprocal %17 {approx = true} : vector<4x64x1xf32> -> vector<4x64x1xf32>
    %21 = vector.broadcast %20 : vector<4x64x1xf32> to vector<4x64x8xf32>
    %22 = arith.mulf %19, %21 : vector<4x64x8xf32>
    %c0_15 = arith.constant 0 : index
    %c0_16 = arith.constant 0 : index
    %c0_17 = arith.constant 0 : index
    %23 = vector.load %arg5[%c0_15, %c0_16, %c0_17] : memref<4x64x8xf32, #tpu.memory_space<vmem>>, vector<4x64x8xf32>
    tpu.vector_store %arg5[%c0_15, %c0_16, %c0_17], %22 {strides = array<i32>} : memref<4x64x8xf32, #tpu.memory_space<vmem>>, vector<4x64x8xf32>,
    return
  }
  func.func @transform_0(%arg0: i32) -> (i32, i32, i32) {
    %c0_i32 = arith.constant 0 : i32
    %c0_i32_0 = arith.constant 0 : i32
    %c0_i32_1 = arith.constant 0 : i32
    return %arg0, %c0_i32, %c0_i32_0 : i32, i32, i32
  }
  func.func @transform_1(%arg0: i32) -> (i32, i32, i32) {
    %c0_i32 = arith.constant 0 : i32
    %c0_i32_0 = arith.constant 0 : i32
    %c0_i32_1 = arith.constant 0 : i32
    return %arg0, %c0_i32, %c0_i32_0 : i32, i32, i32
  }
  func.func @transform_2(%arg0: i32) -> (i32, i32, i32) {
    %c0_i32 = arith.constant 0 : i32
    %c0_i32_0 = arith.constant 0 : i32
    %c0_i32_1 = arith.constant 0 : i32
    return %arg0, %c0_i32, %c0_i32_0 : i32, i32, i32
  }
  func.func @transform_3(%arg0: i32) -> (i32, i32, i32) {
    %c0_i32 = arith.constant 0 : i32
    %c0_i32_0 = arith.constant 0 : i32
    %c0_i32_1 = arith.constant 0 : i32
    return %arg0, %c0_i32, %c0_i32_0 : i32, i32, i32
  }
  func.func @transform_4(%arg0: i32) -> (i32, i32, i32) {
    %c0_i32 = arith.constant 0 : i32
    %c0_i32_0 = arith.constant 0 : i32
    %c0_i32_1 = arith.constant 0 : i32
    return %arg0, %c0_i32, %c0_i32_0 : i32, i32, i32
  }
}

module attributes {stable_mosaic.version = 11 : i64} {
  func.func @_ln_mlp_kernel(%arg0: i32, %arg1: memref<64x32xf32, #tpu.memory_space<vmem>>, %arg2: memref<1x32xf32, #tpu.memory_space<vmem>>, %arg3: memref<1x32xf32, #tpu.memory_space<vmem>>, %arg4: memref<32x128xbf16, #tpu.memory_space<vmem>>, %arg5: memref<1x128xf32, #tpu.memory_space<vmem>>, %arg6: memref<128x32xbf16, #tpu.memory_space<vmem>>, %arg7: memref<1x32xf32, #tpu.memory_space<vmem>>, %arg8: memref<64x32xf32, #tpu.memory_space<vmem>>) attributes {dimension_semantics = [#tpu.dimension_semantics<parallel>], iteration_bounds = array<i64: 2>, scalar_prefetch = 0 : i64, scratch_operands = 0 : i64, tpu.core_type = #tpu.core_type<tc>, window_params = [{transform_indices = @transform_0, window_bounds = array<i64: 64, 32>}, {pipeline_mode = #tpu.pipeline_mode<synchronous>, transform_indices = @transform_1, window_bounds = array<i64: 1, 32>}, {pipeline_mode = #tpu.pipeline_mode<synchronous>, transform_indices = @transform_2, window_bounds = array<i64: 1, 32>}, {pipeline_mode = #tpu.pipeline_mode<synchronous>, transform_indices = @transform_3, window_bounds = array<i64: 32, 128>}, {pipeline_mode = #tpu.pipeline_mode<synchronous>, transform_indices = @transform_4, window_bounds = array<i64: 1, 128>}, {pipeline_mode = #tpu.pipeline_mode<synchronous>, transform_indices = @transform_5, window_bounds = array<i64: 128, 32>}, {pipeline_mode = #tpu.pipeline_mode<synchronous>, transform_indices = @transform_6, window_bounds = array<i64: 1, 32>}, {transform_indices = @transform_7, window_bounds = array<i64: 64, 32>}]} {
    %c0 = arith.constant 0 : index
    %c0_0 = arith.constant 0 : index
    %0 = vector.load %arg1[%c0, %c0_0] : memref<64x32xf32, #tpu.memory_space<vmem>>, vector<64x32xf32>
    %cst = arith.constant dense<0.000000e+00> : vector<64xf32>
    %1 = vector.multi_reduction <add>, %0, %cst [1] : vector<64x32xf32> to vector<64xf32>
    %2 = vector.shape_cast %1 : vector<64xf32> to vector<64x1xf32>
    %cst_1 = arith.constant 3.200000e+01 : f32
    %3 = vector.broadcast %cst_1 : f32 to vector<64x1xf32>
    %4 = arith.divf %2, %3 : vector<64x1xf32>
    %5 = vector.broadcast %4 : vector<64x1xf32> to vector<64x32xf32>
    %6 = arith.subf %0, %5 : vector<64x32xf32>
    %7 = arith.mulf %6, %6 : vector<64x32xf32>
    %cst_2 = arith.constant dense<0.000000e+00> : vector<64xf32>
    %8 = vector.multi_reduction <add>, %7, %cst_2 [1] : vector<64x32xf32> to vector<64xf32>
    %9 = vector.shape_cast %8 : vector<64xf32> to vector<64x1xf32>
    %cst_3 = arith.constant 3.200000e+01 : f32
    %10 = vector.broadcast %cst_3 : f32 to vector<64x1xf32>
    %11 = arith.divf %9, %10 : vector<64x1xf32>
    %12 = vector.broadcast %4 : vector<64x1xf32> to vector<64x32xf32>
    %13 = arith.subf %0, %12 : vector<64x32xf32>
    %cst_4 = arith.constant 9.99999997E-7 : f32
    %14 = vector.broadcast %cst_4 : f32 to vector<64x1xf32>
    %15 = arith.addf %11, %14 : vector<64x1xf32>
    %16 = math.rsqrt %15 : vector<64x1xf32>
    %17 = vector.broadcast %16 : vector<64x1xf32> to vector<64x32xf32>
    %18 = arith.mulf %13, %17 : vector<64x32xf32>
    %c0_5 = arith.constant 0 : index
    %c0_6 = arith.constant 0 : index
    %19 = vector.load %arg2[%c0_5, %c0_6] : memref<1x32xf32, #tpu.memory_space<vmem>>, vector<1x32xf32>
    %20 = vector.broadcast %19 : vector<1x32xf32> to vector<64x32xf32>
    %21 = arith.mulf %18, %20 : vector<64x32xf32>
    %c0_7 = arith.constant 0 : index
    %c0_8 = arith.constant 0 : index
    %22 = vector.load %arg3[%c0_7, %c0_8] : memref<1x32xf32, #tpu.memory_space<vmem>>, vector<1x32xf32>
    %23 = vector.broadcast %22 : vector<1x32xf32> to vector<64x32xf32>
    %24 = arith.addf %21, %23 : vector<64x32xf32>
    %25 = arith.truncf %24 : vector<64x32xf32> to vector<64x32xbf16>
    %c0_9 = arith.constant 0 : index
    %c0_10 = arith.constant 0 : index
    %26 = vector.load %arg4[%c0_9, %c0_10] : memref<32x128xbf16, #tpu.memory_space<vmem>>, vector<32x128xbf16>
    %cst_11 = arith.constant dense<0.000000e+00> : vector<64x128xf32>
    %27 = tpu.matmul %25, %26, %cst_11 {dimension_numbers = #tpu.dot_dimension_numbers<[1], [0], [0], [1], [0, 0, 1, 1], [], []>} : vector<64x32xbf16>, vector<32x128xbf16>, vector<64x128xf32> -> vector<64x128xf32>
    %c0_12 = arith.constant 0 : index
    %c0_13 = arith.constant 0 : index
    %28 = vector.load %arg5[%c0_12, %c0_13] : memref<1x128xf32, #tpu.memory_space<vmem>>, vector<1x128xf32>
    %29 = vector.broadcast %28 : vector<1x128xf32> to vector<64x128xf32>
    %30 = arith.addf %27, %29 : vector<64x128xf32>
    %31 = arith.mulf %30, %30 : vector<64x128xf32>
    %32 = arith.mulf %30, %31 : vector<64x128xf32>
    %cst_14 = arith.constant 4.471500e-02 : f32
    %33 = vector.broadcast %cst_14 : f32 to vector<64x128xf32>
    %34 = arith.mulf %33, %32 : vector<64x128xf32>
    %35 = arith.addf %30, %34 : vector<64x128xf32>
    %cst_15 = arith.constant 0.797884583 : f32
    %36 = vector.broadcast %cst_15 : f32 to vector<64x128xf32>
    %37 = arith.mulf %36, %35 : vector<64x128xf32>
    %38 = math.tanh %37 : vector<64x128xf32>
    %cst_16 = arith.constant 1.000000e+00 : f32
    %39 = vector.broadcast %cst_16 : f32 to vector<64x128xf32>
    %40 = arith.addf %39, %38 : vector<64x128xf32>
    %cst_17 = arith.constant 5.000000e-01 : f32
    %41 = vector.broadcast %cst_17 : f32 to vector<64x128xf32>
    %42 = arith.mulf %41, %40 : vector<64x128xf32>
    %43 = arith.mulf %30, %42 : vector<64x128xf32>
    %44 = arith.truncf %43 : vector<64x128xf32> to vector<64x128xbf16>
    %c0_18 = arith.constant 0 : index
    %c0_19 = arith.constant 0 : index
    %45 = vector.load %arg6[%c0_18, %c0_19] : memref<128x32xbf16, #tpu.memory_space<vmem>>, vector<128x32xbf16>
    %cst_20 = arith.constant dense<0.000000e+00> : vector<64x32xf32>
    %46 = tpu.matmul %44, %45, %cst_20 {dimension_numbers = #tpu.dot_dimension_numbers<[1], [0], [0], [1], [0, 0, 1, 1], [], []>} : vector<64x128xbf16>, vector<128x32xbf16>, vector<64x32xf32> -> vector<64x32xf32>
    %c0_21 = arith.constant 0 : index
    %c0_22 = arith.constant 0 : index
    %47 = vector.load %arg7[%c0_21, %c0_22] : memref<1x32xf32, #tpu.memory_space<vmem>>, vector<1x32xf32>
    %48 = vector.broadcast %47 : vector<1x32xf32> to vector<64x32xf32>
    %49 = arith.addf %46, %48 : vector<64x32xf32>
    %50 = arith.addf %0, %49 : vector<64x32xf32>
    %c0_23 = arith.constant 0 : index
    %c0_24 = arith.constant 0 : index
    %51 = vector.load %arg8[%c0_23, %c0_24] : memref<64x32xf32, #tpu.memory_space<vmem>>, vector<64x32xf32>
    tpu.vector_store %arg8[%c0_23, %c0_24], %50 {strides = array<i32>} : memref<64x32xf32, #tpu.memory_space<vmem>>, vector<64x32xf32>,
    return
  }
  func.func @transform_0(%arg0: i32) -> (i32, i32) {
    %c0_i32 = arith.constant 0 : i32
    %c0_i32_0 = arith.constant 0 : i32
    return %arg0, %c0_i32 : i32, i32
  }
  func.func @transform_1(%arg0: i32) -> (i32, i32) {
    %c0_i32 = arith.constant 0 : i32
    %c0_i32_0 = arith.constant 0 : i32
    %c0_i32_1 = arith.constant 0 : i32
    return %c0_i32, %c0_i32_0 : i32, i32
  }
  func.func @transform_2(%arg0: i32) -> (i32, i32) {
    %c0_i32 = arith.constant 0 : i32
    %c0_i32_0 = arith.constant 0 : i32
    %c0_i32_1 = arith.constant 0 : i32
    return %c0_i32, %c0_i32_0 : i32, i32
  }
  func.func @transform_3(%arg0: i32) -> (i32, i32) {
    %c0_i32 = arith.constant 0 : i32
    %c0_i32_0 = arith.constant 0 : i32
    %c0_i32_1 = arith.constant 0 : i32
    return %c0_i32, %c0_i32_0 : i32, i32
  }
  func.func @transform_4(%arg0: i32) -> (i32, i32) {
    %c0_i32 = arith.constant 0 : i32
    %c0_i32_0 = arith.constant 0 : i32
    %c0_i32_1 = arith.constant 0 : i32
    return %c0_i32, %c0_i32_0 : i32, i32
  }
  func.func @transform_5(%arg0: i32) -> (i32, i32) {
    %c0_i32 = arith.constant 0 : i32
    %c0_i32_0 = arith.constant 0 : i32
    %c0_i32_1 = arith.constant 0 : i32
    return %c0_i32, %c0_i32_0 : i32, i32
  }
  func.func @transform_6(%arg0: i32) -> (i32, i32) {
    %c0_i32 = arith.constant 0 : i32
    %c0_i32_0 = arith.constant 0 : i32
    %c0_i32_1 = arith.constant 0 : i32
    return %c0_i32, %c0_i32_0 : i32, i32
  }
  func.func @transform_7(%arg0: i32) -> (i32, i32) {
    %c0_i32 = arith.constant 0 : i32
    %c0_i32_0 = arith.constant 0 : i32
    return %arg0, %c0_i32 : i32, i32
  }
}

</mosaic_0001>

<llo_original>
// kernel: uninext_forward.9
$region0: #{uninext_forward.9}
  #allocation0 [shape = 'u32[]', space=smem, size = 0x4, offset = 0x4, fixed_abs, tag = 'smem constant byte address 0x4 - core index']
  #allocation1 [shape = 'u32[144,128]{1,0:T(1,128)}', space=vmem, size = 0x12000, scoped, tag = 'internal scratch']
  %s0 = inlined_call_operand.vmem [shape: f32[128,768], index: 0, kind: input, shape index: {}]
  %s1 = inlined_call_operand.vmem [shape: bf16[768,32], index: 1, kind: input, shape index: {}]
  %s2 = inlined_call_operand.vmem [shape: f32[1,32], index: 2, kind: input, shape index: {}]
  %s3 = inlined_call_operand.vmem [shape: f32[64,32], index: 3, kind: input, shape index: {}]
  %s4 = inlined_call_operand.vmem [shape: f32[128,32], index: 4, kind: output, shape index: {}]
  %s5 = sld [smem:[#allocation0]]
  $region49: #{uninext_forward.9} parent=0
    _
  %s7 = ssub.s32 1, %s5
  %s8 = scalar_select 0, %s7, %s5
  loop: start=0, step=1, limit=4
  $region2: #{uninext_forward.9} parent=0 // loop_pre_header
    _
  $region3: #{uninext_forward.9} parent=0 // loop_header
    %s10 = sphi 0, %s14
    %p11 = scmp.ge.s32.totalorder %s10, 4
    %s20 = sphi 0, %s22
    %s23 = sphi 0, %s20
    %s24 = sphi 0, %s23
    %s40 = sphi 0, %s24
    %s44 = sphi 0, %s44
    %s46 = sphi 0, %s44
    %s47 = sphi 0, %s46
    %s61 = sphi 0, %s47
    %s65 = sphi 0, %s65
    %s67 = sphi 0, %s65
    %s68 = sphi 0, %s67
    %s82 = sphi 0, %s68
    %s86 = sphi 0, %s86
    %s88 = sphi 0, %s86
    %s89 = sphi 0, %s88
    %s103 = sphi 0, %s89
    %s109 = sphi 0, %s111
    %s112 = sphi 0, %s109
    %s113 = sphi 0, %s112
    %s129 = sphi 0, %s113
  $region4: #{uninext_forward.9} parent=0 // loop_header_branch
    %13 = sbr.rel (%p11) target = $region8
  $region5: #{uninext_forward.9} parent=0 // loop_body
    %s15 = ssub.s32 %s10, 1
    %s16 = ssub.s32 %s10, 2
    %s17 = sadd.s32 %s10, 1
    %s18 = ssub.s32 %s10, %s17
    %p19 = scmp.eq.s32.totalorder %s18, 0
    %s21 = sadd.s32 %s20, 1
    %s22 = scalar_select %p19, %s20, %s21
    %p25 = pneg %p19
    %p26 = scmp.eq.s32.totalorder %s10, 1
    %p27 = por %p25, %p26
    %p28 = scmp.ne.s32.totalorder %s20, %s23
    %p29 = scmp.eq.s32.totalorder %s10, 0
    %p30 = por %p28, %p29
    %p31 = scmp.ne.s32.totalorder %s20, %s23
    %p32 = scmp.eq.s32.totalorder %s15, 1
    %p33 = por %p31, %p32
    %p34 = scmp.ne.s32.totalorder %s23, %s24
    %p35 = scmp.eq.s32.totalorder %s15, 0
    %p36 = por %p34, %p35
    %p37 = scmp.ne.s32.totalorder %s23, %s24
    %p38 = scmp.eq.s32.totalorder %s16, 1
    %p39 = por %p37, %p38
    %p41 = scmp.ne.s32.totalorder %s24, %s40
    %p42 = scmp.eq.s32.totalorder %s16, 0
    %p43 = por %p41, %p42
    %s45 = sadd.s32 %s44, 1
    %p48 = scmp.eq.s32.totalorder %s10, 1
    %p49 = scmp.ne.s32.totalorder %s44, %s46
    %p50 = scmp.eq.s32.totalorder %s10, 0
    %p51 = por %p49, %p50
    %p52 = scmp.ne.s32.totalorder %s44, %s46
    %p53 = scmp.eq.s32.totalorder %s15, 1
    %p54 = por %p52, %p53
    %p55 = scmp.ne.s32.totalorder %s46, %s47
    %p56 = scmp.eq.s32.totalorder %s15, 0
    %p57 = por %p55, %p56
    %p58 = scmp.ne.s32.totalorder %s46, %s47
    %p59 = scmp.eq.s32.totalorder %s16, 1
    %p60 = por %p58, %p59
    %p62 = scmp.ne.s32.totalorder %s47, %s61
    %p63 = scmp.eq.s32.totalorder %s16, 0
    %p64 = por %p62, %p63
    %s66 = sadd.s32 %s65, 1
    %p69 = scmp.eq.s32.totalorder %s10, 1
    %p70 = scmp.ne.s32.totalorder %s65, %s67
    %p71 = scmp.eq.s32.totalorder %s10, 0
    %p72 = por %p70, %p71
    %p73 = scmp.ne.s32.totalorder %s65, %s67
    %p74 = scmp.eq.s32.totalorder %s15, 1
    %p75 = por %p73, %p74
    %p76 = scmp.ne.s32.totalorder %s67, %s68
    %p77 = scmp.eq.s32.totalorder %s15, 0
    %p78 = por %p76, %p77
    %p79 = scmp.ne.s32.totalorder %s67, %s68
    %p80 = scmp.eq.s32.totalorder %s16, 1
    %p81 = por %p79, %p80
    %p83 = scmp.ne.s32.totalorder %s68, %s82
    %p84 = scmp.eq.s32.totalorder %s16, 0
    %p85 = por %p83, %p84
    %s87 = sadd.s32 %s86, 1
    %p90 = scmp.eq.s32.totalorder %s10, 1
    %p91 = scmp.ne.s32.totalorder %s86, %s88
    %p92 = scmp.eq.s32.totalorder %s10, 0
    %p93 = por %p91, %p92
    %p94 = scmp.ne.s32.totalorder %s86, %s88
    %p95 = scmp.eq.s32.totalorder %s15, 1
    %p96 = por %p94, %p95
    %p97 = scmp.ne.s32.totalorder %s88, %s89
    %p98 = scmp.eq.s32.totalorder %s15, 0
    %p99 = por %p97, %p98
    %p100 = scmp.ne.s32.totalorder %s88, %s89
    %p101 = scmp.eq.s32.totalorder %s16, 1
    %p102 = por %p100, %p101
    %p104 = scmp.ne.s32.totalorder %s89, %s103
    %p105 = scmp.eq.s32.totalorder %s16, 0
    %p106 = por %p104, %p105
    %s107 = ssub.s32 %s10, %s17
    %p108 = scmp.eq.s32.totalorder %s107, 0
    %s110 = sadd.s32 %s109, 1
    %s111 = scalar_select %p108, %s109, %s110
    %p114 = pneg %p108
    %p115 = scmp.eq.s32.totalorder %s10, 1
    %p116 = por %p114, %p115
    %p117 = scmp.ne.s32.totalorder %s109, %s112
    %p118 = scmp.eq.s32.totalorder %s10, 0
    %p119 = por %p117, %p118
    %p120 = scmp.ne.s32.totalorder %s109, %s112
    %p121 = scmp.eq.s32.totalorder %s15, 1
    %p122 = por %p120, %p121
    %p123 = scmp.ne.s32.totalorder %s112, %s113
    %p124 = scmp.eq.s32.totalorder %s15, 0
    %p125 = por %p123, %p124
    %p126 = scmp.ne.s32.totalorder %s112, %s113
    %p127 = scmp.eq.s32.totalorder %s16, 1
    %p128 = por %p126, %p127
    %p130 = scmp.ne.s32.totalorder %s113, %s129
    %p131 = scmp.eq.s32.totalorder %s16, 0
    %p132 = por %p130, %p131
    %p133 = scmp.le.s32.totalorder 1, %s10
    %p134 = scmp.lt.s32.totalorder %s10, 3
    %p135 = pnand %p133, %p134
    %p136 = pneg %p135
    // Predicated region
    $region9: #{uninext_forward.9} parent=5 // pred_check
      _
    $region10: #{uninext_forward.9} parent=5 // pred_check_branch
      %138 = sbr.rel (%p135) target = $region12
    $region11: #{uninext_forward.9} parent=5 // pred_region
      %s139 = ssub.s32 %s10, 1
      // Predicated region
      $region13: #{uninext_forward.9} parent=11 // pred_check
        %p140 = pneg %p57
      $region14: #{uninext_forward.9} parent=11 // pred_check_branch
        %142 = sbr.rel (%p140) target = $region16
      $region15: #{uninext_forward.9} parent=11 // pred_region
        _
      $region16: #{uninext_forward.9} parent=11 // pred_fallthru
        _
      // Predicated region
      $region17: #{uninext_forward.9} parent=11 // pred_check
        %p143 = pneg %p78
      $region18: #{uninext_forward.9} parent=11 // pred_check_branch
        %145 = sbr.rel (%p143) target = $region20
      $region19: #{uninext_forward.9} parent=11 // pred_region
        _
      $region20: #{uninext_forward.9} parent=11 // pred_fallthru
        _
      // Predicated region
      $region21: #{uninext_forward.9} parent=11 // pred_check
        %p146 = pneg %p99
      $region22: #{uninext_forward.9} parent=11 // pred_check_branch
        %148 = sbr.rel (%p146) target = $region24
      $region23: #{uninext_forward.9} parent=11 // pred_region
        _
      $region24: #{uninext_forward.9} parent=11 // pred_fallthru
        _
    $region12: #{uninext_forward.9} parent=5 // pred_fallthru
      _
    %p149 = scmp.lt.s32.totalorder %s10, 2
    // Predicated region
    $region25: #{uninext_forward.9} parent=5 // pred_check
      %p150 = pneg %p149
    $region26: #{uninext_forward.9} parent=5 // pred_check_branch
      %152 = sbr.rel (%p150) target = $region28
    $region27: #{uninext_forward.9} parent=5 // pred_region
      // Predicated region
      $region29: #{uninext_forward.9} parent=27 // pred_check
        %p153 = pneg %p30
      $region30: #{uninext_forward.9} parent=27 // pred_check_branch
        %155 = sbr.rel (%p153) target = $region32
      $region31: #{uninext_forward.9} parent=27 // pred_region
        %s156 = smul.u32 8, %s10
        %p157 = scmp.lt.s32.totalorder %s156, 15
        %s158 = scalar_select %p157, %s156, 15
        %s159 = smul.addr %s158, 6
        %s160 = smul.addr %s159, 8
        %s161 = scalar_lea.vmem %s0, %s160
        %s162 = smul.u32 8, %s10
      $region32: #{uninext_forward.9} parent=27 // pred_fallthru
        _
    $region28: #{uninext_forward.9} parent=5 // pred_fallthru
      _
    %p163 = scmp.le.s32.totalorder 1, %s10
    %p164 = scmp.lt.s32.totalorder %s10, 3
    %p165 = pnand %p163, %p164
    %p166 = pneg %p165
    // Predicated region
    $region33: #{uninext_forward.9} parent=5 // pred_check
      _
    $region34: #{uninext_forward.9} parent=5 // pred_check_branch
      %168 = sbr.rel (%p165) target = $region36
    $region35: #{uninext_forward.9} parent=5 // pred_region
      %s169 = ssub.s32 %s10, 1
      %s170 = smul.u32 8, %s15
      %p171 = scmp.lt.s32.totalorder %s170, 15
      %s172 = scalar_select %p171, %s170, 15
      %s173 = smul.addr %s172, 6
      %s174 = smul.addr %s173, 8
      %s175 = scalar_lea.vmem %s0, %s174
      %p176 = pneg %p36
      %p177 = pneg %p33
      %p178 = pneg %p57
      %p179 = pneg %p54
      %p180 = pneg %p78
      %p181 = pneg %p75
      %p182 = pneg %p99
      %p183 = pneg %p96
      %p184 = pneg %p125
      %p185 = pneg %p122
      %s186 = smul.u32 8, %s15
      %p187 = scmp.lt.s32.totalorder %s186, 15
      %s188 = scalar_select %p187, %s186, 15
      %s189 = smul.addr %s188, 8
      %s190 = scalar_lea.vmem %s4, %s189
      %s191 = smul.u32 8, %s15
      %p192 = scmp.lt.s32.totalorder %s191, 15
      %s193 = scalar_select %p192, %s191, 15
      %s194 = smul.addr %s193, 6
      %s195 = smul.addr %s194, 8
      %s196 = scalar_lea.vmem %s0, %s195
      %s197 = smul.u32 8, %s15
      %s198 = smul.u32 8, %s15
      %p199 = scmp.lt.s32.totalorder %s198, 15
      %s200 = scalar_select %p199, %s198, 15
      %s201 = smul.addr %s200, 8
      %s202 = scalar_lea.vmem %s4, %s201
      %s203 = smul.u32 8, %s15
      %v205 = vld [vmem:[%s196] sm:$0xff]
      %v206 = vld [vmem:[%s196 + $0x8] sm:$0xff]
      %v207 = vld [vmem:[%s196 + $0x10] sm:$0xff]
      %v208 = vld [vmem:[%s196 + $0x18] sm:$0xff]
      %v209 = vld [vmem:[%s196 + $0x20] sm:$0xff]
      %v210 = vld [vmem:[%s196 + $0x28] sm:$0xff]
      %v211 = vld [vmem:[%s196 + $0x30] sm:$0xff]
      %v212 = vld [vmem:[%s196 + $0x38] sm:$0xff]
      %v213 = vld [vmem:[%s196 + $0x40] sm:$0xff]
      %v214 = vld [vmem:[%s196 + $0x48] sm:$0xff]
      %v215 = vld [vmem:[%s196 + $0x50] sm:$0xff]
      %v216 = vld [vmem:[%s196 + $0x58] sm:$0xff]
      %v217 = vld [vmem:[%s196 + $0x60] sm:$0xff]
      %v218 = vld [vmem:[%s196 + $0x68] sm:$0xff]
      %v219 = vld [vmem:[%s196 + $0x70] sm:$0xff]
      %v220 = vld [vmem:[%s196 + $0x78] sm:$0xff]
      %v221 = vld [vmem:[%s196 + $0x80] sm:$0xff]
      %v222 = vld [vmem:[%s196 + $0x88] sm:$0xff]
      %v223 = vld [vmem:[%s196 + $0x90] sm:$0xff]
      %v224 = vld [vmem:[%s196 + $0x98] sm:$0xff]
      %v225 = vld [vmem:[%s196 + $0xa0] sm:$0xff]
      %v226 = vld [vmem:[%s196 + $0xa8] sm:$0xff]
      %v227 = vld [vmem:[%s196 + $0xb0] sm:$0xff]
      %v228 = vld [vmem:[%s196 + $0xb8] sm:$0xff]
      %v229 = vld [vmem:[%s196 + $0xc0] sm:$0xff]
      %v230 = vld [vmem:[%s196 + $0xc8] sm:$0xff]
      %v231 = vld [vmem:[%s196 + $0xd0] sm:$0xff]
      %v232 = vld [vmem:[%s196 + $0xd8] sm:$0xff]
      %v233 = vld [vmem:[%s196 + $0xe0] sm:$0xff]
      %v234 = vld [vmem:[%s196 + $0xe8] sm:$0xff]
      %v235 = vld [vmem:[%s196 + $0xf0] sm:$0xff]
      %v236 = vld [vmem:[%s196 + $0xf8] sm:$0xff]
      %v237 = vld [vmem:[%s196 + $0x100] sm:$0xff]
      %v238 = vld [vmem:[%s196 + $0x108] sm:$0xff]
      %v239 = vld [vmem:[%s196 + $0x110] sm:$0xff]
      %v240 = vld [vmem:[%s196 + $0x118] sm:$0xff]
      %v241 = vld [vmem:[%s196 + $0x120] sm:$0xff]
      %v242 = vld [vmem:[%s196 + $0x128] sm:$0xff]
      %v243 = vld [vmem:[%s196 + $0x130] sm:$0xff]
      %v244 = vld [vmem:[%s196 + $0x138] sm:$0xff]
      %v245 = vld [vmem:[%s196 + $0x140] sm:$0xff]
      %v246 = vld [vmem:[%s196 + $0x148] sm:$0xff]
      %v247 = vld [vmem:[%s196 + $0x150] sm:$0xff]
      %v248 = vld [vmem:[%s196 + $0x158] sm:$0xff]
      %v249 = vld [vmem:[%s196 + $0x160] sm:$0xff]
      %v250 = vld [vmem:[%s196 + $0x168] sm:$0xff]
      %v251 = vld [vmem:[%s196 + $0x170] sm:$0xff]
      %v252 = vld [vmem:[%s196 + $0x178] sm:$0xff]
      %v253 = vpack.c.bf16 %v211, %v205
      %v254 = vpack.c.bf16 %v212, %v206
      %v255 = vpack.c.bf16 %v213, %v207
      %v256 = vpack.c.bf16 %v214, %v208
      %v257 = vpack.c.bf16 %v215, %v209
      %v258 = vpack.c.bf16 %v216, %v210
      %v259 = vpack.c.bf16 %v223, %v217
      %v260 = vpack.c.bf16 %v224, %v218
      %v261 = vpack.c.bf16 %v225, %v219
      %v262 = vpack.c.bf16 %v226, %v220
      %v263 = vpack.c.bf16 %v227, %v221
      %v264 = vpack.c.bf16 %v228, %v222
      %v265 = vpack.c.bf16 %v235, %v229
      %v266 = vpack.c.bf16 %v236, %v230
      %v267 = vpack.c.bf16 %v237, %v231
      %v268 = vpack.c.bf16 %v238, %v232
      %v269 = vpack.c.bf16 %v239, %v233
      %v270 = vpack.c.bf16 %v240, %v234
      %v271 = vpack.c.bf16 %v247, %v241
      %v272 = vpack.c.bf16 %v248, %v242
      %v273 = vpack.c.bf16 %v249, %v243
      %v274 = vpack.c.bf16 %v250, %v244
      %v275 = vpack.c.bf16 %v251, %v245
      %v276 = vpack.c.bf16 %v252, %v246
      %v277 = vld [vmem:[%s1] sm:$0xf]
      %v278 = vld [vmem:[%s1 + $0x4] sm:$0xf]
      %v279 = vld [vmem:[%s1 + $0x8] sm:$0xf]
      %v280 = vld [vmem:[%s1 + $0xc] sm:$0xf]
      %v281 = vld [vmem:[%s1 + $0x10] sm:$0xf]
      %v282 = vld [vmem:[%s1 + $0x14] sm:$0xf]
      %v283 = vld [vmem:[%s1 + $0x18] sm:$0xf]
      %v284 = vld [vmem:[%s1 + $0x1c] sm:$0xf]
      %v285 = vld [vmem:[%s1 + $0x20] sm:$0xf]
      %v286 = vld [vmem:[%s1 + $0x24] sm:$0xf]
      %v287 = vld [vmem:[%s1 + $0x28] sm:$0xf]
      %v288 = vld [vmem:[%s1 + $0x2c] sm:$0xf]
      %v289 = vld [vmem:[%s1 + $0x30] sm:$0xf]
      %v290 = vld [vmem:[%s1 + $0x34] sm:$0xf]
      %v291 = vld [vmem:[%s1 + $0x38] sm:$0xf]
      %v292 = vld [vmem:[%s1 + $0x3c] sm:$0xf]
      %v293 = vld [vmem:[%s1 + $0x40] sm:$0xf]
      %v294 = vld [vmem:[%s1 + $0x44] sm:$0xf]
      %v295 = vld [vmem:[%s1 + $0x48] sm:$0xf]
      %v296 = vld [vmem:[%s1 + $0x4c] sm:$0xf]
      %v297 = vld [vmem:[%s1 + $0x50] sm:$0xf]
      %v298 = vld [vmem:[%s1 + $0x54] sm:$0xf]
      %v299 = vld [vmem:[%s1 + $0x58] sm:$0xf]
      %v300 = vld [vmem:[%s1 + $0x5c] sm:$0xf]
      %v301 = vld [vmem:[%s1 + $0x60] sm:$0xf]
      %v302 = vld [vmem:[%s1 + $0x64] sm:$0xf]
      %v303 = vld [vmem:[%s1 + $0x68] sm:$0xf]
      %v304 = vld [vmem:[%s1 + $0x6c] sm:$0xf]
      %v305 = vld [vmem:[%s1 + $0x70] sm:$0xf]
      %v306 = vld [vmem:[%s1 + $0x74] sm:$0xf]
      %v307 = vld [vmem:[%s1 + $0x78] sm:$0xf]
      %v308 = vld [vmem:[%s1 + $0x7c] sm:$0xf]
      %v309 = vld [vmem:[%s1 + $0x80] sm:$0xf]
      %v310 = vld [vmem:[%s1 + $0x84] sm:$0xf]
      %v311 = vld [vmem:[%s1 + $0x88] sm:$0xf]
      %v312 = vld [vmem:[%s1 + $0x8c] sm:$0xf]
      %v313 = vld [vmem:[%s1 + $0x90] sm:$0xf]
      %v314 = vld [vmem:[%s1 + $0x94] sm:$0xf]
      %v315 = vld [vmem:[%s1 + $0x98] sm:$0xf]
      %v316 = vld [vmem:[%s1 + $0x9c] sm:$0xf]
      %v317 = vld [vmem:[%s1 + $0xa0] sm:$0xf]
      %v318 = vld [vmem:[%s1 + $0xa4] sm:$0xf]
      %v319 = vld [vmem:[%s1 + $0xa8] sm:$0xf]
      %v320 = vld [vmem:[%s1 + $0xac] sm:$0xf]
      %v321 = vld [vmem:[%s1 + $0xb0] sm:$0xf]
      %v322 = vld [vmem:[%s1 + $0xb4] sm:$0xf]
      %v323 = vld [vmem:[%s1 + $0xb8] sm:$0xf]
      %v324 = vld [vmem:[%s1 + $0xbc] sm:$0xf]
      %v325 = vld [vmem:[%s1 + $0xc0] sm:$0xf]
      %v326 = vld [vmem:[%s1 + $0xc4] sm:$0xf]
      %v327 = vld [vmem:[%s1 + $0xc8] sm:$0xf]
      %v328 = vld [vmem:[%s1 + $0xcc] sm:$0xf]
      %v329 = vld [vmem:[%s1 + $0xd0] sm:$0xf]
      %v330 = vld [vmem:[%s1 + $0xd4] sm:$0xf]
      %v331 = vld [vmem:[%s1 + $0xd8] sm:$0xf]
      %v332 = vld [vmem:[%s1 + $0xdc] sm:$0xf]
      %v333 = vld [vmem:[%s1 + $0xe0] sm:$0xf]
      %v334 = vld [vmem:[%s1 + $0xe4] sm:$0xf]
      %v335 = vld [vmem:[%s1 + $0xe8] sm:$0xf]
      %v336 = vld [vmem:[%s1 + $0xec] sm:$0xf]
      %v337 = vld [vmem:[%s1 + $0xf0] sm:$0xf]
      %v338 = vld [vmem:[%s1 + $0xf4] sm:$0xf]
      %v339 = vld [vmem:[%s1 + $0xf8] sm:$0xf]
      %v340 = vld [vmem:[%s1 + $0xfc] sm:$0xf]
      %v341 = vld [vmem:[%s1 + $0x100] sm:$0xf]
      %v342 = vld [vmem:[%s1 + $0x104] sm:$0xf]
      %v343 = vld [vmem:[%s1 + $0x108] sm:$0xf]
      %v344 = vld [vmem:[%s1 + $0x10c] sm:$0xf]
      %v345 = vld [vmem:[%s1 + $0x110] sm:$0xf]
      %v346 = vld [vmem:[%s1 + $0x114] sm:$0xf]
      %v347 = vld [vmem:[%s1 + $0x118] sm:$0xf]
      %v348 = vld [vmem:[%s1 + $0x11c] sm:$0xf]
      %v349 = vld [vmem:[%s1 + $0x120] sm:$0xf]
      %v350 = vld [vmem:[%s1 + $0x124] sm:$0xf]
      %v351 = vld [vmem:[%s1 + $0x128] sm:$0xf]
      %v352 = vld [vmem:[%s1 + $0x12c] sm:$0xf]
      %v353 = vld [vmem:[%s1 + $0x130] sm:$0xf]
      %v354 = vld [vmem:[%s1 + $0x134] sm:$0xf]
      %v355 = vld [vmem:[%s1 + $0x138] sm:$0xf]
      %v356 = vld [vmem:[%s1 + $0x13c] sm:$0xf]
      %v357 = vld [vmem:[%s1 + $0x140] sm:$0xf]
      %v358 = vld [vmem:[%s1 + $0x144] sm:$0xf]
      %v359 = vld [vmem:[%s1 + $0x148] sm:$0xf]
      %v360 = vld [vmem:[%s1 + $0x14c] sm:$0xf]
      %v361 = vld [vmem:[%s1 + $0x150] sm:$0xf]
      %v362 = vld [vmem:[%s1 + $0x154] sm:$0xf]
      %v363 = vld [vmem:[%s1 + $0x158] sm:$0xf]
      %v364 = vld [vmem:[%s1 + $0x15c] sm:$0xf]
      %v365 = vld [vmem:[%s1 + $0x160] sm:$0xf]
      %v366 = vld [vmem:[%s1 + $0x164] sm:$0xf]
      %v367 = vld [vmem:[%s1 + $0x168] sm:$0xf]
      %v368 = vld [vmem:[%s1 + $0x16c] sm:$0xf]
      %v369 = vld [vmem:[%s1 + $0x170] sm:$0xf]
      %v370 = vld [vmem:[%s1 + $0x174] sm:$0xf]
      %v371 = vld [vmem:[%s1 + $0x178] sm:$0xf]
      %v372 = vld [vmem:[%s1 + $0x17c] sm:$0xf]
      %v373 = vld [vmem:[%s2] sm:$0x1]
      %v375 = vlaneseq
      %v376 = vshrl.u32 %v375, 7
      %v377 = vsub.s32 0, %v376
      %v378 = vrot.slane %v373, %v377
      %v476 = vunpack.c.l.b16 %v277
      %v477 = vunpack.c.l.b16 %v278
      %v478 = vunpack.c.l.b16 %v279
      %v479 = vunpack.c.l.b16 %v280
      %v480 = vunpack.c.l.b16 %v281
      %v481 = vunpack.c.l.b16 %v282
      %v482 = vunpack.c.l.b16 %v283
      %v483 = vunpack.c.l.b16 %v284
      %v484 = vunpack.c.l.b16 %v285
      %v485 = vunpack.c.l.b16 %v286
      %v486 = vunpack.c.l.b16 %v287
      %v487 = vunpack.c.l.b16 %v288
      %v488 = vunpack.c.l.b16 %v289
      %v489 = vunpack.c.l.b16 %v290
      %v490 = vunpack.c.l.b16 %v291
      %v491 = vunpack.c.l.b16 %v292
      %v492 = vunpack.c.l.b16 %v293
      %v493 = vunpack.c.l.b16 %v294
      %v494 = vunpack.c.l.b16 %v295
      %v495 = vunpack.c.l.b16 %v296
      %v496 = vunpack.c.l.b16 %v297
      %v497 = vunpack.c.l.b16 %v298
      %v498 = vunpack.c.l.b16 %v299
      %v499 = vunpack.c.l.b16 %v300
      %v500 = vunpack.c.l.b16 %v301
      %v501 = vunpack.c.l.b16 %v302
      %v502 = vunpack.c.l.b16 %v303
      %v503 = vunpack.c.l.b16 %v304
      %v504 = vunpack.c.l.b16 %v305
      %v505 = vunpack.c.l.b16 %v306
      %v506 = vunpack.c.l.b16 %v307
      %v507 = vunpack.c.l.b16 %v308
      %v508 = vunpack.c.l.b16 %v309
      %v509 = vunpack.c.l.b16 %v310
      %v510 = vunpack.c.l.b16 %v311
      %v511 = vunpack.c.l.b16 %v312
      %v512 = vunpack.c.l.b16 %v313
      %v513 = vunpack.c.l.b16 %v314
      %v514 = vunpack.c.l.b16 %v315
      %v515 = vunpack.c.l.b16 %v316
      %v516 = vunpack.c.l.b16 %v317
      %v517 = vunpack.c.l.b16 %v318
      %v518 = vunpack.c.l.b16 %v319
      %v519 = vunpack.c.l.b16 %v320
      %v520 = vunpack.c.l.b16 %v321
      %v521 = vunpack.c.l.b16 %v322
      %v522 = vunpack.c.l.b16 %v323
      %v523 = vunpack.c.l.b16 %v324
      %v524 = vunpack.c.l.b16 %v325
      %v525 = vunpack.c.l.b16 %v326
      %v526 = vunpack.c.l.b16 %v327
      %v527 = vunpack.c.l.b16 %v328
      %v528 = vunpack.c.l.b16 %v329
      %v529 = vunpack.c.l.b16 %v330
      %v530 = vunpack.c.l.b16 %v331
      %v531 = vunpack.c.l.b16 %v332
      %v532 = vunpack.c.l.b16 %v333
      %v533 = vunpack.c.l.b16 %v334
      %v534 = vunpack.c.l.b16 %v335
      %v535 = vunpack.c.l.b16 %v336
      %v536 = vunpack.c.l.b16 %v337
      %v537 = vunpack.c.l.b16 %v338
      %v538 = vunpack.c.l.b16 %v339
      %v539 = vunpack.c.l.b16 %v340
      %v540 = vunpack.c.l.b16 %v341
      %v541 = vunpack.c.l.b16 %v342
      %v542 = vunpack.c.l.b16 %v343
      %v543 = vunpack.c.l.b16 %v344
      %v544 = vunpack.c.l.b16 %v345
      %v545 = vunpack.c.l.b16 %v346
      %v546 = vunpack.c.l.b16 %v347
      %v547 = vunpack.c.l.b16 %v348
      %v548 = vunpack.c.l.b16 %v349
      %v549 = vunpack.c.l.b16 %v350
      %v550 = vunpack.c.l.b16 %v351
      %v551 = vunpack.c.l.b16 %v352
      %v552 = vunpack.c.l.b16 %v353
      %v553 = vunpack.c.l.b16 %v354
      %v554 = vunpack.c.l.b16 %v355
      %v555 = vunpack.c.l.b16 %v356
      %v556 = vunpack.c.l.b16 %v357
      %v557 = vunpack.c.l.b16 %v358
      %v558 = vunpack.c.l.b16 %v359
      %v559 = vunpack.c.l.b16 %v360
      %v560 = vunpack.c.l.b16 %v361
      %v561 = vunpack.c.l.b16 %v362
      %v562 = vunpack.c.l.b16 %v363
      %v563 = vunpack.c.l.b16 %v364
      %v564 = vunpack.c.l.b16 %v365
      %v565 = vunpack.c.l.b16 %v366
      %v566 = vunpack.c.l.b16 %v367
      %v567 = vunpack.c.l.b16 %v368
      %v568 = vunpack.c.l.b16 %v369
      %v569 = vunpack.c.l.b16 %v370
      %v570 = vunpack.c.l.b16 %v371
      %v571 = vunpack.c.l.b16 %v372
      %v572 = vpack.c.b16 %v477, %v476
      %v573 = vpack.c.b16 %v479, %v478
      %v574 = vpack.c.b16 %v481, %v480
      %v575 = vpack.c.b16 %v483, %v482
      %v576 = vpack.c.b16 %v485, %v484
      %v577 = vpack.c.b16 %v487, %v486
      %v578 = vpack.c.b16 %v489, %v488
      %v579 = vpack.c.b16 %v491, %v490
      %v580 = vpack.c.b16 %v493, %v492
      %v581 = vpack.c.b16 %v495, %v494
      %v582 = vpack.c.b16 %v497, %v496
      %v583 = vpack.c.b16 %v499, %v498
      %v584 = vpack.c.b16 %v501, %v500
      %v585 = vpack.c.b16 %v503, %v502
      %v586 = vpack.c.b16 %v505, %v504
      %v587 = vpack.c.b16 %v507, %v506
      %v588 = vpack.c.b16 %v509, %v508
      %v589 = vpack.c.b16 %v511, %v510
      %v590 = vpack.c.b16 %v513, %v512
      %v591 = vpack.c.b16 %v515, %v514
      %v592 = vpack.c.b16 %v517, %v516
      %v593 = vpack.c.b16 %v519, %v518
      %v594 = vpack.c.b16 %v521, %v520
      %v595 = vpack.c.b16 %v523, %v522
      %v596 = vpack.c.b16 %v525, %v524
      %v597 = vpack.c.b16 %v527, %v526
      %v598 = vpack.c.b16 %v529, %v528
      %v599 = vpack.c.b16 %v531, %v530
      %v600 = vpack.c.b16 %v533, %v532
      %v601 = vpack.c.b16 %v535, %v534
      %v602 = vpack.c.b16 %v537, %v536
      %v603 = vpack.c.b16 %v539, %v538
      %v604 = vpack.c.b16 %v541, %v540
      %v605 = vpack.c.b16 %v543, %v542
      %v606 = vpack.c.b16 %v545, %v544
      %v607 = vpack.c.b16 %v547, %v546
      %v608 = vpack.c.b16 %v549, %v548
      %v609 = vpack.c.b16 %v551, %v550
      %v610 = vpack.c.b16 %v553, %v552
      %v611 = vpack.c.b16 %v555, %v554
      %v612 = vpack.c.b16 %v557, %v556
      %v613 = vpack.c.b16 %v559, %v558
      %v614 = vpack.c.b16 %v561, %v560
      %v615 = vpack.c.b16 %v563, %v562
      %v616 = vpack.c.b16 %v565, %v564
      %v617 = vpack.c.b16 %v567, %v566
      %v618 = vpack.c.b16 %v569, %v568
      %v619 = vpack.c.b16 %v571, %v570
      %668 = vmatprep.subr.bf16.mxu0 0
      %669 = vmatpush1.bf16.msra.mxu0 %v579
      %670 = vmatprep.subr.bf16.mxu0 0
      %671 = vmatpush1.bf16.msra.mxu0 %v578
      %672 = vmatprep.subr.bf16.mxu0 0
      %673 = vmatpush1.bf16.msra.mxu0 %v577
      %674 = vmatprep.subr.bf16.mxu0 0
      %675 = vmatpush1.bf16.msra.mxu0 %v576
      %676 = vmatprep.subr.bf16.mxu0 0
      %677 = vmatpush1.bf16.msra.mxu0 %v575
      %678 = vmatprep.subr.bf16.mxu0 0
      %679 = vmatpush1.bf16.msra.mxu0 %v574
      %680 = vmatprep.subr.bf16.mxu0 0
      %681 = vmatpush1.bf16.msra.mxu0 %v573
      %682 = vmatprep.subr.bf16.mxu0 0
      %683 = vmatpush1.bf16.msra.mxu0 %v572
      %684 = vmatprep.subr.bf16.mxu0 0
      %685 = vmatpush2.bf16.msra.mxu0 %v587
      %686 = vmatprep.subr.bf16.mxu0 0
      %687 = vmatpush2.bf16.msra.mxu0 %v586
      %688 = vmatprep.subr.bf16.mxu0 0
      %689 = vmatpush2.bf16.msra.mxu0 %v585
      %690 = vmatprep.subr.bf16.mxu0 0
      %691 = vmatpush2.bf16.msra.mxu0 %v584
      %692 = vmatprep.subr.bf16.mxu0 0
      %693 = vmatpush2.bf16.msra.mxu0 %v583
      %694 = vmatprep.subr.bf16.mxu0 0
      %695 = vmatpush2.bf16.msra.mxu0 %v582
      %696 = vmatprep.subr.bf16.mxu0 0
      %697 = vmatpush2.bf16.msra.mxu0 %v581
      %698 = vmatprep.subr.bf16.mxu0 0
      %699 = vmatpush2.bf16.msra.mxu0 %v580
      %700 = vmatprep.mubr.bf16.mxu0 %v254
      %701 = vmatmul.mubr.bf16.gmra.mxu0 %v253
      %v702 = vpop.f32.mrf.mxu0
      %v703 = vadd.f32 %v378, %v702
      %v704 = vpop.f32.mrf.mxu0
      %v705 = vpop.f32.mrf.mxu0
      %v706 = vadd.f32 %v378, %v705
      %v707 = vpop.f32.mrf.mxu0
      %708 = vmatprep.mubr.bf16.mxu0 %v260
      %709 = vmatmul.mubr.bf16.gmra.mxu0 %v259
      %v710 = vpop.f32.mrf.mxu0
      %v711 = vadd.f32 %v378, %v710
      %v712 = vpop.f32.mrf.mxu0
      %v713 = vpop.f32.mrf.mxu0
      %v714 = vadd.f32 %v378, %v713
      %v715 = vpop.f32.mrf.mxu0
      %716 = vmatprep.mubr.bf16.mxu0 %v266
      %717 = vmatmul.mubr.bf16.gmra.mxu0 %v265
      %v718 = vpop.f32.mrf.mxu0
      %v719 = vadd.f32 %v378, %v718
      %v720 = vpop.f32.mrf.mxu0
      %v721 = vpop.f32.mrf.mxu0
      %v722 = vadd.f32 %v378, %v721
      %v723 = vpop.f32.mrf.mxu0
      %724 = vmatprep.mubr.bf16.mxu0 %v272
      %725 = vmatmul.mubr.bf16.gmra.mxu0 %v271
      %v726 = vpop.f32.mrf.mxu0
      %v727 = vadd.f32 %v378, %v726
      %v728 = vpop.f32.mrf.mxu0
      %v729 = vpop.f32.mrf.mxu0
      %v730 = vadd.f32 %v378, %v729
      %v731 = vpop.f32.mrf.mxu0
      %732 = vdwg.mxu0
      %733 = vmatprep.subr.bf16.mxu0 0
      %734 = vmatpush1.bf16.msra.mxu0 %v595
      %735 = vmatprep.subr.bf16.mxu0 0
      %736 = vmatpush1.bf16.msra.mxu0 %v594
      %737 = vmatprep.subr.bf16.mxu0 0
      %738 = vmatpush1.bf16.msra.mxu0 %v593
      %739 = vmatprep.subr.bf16.mxu0 0
      %740 = vmatpush1.bf16.msra.mxu0 %v592
      %741 = vmatprep.subr.bf16.mxu0 0
      %742 = vmatpush1.bf16.msra.mxu0 %v591
      %743 = vmatprep.subr.bf16.mxu0 0
      %744 = vmatpush1.bf16.msra.mxu0 %v590
      %745 = vmatprep.subr.bf16.mxu0 0
      %746 = vmatpush1.bf16.msra.mxu0 %v589
      %747 = vmatprep.subr.bf16.mxu0 0
      %748 = vmatpush1.bf16.msra.mxu0 %v588
      %749 = vmatprep.subr.bf16.mxu0 0
      %750 = vmatpush2.bf16.msra.mxu0 %v603
      %751 = vmatprep.subr.bf16.mxu0 0
      %752 = vmatpush2.bf16.msra.mxu0 %v602
      %753 = vmatprep.subr.bf16.mxu0 0
      %754 = vmatpush2.bf16.msra.mxu0 %v601
      %755 = vmatprep.subr.bf16.mxu0 0
      %756 = vmatpush2.bf16.msra.mxu0 %v600
      %757 = vmatprep.subr.bf16.mxu0 0
      %758 = vmatpush2.bf16.msra.mxu0 %v599
      %759 = vmatprep.subr.bf16.mxu0 0
      %760 = vmatpush2.bf16.msra.mxu0 %v598
      %761 = vmatprep.subr.bf16.mxu0 0
      %762 = vmatpush2.bf16.msra.mxu0 %v597
      %763 = vmatprep.subr.bf16.mxu0 0
      %764 = vmatpush2.bf16.msra.mxu0 %v596
      %765 = vmatprep.mubr.bf16.mxu0 %v256
      %766 = vmatmul.mubr.bf16.gmra.mxu0 %v255
      %v767 = vpop.f32.mrf.mxu0
      %v768 = vadd.f32 %v703, %v767
      %v769 = vpop.f32.mrf.mxu0
      %v770 = vpop.f32.mrf.mxu0
      %v771 = vadd.f32 %v706, %v770
      %v772 = vpop.f32.mrf.mxu0
      %773 = vmatprep.mubr.bf16.mxu0 %v262
      %774 = vmatmul.mubr.bf16.gmra.mxu0 %v261
      %v775 = vpop.f32.mrf.mxu0
      %v776 = vadd.f32 %v711, %v775
      %v777 = vpop.f32.mrf.mxu0
      %v778 = vpop.f32.mrf.mxu0
      %v779 = vadd.f32 %v714, %v778
      %v780 = vpop.f32.mrf.mxu0
      %781 = vmatprep.mubr.bf16.mxu0 %v268
      %782 = vmatmul.mubr.bf16.gmra.mxu0 %v267
      %v783 = vpop.f32.mrf.mxu0
      %v784 = vadd.f32 %v719, %v783
      %v785 = vpop.f32.mrf.mxu0
      %v786 = vpop.f32.mrf.mxu0
      %v787 = vadd.f32 %v722, %v786
      %v788 = vpop.f32.mrf.mxu0
      %789 = vmatprep.mubr.bf16.mxu0 %v274
      %790 = vmatmul.mubr.bf16.gmra.mxu0 %v273
      %v791 = vpop.f32.mrf.mxu0
      %v792 = vadd.f32 %v727, %v791
      %v793 = vpop.f32.mrf.mxu0
      %v794 = vpop.f32.mrf.mxu0
      %v795 = vadd.f32 %v730, %v794
      %v796 = vpop.f32.mrf.mxu0
      %797 = vdwg.mxu0
      %798 = vmatprep.subr.bf16.mxu0 0
      %799 = vmatpush1.bf16.msra.mxu0 %v611
      %800 = vmatprep.subr.bf16.mxu0 0
      %801 = vmatpush1.bf16.msra.mxu0 %v610
      %802 = vmatprep.subr.bf16.mxu0 0
      %803 = vmatpush1.bf16.msra.mxu0 %v609
      %804 = vmatprep.subr.bf16.mxu0 0
      %805 = vmatpush1.bf16.msra.mxu0 %v608
      %806 = vmatprep.subr.bf16.mxu0 0
      %807 = vmatpush1.bf16.msra.mxu0 %v607
      %808 = vmatprep.subr.bf16.mxu0 0
      %809 = vmatpush1.bf16.msra.mxu0 %v606
      %810 = vmatprep.subr.bf16.mxu0 0
      %811 = vmatpush1.bf16.msra.mxu0 %v605
      %812 = vmatprep.subr.bf16.mxu0 0
      %813 = vmatpush1.bf16.msra.mxu0 %v604
      %814 = vmatprep.subr.bf16.mxu0 0
      %815 = vmatpush2.bf16.msra.mxu0 %v619
      %816 = vmatprep.subr.bf16.mxu0 0
      %817 = vmatpush2.bf16.msra.mxu0 %v618
      %818 = vmatprep.subr.bf16.mxu0 0
      %819 = vmatpush2.bf16.msra.mxu0 %v617
      %820 = vmatprep.subr.bf16.mxu0 0
      %821 = vmatpush2.bf16.msra.mxu0 %v616
      %822 = vmatprep.subr.bf16.mxu0 0
      %823 = vmatpush2.bf16.msra.mxu0 %v615
      %824 = vmatprep.subr.bf16.mxu0 0
      %825 = vmatpush2.bf16.msra.mxu0 %v614
      %826 = vmatprep.subr.bf16.mxu0 0
      %827 = vmatpush2.bf16.msra.mxu0 %v613
      %828 = vmatprep.subr.bf16.mxu0 0
      %829 = vmatpush2.bf16.msra.mxu0 %v612
      %830 = vmatprep.mubr.bf16.mxu0 %v258
      %831 = vmatmul.mubr.bf16.gmra.mxu0 %v257
      %v832 = vpop.f32.mrf.mxu0
      %v833 = vadd.f32 %v768, %v832
      %v834 = vpop.f32.mrf.mxu0
      %v835 = vpop.f32.mrf.mxu0
      %v836 = vadd.f32 %v771, %v835
      %v837 = vpop.f32.mrf.mxu0
      %838 = vmatprep.mubr.bf16.mxu0 %v264
      %839 = vmatmul.mubr.bf16.gmra.mxu0 %v263
      %v840 = vpop.f32.mrf.mxu0
      %v841 = vadd.f32 %v776, %v840
      %v842 = vpop.f32.mrf.mxu0
      %v843 = vpop.f32.mrf.mxu0
      %v844 = vadd.f32 %v779, %v843
      %v845 = vpop.f32.mrf.mxu0
      %846 = vmatprep.mubr.bf16.mxu0 %v270
      %847 = vmatmul.mubr.bf16.gmra.mxu0 %v269
      %v848 = vpop.f32.mrf.mxu0
      %v849 = vadd.f32 %v784, %v848
      %v850 = vpop.f32.mrf.mxu0
      %v851 = vpop.f32.mrf.mxu0
      %v852 = vadd.f32 %v787, %v851
      %v853 = vpop.f32.mrf.mxu0
      %854 = vmatprep.mubr.bf16.mxu0 %v276
      %855 = vmatmul.mubr.bf16.gmra.mxu0 %v275
      %v856 = vpop.f32.mrf.mxu0
      %v857 = vadd.f32 %v792, %v856
      %v858 = vpop.f32.mrf.mxu0
      %v859 = vpop.f32.mrf.mxu0
      %v860 = vadd.f32 %v795, %v859
      %v861 = vpop.f32.mrf.mxu0
      %862 = vdwg.mxu0
      %v863 = vld [vmem:[%s3] sm:$0xff]
      %v864 = vld [vmem:[%s3 + $0x8] sm:$0xff]
      %v865 = vld [vmem:[%s3 + $0x10] sm:$0xff]
      %v866 = vld [vmem:[%s3 + $0x18] sm:$0xff]
      %v867 = vld [vmem:[%s3 + $0x20] sm:$0xff]
      %v868 = vld [vmem:[%s3 + $0x28] sm:$0xff]
      %v869 = vld [vmem:[%s3 + $0x30] sm:$0xff]
      %v870 = vld [vmem:[%s3 + $0x38] sm:$0xff]
      %v871 = vadd.f32 %v833, %v863
      %v872 = vadd.f32 %v836, %v864
      %v873 = vadd.f32 %v841, %v865
      %v874 = vadd.f32 %v844, %v866
      %v875 = vadd.f32 %v849, %v867
      %v876 = vadd.f32 %v852, %v868
      %v877 = vadd.f32 %v857, %v869
      %v878 = vadd.f32 %v860, %v870
      %vm879 = vcmask 261120
      %880 = vst.msk [vmem:[%s202] sm:$0xff] %vm879, %v871
      %881 = vst.msk [vmem:[%s202 + $0x8] sm:$0xff] %vm879, %v872
      %882 = vst.msk [vmem:[%s202 + $0x10] sm:$0xff] %vm879, %v873
      %883 = vst.msk [vmem:[%s202 + $0x18] sm:$0xff] %vm879, %v874
      %884 = vst.msk [vmem:[%s202 + $0x20] sm:$0xff] %vm879, %v875
      %885 = vst.msk [vmem:[%s202 + $0x28] sm:$0xff] %vm879, %v876
      %886 = vst.msk [vmem:[%s202 + $0x30] sm:$0xff] %vm879, %v877
      %887 = vst.msk [vmem:[%s202 + $0x38] sm:$0xff] %vm879, %v878
      %s888 = smul.u32 8, %s15
      %p889 = scmp.lt.s32.totalorder %s888, 15
      %s890 = scalar_select %p889, %s888, 15
      %s891 = smul.addr %s890, 8
      %s892 = scalar_lea.vmem %s4, %s891
      // Predicated region
      $region37: #{uninext_forward.9} parent=35 // pred_check
        %p893 = pneg %p122
      $region38: #{uninext_forward.9} parent=35 // pred_check_branch
        %895 = sbr.rel (%p893) target = $region40
      $region39: #{uninext_forward.9} parent=35 // pred_region
        %s896 = smul.u32 8, %s15
      $region40: #{uninext_forward.9} parent=35 // pred_fallthru
        _
    $region36: #{uninext_forward.9} parent=5 // pred_fallthru
      _
    %p897 = scmp.le.s32.totalorder 2, %s10
    // Predicated region
    $region41: #{uninext_forward.9} parent=5 // pred_check
      %p898 = pneg %p897
    $region42: #{uninext_forward.9} parent=5 // pred_check_branch
      %900 = sbr.rel (%p898) target = $region44
    $region43: #{uninext_forward.9} parent=5 // pred_region
      %s901 = ssub.s32 %s10, 2
      // Predicated region
      $region45: #{uninext_forward.9} parent=43 // pred_check
        %p902 = pneg %p128
      $region46: #{uninext_forward.9} parent=43 // pred_check_branch
        %904 = sbr.rel (%p902) target = $region48
      $region47: #{uninext_forward.9} parent=43 // pred_region
        %s905 = smul.u32 8, %s16
        %p906 = scmp.lt.s32.totalorder %s905, 15
        %s907 = scalar_select %p906, %s905, 15
        %s908 = smul.addr %s907, 8
        %s909 = scalar_lea.vmem %s4, %s908
      $region48: #{uninext_forward.9} parent=43 // pred_fallthru
        _
    $region44: #{uninext_forward.9} parent=5 // pred_fallthru
      _
  $region6: #{uninext_forward.9} parent=0 // loop_footer
    %s14 = sadd.s32 1, %s10
  $region7: #{uninext_forward.9} parent=0 // loop_footer_branch
    %9 = sbr.rel target = $region3
  $region8: #{uninext_forward.9} parent=0 // loop_exit
    _

// kernel: uninext_forward.10
$region0: #{uninext_forward.10}
  #allocation0 [shape = 'u32[]', space=smem, size = 0x4, offset = 0x4, fixed_abs, tag = 'smem constant byte address 0x4 - core index']
  #allocation1 [shape = 'u32[144,128]{1,0:T(1,128)}', space=vmem, size = 0x12000, scoped, tag = 'internal scratch']
  %s0 = inlined_call_operand.vmem [shape: f32[128,32], index: 0, kind: input, shape index: {}]
  %s1 = inlined_call_operand.vmem [shape: f32[1,32], index: 1, kind: input, shape index: {}]
  %s2 = inlined_call_operand.vmem [shape: f32[1,32], index: 2, kind: input, shape index: {}]
  %s3 = inlined_call_operand.vmem [shape: bf16[32,96], index: 3, kind: input, shape index: {}]
  %s4 = inlined_call_operand.vmem [shape: f32[1,96], index: 4, kind: input, shape index: {}]
  %s5 = inlined_call_operand.vmem [shape: f32[128,96], index: 5, kind: output, shape index: {}]
  %s6 = sld [smem:[#allocation0]]
  $region53: #{uninext_forward.10} parent=0
    _
  %s8 = ssub.s32 1, %s6
  %s9 = scalar_select 0, %s8, %s6
  loop: start=0, step=1, limit=4
  $region2: #{uninext_forward.10} parent=0 // loop_pre_header
    _
  $region3: #{uninext_forward.10} parent=0 // loop_header
    %s11 = sphi 0, %s15
    %p12 = scmp.ge.s32.totalorder %s11, 4
    %s21 = sphi 0, %s23
    %s24 = sphi 0, %s21
    %s25 = sphi 0, %s24
    %s41 = sphi 0, %s25
    %s45 = sphi 0, %s45
    %s47 = sphi 0, %s45
    %s48 = sphi 0, %s47
    %s62 = sphi 0, %s48
    %s66 = sphi 0, %s66
    %s68 = sphi 0, %s66
    %s69 = sphi 0, %s68
    %s83 = sphi 0, %s69
    %s87 = sphi 0, %s87
    %s89 = sphi 0, %s87
    %s90 = sphi 0, %s89
    %s104 = sphi 0, %s90
    %s108 = sphi 0, %s108
    %s110 = sphi 0, %s108
    %s111 = sphi 0, %s110
    %s125 = sphi 0, %s111
    %s131 = sphi 0, %s133
    %s134 = sphi 0, %s131
    %s135 = sphi 0, %s134
    %s151 = sphi 0, %s135
  $region4: #{uninext_forward.10} parent=0 // loop_header_branch
    %14 = sbr.rel (%p12) target = $region8
  $region5: #{uninext_forward.10} parent=0 // loop_body
    %s16 = ssub.s32 %s11, 1
    %s17 = ssub.s32 %s11, 2
    %s18 = sadd.s32 %s11, 1
    %s19 = ssub.s32 %s11, %s18
    %p20 = scmp.eq.s32.totalorder %s19, 0
    %s22 = sadd.s32 %s21, 1
    %s23 = scalar_select %p20, %s21, %s22
    %p26 = pneg %p20
    %p27 = scmp.eq.s32.totalorder %s11, 1
    %p28 = por %p26, %p27
    %p29 = scmp.ne.s32.totalorder %s21, %s24
    %p30 = scmp.eq.s32.totalorder %s11, 0
    %p31 = por %p29, %p30
    %p32 = scmp.ne.s32.totalorder %s21, %s24
    %p33 = scmp.eq.s32.totalorder %s16, 1
    %p34 = por %p32, %p33
    %p35 = scmp.ne.s32.totalorder %s24, %s25
    %p36 = scmp.eq.s32.totalorder %s16, 0
    %p37 = por %p35, %p36
    %p38 = scmp.ne.s32.totalorder %s24, %s25
    %p39 = scmp.eq.s32.totalorder %s17, 1
    %p40 = por %p38, %p39
    %p42 = scmp.ne.s32.totalorder %s25, %s41
    %p43 = scmp.eq.s32.totalorder %s17, 0
    %p44 = por %p42, %p43
    %s46 = sadd.s32 %s45, 1
    %p49 = scmp.eq.s32.totalorder %s11, 1
    %p50 = scmp.ne.s32.totalorder %s45, %s47
    %p51 = scmp.eq.s32.totalorder %s11, 0
    %p52 = por %p50, %p51
    %p53 = scmp.ne.s32.totalorder %s45, %s47
    %p54 = scmp.eq.s32.totalorder %s16, 1
    %p55 = por %p53, %p54
    %p56 = scmp.ne.s32.totalorder %s47, %s48
    %p57 = scmp.eq.s32.totalorder %s16, 0
    %p58 = por %p56, %p57
    %p59 = scmp.ne.s32.totalorder %s47, %s48
    %p60 = scmp.eq.s32.totalorder %s17, 1
    %p61 = por %p59, %p60
    %p63 = scmp.ne.s32.totalorder %s48, %s62
    %p64 = scmp.eq.s32.totalorder %s17, 0
    %p65 = por %p63, %p64
    %s67 = sadd.s32 %s66, 1
    %p70 = scmp.eq.s32.totalorder %s11, 1
    %p71 = scmp.ne.s32.totalorder %s66, %s68
    %p72 = scmp.eq.s32.totalorder %s11, 0
    %p73 = por %p71, %p72
    %p74 = scmp.ne.s32.totalorder %s66, %s68
    %p75 = scmp.eq.s32.totalorder %s16, 1
    %p76 = por %p74, %p75
    %p77 = scmp.ne.s32.totalorder %s68, %s69
    %p78 = scmp.eq.s32.totalorder %s16, 0
    %p79 = por %p77, %p78
    %p80 = scmp.ne.s32.totalorder %s68, %s69
    %p81 = scmp.eq.s32.totalorder %s17, 1
    %p82 = por %p80, %p81
    %p84 = scmp.ne.s32.totalorder %s69, %s83
    %p85 = scmp.eq.s32.totalorder %s17, 0
    %p86 = por %p84, %p85
    %s88 = sadd.s32 %s87, 1
    %p91 = scmp.eq.s32.totalorder %s11, 1
    %p92 = scmp.ne.s32.totalorder %s87, %s89
    %p93 = scmp.eq.s32.totalorder %s11, 0
    %p94 = por %p92, %p93
    %p95 = scmp.ne.s32.totalorder %s87, %s89
    %p96 = scmp.eq.s32.totalorder %s16, 1
    %p97 = por %p95, %p96
    %p98 = scmp.ne.s32.totalorder %s89, %s90
    %p99 = scmp.eq.s32.totalorder %s16, 0
    %p100 = por %p98, %p99
    %p101 = scmp.ne.s32.totalorder %s89, %s90
    %p102 = scmp.eq.s32.totalorder %s17, 1
    %p103 = por %p101, %p102
    %p105 = scmp.ne.s32.totalorder %s90, %s104
    %p106 = scmp.eq.s32.totalorder %s17, 0
    %p107 = por %p105, %p106
    %s109 = sadd.s32 %s108, 1
    %p112 = scmp.eq.s32.totalorder %s11, 1
    %p113 = scmp.ne.s32.totalorder %s108, %s110
    %p114 = scmp.eq.s32.totalorder %s11, 0
    %p115 = por %p113, %p114
    %p116 = scmp.ne.s32.totalorder %s108, %s110
    %p117 = scmp.eq.s32.totalorder %s16, 1
    %p118 = por %p116, %p117
    %p119 = scmp.ne.s32.totalorder %s110, %s111
    %p120 = scmp.eq.s32.totalorder %s16, 0
    %p121 = por %p119, %p120
    %p122 = scmp.ne.s32.totalorder %s110, %s111
    %p123 = scmp.eq.s32.totalorder %s17, 1
    %p124 = por %p122, %p123
    %p126 = scmp.ne.s32.totalorder %s111, %s125
    %p127 = scmp.eq.s32.totalorder %s17, 0
    %p128 = por %p126, %p127
    %s129 = ssub.s32 %s11, %s18
    %p130 = scmp.eq.s32.totalorder %s129, 0
    %s132 = sadd.s32 %s131, 1
    %s133 = scalar_select %p130, %s131, %s132
    %p136 = pneg %p130
    %p137 = scmp.eq.s32.totalorder %s11, 1
    %p138 = por %p136, %p137
    %p139 = scmp.ne.s32.totalorder %s131, %s134
    %p140 = scmp.eq.s32.totalorder %s11, 0
    %p141 = por %p139, %p140
    %p142 = scmp.ne.s32.totalorder %s131, %s134
    %p143 = scmp.eq.s32.totalorder %s16, 1
    %p144 = por %p142, %p143
    %p145 = scmp.ne.s32.totalorder %s134, %s135
    %p146 = scmp.eq.s32.totalorder %s16, 0
    %p147 = por %p145, %p146
    %p148 = scmp.ne.s32.totalorder %s134, %s135
    %p149 = scmp.eq.s32.totalorder %s17, 1
    %p150 = por %p148, %p149
    %p152 = scmp.ne.s32.totalorder %s135, %s151
    %p153 = scmp.eq.s32.totalorder %s17, 0
    %p154 = por %p152, %p153
    %p155 = scmp.le.s32.totalorder 1, %s11
    %p156 = scmp.lt.s32.totalorder %s11, 3
    %p157 = pnand %p155, %p156
    %p158 = pneg %p157
    // Predicated region
    $region9: #{uninext_forward.10} parent=5 // pred_check
      _
    $region10: #{uninext_forward.10} parent=5 // pred_check_branch
      %160 = sbr.rel (%p157) target = $region12
    $region11: #{uninext_forward.10} parent=5 // pred_region
      %s161 = ssub.s32 %s11, 1
      // Predicated region
      $region13: #{uninext_forward.10} parent=11 // pred_check
        %p162 = pneg %p58
      $region14: #{uninext_forward.10} parent=11 // pred_check_branch
        %164 = sbr.rel (%p162) target = $region16
      $region15: #{uninext_forward.10} parent=11 // pred_region
        _
      $region16: #{uninext_forward.10} parent=11 // pred_fallthru
        _
      // Predicated region
      $region17: #{uninext_forward.10} parent=11 // pred_check
        %p165 = pneg %p79
      $region18: #{uninext_forward.10} parent=11 // pred_check_branch
        %167 = sbr.rel (%p165) target = $region20
      $region19: #{uninext_forward.10} parent=11 // pred_region
        _
      $region20: #{uninext_forward.10} parent=11 // pred_fallthru
        _
      // Predicated region
      $region21: #{uninext_forward.10} parent=11 // pred_check
        %p168 = pneg %p100
      $region22: #{uninext_forward.10} parent=11 // pred_check_branch
        %170 = sbr.rel (%p168) target = $region24
      $region23: #{uninext_forward.10} parent=11 // pred_region
        _
      $region24: #{uninext_forward.10} parent=11 // pred_fallthru
        _
      // Predicated region
      $region25: #{uninext_forward.10} parent=11 // pred_check
        %p171 = pneg %p121
      $region26: #{uninext_forward.10} parent=11 // pred_check_branch
        %173 = sbr.rel (%p171) target = $region28
      $region27: #{uninext_forward.10} parent=11 // pred_region
        _
      $region28: #{uninext_forward.10} parent=11 // pred_fallthru
        _
    $region12: #{uninext_forward.10} parent=5 // pred_fallthru
      _
    %p174 = scmp.lt.s32.totalorder %s11, 2
    // Predicated region
    $region29: #{uninext_forward.10} parent=5 // pred_check
      %p175 = pneg %p174
    $region30: #{uninext_forward.10} parent=5 // pred_check_branch
      %177 = sbr.rel (%p175) target = $region32
    $region31: #{uninext_forward.10} parent=5 // pred_region
      // Predicated region
      $region33: #{uninext_forward.10} parent=31 // pred_check
        %p178 = pneg %p31
      $region34: #{uninext_forward.10} parent=31 // pred_check_branch
        %180 = sbr.rel (%p178) target = $region36
      $region35: #{uninext_forward.10} parent=31 // pred_region
        %s181 = smul.u32 8, %s11
        %p182 = scmp.lt.s32.totalorder %s181, 15
        %s183 = scalar_select %p182, %s181, 15
        %s184 = smul.addr %s183, 8
        %s185 = scalar_lea.vmem %s0, %s184
        %s186 = smul.u32 8, %s11
      $region36: #{uninext_forward.10} parent=31 // pred_fallthru
        _
    $region32: #{uninext_forward.10} parent=5 // pred_fallthru
      _
    %p187 = scmp.le.s32.totalorder 1, %s11
    %p188 = scmp.lt.s32.totalorder %s11, 3
    %p189 = pnand %p187, %p188
    %p190 = pneg %p189
    // Predicated region
    $region37: #{uninext_forward.10} parent=5 // pred_check
      _
    $region38: #{uninext_forward.10} parent=5 // pred_check_branch
      %192 = sbr.rel (%p189) target = $region40
    $region39: #{uninext_forward.10} parent=5 // pred_region
      %s193 = ssub.s32 %s11, 1
      %s194 = smul.u32 8, %s16
      %p195 = scmp.lt.s32.totalorder %s194, 15
      %s196 = scalar_select %p195, %s194, 15
      %s197 = smul.addr %s196, 8
      %s198 = scalar_lea.vmem %s0, %s197
      %p199 = pneg %p37
      %p200 = pneg %p34
      %p201 = pneg %p58
      %p202 = pneg %p55
      %p203 = pneg %p79
      %p204 = pneg %p76
      %p205 = pneg %p100
      %p206 = pneg %p97
      %p207 = pneg %p121
      %p208 = pneg %p118
      %p209 = pneg %p147
      %p210 = pneg %p144
      %s211 = smul.u32 8, %s16
      %p212 = scmp.lt.s32.totalorder %s211, 15
      %s213 = scalar_select %p212, %s211, 15
      %s214 = smul.addr %s213, 8
      %s215 = scalar_lea.vmem %s5, %s214
      %s216 = smul.u32 8, %s16
      %p217 = scmp.lt.s32.totalorder %s216, 15
      %s218 = scalar_select %p217, %s216, 15
      %s219 = smul.addr %s218, 8
      %s220 = scalar_lea.vmem %s0, %s219
      %s221 = smul.u32 8, %s16
      %s222 = smul.u32 8, %s16
      %p223 = scmp.lt.s32.totalorder %s222, 15
      %s224 = scalar_select %p223, %s222, 15
      %s225 = smul.addr %s224, 8
      %s226 = scalar_lea.vmem %s5, %s225
      %s227 = smul.u32 8, %s16
      %v229 = vld [vmem:[%s220] sm:$0xff]
      %v230 = vld [vmem:[%s220 + $0x8] sm:$0xff]
      %v231 = vld [vmem:[%s220 + $0x10] sm:$0xff]
      %v232 = vld [vmem:[%s220 + $0x18] sm:$0xff]
      %v233 = vld [vmem:[%s220 + $0x20] sm:$0xff]
      %v234 = vld [vmem:[%s220 + $0x28] sm:$0xff]
      %v235 = vld [vmem:[%s220 + $0x30] sm:$0xff]
      %v236 = vld [vmem:[%s220 + $0x38] sm:$0xff]
      %vm237 = vcmask 261120
      %v238 = vsel %vm237, %v229, 0.0
      %239 = vadd.xlane.f32.xlu0 %v238
      %v240 = vpop.xlane.xlu0 %239
      %v241 = vsel %vm237, %v230, 0.0
      %242 = vadd.xlane.f32.xlu0 %v241
      %v243 = vpop.xlane.xlu0 %242
      %v244 = vsel %vm237, %v231, 0.0
      %245 = vadd.xlane.f32.xlu0 %v244
      %v246 = vpop.xlane.xlu0 %245
      %v247 = vsel %vm237, %v232, 0.0
      %248 = vadd.xlane.f32.xlu0 %v247
      %v249 = vpop.xlane.xlu0 %248
      %v250 = vsel %vm237, %v233, 0.0
      %251 = vadd.xlane.f32.xlu0 %v250
      %v252 = vpop.xlane.xlu0 %251
      %v253 = vsel %vm237, %v234, 0.0
      %254 = vadd.xlane.f32.xlu0 %v253
      %v255 = vpop.xlane.xlu0 %254
      %v256 = vsel %vm237, %v235, 0.0
      %257 = vadd.xlane.f32.xlu0 %v256
      %v258 = vpop.xlane.xlu0 %257
      %v259 = vsel %vm237, %v236, 0.0
      %260 = vadd.xlane.f32.xlu0 %v259
      %v261 = vpop.xlane.xlu0 %260
      %v262 = vrcp.pop 32.0
      %v263 = vmul.f32 %v240, %v262
      %v264 = vmul.f32 %v243, %v262
      %v265 = vmul.f32 %v246, %v262
      %v266 = vmul.f32 %v249, %v262
      %v267 = vmul.f32 %v252, %v262
      %v268 = vmul.f32 %v255, %v262
      %v269 = vmul.f32 %v258, %v262
      %v270 = vmul.f32 %v261, %v262
      %v271 = vsub.f32 %v229, %v263
      %v272 = vsub.f32 %v230, %v264
      %v273 = vsub.f32 %v231, %v265
      %v274 = vsub.f32 %v232, %v266
      %v275 = vsub.f32 %v233, %v267
      %v276 = vsub.f32 %v234, %v268
      %v277 = vsub.f32 %v235, %v269
      %v278 = vsub.f32 %v236, %v270
      %v279 = vmul.f32 %v271, %v271
      %v280 = vmul.f32 %v272, %v272
      %v281 = vmul.f32 %v273, %v273
      %v282 = vmul.f32 %v274, %v274
      %v283 = vmul.f32 %v275, %v275
      %v284 = vmul.f32 %v276, %v276
      %v285 = vmul.f32 %v277, %v277
      %v286 = vmul.f32 %v278, %v278
      %v287 = vsel %vm237, %v279, 0.0
      %288 = vadd.xlane.f32.xlu0 %v287
      %v289 = vpop.xlane.xlu0 %288
      %v290 = vsel %vm237, %v280, 0.0
      %291 = vadd.xlane.f32.xlu0 %v290
      %v292 = vpop.xlane.xlu0 %291
      %v293 = vsel %vm237, %v281, 0.0
      %294 = vadd.xlane.f32.xlu0 %v293
      %v295 = vpop.xlane.xlu0 %294
      %v296 = vsel %vm237, %v282, 0.0
      %297 = vadd.xlane.f32.xlu0 %v296
      %v298 = vpop.xlane.xlu0 %297
      %v299 = vsel %vm237, %v283, 0.0
      %300 = vadd.xlane.f32.xlu0 %v299
      %v301 = vpop.xlane.xlu0 %300
      %v302 = vsel %vm237, %v284, 0.0
      %303 = vadd.xlane.f32.xlu0 %v302
      %v304 = vpop.xlane.xlu0 %303
      %v305 = vsel %vm237, %v285, 0.0
      %306 = vadd.xlane.f32.xlu0 %v305
      %v307 = vpop.xlane.xlu0 %306
      %v308 = vsel %vm237, %v286, 0.0
      %309 = vadd.xlane.f32.xlu0 %v308
      %v310 = vpop.xlane.xlu0 %309
      %v311 = vmul.f32 %v289, %v262
      %v312 = vmul.f32 %v292, %v262
      %v313 = vmul.f32 %v295, %v262
      %v314 = vmul.f32 %v298, %v262
      %v315 = vmul.f32 %v301, %v262
      %v316 = vmul.f32 %v304, %v262
      %v317 = vmul.f32 %v307, %v262
      %v318 = vmul.f32 %v310, %v262
      %v319 = vadd.f32 %v311, 1e-06
      %v320 = vadd.f32 %v312, 1e-06
      %v321 = vadd.f32 %v313, 1e-06
      %v322 = vadd.f32 %v314, 1e-06
      %v323 = vadd.f32 %v315, 1e-06
      %v324 = vadd.f32 %v316, 1e-06
      %v325 = vadd.f32 %v317, 1e-06
      %v326 = vadd.f32 %v318, 1e-06
      %v327 = vrsqrt.pop %v319
      %v328 = vrsqrt.pop %v320
      %v329 = vrsqrt.pop %v321
      %v330 = vrsqrt.pop %v322
      %v331 = vrsqrt.pop %v323
      %v332 = vrsqrt.pop %v324
      %v333 = vrsqrt.pop %v325
      %v334 = vrsqrt.pop %v326
      %v335 = vmul.f32 %v271, %v327
      %v336 = vmul.f32 %v272, %v328
      %v337 = vmul.f32 %v273, %v329
      %v338 = vmul.f32 %v274, %v330
      %v339 = vmul.f32 %v275, %v331
      %v340 = vmul.f32 %v276, %v332
      %v341 = vmul.f32 %v277, %v333
      %v342 = vmul.f32 %v278, %v334
      %v343 = vld [vmem:[%s1] sm:$0x1]
      %v345 = vlaneseq
      %v346 = vshrl.u32 %v345, 7
      %v347 = vsub.s32 0, %v346
      %v348 = vrot.slane %v343, %v347
      %v350 = vmul.f32 %v335, %v348
      %v351 = vmul.f32 %v336, %v348
      %v352 = vmul.f32 %v337, %v348
      %v353 = vmul.f32 %v338, %v348
      %v354 = vmul.f32 %v339, %v348
      %v355 = vmul.f32 %v340, %v348
      %v356 = vmul.f32 %v341, %v348
      %v357 = vmul.f32 %v342, %v348
      %v358 = vld [vmem:[%s2] sm:$0x1]
      %v360 = vlaneseq
      %v361 = vshrl.u32 %v360, 7
      %v362 = vsub.s32 0, %v361
      %v363 = vrot.slane %v358, %v362
      %v365 = vadd.f32 %v350, %v363
      %v366 = vadd.f32 %v351, %v363
      %v367 = vadd.f32 %v352, %v363
      %v368 = vadd.f32 %v353, %v363
      %v369 = vadd.f32 %v354, %v363
      %v370 = vadd.f32 %v355, %v363
      %v371 = vadd.f32 %v356, %v363
      %v372 = vadd.f32 %v357, %v363
      %v373 = vpack.c.bf16 %v366, %v365
      %v374 = vpack.c.bf16 %v368, %v367
      %v375 = vpack.c.bf16 %v370, %v369
      %v376 = vpack.c.bf16 %v372, %v371
      %v377 = vld [vmem:[%s3] sm:$0xf]
      %v378 = vld [vmem:[%s3 + $0x4] sm:$0xf]
      %v379 = vld [vmem:[%s3 + $0x8] sm:$0xf]
      %v380 = vld [vmem:[%s3 + $0xc] sm:$0xf]
      %v381 = vld [vmem:[%s4] sm:$0x1]
      %v383 = vlaneseq
      %v384 = vshrl.u32 %v383, 7
      %v385 = vsub.s32 0, %v384
      %v386 = vrot.slane %v381, %v385
      %v392 = vunpack.c.l.b16 %v377
      %v393 = vunpack.c.l.b16 %v378
      %v394 = vunpack.c.l.b16 %v379
      %v395 = vunpack.c.l.b16 %v380
      %v396 = vpack.c.b16 %v393, %v392
      %v397 = vpack.c.b16 %v395, %v394
      %v401 = vsel %vm237, %v373, 0
      %v404 = vsel %vm237, %v374, 0
      %v407 = vsel %vm237, %v375, 0
      %v410 = vsel %vm237, %v376, 0
      %412 = vmatprep.subr.bf16.mxu0 0
      %413 = vmatpush1.bf16.msra.mxu0 0
      %414 = vmatprep.subr.bf16.mxu0 0
      %415 = vmatpush1.bf16.msra.mxu0 0
      %416 = vmatprep.subr.bf16.mxu0 0
      %417 = vmatpush1.bf16.msra.mxu0 0
      %418 = vmatprep.subr.bf16.mxu0 0
      %419 = vmatpush1.bf16.msra.mxu0 0
      %420 = vmatprep.subr.bf16.mxu0 0
      %421 = vmatpush1.bf16.msra.mxu0 0
      %422 = vmatprep.subr.bf16.mxu0 0
      %423 = vmatpush1.bf16.msra.mxu0 0
      %424 = vmatprep.subr.bf16.mxu0 0
      %425 = vmatpush1.bf16.msra.mxu0 %v397
      %426 = vmatprep.subr.bf16.mxu0 0
      %427 = vmatpush1.bf16.msra.mxu0 %v396
      %428 = vmatprep.subr.bf16.mxu0 0
      %429 = vmatpush2.bf16.msra.mxu0 0
      %430 = vmatprep.subr.bf16.mxu0 0
      %431 = vmatpush2.bf16.msra.mxu0 0
      %432 = vmatprep.subr.bf16.mxu0 0
      %433 = vmatpush2.bf16.msra.mxu0 0
      %434 = vmatprep.subr.bf16.mxu0 0
      %435 = vmatpush2.bf16.msra.mxu0 0
      %436 = vmatprep.subr.bf16.mxu0 0
      %437 = vmatpush2.bf16.msra.mxu0 0
      %438 = vmatprep.subr.bf16.mxu0 0
      %439 = vmatpush2.bf16.msra.mxu0 0
      %440 = vmatprep.subr.bf16.mxu0 0
      %441 = vmatpush2.bf16.msra.mxu0 0
      %442 = vmatprep.subr.bf16.mxu0 0
      %443 = vmatpush2.bf16.msra.mxu0 0
      %444 = vmatprep.mubr.bf16.mxu0 0
      %445 = vmatmul.mubr.bf16.gmra.mxu0 %v401
      %v446 = vpop.f32.mrf.mxu0
      %v447 = vadd.f32 %v386, %v446
      %v448 = vpop.f32.mrf.mxu0
      %v449 = vpop.f32.mrf.mxu0
      %v450 = vadd.f32 %v386, %v449
      %v451 = vpop.f32.mrf.mxu0
      %452 = vmatprep.mubr.bf16.mxu0 0
      %453 = vmatmul.mubr.bf16.gmra.mxu0 %v404
      %v454 = vpop.f32.mrf.mxu0
      %v455 = vadd.f32 %v386, %v454
      %v456 = vpop.f32.mrf.mxu0
      %v457 = vpop.f32.mrf.mxu0
      %v458 = vadd.f32 %v386, %v457
      %v459 = vpop.f32.mrf.mxu0
      %460 = vmatprep.mubr.bf16.mxu0 0
      %461 = vmatmul.mubr.bf16.gmra.mxu0 %v407
      %v462 = vpop.f32.mrf.mxu0
      %v463 = vadd.f32 %v386, %v462
      %v464 = vpop.f32.mrf.mxu0
      %v465 = vpop.f32.mrf.mxu0
      %v466 = vadd.f32 %v386, %v465
      %v467 = vpop.f32.mrf.mxu0
      %468 = vmatprep.mubr.bf16.mxu0 0
      %469 = vmatmul.mubr.bf16.gmra.mxu0 %v410
      %v470 = vpop.f32.mrf.mxu0
      %v471 = vadd.f32 %v386, %v470
      %v472 = vpop.f32.mrf.mxu0
      %v473 = vpop.f32.mrf.mxu0
      %v474 = vadd.f32 %v386, %v473
      %v475 = vpop.f32.mrf.mxu0
      %476 = vdwg.mxu0
      %vm477 = vcmask 785408
      %478 = vst.msk [vmem:[%s226] sm:$0xff] %vm477, %v447
      %479 = vst.msk [vmem:[%s226 + $0x8] sm:$0xff] %vm477, %v450
      %480 = vst.msk [vmem:[%s226 + $0x10] sm:$0xff] %vm477, %v455
      %481 = vst.msk [vmem:[%s226 + $0x18] sm:$0xff] %vm477, %v458
      %482 = vst.msk [vmem:[%s226 + $0x20] sm:$0xff] %vm477, %v463
      %483 = vst.msk [vmem:[%s226 + $0x28] sm:$0xff] %vm477, %v466
      %484 = vst.msk [vmem:[%s226 + $0x30] sm:$0xff] %vm477, %v471
      %485 = vst.msk [vmem:[%s226 + $0x38] sm:$0xff] %vm477, %v474
      %s486 = smul.u32 8, %s16
      %p487 = scmp.lt.s32.totalorder %s486, 15
      %s488 = scalar_select %p487, %s486, 15
      %s489 = smul.addr %s488, 8
      %s490 = scalar_lea.vmem %s5, %s489
      // Predicated region
      $region41: #{uninext_forward.10} parent=39 // pred_check
        %p491 = pneg %p144
      $region42: #{uninext_forward.10} parent=39 // pred_check_branch
        %493 = sbr.rel (%p491) target = $region44
      $region43: #{uninext_forward.10} parent=39 // pred_region
        %s494 = smul.u32 8, %s16
      $region44: #{uninext_forward.10} parent=39 // pred_fallthru
        _
    $region40: #{uninext_forward.10} parent=5 // pred_fallthru
      _
    %p495 = scmp.le.s32.totalorder 2, %s11
    // Predicated region
    $region45: #{uninext_forward.10} parent=5 // pred_check
      %p496 = pneg %p495
    $region46: #{uninext_forward.10} parent=5 // pred_check_branch
      %498 = sbr.rel (%p496) target = $region48
    $region47: #{uninext_forward.10} parent=5 // pred_region
      %s499 = ssub.s32 %s11, 2
      // Predicated region
      $region49: #{uninext_forward.10} parent=47 // pred_check
        %p500 = pneg %p150
      $region50: #{uninext_forward.10} parent=47 // pred_check_branch
        %502 = sbr.rel (%p500) target = $region52
      $region51: #{uninext_forward.10} parent=47 // pred_region
        %s503 = smul.u32 8, %s17
        %p504 = scmp.lt.s32.totalorder %s503, 15
        %s505 = scalar_select %p504, %s503, 15
        %s506 = smul.addr %s505, 8
        %s507 = scalar_lea.vmem %s5, %s506
      $region52: #{uninext_forward.10} parent=47 // pred_fallthru
        _
    $region48: #{uninext_forward.10} parent=5 // pred_fallthru
      _
  $region6: #{uninext_forward.10} parent=0 // loop_footer
    %s15 = sadd.s32 1, %s11
  $region7: #{uninext_forward.10} parent=0 // loop_footer_branch
    %10 = sbr.rel target = $region3
  $region8: #{uninext_forward.10} parent=0 // loop_exit
    _

// kernel: uninext_forward.12
$region0: #{uninext_forward.12}
  #allocation0 [shape = 'u32[]', space=smem, size = 0x4, offset = 0x4, fixed_abs, tag = 'smem constant byte address 0x4 - core index']
  #allocation1 [shape = 'u32[144,128]{1,0:T(1,128)}', space=vmem, size = 0x12000, scoped, tag = 'internal scratch']
  %s0 = inlined_call_operand.vmem [shape: f32[128,32], index: 0, kind: input, shape index: {}]
  %s1 = inlined_call_operand.vmem [shape: bf16[32,32], index: 1, kind: input, shape index: {}]
  %s2 = inlined_call_operand.vmem [shape: f32[1,32], index: 2, kind: input, shape index: {}]
  %s3 = inlined_call_operand.vmem [shape: f32[128,32], index: 3, kind: input, shape index: {}]
  %s4 = inlined_call_operand.vmem [shape: f32[128,32], index: 4, kind: output, shape index: {}]
  %s5 = sld [smem:[#allocation0]]
  $region49: #{uninext_forward.12} parent=0
    _
  %s7 = ssub.s32 1, %s5
  %s8 = scalar_select 0, %s7, %s5
  loop: start=0, step=1, limit=4
  $region2: #{uninext_forward.12} parent=0 // loop_pre_header
    _
  $region3: #{uninext_forward.12} parent=0 // loop_header
    %s10 = sphi 0, %s14
    %p11 = scmp.ge.s32.totalorder %s10, 4
    %s20 = sphi 0, %s22
    %s23 = sphi 0, %s20
    %s24 = sphi 0, %s23
    %s40 = sphi 0, %s24
    %s44 = sphi 0, %s44
    %s46 = sphi 0, %s44
    %s47 = sphi 0, %s46
    %s61 = sphi 0, %s47
    %s65 = sphi 0, %s65
    %s67 = sphi 0, %s65
    %s68 = sphi 0, %s67
    %s82 = sphi 0, %s68
    %s88 = sphi 0, %s90
    %s91 = sphi 0, %s88
    %s92 = sphi 0, %s91
    %s108 = sphi 0, %s92
    %s114 = sphi 0, %s116
    %s117 = sphi 0, %s114
    %s118 = sphi 0, %s117
    %s134 = sphi 0, %s118
  $region4: #{uninext_forward.12} parent=0 // loop_header_branch
    %13 = sbr.rel (%p11) target = $region8
  $region5: #{uninext_forward.12} parent=0 // loop_body
    %s15 = ssub.s32 %s10, 1
    %s16 = ssub.s32 %s10, 2
    %s17 = sadd.s32 %s10, 1
    %s18 = ssub.s32 %s10, %s17
    %p19 = scmp.eq.s32.totalorder %s18, 0
    %s21 = sadd.s32 %s20, 1
    %s22 = scalar_select %p19, %s20, %s21
    %p25 = pneg %p19
    %p26 = scmp.eq.s32.totalorder %s10, 1
    %p27 = por %p25, %p26
    %p28 = scmp.ne.s32.totalorder %s20, %s23
    %p29 = scmp.eq.s32.totalorder %s10, 0
    %p30 = por %p28, %p29
    %p31 = scmp.ne.s32.totalorder %s20, %s23
    %p32 = scmp.eq.s32.totalorder %s15, 1
    %p33 = por %p31, %p32
    %p34 = scmp.ne.s32.totalorder %s23, %s24
    %p35 = scmp.eq.s32.totalorder %s15, 0
    %p36 = por %p34, %p35
    %p37 = scmp.ne.s32.totalorder %s23, %s24
    %p38 = scmp.eq.s32.totalorder %s16, 1
    %p39 = por %p37, %p38
    %p41 = scmp.ne.s32.totalorder %s24, %s40
    %p42 = scmp.eq.s32.totalorder %s16, 0
    %p43 = por %p41, %p42
    %s45 = sadd.s32 %s44, 1
    %p48 = scmp.eq.s32.totalorder %s10, 1
    %p49 = scmp.ne.s32.totalorder %s44, %s46
    %p50 = scmp.eq.s32.totalorder %s10, 0
    %p51 = por %p49, %p50
    %p52 = scmp.ne.s32.totalorder %s44, %s46
    %p53 = scmp.eq.s32.totalorder %s15, 1
    %p54 = por %p52, %p53
    %p55 = scmp.ne.s32.totalorder %s46, %s47
    %p56 = scmp.eq.s32.totalorder %s15, 0
    %p57 = por %p55, %p56
    %p58 = scmp.ne.s32.totalorder %s46, %s47
    %p59 = scmp.eq.s32.totalorder %s16, 1
    %p60 = por %p58, %p59
    %p62 = scmp.ne.s32.totalorder %s47, %s61
    %p63 = scmp.eq.s32.totalorder %s16, 0
    %p64 = por %p62, %p63
    %s66 = sadd.s32 %s65, 1
    %p69 = scmp.eq.s32.totalorder %s10, 1
    %p70 = scmp.ne.s32.totalorder %s65, %s67
    %p71 = scmp.eq.s32.totalorder %s10, 0
    %p72 = por %p70, %p71
    %p73 = scmp.ne.s32.totalorder %s65, %s67
    %p74 = scmp.eq.s32.totalorder %s15, 1
    %p75 = por %p73, %p74
    %p76 = scmp.ne.s32.totalorder %s67, %s68
    %p77 = scmp.eq.s32.totalorder %s15, 0
    %p78 = por %p76, %p77
    %p79 = scmp.ne.s32.totalorder %s67, %s68
    %p80 = scmp.eq.s32.totalorder %s16, 1
    %p81 = por %p79, %p80
    %p83 = scmp.ne.s32.totalorder %s68, %s82
    %p84 = scmp.eq.s32.totalorder %s16, 0
    %p85 = por %p83, %p84
    %s86 = ssub.s32 %s10, %s17
    %p87 = scmp.eq.s32.totalorder %s86, 0
    %s89 = sadd.s32 %s88, 1
    %s90 = scalar_select %p87, %s88, %s89
    %p93 = pneg %p87
    %p94 = scmp.eq.s32.totalorder %s10, 1
    %p95 = por %p93, %p94
    %p96 = scmp.ne.s32.totalorder %s88, %s91
    %p97 = scmp.eq.s32.totalorder %s10, 0
    %p98 = por %p96, %p97
    %p99 = scmp.ne.s32.totalorder %s88, %s91
    %p100 = scmp.eq.s32.totalorder %s15, 1
    %p101 = por %p99, %p100
    %p102 = scmp.ne.s32.totalorder %s91, %s92
    %p103 = scmp.eq.s32.totalorder %s15, 0
    %p104 = por %p102, %p103
    %p105 = scmp.ne.s32.totalorder %s91, %s92
    %p106 = scmp.eq.s32.totalorder %s16, 1
    %p107 = por %p105, %p106
    %p109 = scmp.ne.s32.totalorder %s92, %s108
    %p110 = scmp.eq.s32.totalorder %s16, 0
    %p111 = por %p109, %p110
    %s112 = ssub.s32 %s10, %s17
    %p113 = scmp.eq.s32.totalorder %s112, 0
    %s115 = sadd.s32 %s114, 1
    %s116 = scalar_select %p113, %s114, %s115
    %p119 = pneg %p113
    %p120 = scmp.eq.s32.totalorder %s10, 1
    %p121 = por %p119, %p120
    %p122 = scmp.ne.s32.totalorder %s114, %s117
    %p123 = scmp.eq.s32.totalorder %s10, 0
    %p124 = por %p122, %p123
    %p125 = scmp.ne.s32.totalorder %s114, %s117
    %p126 = scmp.eq.s32.totalorder %s15, 1
    %p127 = por %p125, %p126
    %p128 = scmp.ne.s32.totalorder %s117, %s118
    %p129 = scmp.eq.s32.totalorder %s15, 0
    %p130 = por %p128, %p129
    %p131 = scmp.ne.s32.totalorder %s117, %s118
    %p132 = scmp.eq.s32.totalorder %s16, 1
    %p133 = por %p131, %p132
    %p135 = scmp.ne.s32.totalorder %s118, %s134
    %p136 = scmp.eq.s32.totalorder %s16, 0
    %p137 = por %p135, %p136
    %p138 = scmp.le.s32.totalorder 1, %s10
    %p139 = scmp.lt.s32.totalorder %s10, 3
    %p140 = pnand %p138, %p139
    %p141 = pneg %p140
    // Predicated region
    $region9: #{uninext_forward.12} parent=5 // pred_check
      _
    $region10: #{uninext_forward.12} parent=5 // pred_check_branch
      %143 = sbr.rel (%p140) target = $region12
    $region11: #{uninext_forward.12} parent=5 // pred_region
      %s144 = ssub.s32 %s10, 1
      // Predicated region
      $region13: #{uninext_forward.12} parent=11 // pred_check
        %p145 = pneg %p57
      $region14: #{uninext_forward.12} parent=11 // pred_check_branch
        %147 = sbr.rel (%p145) target = $region16
      $region15: #{uninext_forward.12} parent=11 // pred_region
        _
      $region16: #{uninext_forward.12} parent=11 // pred_fallthru
        _
      // Predicated region
      $region17: #{uninext_forward.12} parent=11 // pred_check
        %p148 = pneg %p78
      $region18: #{uninext_forward.12} parent=11 // pred_check_branch
        %150 = sbr.rel (%p148) target = $region20
      $region19: #{uninext_forward.12} parent=11 // pred_region
        _
      $region20: #{uninext_forward.12} parent=11 // pred_fallthru
        _
    $region12: #{uninext_forward.12} parent=5 // pred_fallthru
      _
    %p151 = scmp.lt.s32.totalorder %s10, 2
    // Predicated region
    $region21: #{uninext_forward.12} parent=5 // pred_check
      %p152 = pneg %p151
    $region22: #{uninext_forward.12} parent=5 // pred_check_branch
      %154 = sbr.rel (%p152) target = $region24
    $region23: #{uninext_forward.12} parent=5 // pred_region
      // Predicated region
      $region25: #{uninext_forward.12} parent=23 // pred_check
        %p155 = pneg %p30
      $region26: #{uninext_forward.12} parent=23 // pred_check_branch
        %157 = sbr.rel (%p155) target = $region28
      $region27: #{uninext_forward.12} parent=23 // pred_region
        %s158 = smul.u32 8, %s10
        %p159 = scmp.lt.s32.totalorder %s158, 15
        %s160 = scalar_select %p159, %s158, 15
        %s161 = smul.addr %s160, 8
        %s162 = scalar_lea.vmem %s0, %s161
        %s163 = smul.u32 8, %s10
      $region28: #{uninext_forward.12} parent=23 // pred_fallthru
        _
      // Predicated region
      $region29: #{uninext_forward.12} parent=23 // pred_check
        %p164 = pneg %p98
      $region30: #{uninext_forward.12} parent=23 // pred_check_branch
        %166 = sbr.rel (%p164) target = $region32
      $region31: #{uninext_forward.12} parent=23 // pred_region
        %s167 = smul.u32 8, %s10
        %p168 = scmp.lt.s32.totalorder %s167, 15
        %s169 = scalar_select %p168, %s167, 15
        %s170 = smul.addr %s169, 8
        %s171 = scalar_lea.vmem %s3, %s170
        %s172 = smul.u32 8, %s10
      $region32: #{uninext_forward.12} parent=23 // pred_fallthru
        _
    $region24: #{uninext_forward.12} parent=5 // pred_fallthru
      _
    %p173 = scmp.le.s32.totalorder 1, %s10
    %p174 = scmp.lt.s32.totalorder %s10, 3
    %p175 = pnand %p173, %p174
    %p176 = pneg %p175
    // Predicated region
    $region33: #{uninext_forward.12} parent=5 // pred_check
      _
    $region34: #{uninext_forward.12} parent=5 // pred_check_branch
      %178 = sbr.rel (%p175) target = $region36
    $region35: #{uninext_forward.12} parent=5 // pred_region
      %s179 = ssub.s32 %s10, 1
      %s180 = smul.u32 8, %s15
      %p181 = scmp.lt.s32.totalorder %s180, 15
      %s182 = scalar_select %p181, %s180, 15
      %s183 = smul.addr %s182, 8
      %s184 = scalar_lea.vmem %s0, %s183
      %p185 = pneg %p36
      %p186 = pneg %p33
      %p187 = pneg %p57
      %p188 = pneg %p54
      %p189 = pneg %p78
      %p190 = pneg %p75
      %s191 = smul.u32 8, %s15
      %p192 = scmp.lt.s32.totalorder %s191, 15
      %s193 = scalar_select %p192, %s191, 15
      %s194 = smul.addr %s193, 8
      %s195 = scalar_lea.vmem %s3, %s194
      %p196 = pneg %p104
      %p197 = pneg %p101
      %p198 = pneg %p130
      %p199 = pneg %p127
      %s200 = smul.u32 8, %s15
      %p201 = scmp.lt.s32.totalorder %s200, 15
      %s202 = scalar_select %p201, %s200, 15
      %s203 = smul.addr %s202, 8
      %s204 = scalar_lea.vmem %s4, %s203
      %s205 = smul.u32 8, %s15
      %p206 = scmp.lt.s32.totalorder %s205, 15
      %s207 = scalar_select %p206, %s205, 15
      %s208 = smul.addr %s207, 8
      %s209 = scalar_lea.vmem %s0, %s208
      %s210 = smul.u32 8, %s15
      %s211 = smul.u32 8, %s15
      %p212 = scmp.lt.s32.totalorder %s211, 15
      %s213 = scalar_select %p212, %s211, 15
      %s214 = smul.addr %s213, 8
      %s215 = scalar_lea.vmem %s3, %s214
      %s216 = smul.u32 8, %s15
      %s217 = smul.u32 8, %s15
      %p218 = scmp.lt.s32.totalorder %s217, 15
      %s219 = scalar_select %p218, %s217, 15
      %s220 = smul.addr %s219, 8
      %s221 = scalar_lea.vmem %s4, %s220
      %s222 = smul.u32 8, %s15
      %v224 = vld [vmem:[%s209] sm:$0xff]
      %v225 = vld [vmem:[%s209 + $0x8] sm:$0xff]
      %v226 = vld [vmem:[%s209 + $0x10] sm:$0xff]
      %v227 = vld [vmem:[%s209 + $0x18] sm:$0xff]
      %v228 = vld [vmem:[%s209 + $0x20] sm:$0xff]
      %v229 = vld [vmem:[%s209 + $0x28] sm:$0xff]
      %v230 = vld [vmem:[%s209 + $0x30] sm:$0xff]
      %v231 = vld [vmem:[%s209 + $0x38] sm:$0xff]
      %v232 = vpack.c.bf16 %v225, %v224
      %v233 = vpack.c.bf16 %v227, %v226
      %v234 = vpack.c.bf16 %v229, %v228
      %v235 = vpack.c.bf16 %v231, %v230
      %v236 = vld [vmem:[%s1] sm:$0xf]
      %v237 = vld [vmem:[%s1 + $0x4] sm:$0xf]
      %v238 = vld [vmem:[%s1 + $0x8] sm:$0xf]
      %v239 = vld [vmem:[%s1 + $0xc] sm:$0xf]
      %v240 = vld [vmem:[%s2] sm:$0x1]
      %v242 = vlaneseq
      %v243 = vshrl.u32 %v242, 7
      %v244 = vsub.s32 0, %v243
      %v245 = vrot.slane %v240, %v244
      %v251 = vunpack.c.l.b16 %v236
      %v252 = vunpack.c.l.b16 %v237
      %v253 = vunpack.c.l.b16 %v238
      %v254 = vunpack.c.l.b16 %v239
      %v255 = vpack.c.b16 %v252, %v251
      %v256 = vpack.c.b16 %v254, %v253
      %vm259 = vcmask 261120
      %v261 = vsel %vm259, %v232, 0
      %v264 = vsel %vm259, %v233, 0
      %v267 = vsel %vm259, %v234, 0
      %v270 = vsel %vm259, %v235, 0
      %272 = vmatprep.subr.bf16.mxu0 0
      %273 = vmatpush1.bf16.msra.mxu0 0
      %274 = vmatprep.subr.bf16.mxu0 0
      %275 = vmatpush1.bf16.msra.mxu0 0
      %276 = vmatprep.subr.bf16.mxu0 0
      %277 = vmatpush1.bf16.msra.mxu0 0
      %278 = vmatprep.subr.bf16.mxu0 0
      %279 = vmatpush1.bf16.msra.mxu0 0
      %280 = vmatprep.subr.bf16.mxu0 0
      %281 = vmatpush1.bf16.msra.mxu0 0
      %282 = vmatprep.subr.bf16.mxu0 0
      %283 = vmatpush1.bf16.msra.mxu0 0
      %284 = vmatprep.subr.bf16.mxu0 0
      %285 = vmatpush1.bf16.msra.mxu0 %v256
      %286 = vmatprep.subr.bf16.mxu0 0
      %287 = vmatpush1.bf16.msra.mxu0 %v255
      %288 = vmatprep.subr.bf16.mxu0 0
      %289 = vmatpush2.bf16.msra.mxu0 0
      %290 = vmatprep.subr.bf16.mxu0 0
      %291 = vmatpush2.bf16.msra.mxu0 0
      %292 = vmatprep.subr.bf16.mxu0 0
      %293 = vmatpush2.bf16.msra.mxu0 0
      %294 = vmatprep.subr.bf16.mxu0 0
      %295 = vmatpush2.bf16.msra.mxu0 0
      %296 = vmatprep.subr.bf16.mxu0 0
      %297 = vmatpush2.bf16.msra.mxu0 0
      %298 = vmatprep.subr.bf16.mxu0 0
      %299 = vmatpush2.bf16.msra.mxu0 0
      %300 = vmatprep.subr.bf16.mxu0 0
      %301 = vmatpush2.bf16.msra.mxu0 0
      %302 = vmatprep.subr.bf16.mxu0 0
      %303 = vmatpush2.bf16.msra.mxu0 0
      %304 = vmatprep.mubr.bf16.mxu0 0
      %305 = vmatmul.mubr.bf16.gmra.mxu0 %v261
      %v306 = vpop.f32.mrf.mxu0
      %v307 = vadd.f32 %v245, %v306
      %v308 = vpop.f32.mrf.mxu0
      %v309 = vpop.f32.mrf.mxu0
      %v310 = vadd.f32 %v245, %v309
      %v311 = vpop.f32.mrf.mxu0
      %312 = vmatprep.mubr.bf16.mxu0 0
      %313 = vmatmul.mubr.bf16.gmra.mxu0 %v264
      %v314 = vpop.f32.mrf.mxu0
      %v315 = vadd.f32 %v245, %v314
      %v316 = vpop.f32.mrf.mxu0
      %v317 = vpop.f32.mrf.mxu0
      %v318 = vadd.f32 %v245, %v317
      %v319 = vpop.f32.mrf.mxu0
      %320 = vmatprep.mubr.bf16.mxu0 0
      %321 = vmatmul.mubr.bf16.gmra.mxu0 %v267
      %v322 = vpop.f32.mrf.mxu0
      %v323 = vadd.f32 %v245, %v322
      %v324 = vpop.f32.mrf.mxu0
      %v325 = vpop.f32.mrf.mxu0
      %v326 = vadd.f32 %v245, %v325
      %v327 = vpop.f32.mrf.mxu0
      %328 = vmatprep.mubr.bf16.mxu0 0
      %329 = vmatmul.mubr.bf16.gmra.mxu0 %v270
      %v330 = vpop.f32.mrf.mxu0
      %v331 = vadd.f32 %v245, %v330
      %v332 = vpop.f32.mrf.mxu0
      %v333 = vpop.f32.mrf.mxu0
      %v334 = vadd.f32 %v245, %v333
      %v335 = vpop.f32.mrf.mxu0
      %336 = vdwg.mxu0
      %v337 = vld [vmem:[%s215] sm:$0xff]
      %v338 = vld [vmem:[%s215 + $0x8] sm:$0xff]
      %v339 = vld [vmem:[%s215 + $0x10] sm:$0xff]
      %v340 = vld [vmem:[%s215 + $0x18] sm:$0xff]
      %v341 = vld [vmem:[%s215 + $0x20] sm:$0xff]
      %v342 = vld [vmem:[%s215 + $0x28] sm:$0xff]
      %v343 = vld [vmem:[%s215 + $0x30] sm:$0xff]
      %v344 = vld [vmem:[%s215 + $0x38] sm:$0xff]
      %v345 = vadd.f32 %v307, %v337
      %v346 = vadd.f32 %v310, %v338
      %v347 = vadd.f32 %v315, %v339
      %v348 = vadd.f32 %v318, %v340
      %v349 = vadd.f32 %v323, %v341
      %v350 = vadd.f32 %v326, %v342
      %v351 = vadd.f32 %v331, %v343
      %v352 = vadd.f32 %v334, %v344
      %353 = vst.msk [vmem:[%s221] sm:$0xff] %vm259, %v345
      %354 = vst.msk [vmem:[%s221 + $0x8] sm:$0xff] %vm259, %v346
      %355 = vst.msk [vmem:[%s221 + $0x10] sm:$0xff] %vm259, %v347
      %356 = vst.msk [vmem:[%s221 + $0x18] sm:$0xff] %vm259, %v348
      %357 = vst.msk [vmem:[%s221 + $0x20] sm:$0xff] %vm259, %v349
      %358 = vst.msk [vmem:[%s221 + $0x28] sm:$0xff] %vm259, %v350
      %359 = vst.msk [vmem:[%s221 + $0x30] sm:$0xff] %vm259, %v351
      %360 = vst.msk [vmem:[%s221 + $0x38] sm:$0xff] %vm259, %v352
      %s361 = smul.u32 8, %s15
      %p362 = scmp.lt.s32.totalorder %s361, 15
      %s363 = scalar_select %p362, %s361, 15
      %s364 = smul.addr %s363, 8
      %s365 = scalar_lea.vmem %s4, %s364
      // Predicated region
      $region37: #{uninext_forward.12} parent=35 // pred_check
        %p366 = pneg %p127
      $region38: #{uninext_forward.12} parent=35 // pred_check_branch
        %368 = sbr.rel (%p366) target = $region40
      $region39: #{uninext_forward.12} parent=35 // pred_region
        %s369 = smul.u32 8, %s15
      $region40: #{uninext_forward.12} parent=35 // pred_fallthru
        _
    $region36: #{uninext_forward.12} parent=5 // pred_fallthru
      _
    %p370 = scmp.le.s32.totalorder 2, %s10
    // Predicated region
    $region41: #{uninext_forward.12} parent=5 // pred_check
      %p371 = pneg %p370
    $region42: #{uninext_forward.12} parent=5 // pred_check_branch
      %373 = sbr.rel (%p371) target = $region44
    $region43: #{uninext_forward.12} parent=5 // pred_region
      %s374 = ssub.s32 %s10, 2
      // Predicated region
      $region45: #{uninext_forward.12} parent=43 // pred_check
        %p375 = pneg %p133
      $region46: #{uninext_forward.12} parent=43 // pred_check_branch
        %377 = sbr.rel (%p375) target = $region48
      $region47: #{uninext_forward.12} parent=43 // pred_region
        %s378 = smul.u32 8, %s16
        %p379 = scmp.lt.s32.totalorder %s378, 15
        %s380 = scalar_select %p379, %s378, 15
        %s381 = smul.addr %s380, 8
        %s382 = scalar_lea.vmem %s4, %s381
      $region48: #{uninext_forward.12} parent=43 // pred_fallthru
        _
    $region44: #{uninext_forward.12} parent=5 // pred_fallthru
      _
  $region6: #{uninext_forward.12} parent=0 // loop_footer
    %s14 = sadd.s32 1, %s10
  $region7: #{uninext_forward.12} parent=0 // loop_footer_branch
    %9 = sbr.rel target = $region3
  $region8: #{uninext_forward.12} parent=0 // loop_exit
    _

// kernel: squeeze.15
$region0: #{squeeze.15}
  %s0 = inlined_call_operand.vmem [shape: bf16[1,2,4,64,8], index: 0, kind: input, shape index: {}]
  %s1 = inlined_call_operand.vmem [shape: bf16[8,8,8,8], index: 1, kind: output, shape index: {}]
  $region1: #{squeeze.15} parent=0
    #allocation0 [shape = 'u8[262144]{0}', space=vmem, size = 0x40000, scoped, tag = 'scoped mem for output reshape']
    #allocation1 [shape = 'u8[32768]{0}', space=vmem, size = 0x8000, scoped, tag = 'scoped mem for input reshape']
    %s3 = smul.u32 4, 2
    %s4 = sshll.u32 1, %s3
    %s5 = ssub.s32 %s4, 1
    %s6 = smul.addr 4, 7
    %s7 = scalar_lea.vmem %s0, %s6
    %s8 = sshrl.u32 %s5, 1
    %s9 = sor.u32 %s5, %s8
    %s10 = sand.u32 %s9, 85
    %s11 = sshrl.u32 %s10, 1
    %s12 = sor.u32 %s10, %s11
    %s13 = sand.u32 51, %s12
    %s14 = sshrl.u32 %s13, 2
    %s15 = sor.u32 %s13, %s14
    %s16 = sand.u32 15, %s15
    %v17 = vld [vmem:[%s7] sm:%s16]
    %v18 = vunpack.c.l.bf16 %v17
    %v19 = vunpack.c.h.bf16 %v17
    %s20 = scalar_lea.vmem [#allocation1], 56
    %21 = vst [vmem:[%s20] sm:%s5] %v18
    %s22 = smul.addr 4, 6
    %s23 = scalar_lea.vmem %s0, %s22
    %s24 = sshrl.u32 %s5, 1
    %s25 = sor.u32 %s5, %s24
    %s26 = sand.u32 %s25, 85
    %s27 = sshrl.u32 %s26, 1
    %s28 = sor.u32 %s26, %s27
    %s29 = sand.u32 51, %s28
    %s30 = sshrl.u32 %s29, 2
    %s31 = sor.u32 %s29, %s30
    %s32 = sand.u32 15, %s31
    %v33 = vld [vmem:[%s23] sm:%s32]
    %v34 = vunpack.c.l.bf16 %v33
    %v35 = vunpack.c.h.bf16 %v33
    %s36 = scalar_lea.vmem [#allocation1], 48
    %37 = vst [vmem:[%s36] sm:%s5] %v34
    %s38 = smul.addr 4, 5
    %s39 = scalar_lea.vmem %s0, %s38
    %s40 = sshrl.u32 %s5, 1
    %s41 = sor.u32 %s5, %s40
    %s42 = sand.u32 %s41, 85
    %s43 = sshrl.u32 %s42, 1
    %s44 = sor.u32 %s42, %s43
    %s45 = sand.u32 51, %s44
    %s46 = sshrl.u32 %s45, 2
    %s47 = sor.u32 %s45, %s46
    %s48 = sand.u32 15, %s47
    %v49 = vld [vmem:[%s39] sm:%s48]
    %v50 = vunpack.c.l.bf16 %v49
    %v51 = vunpack.c.h.bf16 %v49
    %s52 = scalar_lea.vmem [#allocation1], 40
    %53 = vst [vmem:[%s52] sm:%s5] %v50
    %s54 = smul.addr 4, 4
    %s55 = scalar_lea.vmem %s0, %s54
    %s56 = sshrl.u32 %s5, 1
    %s57 = sor.u32 %s5, %s56
    %s58 = sand.u32 %s57, 85
    %s59 = sshrl.u32 %s58, 1
    %s60 = sor.u32 %s58, %s59
    %s61 = sand.u32 51, %s60
    %s62 = sshrl.u32 %s61, 2
    %s63 = sor.u32 %s61, %s62
    %s64 = sand.u32 15, %s63
    %v65 = vld [vmem:[%s55] sm:%s64]
    %v66 = vunpack.c.l.bf16 %v65
    %v67 = vunpack.c.h.bf16 %v65
    %s68 = scalar_lea.vmem [#allocation1], 32
    %69 = vst [vmem:[%s68] sm:%s5] %v66
    %s70 = smul.addr 4, 3
    %s71 = scalar_lea.vmem %s0, %s70
    %s72 = sshrl.u32 %s5, 1
    %s73 = sor.u32 %s5, %s72
    %s74 = sand.u32 %s73, 85
    %s75 = sshrl.u32 %s74, 1
    %s76 = sor.u32 %s74, %s75
    %s77 = sand.u32 51, %s76
    %s78 = sshrl.u32 %s77, 2
    %s79 = sor.u32 %s77, %s78
    %s80 = sand.u32 15, %s79
    %v81 = vld [vmem:[%s71] sm:%s80]
    %v82 = vunpack.c.l.bf16 %v81
    %v83 = vunpack.c.h.bf16 %v81
    %s84 = scalar_lea.vmem [#allocation1], 24
    %85 = vst [vmem:[%s84] sm:%s5] %v82
    %s86 = smul.addr 4, 2
    %s87 = scalar_lea.vmem %s0, %s86
    %s88 = sshrl.u32 %s5, 1
    %s89 = sor.u32 %s5, %s88
    %s90 = sand.u32 %s89, 85
    %s91 = sshrl.u32 %s90, 1
    %s92 = sor.u32 %s90, %s91
    %s93 = sand.u32 51, %s92
    %s94 = sshrl.u32 %s93, 2
    %s95 = sor.u32 %s93, %s94
    %s96 = sand.u32 15, %s95
    %v97 = vld [vmem:[%s87] sm:%s96]
    %v98 = vunpack.c.l.bf16 %v97
    %v99 = vunpack.c.h.bf16 %v97
    %s100 = scalar_lea.vmem [#allocation1], 16
    %101 = vst [vmem:[%s100] sm:%s5] %v98
    %s102 = scalar_lea.vmem %s0, 4
    %s103 = sshrl.u32 %s5, 1
    %s104 = sor.u32 %s5, %s103
    %s105 = sand.u32 %s104, 85
    %s106 = sshrl.u32 %s105, 1
    %s107 = sor.u32 %s105, %s106
    %s108 = sand.u32 51, %s107
    %s109 = sshrl.u32 %s108, 2
    %s110 = sor.u32 %s108, %s109
    %s111 = sand.u32 15, %s110
    %v112 = vld [vmem:[%s102] sm:%s111]
    %v113 = vunpack.c.l.bf16 %v112
    %v114 = vunpack.c.h.bf16 %v112
    %s115 = scalar_lea.vmem [#allocation1], 8
    %116 = vst [vmem:[%s115] sm:%s5] %v113
    %s117 = sshrl.u32 %s5, 1
    %s118 = sor.u32 %s5, %s117
    %s119 = sand.u32 %s118, 85
    %s120 = sshrl.u32 %s119, 1
    %s121 = sor.u32 %s119, %s120
    %s122 = sand.u32 51, %s121
    %s123 = sshrl.u32 %s122, 2
    %s124 = sor.u32 %s122, %s123
    %s125 = sand.u32 15, %s124
    %v126 = vld [vmem:[%s0] sm:%s125]
    %v127 = vunpack.c.l.bf16 %v126
    %v128 = vunpack.c.h.bf16 %v126
    %129 = vst [vmem:[#allocation1] sm:%s5] %v127
    %v130 = vld [vmem:[#allocation1] sm:$0xff]
    %vm131 = vcmask 64512
    %132 = vst.msk [vmem:[#allocation0] ss:$8 sm:$0xf] %vm131, %v130
    %133 = vst.msk [vmem:[#allocation0] ss:$8 sm:$0xf0] %vm131, %v130
    %s134 = scalar_lea.vmem [#allocation1], 8
    %v135 = vld [vmem:[%s134] sm:$0xff]
    %vm136 = vcmask 64512
    %s137 = scalar_lea.vmem [#allocation0], 64
    %138 = vst.msk [vmem:[%s137] ss:$8 sm:$0xf] %vm136, %v135
    %s139 = scalar_lea.vmem [#allocation0], 64
    %140 = vst.msk [vmem:[%s139] ss:$8 sm:$0xf0] %vm136, %v135
    %s141 = scalar_lea.vmem [#allocation1], 16
    %v142 = vld [vmem:[%s141] sm:$0xff]
    %vm143 = vcmask 64512
    %s144 = scalar_lea.vmem [#allocation0], 128
    %145 = vst.msk [vmem:[%s144] ss:$8 sm:$0xf] %vm143, %v142
    %s146 = scalar_lea.vmem [#allocation0], 128
    %147 = vst.msk [vmem:[%s146] ss:$8 sm:$0xf0] %vm143, %v142
    %s148 = scalar_lea.vmem [#allocation1], 24
    %v149 = vld [vmem:[%s148] sm:$0xff]
    %vm150 = vcmask 64512
    %s151 = scalar_lea.vmem [#allocation0], 192
    %152 = vst.msk [vmem:[%s151] ss:$8 sm:$0xf] %vm150, %v149
    %s153 = scalar_lea.vmem [#allocation0], 192
    %154 = vst.msk [vmem:[%s153] ss:$8 sm:$0xf0] %vm150, %v149
    %s155 = scalar_lea.vmem [#allocation1], 32
    %v156 = vld [vmem:[%s155] sm:$0xff]
    %vm157 = vcmask 64512
    %s158 = scalar_lea.vmem [#allocation0], 256
    %159 = vst.msk [vmem:[%s158] ss:$8 sm:$0xf] %vm157, %v156
    %s160 = scalar_lea.vmem [#allocation0], 256
    %161 = vst.msk [vmem:[%s160] ss:$8 sm:$0xf0] %vm157, %v156
    %s162 = scalar_lea.vmem [#allocation1], 40
    %v163 = vld [vmem:[%s162] sm:$0xff]
    %vm164 = vcmask 64512
    %s165 = scalar_lea.vmem [#allocation0], 320
    %166 = vst.msk [vmem:[%s165] ss:$8 sm:$0xf] %vm164, %v163
    %s167 = scalar_lea.vmem [#allocation0], 320
    %168 = vst.msk [vmem:[%s167] ss:$8 sm:$0xf0] %vm164, %v163
    %s169 = scalar_lea.vmem [#allocation1], 48
    %v170 = vld [vmem:[%s169] sm:$0xff]
    %vm171 = vcmask 64512
    %s172 = scalar_lea.vmem [#allocation0], 384
    %173 = vst.msk [vmem:[%s172] ss:$8 sm:$0xf] %vm171, %v170
    %s174 = scalar_lea.vmem [#allocation0], 384
    %175 = vst.msk [vmem:[%s174] ss:$8 sm:$0xf0] %vm171, %v170
    %s176 = scalar_lea.vmem [#allocation1], 56
    %v177 = vld [vmem:[%s176] sm:$0xff]
    %vm178 = vcmask 64512
    %s179 = scalar_lea.vmem [#allocation0], 448
    %180 = vst.msk [vmem:[%s179] ss:$8 sm:$0xf] %vm178, %v177
    %s181 = scalar_lea.vmem [#allocation0], 448
    %182 = vst.msk [vmem:[%s181] ss:$8 sm:$0xf0] %vm178, %v177
    %v183 = vld [vmem:[#allocation1] sm:$0xff]
    %184 = vrot.lane.b32.xlu0 %v183, 120
    %v185 = vpop.permute.xlu0 %184
    %vm186 = vcmask 64512
    %s187 = scalar_lea.vmem [#allocation0], 1
    %188 = vst.msk [vmem:[%s187] ss:$8 sm:$0xf] %vm186, %v185
    %s189 = scalar_lea.vmem [#allocation0], 1
    %190 = vst.msk [vmem:[%s189] ss:$8 sm:$0xf0] %vm186, %v185
    %s191 = scalar_lea.vmem [#allocation1], 8
    %v192 = vld [vmem:[%s191] sm:$0xff]
    %193 = vrot.lane.b32.xlu0 %v192, 120
    %v194 = vpop.permute.xlu0 %193
    %vm195 = vcmask 64512
    %s196 = scalar_lea.vmem [#allocation0], 65
    %197 = vst.msk [vmem:[%s196] ss:$8 sm:$0xf] %vm195, %v194
    %s198 = scalar_lea.vmem [#allocation0], 65
    %199 = vst.msk [vmem:[%s198] ss:$8 sm:$0xf0] %vm195, %v194
    %s200 = scalar_lea.vmem [#allocation1], 16
    %v201 = vld [vmem:[%s200] sm:$0xff]
    %202 = vrot.lane.b32.xlu0 %v201, 120
    %v203 = vpop.permute.xlu0 %202
    %vm204 = vcmask 64512
    %s205 = scalar_lea.vmem [#allocation0], 129
    %206 = vst.msk [vmem:[%s205] ss:$8 sm:$0xf] %vm204, %v203
    %s207 = scalar_lea.vmem [#allocation0], 129
    %208 = vst.msk [vmem:[%s207] ss:$8 sm:$0xf0] %vm204, %v203
    %s209 = scalar_lea.vmem [#allocation1], 24
    %v210 = vld [vmem:[%s209] sm:$0xff]
    %211 = vrot.lane.b32.xlu0 %v210, 120
    %v212 = vpop.permute.xlu0 %211
    %vm213 = vcmask 64512
    %s214 = scalar_lea.vmem [#allocation0], 193
    %215 = vst.msk [vmem:[%s214] ss:$8 sm:$0xf] %vm213, %v212
    %s216 = scalar_lea.vmem [#allocation0], 193
    %217 = vst.msk [vmem:[%s216] ss:$8 sm:$0xf0] %vm213, %v212
    %s218 = scalar_lea.vmem [#allocation1], 32
    %v219 = vld [vmem:[%s218] sm:$0xff]
    %220 = vrot.lane.b32.xlu0 %v219, 120
    %v221 = vpop.permute.xlu0 %220
    %vm222 = vcmask 64512
    %s223 = scalar_lea.vmem [#allocation0], 257
    %224 = vst.msk [vmem:[%s223] ss:$8 sm:$0xf] %vm222, %v221
    %s225 = scalar_lea.vmem [#allocation0], 257
    %226 = vst.msk [vmem:[%s225] ss:$8 sm:$0xf0] %vm222, %v221
    %s227 = scalar_lea.vmem [#allocation1], 40
    %v228 = vld [vmem:[%s227] sm:$0xff]
    %229 = vrot.lane.b32.xlu0 %v228, 120
    %v230 = vpop.permute.xlu0 %229
    %vm231 = vcmask 64512
    %s232 = scalar_lea.vmem [#allocation0], 321
    %233 = vst.msk [vmem:[%s232] ss:$8 sm:$0xf] %vm231, %v230
    %s234 = scalar_lea.vmem [#allocation0], 321
    %235 = vst.msk [vmem:[%s234] ss:$8 sm:$0xf0] %vm231, %v230
    %s236 = scalar_lea.vmem [#allocation1], 48
    %v237 = vld [vmem:[%s236] sm:$0xff]
    %238 = vrot.lane.b32.xlu0 %v237, 120
    %v239 = vpop.permute.xlu0 %238
    %vm240 = vcmask 64512
    %s241 = scalar_lea.vmem [#allocation0], 385
    %242 = vst.msk [vmem:[%s241] ss:$8 sm:$0xf] %vm240, %v239
    %s243 = scalar_lea.vmem [#allocation0], 385
    %244 = vst.msk [vmem:[%s243] ss:$8 sm:$0xf0] %vm240, %v239
    %s245 = scalar_lea.vmem [#allocation1], 56
    %v246 = vld [vmem:[%s245] sm:$0xff]
    %247 = vrot.lane.b32.xlu0 %v246, 120
    %v248 = vpop.permute.xlu0 %247
    %vm249 = vcmask 64512
    %s250 = scalar_lea.vmem [#allocation0], 449
    %251 = vst.msk [vmem:[%s250] ss:$8 sm:$0xf] %vm249, %v248
    %s252 = scalar_lea.vmem [#allocation0], 449
    %253 = vst.msk [vmem:[%s252] ss:$8 sm:$0xf0] %vm249, %v248
    %v254 = vld [vmem:[#allocation1] sm:$0xff]
    %255 = vrot.lane.b32.xlu0 %v254, 112
    %v256 = vpop.permute.xlu0 %255
    %vm257 = vcmask 64512
    %s258 = scalar_lea.vmem [#allocation0], 2
    %259 = vst.msk [vmem:[%s258] ss:$8 sm:$0xf] %vm257, %v256
    %s260 = scalar_lea.vmem [#allocation0], 2
    %261 = vst.msk [vmem:[%s260] ss:$8 sm:$0xf0] %vm257, %v256
    %s262 = scalar_lea.vmem [#allocation1], 8
    %v263 = vld [vmem:[%s262] sm:$0xff]
    %264 = vrot.lane.b32.xlu0 %v263, 112
    %v265 = vpop.permute.xlu0 %264
    %vm266 = vcmask 64512
    %s267 = scalar_lea.vmem [#allocation0], 66
    %268 = vst.msk [vmem:[%s267] ss:$8 sm:$0xf] %vm266, %v265
    %s269 = scalar_lea.vmem [#allocation0], 66
    %270 = vst.msk [vmem:[%s269] ss:$8 sm:$0xf0] %vm266, %v265
    %s271 = scalar_lea.vmem [#allocation1], 16
    %v272 = vld [vmem:[%s271] sm:$0xff]
    %273 = vrot.lane.b32.xlu0 %v272, 112
    %v274 = vpop.permute.xlu0 %273
    %vm275 = vcmask 64512
    %s276 = scalar_lea.vmem [#allocation0], 130
    %277 = vst.msk [vmem:[%s276] ss:$8 sm:$0xf] %vm275, %v274
    %s278 = scalar_lea.vmem [#allocation0], 130
    %279 = vst.msk [vmem:[%s278] ss:$8 sm:$0xf0] %vm275, %v274
    %s280 = scalar_lea.vmem [#allocation1], 24
    %v281 = vld [vmem:[%s280] sm:$0xff]
    %282 = vrot.lane.b32.xlu0 %v281, 112
    %v283 = vpop.permute.xlu0 %282
    %vm284 = vcmask 64512
    %s285 = scalar_lea.vmem [#allocation0], 194
    %286 = vst.msk [vmem:[%s285] ss:$8 sm:$0xf] %vm284, %v283
    %s287 = scalar_lea.vmem [#allocation0], 194
    %288 = vst.msk [vmem:[%s287] ss:$8 sm:$0xf0] %vm284, %v283
    %s289 = scalar_lea.vmem [#allocation1], 32
    %v290 = vld [vmem:[%s289] sm:$0xff]
    %291 = vrot.lane.b32.xlu0 %v290, 112
    %v292 = vpop.permute.xlu0 %291
    %vm293 = vcmask 64512
    %s294 = scalar_lea.vmem [#allocation0], 258
    %295 = vst.msk [vmem:[%s294] ss:$8 sm:$0xf] %vm293, %v292
    %s296 = scalar_lea.vmem [#allocation0], 258
    %297 = vst.msk [vmem:[%s296] ss:$8 sm:$0xf0] %vm293, %v292
    %s298 = scalar_lea.vmem [#allocation1], 40
    %v299 = vld [vmem:[%s298] sm:$0xff]
    %300 = vrot.lane.b32.xlu0 %v299, 112
    %v301 = vpop.permute.xlu0 %300
    %vm302 = vcmask 64512
    %s303 = scalar_lea.vmem [#allocation0], 322
    %304 = vst.msk [vmem:[%s303] ss:$8 sm:$0xf] %vm302, %v301
    %s305 = scalar_lea.vmem [#allocation0], 322
    %306 = vst.msk [vmem:[%s305] ss:$8 sm:$0xf0] %vm302, %v301
    %s307 = scalar_lea.vmem [#allocation1], 48
    %v308 = vld [vmem:[%s307] sm:$0xff]
    %309 = vrot.lane.b32.xlu0 %v308, 112
    %v310 = vpop.permute.xlu0 %309
    %vm311 = vcmask 64512
    %s312 = scalar_lea.vmem [#allocation0], 386
    %313 = vst.msk [vmem:[%s312] ss:$8 sm:$0xf] %vm311, %v310
    %s314 = scalar_lea.vmem [#allocation0], 386
    %315 = vst.msk [vmem:[%s314] ss:$8 sm:$0xf0] %vm311, %v310
    %s316 = scalar_lea.vmem [#allocation1], 56
    %v317 = vld [vmem:[%s316] sm:$0xff]
    %318 = vrot.lane.b32.xlu0 %v317, 112
    %v319 = vpop.permute.xlu0 %318
    %vm320 = vcmask 64512
    %s321 = scalar_lea.vmem [#allocation0], 450
    %322 = vst.msk [vmem:[%s321] ss:$8 sm:$0xf] %vm320, %v319
    %s323 = scalar_lea.vmem [#allocation0], 450
    %324 = vst.msk [vmem:[%s323] ss:$8 sm:$0xf0] %vm320, %v319
    %v325 = vld [vmem:[#allocation1] sm:$0xff]
    %326 = vrot.lane.b32.xlu0 %v325, 104
    %v327 = vpop.permute.xlu0 %326
    %vm328 = vcmask 64512
    %s329 = scalar_lea.vmem [#allocation0], 3
    %330 = vst.msk [vmem:[%s329] ss:$8 sm:$0xf] %vm328, %v327
    %s331 = scalar_lea.vmem [#allocation0], 3
    %332 = vst.msk [vmem:[%s331] ss:$8 sm:$0xf0] %vm328, %v327
    %s333 = scalar_lea.vmem [#allocation1], 8
    %v334 = vld [vmem:[%s333] sm:$0xff]
    %335 = vrot.lane.b32.xlu0 %v334, 104
    %v336 = vpop.permute.xlu0 %335
    %vm337 = vcmask 64512
    %s338 = scalar_lea.vmem [#allocation0], 67
    %339 = vst.msk [vmem:[%s338] ss:$8 sm:$0xf] %vm337, %v336
    %s340 = scalar_lea.vmem [#allocation0], 67
    %341 = vst.msk [vmem:[%s340] ss:$8 sm:$0xf0] %vm337, %v336
    %s342 = scalar_lea.vmem [#allocation1], 16
    %v343 = vld [vmem:[%s342] sm:$0xff]
    %344 = vrot.lane.b32.xlu0 %v343, 104
    %v345 = vpop.permute.xlu0 %344
    %vm346 = vcmask 64512
    %s347 = scalar_lea.vmem [#allocation0], 131
    %348 = vst.msk [vmem:[%s347] ss:$8 sm:$0xf] %vm346, %v345
    %s349 = scalar_lea.vmem [#allocation0], 131
    %350 = vst.msk [vmem:[%s349] ss:$8 sm:$0xf0] %vm346, %v345
    %s351 = scalar_lea.vmem [#allocation1], 24
    %v352 = vld [vmem:[%s351] sm:$0xff]
    %353 = vrot.lane.b32.xlu0 %v352, 104
    %v354 = vpop.permute.xlu0 %353
    %vm355 = vcmask 64512
    %s356 = scalar_lea.vmem [#allocation0], 195
    %357 = vst.msk [vmem:[%s356] ss:$8 sm:$0xf] %vm355, %v354
    %s358 = scalar_lea.vmem [#allocation0], 195
    %359 = vst.msk [vmem:[%s358] ss:$8 sm:$0xf0] %vm355, %v354
    %s360 = scalar_lea.vmem [#allocation1], 32
    %v361 = vld [vmem:[%s360] sm:$0xff]
    %362 = vrot.lane.b32.xlu0 %v361, 104
    %v363 = vpop.permute.xlu0 %362
    %vm364 = vcmask 64512
    %s365 = scalar_lea.vmem [#allocation0], 259
    %366 = vst.msk [vmem:[%s365] ss:$8 sm:$0xf] %vm364, %v363
    %s367 = scalar_lea.vmem [#allocation0], 259
    %368 = vst.msk [vmem:[%s367] ss:$8 sm:$0xf0] %vm364, %v363
    %s369 = scalar_lea.vmem [#allocation1], 40
    %v370 = vld [vmem:[%s369] sm:$0xff]
    %371 = vrot.lane.b32.xlu0 %v370, 104
    %v372 = vpop.permute.xlu0 %371
    %vm373 = vcmask 64512
    %s374 = scalar_lea.vmem [#allocation0], 323
    %375 = vst.msk [vmem:[%s374] ss:$8 sm:$0xf] %vm373, %v372
    %s376 = scalar_lea.vmem [#allocation0], 323
    %377 = vst.msk [vmem:[%s376] ss:$8 sm:$0xf0] %vm373, %v372
    %s378 = scalar_lea.vmem [#allocation1], 48
    %v379 = vld [vmem:[%s378] sm:$0xff]
    %380 = vrot.lane.b32.xlu0 %v379, 104
    %v381 = vpop.permute.xlu0 %380
    %vm382 = vcmask 64512
    %s383 = scalar_lea.vmem [#allocation0], 387
    %384 = vst.msk [vmem:[%s383] ss:$8 sm:$0xf] %vm382, %v381
    %s385 = scalar_lea.vmem [#allocation0], 387
    %386 = vst.msk [vmem:[%s385] ss:$8 sm:$0xf0] %vm382, %v381
    %s387 = scalar_lea.vmem [#allocation1], 56
    %v388 = vld [vmem:[%s387] sm:$0xff]
    %389 = vrot.lane.b32.xlu0 %v388, 104
    %v390 = vpop.permute.xlu0 %389
    %vm391 = vcmask 64512
    %s392 = scalar_lea.vmem [#allocation0], 451
    %393 = vst.msk [vmem:[%s392] ss:$8 sm:$0xf] %vm391, %v390
    %s394 = scalar_lea.vmem [#allocation0], 451
    %395 = vst.msk [vmem:[%s394] ss:$8 sm:$0xf0] %vm391, %v390
    %v396 = vld [vmem:[#allocation1] sm:$0xff]
    %397 = vrot.lane.b32.xlu0 %v396, 96
    %v398 = vpop.permute.xlu0 %397
    %vm399 = vcmask 64512
    %s400 = scalar_lea.vmem [#allocation0], 4
    %401 = vst.msk [vmem:[%s400] ss:$8 sm:$0xf] %vm399, %v398
    %s402 = scalar_lea.vmem [#allocation0], 4
    %403 = vst.msk [vmem:[%s402] ss:$8 sm:$0xf0] %vm399, %v398
    %s404 = scalar_lea.vmem [#allocation1], 8
    %v405 = vld [vmem:[%s404] sm:$0xff]
    %406 = vrot.lane.b32.xlu0 %v405, 96
    %v407 = vpop.permute.xlu0 %406
    %vm408 = vcmask 64512
    %s409 = scalar_lea.vmem [#allocation0], 68
    %410 = vst.msk [vmem:[%s409] ss:$8 sm:$0xf] %vm408, %v407
    %s411 = scalar_lea.vmem [#allocation0], 68
    %412 = vst.msk [vmem:[%s411] ss:$8 sm:$0xf0] %vm408, %v407
    %s413 = scalar_lea.vmem [#allocation1], 16
    %v414 = vld [vmem:[%s413] sm:$0xff]
    %415 = vrot.lane.b32.xlu0 %v414, 96
    %v416 = vpop.permute.xlu0 %415
    %vm417 = vcmask 64512
    %s418 = scalar_lea.vmem [#allocation0], 132
    %419 = vst.msk [vmem:[%s418] ss:$8 sm:$0xf] %vm417, %v416
    %s420 = scalar_lea.vmem [#allocation0], 132
    %421 = vst.msk [vmem:[%s420] ss:$8 sm:$0xf0] %vm417, %v416
    %s422 = scalar_lea.vmem [#allocation1], 24
    %v423 = vld [vmem:[%s422] sm:$0xff]
    %424 = vrot.lane.b32.xlu0 %v423, 96
    %v425 = vpop.permute.xlu0 %424
    %vm426 = vcmask 64512
    %s427 = scalar_lea.vmem [#allocation0], 196
    %428 = vst.msk [vmem:[%s427] ss:$8 sm:$0xf] %vm426, %v425
    %s429 = scalar_lea.vmem [#allocation0], 196
    %430 = vst.msk [vmem:[%s429] ss:$8 sm:$0xf0] %vm426, %v425
    %s431 = scalar_lea.vmem [#allocation1], 32
    %v432 = vld [vmem:[%s431] sm:$0xff]
    %433 = vrot.lane.b32.xlu0 %v432, 96
    %v434 = vpop.permute.xlu0 %433
    %vm435 = vcmask 64512
    %s436 = scalar_lea.vmem [#allocation0], 260
    %437 = vst.msk [vmem:[%s436] ss:$8 sm:$0xf] %vm435, %v434
    %s438 = scalar_lea.vmem [#allocation0], 260
    %439 = vst.msk [vmem:[%s438] ss:$8 sm:$0xf0] %vm435, %v434
    %s440 = scalar_lea.vmem [#allocation1], 40
    %v441 = vld [vmem:[%s440] sm:$0xff]
    %442 = vrot.lane.b32.xlu0 %v441, 96
    %v443 = vpop.permute.xlu0 %442
    %vm444 = vcmask 64512
    %s445 = scalar_lea.vmem [#allocation0], 324
    %446 = vst.msk [vmem:[%s445] ss:$8 sm:$0xf] %vm444, %v443
    %s447 = scalar_lea.vmem [#allocation0], 324
    %448 = vst.msk [vmem:[%s447] ss:$8 sm:$0xf0] %vm444, %v443
    %s449 = scalar_lea.vmem [#allocation1], 48
    %v450 = vld [vmem:[%s449] sm:$0xff]
    %451 = vrot.lane.b32.xlu0 %v450, 96
    %v452 = vpop.permute.xlu0 %451
    %vm453 = vcmask 64512
    %s454 = scalar_lea.vmem [#allocation0], 388
    %455 = vst.msk [vmem:[%s454] ss:$8 sm:$0xf] %vm453, %v452
    %s456 = scalar_lea.vmem [#allocation0], 388
    %457 = vst.msk [vmem:[%s456] ss:$8 sm:$0xf0] %vm453, %v452
    %s458 = scalar_lea.vmem [#allocation1], 56
    %v459 = vld [vmem:[%s458] sm:$0xff]
    %460 = vrot.lane.b32.xlu0 %v459, 96
    %v461 = vpop.permute.xlu0 %460
    %vm462 = vcmask 64512
    %s463 = scalar_lea.vmem [#allocation0], 452
    %464 = vst.msk [vmem:[%s463] ss:$8 sm:$0xf] %vm462, %v461
    %s465 = scalar_lea.vmem [#allocation0], 452
    %466 = vst.msk [vmem:[%s465] ss:$8 sm:$0xf0] %vm462, %v461
    %v467 = vld [vmem:[#allocation1] sm:$0xff]
    %468 = vrot.lane.b32.xlu0 %v467, 88
    %v469 = vpop.permute.xlu0 %468
    %vm470 = vcmask 64512
    %s471 = scalar_lea.vmem [#allocation0], 5
    %472 = vst.msk [vmem:[%s471] ss:$8 sm:$0xf] %vm470, %v469
    %s473 = scalar_lea.vmem [#allocation0], 5
    %474 = vst.msk [vmem:[%s473] ss:$8 sm:$0xf0] %vm470, %v469
    %s475 = scalar_lea.vmem [#allocation1], 8
    %v476 = vld [vmem:[%s475] sm:$0xff]
    %477 = vrot.lane.b32.xlu0 %v476, 88
    %v478 = vpop.permute.xlu0 %477
    %vm479 = vcmask 64512
    %s480 = scalar_lea.vmem [#allocation0], 69
    %481 = vst.msk [vmem:[%s480] ss:$8 sm:$0xf] %vm479, %v478
    %s482 = scalar_lea.vmem [#allocation0], 69
    %483 = vst.msk [vmem:[%s482] ss:$8 sm:$0xf0] %vm479, %v478
    %s484 = scalar_lea.vmem [#allocation1], 16
    %v485 = vld [vmem:[%s484] sm:$0xff]
    %486 = vrot.lane.b32.xlu0 %v485, 88
    %v487 = vpop.permute.xlu0 %486
    %vm488 = vcmask 64512
    %s489 = scalar_lea.vmem [#allocation0], 133
    %490 = vst.msk [vmem:[%s489] ss:$8 sm:$0xf] %vm488, %v487
    %s491 = scalar_lea.vmem [#allocation0], 133
    %492 = vst.msk [vmem:[%s491] ss:$8 sm:$0xf0] %vm488, %v487
    %s493 = scalar_lea.vmem [#allocation1], 24
    %v494 = vld [vmem:[%s493] sm:$0xff]
    %495 = vrot.lane.b32.xlu0 %v494, 88
    %v496 = vpop.permute.xlu0 %495
    %vm497 = vcmask 64512
    %s498 = scalar_lea.vmem [#allocation0], 197
    %499 = vst.msk [vmem:[%s498] ss:$8 sm:$0xf] %vm497, %v496
    %s500 = scalar_lea.vmem [#allocation0], 197
    %501 = vst.msk [vmem:[%s500] ss:$8 sm:$0xf0] %vm497, %v496
    %s502 = scalar_lea.vmem [#allocation1], 32
    %v503 = vld [vmem:[%s502] sm:$0xff]
    %504 = vrot.lane.b32.xlu0 %v503, 88
    %v505 = vpop.permute.xlu0 %504
    %vm506 = vcmask 64512
    %s507 = scalar_lea.vmem [#allocation0], 261
    %508 = vst.msk [vmem:[%s507] ss:$8 sm:$0xf] %vm506, %v505
    %s509 = scalar_lea.vmem [#allocation0], 261
    %510 = vst.msk [vmem:[%s509] ss:$8 sm:$0xf0] %vm506, %v505
    %s511 = scalar_lea.vmem [#allocation1], 40
    %v512 = vld [vmem:[%s511] sm:$0xff]
    %513 = vrot.lane.b32.xlu0 %v512, 88
    %v514 = vpop.permute.xlu0 %513
    %vm515 = vcmask 64512
    %s516 = scalar_lea.vmem [#allocation0], 325
    %517 = vst.msk [vmem:[%s516] ss:$8 sm:$0xf] %vm515, %v514
    %s518 = scalar_lea.vmem [#allocation0], 325
    %519 = vst.msk [vmem:[%s518] ss:$8 sm:$0xf0] %vm515, %v514
    %s520 = scalar_lea.vmem [#allocation1], 48
    %v521 = vld [vmem:[%s520] sm:$0xff]
    %522 = vrot.lane.b32.xlu0 %v521, 88
    %v523 = vpop.permute.xlu0 %522
    %vm524 = vcmask 64512
    %s525 = scalar_lea.vmem [#allocation0], 389
    %526 = vst.msk [vmem:[%s525] ss:$8 sm:$0xf] %vm524, %v523
    %s527 = scalar_lea.vmem [#allocation0], 389
    %528 = vst.msk [vmem:[%s527] ss:$8 sm:$0xf0] %vm524, %v523
    %s529 = scalar_lea.vmem [#allocation1], 56
    %v530 = vld [vmem:[%s529] sm:$0xff]
    %531 = vrot.lane.b32.xlu0 %v530, 88
    %v532 = vpop.permute.xlu0 %531
    %vm533 = vcmask 64512
    %s534 = scalar_lea.vmem [#allocation0], 453
    %535 = vst.msk [vmem:[%s534] ss:$8 sm:$0xf] %vm533, %v532
    %s536 = scalar_lea.vmem [#allocation0], 453
    %537 = vst.msk [vmem:[%s536] ss:$8 sm:$0xf0] %vm533, %v532
    %v538 = vld [vmem:[#allocation1] sm:$0xff]
    %539 = vrot.lane.b32.xlu0 %v538, 80
    %v540 = vpop.permute.xlu0 %539
    %vm541 = vcmask 64512
    %s542 = scalar_lea.vmem [#allocation0], 6
    %543 = vst.msk [vmem:[%s542] ss:$8 sm:$0xf] %vm541, %v540
    %s544 = scalar_lea.vmem [#allocation0], 6
    %545 = vst.msk [vmem:[%s544] ss:$8 sm:$0xf0] %vm541, %v540
    %s546 = scalar_lea.vmem [#allocation1], 8
    %v547 = vld [vmem:[%s546] sm:$0xff]
    %548 = vrot.lane.b32.xlu0 %v547, 80
    %v549 = vpop.permute.xlu0 %548
    %vm550 = vcmask 64512
    %s551 = scalar_lea.vmem [#allocation0], 70
    %552 = vst.msk [vmem:[%s551] ss:$8 sm:$0xf] %vm550, %v549
    %s553 = scalar_lea.vmem [#allocation0], 70
    %554 = vst.msk [vmem:[%s553] ss:$8 sm:$0xf0] %vm550, %v549
    %s555 = scalar_lea.vmem [#allocation1], 16
    %v556 = vld [vmem:[%s555] sm:$0xff]
    %557 = vrot.lane.b32.xlu0 %v556, 80
    %v558 = vpop.permute.xlu0 %557
    %vm559 = vcmask 64512
    %s560 = scalar_lea.vmem [#allocation0], 134
    %561 = vst.msk [vmem:[%s560] ss:$8 sm:$0xf] %vm559, %v558
    %s562 = scalar_lea.vmem [#allocation0], 134
    %563 = vst.msk [vmem:[%s562] ss:$8 sm:$0xf0] %vm559, %v558
    %s564 = scalar_lea.vmem [#allocation1], 24
    %v565 = vld [vmem:[%s564] sm:$0xff]
    %566 = vrot.lane.b32.xlu0 %v565, 80
    %v567 = vpop.permute.xlu0 %566
    %vm568 = vcmask 64512
    %s569 = scalar_lea.vmem [#allocation0], 198
    %570 = vst.msk [vmem:[%s569] ss:$8 sm:$0xf] %vm568, %v567
    %s571 = scalar_lea.vmem [#allocation0], 198
    %572 = vst.msk [vmem:[%s571] ss:$8 sm:$0xf0] %vm568, %v567
    %s573 = scalar_lea.vmem [#allocation1], 32
    %v574 = vld [vmem:[%s573] sm:$0xff]
    %575 = vrot.lane.b32.xlu0 %v574, 80
    %v576 = vpop.permute.xlu0 %575
    %vm577 = vcmask 64512
    %s578 = scalar_lea.vmem [#allocation0], 262
    %579 = vst.msk [vmem:[%s578] ss:$8 sm:$0xf] %vm577, %v576
    %s580 = scalar_lea.vmem [#allocation0], 262
    %581 = vst.msk [vmem:[%s580] ss:$8 sm:$0xf0] %vm577, %v576
    %s582 = scalar_lea.vmem [#allocation1], 40
    %v583 = vld [vmem:[%s582] sm:$0xff]
    %584 = vrot.lane.b32.xlu0 %v583, 80
    %v585 = vpop.permute.xlu0 %584
    %vm586 = vcmask 64512
    %s587 = scalar_lea.vmem [#allocation0], 326
    %588 = vst.msk [vmem:[%s587] ss:$8 sm:$0xf] %vm586, %v585
    %s589 = scalar_lea.vmem [#allocation0], 326
    %590 = vst.msk [vmem:[%s589] ss:$8 sm:$0xf0] %vm586, %v585
    %s591 = scalar_lea.vmem [#allocation1], 48
    %v592 = vld [vmem:[%s591] sm:$0xff]
    %593 = vrot.lane.b32.xlu0 %v592, 80
    %v594 = vpop.permute.xlu0 %593
    %vm595 = vcmask 64512
    %s596 = scalar_lea.vmem [#allocation0], 390
    %597 = vst.msk [vmem:[%s596] ss:$8 sm:$0xf] %vm595, %v594
    %s598 = scalar_lea.vmem [#allocation0], 390
    %599 = vst.msk [vmem:[%s598] ss:$8 sm:$0xf0] %vm595, %v594
    %s600 = scalar_lea.vmem [#allocation1], 56
    %v601 = vld [vmem:[%s600] sm:$0xff]
    %602 = vrot.lane.b32.xlu0 %v601, 80
    %v603 = vpop.permute.xlu0 %602
    %vm604 = vcmask 64512
    %s605 = scalar_lea.vmem [#allocation0], 454
    %606 = vst.msk [vmem:[%s605] ss:$8 sm:$0xf] %vm604, %v603
    %s607 = scalar_lea.vmem [#allocation0], 454
    %608 = vst.msk [vmem:[%s607] ss:$8 sm:$0xf0] %vm604, %v603
    %v609 = vld [vmem:[#allocation1] sm:$0xff]
    %610 = vrot.lane.b32.xlu0 %v609, 72
    %v611 = vpop.permute.xlu0 %610
    %vm612 = vcmask 64512
    %s613 = scalar_lea.vmem [#allocation0], 7
    %614 = vst.msk [vmem:[%s613] ss:$8 sm:$0xf] %vm612, %v611
    %s615 = scalar_lea.vmem [#allocation0], 7
    %616 = vst.msk [vmem:[%s615] ss:$8 sm:$0xf0] %vm612, %v611
    %s617 = scalar_lea.vmem [#allocation1], 8
    %v618 = vld [vmem:[%s617] sm:$0xff]
    %619 = vrot.lane.b32.xlu0 %v618, 72
    %v620 = vpop.permute.xlu0 %619
    %vm621 = vcmask 64512
    %s622 = scalar_lea.vmem [#allocation0], 71
    %623 = vst.msk [vmem:[%s622] ss:$8 sm:$0xf] %vm621, %v620
    %s624 = scalar_lea.vmem [#allocation0], 71
    %625 = vst.msk [vmem:[%s624] ss:$8 sm:$0xf0] %vm621, %v620
    %s626 = scalar_lea.vmem [#allocation1], 16
    %v627 = vld [vmem:[%s626] sm:$0xff]
    %628 = vrot.lane.b32.xlu0 %v627, 72
    %v629 = vpop.permute.xlu0 %628
    %vm630 = vcmask 64512
    %s631 = scalar_lea.vmem [#allocation0], 135
    %632 = vst.msk [vmem:[%s631] ss:$8 sm:$0xf] %vm630, %v629
    %s633 = scalar_lea.vmem [#allocation0], 135
    %634 = vst.msk [vmem:[%s633] ss:$8 sm:$0xf0] %vm630, %v629
    %s635 = scalar_lea.vmem [#allocation1], 24
    %v636 = vld [vmem:[%s635] sm:$0xff]
    %637 = vrot.lane.b32.xlu0 %v636, 72
    %v638 = vpop.permute.xlu0 %637
    %vm639 = vcmask 64512
    %s640 = scalar_lea.vmem [#allocation0], 199
    %641 = vst.msk [vmem:[%s640] ss:$8 sm:$0xf] %vm639, %v638
    %s642 = scalar_lea.vmem [#allocation0], 199
    %643 = vst.msk [vmem:[%s642] ss:$8 sm:$0xf0] %vm639, %v638
    %s644 = scalar_lea.vmem [#allocation1], 32
    %v645 = vld [vmem:[%s644] sm:$0xff]
    %646 = vrot.lane.b32.xlu0 %v645, 72
    %v647 = vpop.permute.xlu0 %646
    %vm648 = vcmask 64512
    %s649 = scalar_lea.vmem [#allocation0], 263
    %650 = vst.msk [vmem:[%s649] ss:$8 sm:$0xf] %vm648, %v647
    %s651 = scalar_lea.vmem [#allocation0], 263
    %652 = vst.msk [vmem:[%s651] ss:$8 sm:$0xf0] %vm648, %v647
    %s653 = scalar_lea.vmem [#allocation1], 40
    %v654 = vld [vmem:[%s653] sm:$0xff]
    %655 = vrot.lane.b32.xlu0 %v654, 72
    %v656 = vpop.permute.xlu0 %655
    %vm657 = vcmask 64512
    %s658 = scalar_lea.vmem [#allocation0], 327
    %659 = vst.msk [vmem:[%s658] ss:$8 sm:$0xf] %vm657, %v656
    %s660 = scalar_lea.vmem [#allocation0], 327
    %661 = vst.msk [vmem:[%s660] ss:$8 sm:$0xf0] %vm657, %v656
    %s662 = scalar_lea.vmem [#allocation1], 48
    %v663 = vld [vmem:[%s662] sm:$0xff]
    %664 = vrot.lane.b32.xlu0 %v663, 72
    %v665 = vpop.permute.xlu0 %664
    %vm666 = vcmask 64512
    %s667 = scalar_lea.vmem [#allocation0], 391
    %668 = vst.msk [vmem:[%s667] ss:$8 sm:$0xf] %vm666, %v665
    %s669 = scalar_lea.vmem [#allocation0], 391
    %670 = vst.msk [vmem:[%s669] ss:$8 sm:$0xf0] %vm666, %v665
    %s671 = scalar_lea.vmem [#allocation1], 56
    %v672 = vld [vmem:[%s671] sm:$0xff]
    %673 = vrot.lane.b32.xlu0 %v672, 72
    %v674 = vpop.permute.xlu0 %673
    %vm675 = vcmask 64512
    %s676 = scalar_lea.vmem [#allocation0], 455
    %677 = vst.msk [vmem:[%s676] ss:$8 sm:$0xf] %vm675, %v674
    %s678 = scalar_lea.vmem [#allocation0], 455
    %679 = vst.msk [vmem:[%s678] ss:$8 sm:$0xf0] %vm675, %v674
    %s681 = smul.u32 4, 2
    %s682 = sshll.u32 1, %s681
    %s683 = ssub.s32 %s682, 1
    %s684 = sshrl.u32 %s681, 1
    %v685 = vld [vmem:[#allocation0] sm:%s683]
    %v686 = vpack.c.bf16 0.0, %v685
    %s687 = sshll.u32 1, %s684
    %s688 = ssub.s32 %s687, 1
    %689 = vst [vmem:[%s1] sm:%s688] %v686
    %s690 = scalar_lea.vmem [#allocation0], 8
    %v691 = vld [vmem:[%s690] sm:%s683]
    %v692 = vpack.c.bf16 0.0, %v691
    %s693 = sshll.u32 1, %s684
    %s694 = ssub.s32 %s693, 1
    %s695 = scalar_lea.vmem %s1, 4
    %696 = vst [vmem:[%s695] sm:%s694] %v692
    %s697 = scalar_lea.vmem [#allocation0], 16
    %v698 = vld [vmem:[%s697] sm:%s683]
    %v699 = vpack.c.bf16 0.0, %v698
    %s700 = sshll.u32 1, %s684
    %s701 = ssub.s32 %s700, 1
    %s702 = smul.addr 4, 2
    %s703 = scalar_lea.vmem %s1, %s702
    %704 = vst [vmem:[%s703] sm:%s701] %v699
    %s705 = scalar_lea.vmem [#allocation0], 24
    %v706 = vld [vmem:[%s705] sm:%s683]
    %v707 = vpack.c.bf16 0.0, %v706
    %s708 = sshll.u32 1, %s684
    %s709 = ssub.s32 %s708, 1
    %s710 = smul.addr 4, 3
    %s711 = scalar_lea.vmem %s1, %s710
    %712 = vst [vmem:[%s711] sm:%s709] %v707
    %s713 = scalar_lea.vmem [#allocation0], 32
    %v714 = vld [vmem:[%s713] sm:%s683]
    %v715 = vpack.c.bf16 0.0, %v714
    %s716 = sshll.u32 1, %s684
    %s717 = ssub.s32 %s716, 1
    %s718 = smul.addr 4, 4
    %s719 = scalar_lea.vmem %s1, %s718
    %720 = vst [vmem:[%s719] sm:%s717] %v715
    %s721 = scalar_lea.vmem [#allocation0], 40
    %v722 = vld [vmem:[%s721] sm:%s683]
    %v723 = vpack.c.bf16 0.0, %v722
    %s724 = sshll.u32 1, %s684
    %s725 = ssub.s32 %s724, 1
    %s726 = smul.addr 4, 5
    %s727 = scalar_lea.vmem %s1, %s726
    %728 = vst [vmem:[%s727] sm:%s725] %v723
    %s729 = scalar_lea.vmem [#allocation0], 48
    %v730 = vld [vmem:[%s729] sm:%s683]
    %v731 = vpack.c.bf16 0.0, %v730
    %s732 = sshll.u32 1, %s684
    %s733 = ssub.s32 %s732, 1
    %s734 = smul.addr 4, 6
    %s735 = scalar_lea.vmem %s1, %s734
    %736 = vst [vmem:[%s735] sm:%s733] %v731
    %s737 = scalar_lea.vmem [#allocation0], 56
    %v738 = vld [vmem:[%s737] sm:%s683]
    %v739 = vpack.c.bf16 0.0, %v738
    %s740 = sshll.u32 1, %s684
    %s741 = ssub.s32 %s740, 1
    %s742 = smul.addr 4, 7
    %s743 = scalar_lea.vmem %s1, %s742
    %744 = vst [vmem:[%s743] sm:%s741] %v739
    %s745 = scalar_lea.vmem [#allocation0], 64
    %v746 = vld [vmem:[%s745] sm:%s683]
    %v747 = vpack.c.bf16 0.0, %v746
    %s748 = sshll.u32 1, %s684
    %s749 = ssub.s32 %s748, 1
    %s750 = smul.addr 4, 8
    %s751 = scalar_lea.vmem %s1, %s750
    %752 = vst [vmem:[%s751] sm:%s749] %v747
    %s753 = scalar_lea.vmem [#allocation0], 72
    %v754 = vld [vmem:[%s753] sm:%s683]
    %v755 = vpack.c.bf16 0.0, %v754
    %s756 = sshll.u32 1, %s684
    %s757 = ssub.s32 %s756, 1
    %s758 = smul.addr 4, 9
    %s759 = scalar_lea.vmem %s1, %s758
    %760 = vst [vmem:[%s759] sm:%s757] %v755
    %s761 = scalar_lea.vmem [#allocation0], 80
    %v762 = vld [vmem:[%s761] sm:%s683]
    %v763 = vpack.c.bf16 0.0, %v762
    %s764 = sshll.u32 1, %s684
    %s765 = ssub.s32 %s764, 1
    %s766 = smul.addr 4, 10
    %s767 = scalar_lea.vmem %s1, %s766
    %768 = vst [vmem:[%s767] sm:%s765] %v763
    %s769 = scalar_lea.vmem [#allocation0], 88
    %v770 = vld [vmem:[%s769] sm:%s683]
    %v771 = vpack.c.bf16 0.0, %v770
    %s772 = sshll.u32 1, %s684
    %s773 = ssub.s32 %s772, 1
    %s774 = smul.addr 4, 11
    %s775 = scalar_lea.vmem %s1, %s774
    %776 = vst [vmem:[%s775] sm:%s773] %v771
    %s777 = scalar_lea.vmem [#allocation0], 96
    %v778 = vld [vmem:[%s777] sm:%s683]
    %v779 = vpack.c.bf16 0.0, %v778
    %s780 = sshll.u32 1, %s684
    %s781 = ssub.s32 %s780, 1
    %s782 = smul.addr 4, 12
    %s783 = scalar_lea.vmem %s1, %s782
    %784 = vst [vmem:[%s783] sm:%s781] %v779
    %s785 = scalar_lea.vmem [#allocation0], 104
    %v786 = vld [vmem:[%s785] sm:%s683]
    %v787 = vpack.c.bf16 0.0, %v786
    %s788 = sshll.u32 1, %s684
    %s789 = ssub.s32 %s788, 1
    %s790 = smul.addr 4, 13
    %s791 = scalar_lea.vmem %s1, %s790
    %792 = vst [vmem:[%s791] sm:%s789] %v787
    %s793 = scalar_lea.vmem [#allocation0], 112
    %v794 = vld [vmem:[%s793] sm:%s683]
    %v795 = vpack.c.bf16 0.0, %v794
    %s796 = sshll.u32 1, %s684
    %s797 = ssub.s32 %s796, 1
    %s798 = smul.addr 4, 14
    %s799 = scalar_lea.vmem %s1, %s798
    %800 = vst [vmem:[%s799] sm:%s797] %v795
    %s801 = scalar_lea.vmem [#allocation0], 120
    %v802 = vld [vmem:[%s801] sm:%s683]
    %v803 = vpack.c.bf16 0.0, %v802
    %s804 = sshll.u32 1, %s684
    %s805 = ssub.s32 %s804, 1
    %s806 = smul.addr 4, 15
    %s807 = scalar_lea.vmem %s1, %s806
    %808 = vst [vmem:[%s807] sm:%s805] %v803
    %s809 = scalar_lea.vmem [#allocation0], 128
    %v810 = vld [vmem:[%s809] sm:%s683]
    %v811 = vpack.c.bf16 0.0, %v810
    %s812 = sshll.u32 1, %s684
    %s813 = ssub.s32 %s812, 1
    %s814 = smul.addr 4, 16
    %s815 = scalar_lea.vmem %s1, %s814
    %816 = vst [vmem:[%s815] sm:%s813] %v811
    %s817 = scalar_lea.vmem [#allocation0], 136
    %v818 = vld [vmem:[%s817] sm:%s683]
    %v819 = vpack.c.bf16 0.0, %v818
    %s820 = sshll.u32 1, %s684
    %s821 = ssub.s32 %s820, 1
    %s822 = smul.addr 4, 17
    %s823 = scalar_lea.vmem %s1, %s822
    %824 = vst [vmem:[%s823] sm:%s821] %v819
    %s825 = scalar_lea.vmem [#allocation0], 144
    %v826 = vld [vmem:[%s825] sm:%s683]
    %v827 = vpack.c.bf16 0.0, %v826
    %s828 = sshll.u32 1, %s684
    %s829 = ssub.s32 %s828, 1
    %s830 = smul.addr 4, 18
    %s831 = scalar_lea.vmem %s1, %s830
    %832 = vst [vmem:[%s831] sm:%s829] %v827
    %s833 = scalar_lea.vmem [#allocation0], 152
    %v834 = vld [vmem:[%s833] sm:%s683]
    %v835 = vpack.c.bf16 0.0, %v834
    %s836 = sshll.u32 1, %s684
    %s837 = ssub.s32 %s836, 1
    %s838 = smul.addr 4, 19
    %s839 = scalar_lea.vmem %s1, %s838
    %840 = vst [vmem:[%s839] sm:%s837] %v835
    %s841 = scalar_lea.vmem [#allocation0], 160
    %v842 = vld [vmem:[%s841] sm:%s683]
    %v843 = vpack.c.bf16 0.0, %v842
    %s844 = sshll.u32 1, %s684
    %s845 = ssub.s32 %s844, 1
    %s846 = smul.addr 4, 20
    %s847 = scalar_lea.vmem %s1, %s846
    %848 = vst [vmem:[%s847] sm:%s845] %v843
    %s849 = scalar_lea.vmem [#allocation0], 168
    %v850 = vld [vmem:[%s849] sm:%s683]
    %v851 = vpack.c.bf16 0.0, %v850
    %s852 = sshll.u32 1, %s684
    %s853 = ssub.s32 %s852, 1
    %s854 = smul.addr 4, 21
    %s855 = scalar_lea.vmem %s1, %s854
    %856 = vst [vmem:[%s855] sm:%s853] %v851
    %s857 = scalar_lea.vmem [#allocation0], 176
    %v858 = vld [vmem:[%s857] sm:%s683]
    %v859 = vpack.c.bf16 0.0, %v858
    %s860 = sshll.u32 1, %s684
    %s861 = ssub.s32 %s860, 1
    %s862 = smul.addr 4, 22
    %s863 = scalar_lea.vmem %s1, %s862
    %864 = vst [vmem:[%s863] sm:%s861] %v859
    %s865 = scalar_lea.vmem [#allocation0], 184
    %v866 = vld [vmem:[%s865] sm:%s683]
    %v867 = vpack.c.bf16 0.0, %v866
    %s868 = sshll.u32 1, %s684
    %s869 = ssub.s32 %s868, 1
    %s870 = smul.addr 4, 23
    %s871 = scalar_lea.vmem %s1, %s870
    %872 = vst [vmem:[%s871] sm:%s869] %v867
    %s873 = scalar_lea.vmem [#allocation0], 192
    %v874 = vld [vmem:[%s873] sm:%s683]
    %v875 = vpack.c.bf16 0.0, %v874
    %s876 = sshll.u32 1, %s684
    %s877 = ssub.s32 %s876, 1
    %s878 = smul.addr 4, 24
    %s879 = scalar_lea.vmem %s1, %s878
    %880 = vst [vmem:[%s879] sm:%s877] %v875
    %s881 = scalar_lea.vmem [#allocation0], 200
    %v882 = vld [vmem:[%s881] sm:%s683]
    %v883 = vpack.c.bf16 0.0, %v882
    %s884 = sshll.u32 1, %s684
    %s885 = ssub.s32 %s884, 1
    %s886 = smul.addr 4, 25
    %s887 = scalar_lea.vmem %s1, %s886
    %888 = vst [vmem:[%s887] sm:%s885] %v883
    %s889 = scalar_lea.vmem [#allocation0], 208
    %v890 = vld [vmem:[%s889] sm:%s683]
    %v891 = vpack.c.bf16 0.0, %v890
    %s892 = sshll.u32 1, %s684
    %s893 = ssub.s32 %s892, 1
    %s894 = smul.addr 4, 26
    %s895 = scalar_lea.vmem %s1, %s894
    %896 = vst [vmem:[%s895] sm:%s893] %v891
    %s897 = scalar_lea.vmem [#allocation0], 216
    %v898 = vld [vmem:[%s897] sm:%s683]
    %v899 = vpack.c.bf16 0.0, %v898
    %s900 = sshll.u32 1, %s684
    %s901 = ssub.s32 %s900, 1
    %s902 = smul.addr 4, 27
    %s903 = scalar_lea.vmem %s1, %s902
    %904 = vst [vmem:[%s903] sm:%s901] %v899
    %s905 = scalar_lea.vmem [#allocation0], 224
    %v906 = vld [vmem:[%s905] sm:%s683]
    %v907 = vpack.c.bf16 0.0, %v906
    %s908 = sshll.u32 1, %s684
    %s909 = ssub.s32 %s908, 1
    %s910 = smul.addr 4, 28
    %s911 = scalar_lea.vmem %s1, %s910
    %912 = vst [vmem:[%s911] sm:%s909] %v907
    %s913 = scalar_lea.vmem [#allocation0], 232
    %v914 = vld [vmem:[%s913] sm:%s683]
    %v915 = vpack.c.bf16 0.0, %v914
    %s916 = sshll.u32 1, %s684
    %s917 = ssub.s32 %s916, 1
    %s918 = smul.addr 4, 29
    %s919 = scalar_lea.vmem %s1, %s918
    %920 = vst [vmem:[%s919] sm:%s917] %v915
    %s921 = scalar_lea.vmem [#allocation0], 240
    %v922 = vld [vmem:[%s921] sm:%s683]
    %v923 = vpack.c.bf16 0.0, %v922
    %s924 = sshll.u32 1, %s684
    %s925 = ssub.s32 %s924, 1
    %s926 = smul.addr 4, 30
    %s927 = scalar_lea.vmem %s1, %s926
    %928 = vst [vmem:[%s927] sm:%s925] %v923
    %s929 = scalar_lea.vmem [#allocation0], 248
    %v930 = vld [vmem:[%s929] sm:%s683]
    %v931 = vpack.c.bf16 0.0, %v930
    %s932 = sshll.u32 1, %s684
    %s933 = ssub.s32 %s932, 1
    %s934 = smul.addr 4, 31
    %s935 = scalar_lea.vmem %s1, %s934
    %936 = vst [vmem:[%s935] sm:%s933] %v931
    %s937 = scalar_lea.vmem [#allocation0], 256
    %v938 = vld [vmem:[%s937] sm:%s683]
    %v939 = vpack.c.bf16 0.0, %v938
    %s940 = sshll.u32 1, %s684
    %s941 = ssub.s32 %s940, 1
    %s942 = smul.addr 4, 32
    %s943 = scalar_lea.vmem %s1, %s942
    %944 = vst [vmem:[%s943] sm:%s941] %v939
    %s945 = scalar_lea.vmem [#allocation0], 264
    %v946 = vld [vmem:[%s945] sm:%s683]
    %v947 = vpack.c.bf16 0.0, %v946
    %s948 = sshll.u32 1, %s684
    %s949 = ssub.s32 %s948, 1
    %s950 = smul.addr 4, 33
    %s951 = scalar_lea.vmem %s1, %s950
    %952 = vst [vmem:[%s951] sm:%s949] %v947
    %s953 = scalar_lea.vmem [#allocation0], 272
    %v954 = vld [vmem:[%s953] sm:%s683]
    %v955 = vpack.c.bf16 0.0, %v954
    %s956 = sshll.u32 1, %s684
    %s957 = ssub.s32 %s956, 1
    %s958 = smul.addr 4, 34
    %s959 = scalar_lea.vmem %s1, %s958
    %960 = vst [vmem:[%s959] sm:%s957] %v955
    %s961 = scalar_lea.vmem [#allocation0], 280
    %v962 = vld [vmem:[%s961] sm:%s683]
    %v963 = vpack.c.bf16 0.0, %v962
    %s964 = sshll.u32 1, %s684
    %s965 = ssub.s32 %s964, 1
    %s966 = smul.addr 4, 35
    %s967 = scalar_lea.vmem %s1, %s966
    %968 = vst [vmem:[%s967] sm:%s965] %v963
    %s969 = scalar_lea.vmem [#allocation0], 288
    %v970 = vld [vmem:[%s969] sm:%s683]
    %v971 = vpack.c.bf16 0.0, %v970
    %s972 = sshll.u32 1, %s684
    %s973 = ssub.s32 %s972, 1
    %s974 = smul.addr 4, 36
    %s975 = scalar_lea.vmem %s1, %s974
    %976 = vst [vmem:[%s975] sm:%s973] %v971
    %s977 = scalar_lea.vmem [#allocation0], 296
    %v978 = vld [vmem:[%s977] sm:%s683]
    %v979 = vpack.c.bf16 0.0, %v978
    %s980 = sshll.u32 1, %s684
    %s981 = ssub.s32 %s980, 1
    %s982 = smul.addr 4, 37
    %s983 = scalar_lea.vmem %s1, %s982
    %984 = vst [vmem:[%s983] sm:%s981] %v979
    %s985 = scalar_lea.vmem [#allocation0], 304
    %v986 = vld [vmem:[%s985] sm:%s683]
    %v987 = vpack.c.bf16 0.0, %v986
    %s988 = sshll.u32 1, %s684
    %s989 = ssub.s32 %s988, 1
    %s990 = smul.addr 4, 38
    %s991 = scalar_lea.vmem %s1, %s990
    %992 = vst [vmem:[%s991] sm:%s989] %v987
    %s993 = scalar_lea.vmem [#allocation0], 312
    %v994 = vld [vmem:[%s993] sm:%s683]
    %v995 = vpack.c.bf16 0.0, %v994
    %s996 = sshll.u32 1, %s684
    %s997 = ssub.s32 %s996, 1
    %s998 = smul.addr 4, 39
    %s999 = scalar_lea.vmem %s1, %s998
    %1000 = vst [vmem:[%s999] sm:%s997] %v995
    %s1001 = scalar_lea.vmem [#allocation0], 320
    %v1002 = vld [vmem:[%s1001] sm:%s683]
    %v1003 = vpack.c.bf16 0.0, %v1002
    %s1004 = sshll.u32 1, %s684
    %s1005 = ssub.s32 %s1004, 1
    %s1006 = smul.addr 4, 40
    %s1007 = scalar_lea.vmem %s1, %s1006
    %1008 = vst [vmem:[%s1007] sm:%s1005] %v1003
    %s1009 = scalar_lea.vmem [#allocation0], 328
    %v1010 = vld [vmem:[%s1009] sm:%s683]
    %v1011 = vpack.c.bf16 0.0, %v1010
    %s1012 = sshll.u32 1, %s684
    %s1013 = ssub.s32 %s1012, 1
    %s1014 = smul.addr 4, 41
    %s1015 = scalar_lea.vmem %s1, %s1014
    %1016 = vst [vmem:[%s1015] sm:%s1013] %v1011
    %s1017 = scalar_lea.vmem [#allocation0], 336
    %v1018 = vld [vmem:[%s1017] sm:%s683]
    %v1019 = vpack.c.bf16 0.0, %v1018
    %s1020 = sshll.u32 1, %s684
    %s1021 = ssub.s32 %s1020, 1
    %s1022 = smul.addr 4, 42
    %s1023 = scalar_lea.vmem %s1, %s1022
    %1024 = vst [vmem:[%s1023] sm:%s1021] %v1019
    %s1025 = scalar_lea.vmem [#allocation0], 344
    %v1026 = vld [vmem:[%s1025] sm:%s683]
    %v1027 = vpack.c.bf16 0.0, %v1026
    %s1028 = sshll.u32 1, %s684
    %s1029 = ssub.s32 %s1028, 1
    %s1030 = smul.addr 4, 43
    %s1031 = scalar_lea.vmem %s1, %s1030
    %1032 = vst [vmem:[%s1031] sm:%s1029] %v1027
    %s1033 = scalar_lea.vmem [#allocation0], 352
    %v1034 = vld [vmem:[%s1033] sm:%s683]
    %v1035 = vpack.c.bf16 0.0, %v1034
    %s1036 = sshll.u32 1, %s684
    %s1037 = ssub.s32 %s1036, 1
    %s1038 = smul.addr 4, 44
    %s1039 = scalar_lea.vmem %s1, %s1038
    %1040 = vst [vmem:[%s1039] sm:%s1037] %v1035
    %s1041 = scalar_lea.vmem [#allocation0], 360
    %v1042 = vld [vmem:[%s1041] sm:%s683]
    %v1043 = vpack.c.bf16 0.0, %v1042
    %s1044 = sshll.u32 1, %s684
    %s1045 = ssub.s32 %s1044, 1
    %s1046 = smul.addr 4, 45
    %s1047 = scalar_lea.vmem %s1, %s1046
    %1048 = vst [vmem:[%s1047] sm:%s1045] %v1043
    %s1049 = scalar_lea.vmem [#allocation0], 368
    %v1050 = vld [vmem:[%s1049] sm:%s683]
    %v1051 = vpack.c.bf16 0.0, %v1050
    %s1052 = sshll.u32 1, %s684
    %s1053 = ssub.s32 %s1052, 1
    %s1054 = smul.addr 4, 46
    %s1055 = scalar_lea.vmem %s1, %s1054
    %1056 = vst [vmem:[%s1055] sm:%s1053] %v1051
    %s1057 = scalar_lea.vmem [#allocation0], 376
    %v1058 = vld [vmem:[%s1057] sm:%s683]
    %v1059 = vpack.c.bf16 0.0, %v1058
    %s1060 = sshll.u32 1, %s684
    %s1061 = ssub.s32 %s1060, 1
    %s1062 = smul.addr 4, 47
    %s1063 = scalar_lea.vmem %s1, %s1062
    %1064 = vst [vmem:[%s1063] sm:%s1061] %v1059
    %s1065 = scalar_lea.vmem [#allocation0], 384
    %v1066 = vld [vmem:[%s1065] sm:%s683]
    %v1067 = vpack.c.bf16 0.0, %v1066
    %s1068 = sshll.u32 1, %s684
    %s1069 = ssub.s32 %s1068, 1
    %s1070 = smul.addr 4, 48
    %s1071 = scalar_lea.vmem %s1, %s1070
    %1072 = vst [vmem:[%s1071] sm:%s1069] %v1067
    %s1073 = scalar_lea.vmem [#allocation0], 392
    %v1074 = vld [vmem:[%s1073] sm:%s683]
    %v1075 = vpack.c.bf16 0.0, %v1074
    %s1076 = sshll.u32 1, %s684
    %s1077 = ssub.s32 %s1076, 1
    %s1078 = smul.addr 4, 49
    %s1079 = scalar_lea.vmem %s1, %s1078
    %1080 = vst [vmem:[%s1079] sm:%s1077] %v1075
    %s1081 = scalar_lea.vmem [#allocation0], 400
    %v1082 = vld [vmem:[%s1081] sm:%s683]
    %v1083 = vpack.c.bf16 0.0, %v1082
    %s1084 = sshll.u32 1, %s684
    %s1085 = ssub.s32 %s1084, 1
    %s1086 = smul.addr 4, 50
    %s1087 = scalar_lea.vmem %s1, %s1086
    %1088 = vst [vmem:[%s1087] sm:%s1085] %v1083
    %s1089 = scalar_lea.vmem [#allocation0], 408
    %v1090 = vld [vmem:[%s1089] sm:%s683]
    %v1091 = vpack.c.bf16 0.0, %v1090
    %s1092 = sshll.u32 1, %s684
    %s1093 = ssub.s32 %s1092, 1
    %s1094 = smul.addr 4, 51
    %s1095 = scalar_lea.vmem %s1, %s1094
    %1096 = vst [vmem:[%s1095] sm:%s1093] %v1091
    %s1097 = scalar_lea.vmem [#allocation0], 416
    %v1098 = vld [vmem:[%s1097] sm:%s683]
    %v1099 = vpack.c.bf16 0.0, %v1098
    %s1100 = sshll.u32 1, %s684
    %s1101 = ssub.s32 %s1100, 1
    %s1102 = smul.addr 4, 52
    %s1103 = scalar_lea.vmem %s1, %s1102
    %1104 = vst [vmem:[%s1103] sm:%s1101] %v1099
    %s1105 = scalar_lea.vmem [#allocation0], 424
    %v1106 = vld [vmem:[%s1105] sm:%s683]
    %v1107 = vpack.c.bf16 0.0, %v1106
    %s1108 = sshll.u32 1, %s684
    %s1109 = ssub.s32 %s1108, 1
    %s1110 = smul.addr 4, 53
    %s1111 = scalar_lea.vmem %s1, %s1110
    %1112 = vst [vmem:[%s1111] sm:%s1109] %v1107
    %s1113 = scalar_lea.vmem [#allocation0], 432
    %v1114 = vld [vmem:[%s1113] sm:%s683]
    %v1115 = vpack.c.bf16 0.0, %v1114
    %s1116 = sshll.u32 1, %s684
    %s1117 = ssub.s32 %s1116, 1
    %s1118 = smul.addr 4, 54
    %s1119 = scalar_lea.vmem %s1, %s1118
    %1120 = vst [vmem:[%s1119] sm:%s1117] %v1115
    %s1121 = scalar_lea.vmem [#allocation0], 440
    %v1122 = vld [vmem:[%s1121] sm:%s683]
    %v1123 = vpack.c.bf16 0.0, %v1122
    %s1124 = sshll.u32 1, %s684
    %s1125 = ssub.s32 %s1124, 1
    %s1126 = smul.addr 4, 55
    %s1127 = scalar_lea.vmem %s1, %s1126
    %1128 = vst [vmem:[%s1127] sm:%s1125] %v1123
    %s1129 = scalar_lea.vmem [#allocation0], 448
    %v1130 = vld [vmem:[%s1129] sm:%s683]
    %v1131 = vpack.c.bf16 0.0, %v1130
    %s1132 = sshll.u32 1, %s684
    %s1133 = ssub.s32 %s1132, 1
    %s1134 = smul.addr 4, 56
    %s1135 = scalar_lea.vmem %s1, %s1134
    %1136 = vst [vmem:[%s1135] sm:%s1133] %v1131
    %s1137 = scalar_lea.vmem [#allocation0], 456
    %v1138 = vld [vmem:[%s1137] sm:%s683]
    %v1139 = vpack.c.bf16 0.0, %v1138
    %s1140 = sshll.u32 1, %s684
    %s1141 = ssub.s32 %s1140, 1
    %s1142 = smul.addr 4, 57
    %s1143 = scalar_lea.vmem %s1, %s1142
    %1144 = vst [vmem:[%s1143] sm:%s1141] %v1139
    %s1145 = scalar_lea.vmem [#allocation0], 464
    %v1146 = vld [vmem:[%s1145] sm:%s683]
    %v1147 = vpack.c.bf16 0.0, %v1146
    %s1148 = sshll.u32 1, %s684
    %s1149 = ssub.s32 %s1148, 1
    %s1150 = smul.addr 4, 58
    %s1151 = scalar_lea.vmem %s1, %s1150
    %1152 = vst [vmem:[%s1151] sm:%s1149] %v1147
    %s1153 = scalar_lea.vmem [#allocation0], 472
    %v1154 = vld [vmem:[%s1153] sm:%s683]
    %v1155 = vpack.c.bf16 0.0, %v1154
    %s1156 = sshll.u32 1, %s684
    %s1157 = ssub.s32 %s1156, 1
    %s1158 = smul.addr 4, 59
    %s1159 = scalar_lea.vmem %s1, %s1158
    %1160 = vst [vmem:[%s1159] sm:%s1157] %v1155
    %s1161 = scalar_lea.vmem [#allocation0], 480
    %v1162 = vld [vmem:[%s1161] sm:%s683]
    %v1163 = vpack.c.bf16 0.0, %v1162
    %s1164 = sshll.u32 1, %s684
    %s1165 = ssub.s32 %s1164, 1
    %s1166 = smul.addr 4, 60
    %s1167 = scalar_lea.vmem %s1, %s1166
    %1168 = vst [vmem:[%s1167] sm:%s1165] %v1163
    %s1169 = scalar_lea.vmem [#allocation0], 488
    %v1170 = vld [vmem:[%s1169] sm:%s683]
    %v1171 = vpack.c.bf16 0.0, %v1170
    %s1172 = sshll.u32 1, %s684
    %s1173 = ssub.s32 %s1172, 1
    %s1174 = smul.addr 4, 61
    %s1175 = scalar_lea.vmem %s1, %s1174
    %1176 = vst [vmem:[%s1175] sm:%s1173] %v1171
    %s1177 = scalar_lea.vmem [#allocation0], 496
    %v1178 = vld [vmem:[%s1177] sm:%s683]
    %v1179 = vpack.c.bf16 0.0, %v1178
    %s1180 = sshll.u32 1, %s684
    %s1181 = ssub.s32 %s1180, 1
    %s1182 = smul.addr 4, 62
    %s1183 = scalar_lea.vmem %s1, %s1182
    %1184 = vst [vmem:[%s1183] sm:%s1181] %v1179
    %s1185 = scalar_lea.vmem [#allocation0], 504
    %v1186 = vld [vmem:[%s1185] sm:%s683]
    %v1187 = vpack.c.bf16 0.0, %v1186
    %s1188 = sshll.u32 1, %s684
    %s1189 = ssub.s32 %s1188, 1
    %s1190 = smul.addr 4, 63
    %s1191 = scalar_lea.vmem %s1, %s1190
    %1192 = vst [vmem:[%s1191] sm:%s1189] %v1187

// kernel: uninext_forward.11
$region0: #{uninext_forward.11}
  #allocation0 [shape = 'u32[]', space=smem, size = 0x4, offset = 0x4, fixed_abs, tag = 'smem constant byte address 0x4 - core index']
  #allocation1 [shape = 'u32[144,128]{1,0:T(1,128)}', space=vmem, size = 0x12000, scoped, tag = 'internal scratch']
  %s0 = inlined_call_operand.vmem [shape: f32[32,16,8], index: 0, kind: input, shape index: {}]
  %s1 = inlined_call_operand.vmem [shape: f32[32,16,8], index: 1, kind: input, shape index: {}]
  %s2 = inlined_call_operand.vmem [shape: f32[32,16,8], index: 2, kind: input, shape index: {}]
  %s3 = inlined_call_operand.vmem [shape: f32[32,16,16], index: 3, kind: input, shape index: {}]
  %s4 = inlined_call_operand.vmem [shape: f32[32,16,8], index: 4, kind: output, shape index: {}]
  %s5 = sld [smem:[#allocation0]]
  $region49: #{uninext_forward.11} parent=0
    _
  %s7 = ssub.s32 1, %s5
  %s8 = scalar_select 0, %s7, %s5
  loop: start=0, step=1, limit=4
  $region2: #{uninext_forward.11} parent=0 // loop_pre_header
    _
  $region3: #{uninext_forward.11} parent=0 // loop_header
    %s10 = sphi 0, %s14
    %p11 = scmp.ge.s32.totalorder %s10, 4
    %s20 = sphi 0, %s22
    %s23 = sphi 0, %s20
    %s24 = sphi 0, %s23
    %s40 = sphi 0, %s24
    %s46 = sphi 0, %s48
    %s49 = sphi 0, %s46
    %s50 = sphi 0, %s49
    %s66 = sphi 0, %s50
    %s72 = sphi 0, %s74
    %s75 = sphi 0, %s72
    %s76 = sphi 0, %s75
    %s92 = sphi 0, %s76
    %s98 = sphi 0, %s100
    %s101 = sphi 0, %s98
    %s102 = sphi 0, %s101
    %s118 = sphi 0, %s102
    %s124 = sphi 0, %s126
    %s127 = sphi 0, %s124
    %s128 = sphi 0, %s127
    %s144 = sphi 0, %s128
  $region4: #{uninext_forward.11} parent=0 // loop_header_branch
    %13 = sbr.rel (%p11) target = $region8
  $region5: #{uninext_forward.11} parent=0 // loop_body
    %s15 = ssub.s32 %s10, 1
    %s16 = ssub.s32 %s10, 2
    %s17 = sadd.s32 %s10, 1
    %s18 = ssub.s32 %s10, %s17
    %p19 = scmp.eq.s32.totalorder %s18, 0
    %s21 = sadd.s32 %s20, 1
    %s22 = scalar_select %p19, %s20, %s21
    %p25 = pneg %p19
    %p26 = scmp.eq.s32.totalorder %s10, 1
    %p27 = por %p25, %p26
    %p28 = scmp.ne.s32.totalorder %s20, %s23
    %p29 = scmp.eq.s32.totalorder %s10, 0
    %p30 = por %p28, %p29
    %p31 = scmp.ne.s32.totalorder %s20, %s23
    %p32 = scmp.eq.s32.totalorder %s15, 1
    %p33 = por %p31, %p32
    %p34 = scmp.ne.s32.totalorder %s23, %s24
    %p35 = scmp.eq.s32.totalorder %s15, 0
    %p36 = por %p34, %p35
    %p37 = scmp.ne.s32.totalorder %s23, %s24
    %p38 = scmp.eq.s32.totalorder %s16, 1
    %p39 = por %p37, %p38
    %p41 = scmp.ne.s32.totalorder %s24, %s40
    %p42 = scmp.eq.s32.totalorder %s16, 0
    %p43 = por %p41, %p42
    %s44 = ssub.s32 %s10, %s17
    %p45 = scmp.eq.s32.totalorder %s44, 0
    %s47 = sadd.s32 %s46, 1
    %s48 = scalar_select %p45, %s46, %s47
    %p51 = pneg %p45
    %p52 = scmp.eq.s32.totalorder %s10, 1
    %p53 = por %p51, %p52
    %p54 = scmp.ne.s32.totalorder %s46, %s49
    %p55 = scmp.eq.s32.totalorder %s10, 0
    %p56 = por %p54, %p55
    %p57 = scmp.ne.s32.totalorder %s46, %s49
    %p58 = scmp.eq.s32.totalorder %s15, 1
    %p59 = por %p57, %p58
    %p60 = scmp.ne.s32.totalorder %s49, %s50
    %p61 = scmp.eq.s32.totalorder %s15, 0
    %p62 = por %p60, %p61
    %p63 = scmp.ne.s32.totalorder %s49, %s50
    %p64 = scmp.eq.s32.totalorder %s16, 1
    %p65 = por %p63, %p64
    %p67 = scmp.ne.s32.totalorder %s50, %s66
    %p68 = scmp.eq.s32.totalorder %s16, 0
    %p69 = por %p67, %p68
    %s70 = ssub.s32 %s10, %s17
    %p71 = scmp.eq.s32.totalorder %s70, 0
    %s73 = sadd.s32 %s72, 1
    %s74 = scalar_select %p71, %s72, %s73
    %p77 = pneg %p71
    %p78 = scmp.eq.s32.totalorder %s10, 1
    %p79 = por %p77, %p78
    %p80 = scmp.ne.s32.totalorder %s72, %s75
    %p81 = scmp.eq.s32.totalorder %s10, 0
    %p82 = por %p80, %p81
    %p83 = scmp.ne.s32.totalorder %s72, %s75
    %p84 = scmp.eq.s32.totalorder %s15, 1
    %p85 = por %p83, %p84
    %p86 = scmp.ne.s32.totalorder %s75, %s76
    %p87 = scmp.eq.s32.totalorder %s15, 0
    %p88 = por %p86, %p87
    %p89 = scmp.ne.s32.totalorder %s75, %s76
    %p90 = scmp.eq.s32.totalorder %s16, 1
    %p91 = por %p89, %p90
    %p93 = scmp.ne.s32.totalorder %s76, %s92
    %p94 = scmp.eq.s32.totalorder %s16, 0
    %p95 = por %p93, %p94
    %s96 = ssub.s32 %s10, %s17
    %p97 = scmp.eq.s32.totalorder %s96, 0
    %s99 = sadd.s32 %s98, 1
    %s100 = scalar_select %p97, %s98, %s99
    %p103 = pneg %p97
    %p104 = scmp.eq.s32.totalorder %s10, 1
    %p105 = por %p103, %p104
    %p106 = scmp.ne.s32.totalorder %s98, %s101
    %p107 = scmp.eq.s32.totalorder %s10, 0
    %p108 = por %p106, %p107
    %p109 = scmp.ne.s32.totalorder %s98, %s101
    %p110 = scmp.eq.s32.totalorder %s15, 1
    %p111 = por %p109, %p110
    %p112 = scmp.ne.s32.totalorder %s101, %s102
    %p113 = scmp.eq.s32.totalorder %s15, 0
    %p114 = por %p112, %p113
    %p115 = scmp.ne.s32.totalorder %s101, %s102
    %p116 = scmp.eq.s32.totalorder %s16, 1
    %p117 = por %p115, %p116
    %p119 = scmp.ne.s32.totalorder %s102, %s118
    %p120 = scmp.eq.s32.totalorder %s16, 0
    %p121 = por %p119, %p120
    %s122 = ssub.s32 %s10, %s17
    %p123 = scmp.eq.s32.totalorder %s122, 0
    %s125 = sadd.s32 %s124, 1
    %s126 = scalar_select %p123, %s124, %s125
    %p129 = pneg %p123
    %p130 = scmp.eq.s32.totalorder %s10, 1
    %p131 = por %p129, %p130
    %p132 = scmp.ne.s32.totalorder %s124, %s127
    %p133 = scmp.eq.s32.totalorder %s10, 0
    %p134 = por %p132, %p133
    %p135 = scmp.ne.s32.totalorder %s124, %s127
    %p136 = scmp.eq.s32.totalorder %s15, 1
    %p137 = por %p135, %p136
    %p138 = scmp.ne.s32.totalorder %s127, %s128
    %p139 = scmp.eq.s32.totalorder %s15, 0
    %p140 = por %p138, %p139
    %p141 = scmp.ne.s32.totalorder %s127, %s128
    %p142 = scmp.eq.s32.totalorder %s16, 1
    %p143 = por %p141, %p142
    %p145 = scmp.ne.s32.totalorder %s128, %s144
    %p146 = scmp.eq.s32.totalorder %s16, 0
    %p147 = por %p145, %p146
    %p148 = scmp.le.s32.totalorder 1, %s10
    %p149 = scmp.lt.s32.totalorder %s10, 3
    %p150 = pnand %p148, %p149
    %p151 = pneg %p150
    // Predicated region
    $region9: #{uninext_forward.11} parent=5 // pred_check
      _
    $region10: #{uninext_forward.11} parent=5 // pred_check_branch
      %153 = sbr.rel (%p150) target = $region12
    $region11: #{uninext_forward.11} parent=5 // pred_region
      %s154 = ssub.s32 %s10, 1
    $region12: #{uninext_forward.11} parent=5 // pred_fallthru
      _
    %p155 = scmp.lt.s32.totalorder %s10, 2
    // Predicated region
    $region13: #{uninext_forward.11} parent=5 // pred_check
      %p156 = pneg %p155
    $region14: #{uninext_forward.11} parent=5 // pred_check_branch
      %158 = sbr.rel (%p156) target = $region16
    $region15: #{uninext_forward.11} parent=5 // pred_region
      // Predicated region
      $region17: #{uninext_forward.11} parent=15 // pred_check
        %p159 = pneg %p30
      $region18: #{uninext_forward.11} parent=15 // pred_check_branch
        %161 = sbr.rel (%p159) target = $region20
      $region19: #{uninext_forward.11} parent=15 // pred_region
        %s162 = smul.u32 16, %s10
        %p163 = scmp.lt.s32.totalorder %s162, 31
        %s164 = scalar_select %p163, %s162, 31
        %s165 = smul.addr %s164, 2
        %s166 = smul.addr %s165, 8
        %s167 = scalar_lea.vmem %s0, %s166
        %s168 = smul.u32 16, %s10
      $region20: #{uninext_forward.11} parent=15 // pred_fallthru
        _
      // Predicated region
      $region21: #{uninext_forward.11} parent=15 // pred_check
        %p169 = pneg %p56
      $region22: #{uninext_forward.11} parent=15 // pred_check_branch
        %171 = sbr.rel (%p169) target = $region24
      $region23: #{uninext_forward.11} parent=15 // pred_region
        %s172 = smul.u32 16, %s10
        %p173 = scmp.lt.s32.totalorder %s172, 31
        %s174 = scalar_select %p173, %s172, 31
        %s175 = smul.addr %s174, 2
        %s176 = smul.addr %s175, 8
        %s177 = scalar_lea.vmem %s1, %s176
        %s178 = smul.u32 16, %s10
      $region24: #{uninext_forward.11} parent=15 // pred_fallthru
        _
      // Predicated region
      $region25: #{uninext_forward.11} parent=15 // pred_check
        %p179 = pneg %p82
      $region26: #{uninext_forward.11} parent=15 // pred_check_branch
        %181 = sbr.rel (%p179) target = $region28
      $region27: #{uninext_forward.11} parent=15 // pred_region
        %s182 = smul.u32 16, %s10
        %p183 = scmp.lt.s32.totalorder %s182, 31
        %s184 = scalar_select %p183, %s182, 31
        %s185 = smul.addr %s184, 2
        %s186 = smul.addr %s185, 8
        %s187 = scalar_lea.vmem %s2, %s186
        %s188 = smul.u32 16, %s10
      $region28: #{uninext_forward.11} parent=15 // pred_fallthru
        _
      // Predicated region
      $region29: #{uninext_forward.11} parent=15 // pred_check
        %p189 = pneg %p108
      $region30: #{uninext_forward.11} parent=15 // pred_check_branch
        %191 = sbr.rel (%p189) target = $region32
      $region31: #{uninext_forward.11} parent=15 // pred_region
        %s192 = smul.u32 16, %s10
        %p193 = scmp.lt.s32.totalorder %s192, 31
        %s194 = scalar_select %p193, %s192, 31
        %s195 = smul.addr %s194, 2
        %s196 = smul.addr %s195, 8
        %s197 = scalar_lea.vmem %s3, %s196
        %s198 = smul.u32 16, %s10
      $region32: #{uninext_forward.11} parent=15 // pred_fallthru
        _
    $region16: #{uninext_forward.11} parent=5 // pred_fallthru
      _
    %p199 = scmp.le.s32.totalorder 1, %s10
    %p200 = scmp.lt.s32.totalorder %s10, 3
    %p201 = pnand %p199, %p200
    %p202 = pneg %p201
    // Predicated region
    $region33: #{uninext_forward.11} parent=5 // pred_check
      _
    $region34: #{uninext_forward.11} parent=5 // pred_check_branch
      %204 = sbr.rel (%p201) target = $region36
    $region35: #{uninext_forward.11} parent=5 // pred_region
      %s205 = ssub.s32 %s10, 1
      %s206 = smul.u32 16, %s15
      %p207 = scmp.lt.s32.totalorder %s206, 31
      %s208 = scalar_select %p207, %s206, 31
      %s209 = smul.addr %s208, 2
      %s210 = smul.addr %s209, 8
      %s211 = scalar_lea.vmem %s0, %s210
      %p212 = pneg %p36
      %p213 = pneg %p33
      %s214 = smul.u32 16, %s15
      %p215 = scmp.lt.s32.totalorder %s214, 31
      %s216 = scalar_select %p215, %s214, 31
      %s217 = smul.addr %s216, 2
      %s218 = smul.addr %s217, 8
      %s219 = scalar_lea.vmem %s1, %s218
      %p220 = pneg %p62
      %p221 = pneg %p59
      %s222 = smul.u32 16, %s15
      %p223 = scmp.lt.s32.totalorder %s222, 31
      %s224 = scalar_select %p223, %s222, 31
      %s225 = smul.addr %s224, 2
      %s226 = smul.addr %s225, 8
      %s227 = scalar_lea.vmem %s2, %s226
      %p228 = pneg %p88
      %p229 = pneg %p85
      %s230 = smul.u32 16, %s15
      %p231 = scmp.lt.s32.totalorder %s230, 31
      %s232 = scalar_select %p231, %s230, 31
      %s233 = smul.addr %s232, 2
      %s234 = smul.addr %s233, 8
      %s235 = scalar_lea.vmem %s3, %s234
      %p236 = pneg %p114
      %p237 = pneg %p111
      %p238 = pneg %p140
      %p239 = pneg %p137
      %s240 = smul.u32 16, %s15
      %p241 = scmp.lt.s32.totalorder %s240, 31
      %s242 = scalar_select %p241, %s240, 31
      %s243 = smul.addr %s242, 2
      %s244 = smul.addr %s243, 8
      %s245 = scalar_lea.vmem %s4, %s244
      %s246 = smul.u32 16, %s15
      %p247 = scmp.lt.s32.totalorder %s246, 31
      %s248 = scalar_select %p247, %s246, 31
      %s249 = smul.addr %s248, 2
      %s250 = smul.addr %s249, 8
      %s251 = scalar_lea.vmem %s0, %s250
      %s252 = smul.u32 16, %s15
      %s253 = smul.u32 16, %s15
      %p254 = scmp.lt.s32.totalorder %s253, 31
      %s255 = scalar_select %p254, %s253, 31
      %s256 = smul.addr %s255, 2
      %s257 = smul.addr %s256, 8
      %s258 = scalar_lea.vmem %s1, %s257
      %s259 = smul.u32 16, %s15
      %s260 = smul.u32 16, %s15
      %p261 = scmp.lt.s32.totalorder %s260, 31
      %s262 = scalar_select %p261, %s260, 31
      %s263 = smul.addr %s262, 2
      %s264 = smul.addr %s263, 8
      %s265 = scalar_lea.vmem %s2, %s264
      %s266 = smul.u32 16, %s15
      %s267 = smul.u32 16, %s15
      %p268 = scmp.lt.s32.totalorder %s267, 31
      %s269 = scalar_select %p268, %s267, 31
      %s270 = smul.addr %s269, 2
      %s271 = smul.addr %s270, 8
      %s272 = scalar_lea.vmem %s3, %s271
      %s273 = smul.u32 16, %s15
      %s274 = smul.u32 16, %s15
      %p275 = scmp.lt.s32.totalorder %s274, 31
      %s276 = scalar_select %p275, %s274, 31
      %s277 = smul.addr %s276, 2
      %s278 = smul.addr %s277, 8
      %s279 = scalar_lea.vmem %s4, %s278
      %s280 = smul.u32 16, %s15
      %v282 = vld [vmem:[%s251] sm:$0xff]
      %v283 = vld [vmem:[%s251 + $0x8] sm:$0xff]
      %v284 = vld [vmem:[%s251 + $0x10] sm:$0xff]
      %v285 = vld [vmem:[%s251 + $0x18] sm:$0xff]
      %v286 = vld [vmem:[%s251 + $0x20] sm:$0xff]
      %v287 = vld [vmem:[%s251 + $0x28] sm:$0xff]
      %v288 = vld [vmem:[%s251 + $0x30] sm:$0xff]
      %v289 = vld [vmem:[%s251 + $0x38] sm:$0xff]
      %v290 = vld [vmem:[%s251 + $0x40] sm:$0xff]
      %v291 = vld [vmem:[%s251 + $0x48] sm:$0xff]
      %v292 = vld [vmem:[%s251 + $0x50] sm:$0xff]
      %v293 = vld [vmem:[%s251 + $0x58] sm:$0xff]
      %v294 = vld [vmem:[%s251 + $0x60] sm:$0xff]
      %v295 = vld [vmem:[%s251 + $0x68] sm:$0xff]
      %v296 = vld [vmem:[%s251 + $0x70] sm:$0xff]
      %v297 = vld [vmem:[%s251 + $0x78] sm:$0xff]
      %v298 = vld [vmem:[%s251 + $0x80] sm:$0xff]
      %v299 = vld [vmem:[%s251 + $0x88] sm:$0xff]
      %v300 = vld [vmem:[%s251 + $0x90] sm:$0xff]
      %v301 = vld [vmem:[%s251 + $0x98] sm:$0xff]
      %v302 = vld [vmem:[%s251 + $0xa0] sm:$0xff]
      %v303 = vld [vmem:[%s251 + $0xa8] sm:$0xff]
      %v304 = vld [vmem:[%s251 + $0xb0] sm:$0xff]
      %v305 = vld [vmem:[%s251 + $0xb8] sm:$0xff]
      %v306 = vld [vmem:[%s251 + $0xc0] sm:$0xff]
      %v307 = vld [vmem:[%s251 + $0xc8] sm:$0xff]
      %v308 = vld [vmem:[%s251 + $0xd0] sm:$0xff]
      %v309 = vld [vmem:[%s251 + $0xd8] sm:$0xff]
      %v310 = vld [vmem:[%s251 + $0xe0] sm:$0xff]
      %v311 = vld [vmem:[%s251 + $0xe8] sm:$0xff]
      %v312 = vld [vmem:[%s251 + $0xf0] sm:$0xff]
      %v313 = vld [vmem:[%s251 + $0xf8] sm:$0xff]
      %v314 = vpack.c.bf16 %v283, %v282
      %v315 = vpack.c.bf16 %v285, %v284
      %v316 = vpack.c.bf16 %v287, %v286
      %v317 = vpack.c.bf16 %v289, %v288
      %v318 = vpack.c.bf16 %v291, %v290
      %v319 = vpack.c.bf16 %v293, %v292
      %v320 = vpack.c.bf16 %v295, %v294
      %v321 = vpack.c.bf16 %v297, %v296
      %v322 = vpack.c.bf16 %v299, %v298
      %v323 = vpack.c.bf16 %v301, %v300
      %v324 = vpack.c.bf16 %v303, %v302
      %v325 = vpack.c.bf16 %v305, %v304
      %v326 = vpack.c.bf16 %v307, %v306
      %v327 = vpack.c.bf16 %v309, %v308
      %v328 = vpack.c.bf16 %v311, %v310
      %v329 = vpack.c.bf16 %v313, %v312
      %v330 = vld [vmem:[%s258] sm:$0xff]
      %v331 = vld [vmem:[%s258 + $0x8] sm:$0xff]
      %v332 = vld [vmem:[%s258 + $0x10] sm:$0xff]
      %v333 = vld [vmem:[%s258 + $0x18] sm:$0xff]
      %v334 = vld [vmem:[%s258 + $0x20] sm:$0xff]
      %v335 = vld [vmem:[%s258 + $0x28] sm:$0xff]
      %v336 = vld [vmem:[%s258 + $0x30] sm:$0xff]
      %v337 = vld [vmem:[%s258 + $0x38] sm:$0xff]
      %v338 = vld [vmem:[%s258 + $0x40] sm:$0xff]
      %v339 = vld [vmem:[%s258 + $0x48] sm:$0xff]
      %v340 = vld [vmem:[%s258 + $0x50] sm:$0xff]
      %v341 = vld [vmem:[%s258 + $0x58] sm:$0xff]
      %v342 = vld [vmem:[%s258 + $0x60] sm:$0xff]
      %v343 = vld [vmem:[%s258 + $0x68] sm:$0xff]
      %v344 = vld [vmem:[%s258 + $0x70] sm:$0xff]
      %v345 = vld [vmem:[%s258 + $0x78] sm:$0xff]
      %v346 = vld [vmem:[%s258 + $0x80] sm:$0xff]
      %v347 = vld [vmem:[%s258 + $0x88] sm:$0xff]
      %v348 = vld [vmem:[%s258 + $0x90] sm:$0xff]
      %v349 = vld [vmem:[%s258 + $0x98] sm:$0xff]
      %v350 = vld [vmem:[%s258 + $0xa0] sm:$0xff]
      %v351 = vld [vmem:[%s258 + $0xa8] sm:$0xff]
      %v352 = vld [vmem:[%s258 + $0xb0] sm:$0xff]
      %v353 = vld [vmem:[%s258 + $0xb8] sm:$0xff]
      %v354 = vld [vmem:[%s258 + $0xc0] sm:$0xff]
      %v355 = vld [vmem:[%s258 + $0xc8] sm:$0xff]
      %v356 = vld [vmem:[%s258 + $0xd0] sm:$0xff]
      %v357 = vld [vmem:[%s258 + $0xd8] sm:$0xff]
      %v358 = vld [vmem:[%s258 + $0xe0] sm:$0xff]
      %v359 = vld [vmem:[%s258 + $0xe8] sm:$0xff]
      %v360 = vld [vmem:[%s258 + $0xf0] sm:$0xff]
      %v361 = vld [vmem:[%s258 + $0xf8] sm:$0xff]
      %v362 = vpack.c.bf16 %v331, %v330
      %v363 = vpack.c.bf16 %v333, %v332
      %v364 = vpack.c.bf16 %v335, %v334
      %v365 = vpack.c.bf16 %v337, %v336
      %v366 = vpack.c.bf16 %v339, %v338
      %v367 = vpack.c.bf16 %v341, %v340
      %v368 = vpack.c.bf16 %v343, %v342
      %v369 = vpack.c.bf16 %v345, %v344
      %v370 = vpack.c.bf16 %v347, %v346
      %v371 = vpack.c.bf16 %v349, %v348
      %v372 = vpack.c.bf16 %v351, %v350
      %v373 = vpack.c.bf16 %v353, %v352
      %v374 = vpack.c.bf16 %v355, %v354
      %v375 = vpack.c.bf16 %v357, %v356
      %v376 = vpack.c.bf16 %v359, %v358
      %v377 = vpack.c.bf16 %v361, %v360
      %v378 = vld [vmem:[%s265] sm:$0xff]
      %v379 = vld [vmem:[%s265 + $0x8] sm:$0xff]
      %v380 = vld [vmem:[%s265 + $0x10] sm:$0xff]
      %v381 = vld [vmem:[%s265 + $0x18] sm:$0xff]
      %v382 = vld [vmem:[%s265 + $0x20] sm:$0xff]
      %v383 = vld [vmem:[%s265 + $0x28] sm:$0xff]
      %v384 = vld [vmem:[%s265 + $0x30] sm:$0xff]
      %v385 = vld [vmem:[%s265 + $0x38] sm:$0xff]
      %v386 = vld [vmem:[%s265 + $0x40] sm:$0xff]
      %v387 = vld [vmem:[%s265 + $0x48] sm:$0xff]
      %v388 = vld [vmem:[%s265 + $0x50] sm:$0xff]
      %v389 = vld [vmem:[%s265 + $0x58] sm:$0xff]
      %v390 = vld [vmem:[%s265 + $0x60] sm:$0xff]
      %v391 = vld [vmem:[%s265 + $0x68] sm:$0xff]
      %v392 = vld [vmem:[%s265 + $0x70] sm:$0xff]
      %v393 = vld [vmem:[%s265 + $0x78] sm:$0xff]
      %v394 = vld [vmem:[%s265 + $0x80] sm:$0xff]
      %v395 = vld [vmem:[%s265 + $0x88] sm:$0xff]
      %v396 = vld [vmem:[%s265 + $0x90] sm:$0xff]
      %v397 = vld [vmem:[%s265 + $0x98] sm:$0xff]
      %v398 = vld [vmem:[%s265 + $0xa0] sm:$0xff]
      %v399 = vld [vmem:[%s265 + $0xa8] sm:$0xff]
      %v400 = vld [vmem:[%s265 + $0xb0] sm:$0xff]
      %v401 = vld [vmem:[%s265 + $0xb8] sm:$0xff]
      %v402 = vld [vmem:[%s265 + $0xc0] sm:$0xff]
      %v403 = vld [vmem:[%s265 + $0xc8] sm:$0xff]
      %v404 = vld [vmem:[%s265 + $0xd0] sm:$0xff]
      %v405 = vld [vmem:[%s265 + $0xd8] sm:$0xff]
      %v406 = vld [vmem:[%s265 + $0xe0] sm:$0xff]
      %v407 = vld [vmem:[%s265 + $0xe8] sm:$0xff]
      %v408 = vld [vmem:[%s265 + $0xf0] sm:$0xff]
      %v409 = vld [vmem:[%s265 + $0xf8] sm:$0xff]
      %v410 = vpack.c.bf16 %v379, %v378
      %v411 = vpack.c.bf16 %v381, %v380
      %v412 = vpack.c.bf16 %v383, %v382
      %v413 = vpack.c.bf16 %v385, %v384
      %v414 = vpack.c.bf16 %v387, %v386
      %v415 = vpack.c.bf16 %v389, %v388
      %v416 = vpack.c.bf16 %v391, %v390
      %v417 = vpack.c.bf16 %v393, %v392
      %v418 = vpack.c.bf16 %v395, %v394
      %v419 = vpack.c.bf16 %v397, %v396
      %v420 = vpack.c.bf16 %v399, %v398
      %v421 = vpack.c.bf16 %v401, %v400
      %v422 = vpack.c.bf16 %v403, %v402
      %v423 = vpack.c.bf16 %v405, %v404
      %v424 = vpack.c.bf16 %v407, %v406
      %v425 = vpack.c.bf16 %v409, %v408
      %vm426 = vcmask 64512
      %v428 = vsel %vm426, %v314, 0
      %v431 = vsel %vm426, %v362, 0
      %433 = vmatprep.subr.bf16.mxu0 0
      %434 = vmatpush1.bf16.xpose.msra.mxu0 0
      %435 = vmatprep.subr.bf16.mxu0 0
      %436 = vmatpush1.bf16.xpose.msra.mxu0 0
      %437 = vmatprep.subr.bf16.mxu0 0
      %438 = vmatpush1.bf16.xpose.msra.mxu0 0
      %439 = vmatprep.subr.bf16.mxu0 0
      %440 = vmatpush1.bf16.xpose.msra.mxu0 0
      %441 = vmatprep.subr.bf16.mxu0 0
      %442 = vmatpush1.bf16.xpose.msra.mxu0 0
      %443 = vmatprep.subr.bf16.mxu0 0
      %444 = vmatpush1.bf16.xpose.msra.mxu0 0
      %445 = vmatprep.subr.bf16.mxu0 0
      %446 = vmatpush1.bf16.xpose.msra.mxu0 0
      %447 = vmatprep.subr.bf16.mxu0 0
      %448 = vmatpush1.bf16.xpose.msra.mxu0 %v431
      %449 = vmatprep.subr.bf16.mxu0 0
      %450 = vmatpush2.bf16.xpose.msra.mxu0 0
      %451 = vmatprep.subr.bf16.mxu0 0
      %452 = vmatpush2.bf16.xpose.msra.mxu0 0
      %453 = vmatprep.subr.bf16.mxu0 0
      %454 = vmatpush2.bf16.xpose.msra.mxu0 0
      %455 = vmatprep.subr.bf16.mxu0 0
      %456 = vmatpush2.bf16.xpose.msra.mxu0 0
      %457 = vmatprep.subr.bf16.mxu0 0
      %458 = vmatpush2.bf16.xpose.msra.mxu0 0
      %459 = vmatprep.subr.bf16.mxu0 0
      %460 = vmatpush2.bf16.xpose.msra.mxu0 0
      %461 = vmatprep.subr.bf16.mxu0 0
      %462 = vmatpush2.bf16.xpose.msra.mxu0 0
      %463 = vmatprep.subr.bf16.mxu0 0
      %464 = vmatpush2.bf16.xpose.msra.mxu0 0
      %465 = vmatprep.mubr.bf16.mxu0 0
      %466 = vmatmul.mubr.bf16.gmra.mxu0 %v428
      %v467 = vpop.f32.mrf.mxu0
      %v468 = vadd.f32 0.0, %v467
      %v469 = vpop.f32.mrf.mxu0
      %v470 = vpop.f32.mrf.mxu0
      %v471 = vadd.f32 0.0, %v470
      %v472 = vpop.f32.mrf.mxu0
      %473 = vdwg.mxu0
      %v475 = vsel %vm426, %v315, 0
      %v478 = vsel %vm426, %v363, 0
      %480 = vmatprep.subr.bf16.mxu0 0
      %481 = vmatpush1.bf16.xpose.msra.mxu0 0
      %482 = vmatprep.subr.bf16.mxu0 0
      %483 = vmatpush1.bf16.xpose.msra.mxu0 0
      %484 = vmatprep.subr.bf16.mxu0 0
      %485 = vmatpush1.bf16.xpose.msra.mxu0 0
      %486 = vmatprep.subr.bf16.mxu0 0
      %487 = vmatpush1.bf16.xpose.msra.mxu0 0
      %488 = vmatprep.subr.bf16.mxu0 0
      %489 = vmatpush1.bf16.xpose.msra.mxu0 0
      %490 = vmatprep.subr.bf16.mxu0 0
      %491 = vmatpush1.bf16.xpose.msra.mxu0 0
      %492 = vmatprep.subr.bf16.mxu0 0
      %493 = vmatpush1.bf16.xpose.msra.mxu0 0
      %494 = vmatprep.subr.bf16.mxu0 0
      %495 = vmatpush1.bf16.xpose.msra.mxu0 %v478
      %496 = vmatprep.subr.bf16.mxu0 0
      %497 = vmatpush2.bf16.xpose.msra.mxu0 0
      %498 = vmatprep.subr.bf16.mxu0 0
      %499 = vmatpush2.bf16.xpose.msra.mxu0 0
      %500 = vmatprep.subr.bf16.mxu0 0
      %501 = vmatpush2.bf16.xpose.msra.mxu0 0
      %502 = vmatprep.subr.bf16.mxu0 0
      %503 = vmatpush2.bf16.xpose.msra.mxu0 0
      %504 = vmatprep.subr.bf16.mxu0 0
      %505 = vmatpush2.bf16.xpose.msra.mxu0 0
      %506 = vmatprep.subr.bf16.mxu0 0
      %507 = vmatpush2.bf16.xpose.msra.mxu0 0
      %508 = vmatprep.subr.bf16.mxu0 0
      %509 = vmatpush2.bf16.xpose.msra.mxu0 0
      %510 = vmatprep.subr.bf16.mxu0 0
      %511 = vmatpush2.bf16.xpose.msra.mxu0 0
      %512 = vmatprep.mubr.bf16.mxu0 0
      %513 = vmatmul.mubr.bf16.gmra.mxu0 %v475
      %v514 = vpop.f32.mrf.mxu0
      %v515 = vadd.f32 0.0, %v514
      %v516 = vpop.f32.mrf.mxu0
      %v517 = vpop.f32.mrf.mxu0
      %v518 = vadd.f32 0.0, %v517
      %v519 = vpop.f32.mrf.mxu0
      %520 = vdwg.mxu0
      %v522 = vsel %vm426, %v316, 0
      %v525 = vsel %vm426, %v364, 0
      %527 = vmatprep.subr.bf16.mxu0 0
      %528 = vmatpush1.bf16.xpose.msra.mxu0 0
      %529 = vmatprep.subr.bf16.mxu0 0
      %530 = vmatpush1.bf16.xpose.msra.mxu0 0
      %531 = vmatprep.subr.bf16.mxu0 0
      %532 = vmatpush1.bf16.xpose.msra.mxu0 0
      %533 = vmatprep.subr.bf16.mxu0 0
      %534 = vmatpush1.bf16.xpose.msra.mxu0 0
      %535 = vmatprep.subr.bf16.mxu0 0
      %536 = vmatpush1.bf16.xpose.msra.mxu0 0
      %537 = vmatprep.subr.bf16.mxu0 0
      %538 = vmatpush1.bf16.xpose.msra.mxu0 0
      %539 = vmatprep.subr.bf16.mxu0 0
      %540 = vmatpush1.bf16.xpose.msra.mxu0 0
      %541 = vmatprep.subr.bf16.mxu0 0
      %542 = vmatpush1.bf16.xpose.msra.mxu0 %v525
      %543 = vmatprep.subr.bf16.mxu0 0
      %544 = vmatpush2.bf16.xpose.msra.mxu0 0
      %545 = vmatprep.subr.bf16.mxu0 0
      %546 = vmatpush2.bf16.xpose.msra.mxu0 0
      %547 = vmatprep.subr.bf16.mxu0 0
      %548 = vmatpush2.bf16.xpose.msra.mxu0 0
      %549 = vmatprep.subr.bf16.mxu0 0
      %550 = vmatpush2.bf16.xpose.msra.mxu0 0
      %551 = vmatprep.subr.bf16.mxu0 0
      %552 = vmatpush2.bf16.xpose.msra.mxu0 0
      %553 = vmatprep.subr.bf16.mxu0 0
      %554 = vmatpush2.bf16.xpose.msra.mxu0 0
      %555 = vmatprep.subr.bf16.mxu0 0
      %556 = vmatpush2.bf16.xpose.msra.mxu0 0
      %557 = vmatprep.subr.bf16.mxu0 0
      %558 = vmatpush2.bf16.xpose.msra.mxu0 0
      %559 = vmatprep.mubr.bf16.mxu0 0
      %560 = vmatmul.mubr.bf16.gmra.mxu0 %v522
      %v561 = vpop.f32.mrf.mxu0
      %v562 = vadd.f32 0.0, %v561
      %v563 = vpop.f32.mrf.mxu0
      %v564 = vpop.f32.mrf.mxu0
      %v565 = vadd.f32 0.0, %v564
      %v566 = vpop.f32.mrf.mxu0
      %567 = vdwg.mxu0
      %v569 = vsel %vm426, %v317, 0
      %v572 = vsel %vm426, %v365, 0
      %574 = vmatprep.subr.bf16.mxu0 0
      %575 = vmatpush1.bf16.xpose.msra.mxu0 0
      %576 = vmatprep.subr.bf16.mxu0 0
      %577 = vmatpush1.bf16.xpose.msra.mxu0 0
      %578 = vmatprep.subr.bf16.mxu0 0
      %579 = vmatpush1.bf16.xpose.msra.mxu0 0
      %580 = vmatprep.subr.bf16.mxu0 0
      %581 = vmatpush1.bf16.xpose.msra.mxu0 0
      %582 = vmatprep.subr.bf16.mxu0 0
      %583 = vmatpush1.bf16.xpose.msra.mxu0 0
      %584 = vmatprep.subr.bf16.mxu0 0
      %585 = vmatpush1.bf16.xpose.msra.mxu0 0
      %586 = vmatprep.subr.bf16.mxu0 0
      %587 = vmatpush1.bf16.xpose.msra.mxu0 0
      %588 = vmatprep.subr.bf16.mxu0 0
      %589 = vmatpush1.bf16.xpose.msra.mxu0 %v572
      %590 = vmatprep.subr.bf16.mxu0 0
      %591 = vmatpush2.bf16.xpose.msra.mxu0 0
      %592 = vmatprep.subr.bf16.mxu0 0
      %593 = vmatpush2.bf16.xpose.msra.mxu0 0
      %594 = vmatprep.subr.bf16.mxu0 0
      %595 = vmatpush2.bf16.xpose.msra.mxu0 0
      %596 = vmatprep.subr.bf16.mxu0 0
      %597 = vmatpush2.bf16.xpose.msra.mxu0 0
      %598 = vmatprep.subr.bf16.mxu0 0
      %599 = vmatpush2.bf16.xpose.msra.mxu0 0
      %600 = vmatprep.subr.bf16.mxu0 0
      %601 = vmatpush2.bf16.xpose.msra.mxu0 0
      %602 = vmatprep.subr.bf16.mxu0 0
      %603 = vmatpush2.bf16.xpose.msra.mxu0 0
      %604 = vmatprep.subr.bf16.mxu0 0
      %605 = vmatpush2.bf16.xpose.msra.mxu0 0
      %606 = vmatprep.mubr.bf16.mxu0 0
      %607 = vmatmul.mubr.bf16.gmra.mxu0 %v569
      %v608 = vpop.f32.mrf.mxu0
      %v609 = vadd.f32 0.0, %v608
      %v610 = vpop.f32.mrf.mxu0
      %v611 = vpop.f32.mrf.mxu0
      %v612 = vadd.f32 0.0, %v611
      %v613 = vpop.f32.mrf.mxu0
      %614 = vdwg.mxu0
      %v616 = vsel %vm426, %v318, 0
      %v619 = vsel %vm426, %v366, 0
      %621 = vmatprep.subr.bf16.mxu0 0
      %622 = vmatpush1.bf16.xpose.msra.mxu0 0
      %623 = vmatprep.subr.bf16.mxu0 0
      %624 = vmatpush1.bf16.xpose.msra.mxu0 0
      %625 = vmatprep.subr.bf16.mxu0 0
      %626 = vmatpush1.bf16.xpose.msra.mxu0 0
      %627 = vmatprep.subr.bf16.mxu0 0
      %628 = vmatpush1.bf16.xpose.msra.mxu0 0
      %629 = vmatprep.subr.bf16.mxu0 0
      %630 = vmatpush1.bf16.xpose.msra.mxu0 0
      %631 = vmatprep.subr.bf16.mxu0 0
      %632 = vmatpush1.bf16.xpose.msra.mxu0 0
      %633 = vmatprep.subr.bf16.mxu0 0
      %634 = vmatpush1.bf16.xpose.msra.mxu0 0
      %635 = vmatprep.subr.bf16.mxu0 0
      %636 = vmatpush1.bf16.xpose.msra.mxu0 %v619
      %637 = vmatprep.subr.bf16.mxu0 0
      %638 = vmatpush2.bf16.xpose.msra.mxu0 0
      %639 = vmatprep.subr.bf16.mxu0 0
      %640 = vmatpush2.bf16.xpose.msra.mxu0 0
      %641 = vmatprep.subr.bf16.mxu0 0
      %642 = vmatpush2.bf16.xpose.msra.mxu0 0
      %643 = vmatprep.subr.bf16.mxu0 0
      %644 = vmatpush2.bf16.xpose.msra.mxu0 0
      %645 = vmatprep.subr.bf16.mxu0 0
      %646 = vmatpush2.bf16.xpose.msra.mxu0 0
      %647 = vmatprep.subr.bf16.mxu0 0
      %648 = vmatpush2.bf16.xpose.msra.mxu0 0
      %649 = vmatprep.subr.bf16.mxu0 0
      %650 = vmatpush2.bf16.xpose.msra.mxu0 0
      %651 = vmatprep.subr.bf16.mxu0 0
      %652 = vmatpush2.bf16.xpose.msra.mxu0 0
      %653 = vmatprep.mubr.bf16.mxu0 0
      %654 = vmatmul.mubr.bf16.gmra.mxu0 %v616
      %v655 = vpop.f32.mrf.mxu0
      %v656 = vadd.f32 0.0, %v655
      %v657 = vpop.f32.mrf.mxu0
      %v658 = vpop.f32.mrf.mxu0
      %v659 = vadd.f32 0.0, %v658
      %v660 = vpop.f32.mrf.mxu0
      %661 = vdwg.mxu0
      %v663 = vsel %vm426, %v319, 0
      %v666 = vsel %vm426, %v367, 0
      %668 = vmatprep.subr.bf16.mxu0 0
      %669 = vmatpush1.bf16.xpose.msra.mxu0 0
      %670 = vmatprep.subr.bf16.mxu0 0
      %671 = vmatpush1.bf16.xpose.msra.mxu0 0
      %672 = vmatprep.subr.bf16.mxu0 0
      %673 = vmatpush1.bf16.xpose.msra.mxu0 0
      %674 = vmatprep.subr.bf16.mxu0 0
      %675 = vmatpush1.bf16.xpose.msra.mxu0 0
      %676 = vmatprep.subr.bf16.mxu0 0
      %677 = vmatpush1.bf16.xpose.msra.mxu0 0
      %678 = vmatprep.subr.bf16.mxu0 0
      %679 = vmatpush1.bf16.xpose.msra.mxu0 0
      %680 = vmatprep.subr.bf16.mxu0 0
      %681 = vmatpush1.bf16.xpose.msra.mxu0 0
      %682 = vmatprep.subr.bf16.mxu0 0
      %683 = vmatpush1.bf16.xpose.msra.mxu0 %v666
      %684 = vmatprep.subr.bf16.mxu0 0
      %685 = vmatpush2.bf16.xpose.msra.mxu0 0
      %686 = vmatprep.subr.bf16.mxu0 0
      %687 = vmatpush2.bf16.xpose.msra.mxu0 0
      %688 = vmatprep.subr.bf16.mxu0 0
      %689 = vmatpush2.bf16.xpose.msra.mxu0 0
      %690 = vmatprep.subr.bf16.mxu0 0
      %691 = vmatpush2.bf16.xpose.msra.mxu0 0
      %692 = vmatprep.subr.bf16.mxu0 0
      %693 = vmatpush2.bf16.xpose.msra.mxu0 0
      %694 = vmatprep.subr.bf16.mxu0 0
      %695 = vmatpush2.bf16.xpose.msra.mxu0 0
      %696 = vmatprep.subr.bf16.mxu0 0
      %697 = vmatpush2.bf16.xpose.msra.mxu0 0
      %698 = vmatprep.subr.bf16.mxu0 0
      %699 = vmatpush2.bf16.xpose.msra.mxu0 0
      %700 = vmatprep.mubr.bf16.mxu0 0
      %701 = vmatmul.mubr.bf16.gmra.mxu0 %v663
      %v702 = vpop.f32.mrf.mxu0
      %v703 = vadd.f32 0.0, %v702
      %v704 = vpop.f32.mrf.mxu0
      %v705 = vpop.f32.mrf.mxu0
      %v706 = vadd.f32 0.0, %v705
      %v707 = vpop.f32.mrf.mxu0
      %708 = vdwg.mxu0
      %v710 = vsel %vm426, %v320, 0
      %v713 = vsel %vm426, %v368, 0
      %715 = vmatprep.subr.bf16.mxu0 0
      %716 = vmatpush1.bf16.xpose.msra.mxu0 0
      %717 = vmatprep.subr.bf16.mxu0 0
      %718 = vmatpush1.bf16.xpose.msra.mxu0 0
      %719 = vmatprep.subr.bf16.mxu0 0
      %720 = vmatpush1.bf16.xpose.msra.mxu0 0
      %721 = vmatprep.subr.bf16.mxu0 0
      %722 = vmatpush1.bf16.xpose.msra.mxu0 0
      %723 = vmatprep.subr.bf16.mxu0 0
      %724 = vmatpush1.bf16.xpose.msra.mxu0 0
      %725 = vmatprep.subr.bf16.mxu0 0
      %726 = vmatpush1.bf16.xpose.msra.mxu0 0
      %727 = vmatprep.subr.bf16.mxu0 0
      %728 = vmatpush1.bf16.xpose.msra.mxu0 0
      %729 = vmatprep.subr.bf16.mxu0 0
      %730 = vmatpush1.bf16.xpose.msra.mxu0 %v713
      %731 = vmatprep.subr.bf16.mxu0 0
      %732 = vmatpush2.bf16.xpose.msra.mxu0 0
      %733 = vmatprep.subr.bf16.mxu0 0
      %734 = vmatpush2.bf16.xpose.msra.mxu0 0
      %735 = vmatprep.subr.bf16.mxu0 0
      %736 = vmatpush2.bf16.xpose.msra.mxu0 0
      %737 = vmatprep.subr.bf16.mxu0 0
      %738 = vmatpush2.bf16.xpose.msra.mxu0 0
      %739 = vmatprep.subr.bf16.mxu0 0
      %740 = vmatpush2.bf16.xpose.msra.mxu0 0
      %741 = vmatprep.subr.bf16.mxu0 0
      %742 = vmatpush2.bf16.xpose.msra.mxu0 0
      %743 = vmatprep.subr.bf16.mxu0 0
      %744 = vmatpush2.bf16.xpose.msra.mxu0 0
      %745 = vmatprep.subr.bf16.mxu0 0
      %746 = vmatpush2.bf16.xpose.msra.mxu0 0
      %747 = vmatprep.mubr.bf16.mxu0 0
      %748 = vmatmul.mubr.bf16.gmra.mxu0 %v710
      %v749 = vpop.f32.mrf.mxu0
      %v750 = vadd.f32 0.0, %v749
      %v751 = vpop.f32.mrf.mxu0
      %v752 = vpop.f32.mrf.mxu0
      %v753 = vadd.f32 0.0, %v752
      %v754 = vpop.f32.mrf.mxu0
      %755 = vdwg.mxu0
      %v757 = vsel %vm426, %v321, 0
      %v760 = vsel %vm426, %v369, 0
      %762 = vmatprep.subr.bf16.mxu0 0
      %763 = vmatpush1.bf16.xpose.msra.mxu0 0
      %764 = vmatprep.subr.bf16.mxu0 0
      %765 = vmatpush1.bf16.xpose.msra.mxu0 0
      %766 = vmatprep.subr.bf16.mxu0 0
      %767 = vmatpush1.bf16.xpose.msra.mxu0 0
      %768 = vmatprep.subr.bf16.mxu0 0
      %769 = vmatpush1.bf16.xpose.msra.mxu0 0
      %770 = vmatprep.subr.bf16.mxu0 0
      %771 = vmatpush1.bf16.xpose.msra.mxu0 0
      %772 = vmatprep.subr.bf16.mxu0 0
      %773 = vmatpush1.bf16.xpose.msra.mxu0 0
      %774 = vmatprep.subr.bf16.mxu0 0
      %775 = vmatpush1.bf16.xpose.msra.mxu0 0
      %776 = vmatprep.subr.bf16.mxu0 0
      %777 = vmatpush1.bf16.xpose.msra.mxu0 %v760
      %778 = vmatprep.subr.bf16.mxu0 0
      %779 = vmatpush2.bf16.xpose.msra.mxu0 0
      %780 = vmatprep.subr.bf16.mxu0 0
      %781 = vmatpush2.bf16.xpose.msra.mxu0 0
      %782 = vmatprep.subr.bf16.mxu0 0
      %783 = vmatpush2.bf16.xpose.msra.mxu0 0
      %784 = vmatprep.subr.bf16.mxu0 0
      %785 = vmatpush2.bf16.xpose.msra.mxu0 0
      %786 = vmatprep.subr.bf16.mxu0 0
      %787 = vmatpush2.bf16.xpose.msra.mxu0 0
      %788 = vmatprep.subr.bf16.mxu0 0
      %789 = vmatpush2.bf16.xpose.msra.mxu0 0
      %790 = vmatprep.subr.bf16.mxu0 0
      %791 = vmatpush2.bf16.xpose.msra.mxu0 0
      %792 = vmatprep.subr.bf16.mxu0 0
      %793 = vmatpush2.bf16.xpose.msra.mxu0 0
      %794 = vmatprep.mubr.bf16.mxu0 0
      %795 = vmatmul.mubr.bf16.gmra.mxu0 %v757
      %v796 = vpop.f32.mrf.mxu0
      %v797 = vadd.f32 0.0, %v796
      %v798 = vpop.f32.mrf.mxu0
      %v799 = vpop.f32.mrf.mxu0
      %v800 = vadd.f32 0.0, %v799
      %v801 = vpop.f32.mrf.mxu0
      %802 = vdwg.mxu0
      %v804 = vsel %vm426, %v322, 0
      %v807 = vsel %vm426, %v370, 0
      %809 = vmatprep.subr.bf16.mxu0 0
      %810 = vmatpush1.bf16.xpose.msra.mxu0 0
      %811 = vmatprep.subr.bf16.mxu0 0
      %812 = vmatpush1.bf16.xpose.msra.mxu0 0
      %813 = vmatprep.subr.bf16.mxu0 0
      %814 = vmatpush1.bf16.xpose.msra.mxu0 0
      %815 = vmatprep.subr.bf16.mxu0 0
      %816 = vmatpush1.bf16.xpose.msra.mxu0 0
      %817 = vmatprep.subr.bf16.mxu0 0
      %818 = vmatpush1.bf16.xpose.msra.mxu0 0
      %819 = vmatprep.subr.bf16.mxu0 0
      %820 = vmatpush1.bf16.xpose.msra.mxu0 0
      %821 = vmatprep.subr.bf16.mxu0 0
      %822 = vmatpush1.bf16.xpose.msra.mxu0 0
      %823 = vmatprep.subr.bf16.mxu0 0
      %824 = vmatpush1.bf16.xpose.msra.mxu0 %v807
      %825 = vmatprep.subr.bf16.mxu0 0
      %826 = vmatpush2.bf16.xpose.msra.mxu0 0
      %827 = vmatprep.subr.bf16.mxu0 0
      %828 = vmatpush2.bf16.xpose.msra.mxu0 0
      %829 = vmatprep.subr.bf16.mxu0 0
      %830 = vmatpush2.bf16.xpose.msra.mxu0 0
      %831 = vmatprep.subr.bf16.mxu0 0
      %832 = vmatpush2.bf16.xpose.msra.mxu0 0
      %833 = vmatprep.subr.bf16.mxu0 0
      %834 = vmatpush2.bf16.xpose.msra.mxu0 0
      %835 = vmatprep.subr.bf16.mxu0 0
      %836 = vmatpush2.bf16.xpose.msra.mxu0 0
      %837 = vmatprep.subr.bf16.mxu0 0
      %838 = vmatpush2.bf16.xpose.msra.mxu0 0
      %839 = vmatprep.subr.bf16.mxu0 0
      %840 = vmatpush2.bf16.xpose.msra.mxu0 0
      %841 = vmatprep.mubr.bf16.mxu0 0
      %842 = vmatmul.mubr.bf16.gmra.mxu0 %v804
      %v843 = vpop.f32.mrf.mxu0
      %v844 = vadd.f32 0.0, %v843
      %v845 = vpop.f32.mrf.mxu0
      %v846 = vpop.f32.mrf.mxu0
      %v847 = vadd.f32 0.0, %v846
      %v848 = vpop.f32.mrf.mxu0
      %849 = vdwg.mxu0
      %v851 = vsel %vm426, %v323, 0
      %v854 = vsel %vm426, %v371, 0
      %856 = vmatprep.subr.bf16.mxu0 0
      %857 = vmatpush1.bf16.xpose.msra.mxu0 0
      %858 = vmatprep.subr.bf16.mxu0 0
      %859 = vmatpush1.bf16.xpose.msra.mxu0 0
      %860 = vmatprep.subr.bf16.mxu0 0
      %861 = vmatpush1.bf16.xpose.msra.mxu0 0
      %862 = vmatprep.subr.bf16.mxu0 0
      %863 = vmatpush1.bf16.xpose.msra.mxu0 0
      %864 = vmatprep.subr.bf16.mxu0 0
      %865 = vmatpush1.bf16.xpose.msra.mxu0 0
      %866 = vmatprep.subr.bf16.mxu0 0
      %867 = vmatpush1.bf16.xpose.msra.mxu0 0
      %868 = vmatprep.subr.bf16.mxu0 0
      %869 = vmatpush1.bf16.xpose.msra.mxu0 0
      %870 = vmatprep.subr.bf16.mxu0 0
      %871 = vmatpush1.bf16.xpose.msra.mxu0 %v854
      %872 = vmatprep.subr.bf16.mxu0 0
      %873 = vmatpush2.bf16.xpose.msra.mxu0 0
      %874 = vmatprep.subr.bf16.mxu0 0
      %875 = vmatpush2.bf16.xpose.msra.mxu0 0
      %876 = vmatprep.subr.bf16.mxu0 0
      %877 = vmatpush2.bf16.xpose.msra.mxu0 0
      %878 = vmatprep.subr.bf16.mxu0 0
      %879 = vmatpush2.bf16.xpose.msra.mxu0 0
      %880 = vmatprep.subr.bf16.mxu0 0
      %881 = vmatpush2.bf16.xpose.msra.mxu0 0
      %882 = vmatprep.subr.bf16.mxu0 0
      %883 = vmatpush2.bf16.xpose.msra.mxu0 0
      %884 = vmatprep.subr.bf16.mxu0 0
      %885 = vmatpush2.bf16.xpose.msra.mxu0 0
      %886 = vmatprep.subr.bf16.mxu0 0
      %887 = vmatpush2.bf16.xpose.msra.mxu0 0
      %888 = vmatprep.mubr.bf16.mxu0 0
      %889 = vmatmul.mubr.bf16.gmra.mxu0 %v851
      %v890 = vpop.f32.mrf.mxu0
      %v891 = vadd.f32 0.0, %v890
      %v892 = vpop.f32.mrf.mxu0
      %v893 = vpop.f32.mrf.mxu0
      %v894 = vadd.f32 0.0, %v893
      %v895 = vpop.f32.mrf.mxu0
      %896 = vdwg.mxu0
      %v898 = vsel %vm426, %v324, 0
      %v901 = vsel %vm426, %v372, 0
      %903 = vmatprep.subr.bf16.mxu0 0
      %904 = vmatpush1.bf16.xpose.msra.mxu0 0
      %905 = vmatprep.subr.bf16.mxu0 0
      %906 = vmatpush1.bf16.xpose.msra.mxu0 0
      %907 = vmatprep.subr.bf16.mxu0 0
      %908 = vmatpush1.bf16.xpose.msra.mxu0 0
      %909 = vmatprep.subr.bf16.mxu0 0
      %910 = vmatpush1.bf16.xpose.msra.mxu0 0
      %911 = vmatprep.subr.bf16.mxu0 0
      %912 = vmatpush1.bf16.xpose.msra.mxu0 0
      %913 = vmatprep.subr.bf16.mxu0 0
      %914 = vmatpush1.bf16.xpose.msra.mxu0 0
      %915 = vmatprep.subr.bf16.mxu0 0
      %916 = vmatpush1.bf16.xpose.msra.mxu0 0
      %917 = vmatprep.subr.bf16.mxu0 0
      %918 = vmatpush1.bf16.xpose.msra.mxu0 %v901
      %919 = vmatprep.subr.bf16.mxu0 0
      %920 = vmatpush2.bf16.xpose.msra.mxu0 0
      %921 = vmatprep.subr.bf16.mxu0 0
      %922 = vmatpush2.bf16.xpose.msra.mxu0 0
      %923 = vmatprep.subr.bf16.mxu0 0
      %924 = vmatpush2.bf16.xpose.msra.mxu0 0
      %925 = vmatprep.subr.bf16.mxu0 0
      %926 = vmatpush2.bf16.xpose.msra.mxu0 0
      %927 = vmatprep.subr.bf16.mxu0 0
      %928 = vmatpush2.bf16.xpose.msra.mxu0 0
      %929 = vmatprep.subr.bf16.mxu0 0
      %930 = vmatpush2.bf16.xpose.msra.mxu0 0
      %931 = vmatprep.subr.bf16.mxu0 0
      %932 = vmatpush2.bf16.xpose.msra.mxu0 0
      %933 = vmatprep.subr.bf16.mxu0 0
      %934 = vmatpush2.bf16.xpose.msra.mxu0 0
      %935 = vmatprep.mubr.bf16.mxu0 0
      %936 = vmatmul.mubr.bf16.gmra.mxu0 %v898
      %v937 = vpop.f32.mrf.mxu0
      %v938 = vadd.f32 0.0, %v937
      %v939 = vpop.f32.mrf.mxu0
      %v940 = vpop.f32.mrf.mxu0
      %v941 = vadd.f32 0.0, %v940
      %v942 = vpop.f32.mrf.mxu0
      %943 = vdwg.mxu0
      %v945 = vsel %vm426, %v325, 0
      %v948 = vsel %vm426, %v373, 0
      %950 = vmatprep.subr.bf16.mxu0 0
      %951 = vmatpush1.bf16.xpose.msra.mxu0 0
      %952 = vmatprep.subr.bf16.mxu0 0
      %953 = vmatpush1.bf16.xpose.msra.mxu0 0
      %954 = vmatprep.subr.bf16.mxu0 0
      %955 = vmatpush1.bf16.xpose.msra.mxu0 0
      %956 = vmatprep.subr.bf16.mxu0 0
      %957 = vmatpush1.bf16.xpose.msra.mxu0 0
      %958 = vmatprep.subr.bf16.mxu0 0
      %959 = vmatpush1.bf16.xpose.msra.mxu0 0
      %960 = vmatprep.subr.bf16.mxu0 0
      %961 = vmatpush1.bf16.xpose.msra.mxu0 0
      %962 = vmatprep.subr.bf16.mxu0 0
      %963 = vmatpush1.bf16.xpose.msra.mxu0 0
      %964 = vmatprep.subr.bf16.mxu0 0
      %965 = vmatpush1.bf16.xpose.msra.mxu0 %v948
      %966 = vmatprep.subr.bf16.mxu0 0
      %967 = vmatpush2.bf16.xpose.msra.mxu0 0
      %968 = vmatprep.subr.bf16.mxu0 0
      %969 = vmatpush2.bf16.xpose.msra.mxu0 0
      %970 = vmatprep.subr.bf16.mxu0 0
      %971 = vmatpush2.bf16.xpose.msra.mxu0 0
      %972 = vmatprep.subr.bf16.mxu0 0
      %973 = vmatpush2.bf16.xpose.msra.mxu0 0
      %974 = vmatprep.subr.bf16.mxu0 0
      %975 = vmatpush2.bf16.xpose.msra.mxu0 0
      %976 = vmatprep.subr.bf16.mxu0 0
      %977 = vmatpush2.bf16.xpose.msra.mxu0 0
      %978 = vmatprep.subr.bf16.mxu0 0
      %979 = vmatpush2.bf16.xpose.msra.mxu0 0
      %980 = vmatprep.subr.bf16.mxu0 0
      %981 = vmatpush2.bf16.xpose.msra.mxu0 0
      %982 = vmatprep.mubr.bf16.mxu0 0
      %983 = vmatmul.mubr.bf16.gmra.mxu0 %v945
      %v984 = vpop.f32.mrf.mxu0
      %v985 = vadd.f32 0.0, %v984
      %v986 = vpop.f32.mrf.mxu0
      %v987 = vpop.f32.mrf.mxu0
      %v988 = vadd.f32 0.0, %v987
      %v989 = vpop.f32.mrf.mxu0
      %990 = vdwg.mxu0
      %v992 = vsel %vm426, %v326, 0
      %v995 = vsel %vm426, %v374, 0
      %997 = vmatprep.subr.bf16.mxu0 0
      %998 = vmatpush1.bf16.xpose.msra.mxu0 0
      %999 = vmatprep.subr.bf16.mxu0 0
      %1000 = vmatpush1.bf16.xpose.msra.mxu0 0
      %1001 = vmatprep.subr.bf16.mxu0 0
      %1002 = vmatpush1.bf16.xpose.msra.mxu0 0
      %1003 = vmatprep.subr.bf16.mxu0 0
      %1004 = vmatpush1.bf16.xpose.msra.mxu0 0
      %1005 = vmatprep.subr.bf16.mxu0 0
      %1006 = vmatpush1.bf16.xpose.msra.mxu0 0
      %1007 = vmatprep.subr.bf16.mxu0 0
      %1008 = vmatpush1.bf16.xpose.msra.mxu0 0
      %1009 = vmatprep.subr.bf16.mxu0 0
      %1010 = vmatpush1.bf16.xpose.msra.mxu0 0
      %1011 = vmatprep.subr.bf16.mxu0 0
      %1012 = vmatpush1.bf16.xpose.msra.mxu0 %v995
      %1013 = vmatprep.subr.bf16.mxu0 0
      %1014 = vmatpush2.bf16.xpose.msra.mxu0 0
      %1015 = vmatprep.subr.bf16.mxu0 0
      %1016 = vmatpush2.bf16.xpose.msra.mxu0 0
      %1017 = vmatprep.subr.bf16.mxu0 0
      %1018 = vmatpush2.bf16.xpose.msra.mxu0 0
      %1019 = vmatprep.subr.bf16.mxu0 0
      %1020 = vmatpush2.bf16.xpose.msra.mxu0 0
      %1021 = vmatprep.subr.bf16.mxu0 0
      %1022 = vmatpush2.bf16.xpose.msra.mxu0 0
      %1023 = vmatprep.subr.bf16.mxu0 0
      %1024 = vmatpush2.bf16.xpose.msra.mxu0 0
      %1025 = vmatprep.subr.bf16.mxu0 0
      %1026 = vmatpush2.bf16.xpose.msra.mxu0 0
      %1027 = vmatprep.subr.bf16.mxu0 0
      %1028 = vmatpush2.bf16.xpose.msra.mxu0 0
      %1029 = vmatprep.mubr.bf16.mxu0 0
      %1030 = vmatmul.mubr.bf16.gmra.mxu0 %v992
      %v1031 = vpop.f32.mrf.mxu0
      %v1032 = vadd.f32 0.0, %v1031
      %v1033 = vpop.f32.mrf.mxu0
      %v1034 = vpop.f32.mrf.mxu0
      %v1035 = vadd.f32 0.0, %v1034
      %v1036 = vpop.f32.mrf.mxu0
      %1037 = vdwg.mxu0
      %v1039 = vsel %vm426, %v327, 0
      %v1042 = vsel %vm426, %v375, 0
      %1044 = vmatprep.subr.bf16.mxu0 0
      %1045 = vmatpush1.bf16.xpose.msra.mxu0 0
      %1046 = vmatprep.subr.bf16.mxu0 0
      %1047 = vmatpush1.bf16.xpose.msra.mxu0 0
      %1048 = vmatprep.subr.bf16.mxu0 0
      %1049 = vmatpush1.bf16.xpose.msra.mxu0 0
      %1050 = vmatprep.subr.bf16.mxu0 0
      %1051 = vmatpush1.bf16.xpose.msra.mxu0 0
      %1052 = vmatprep.subr.bf16.mxu0 0
      %1053 = vmatpush1.bf16.xpose.msra.mxu0 0
      %1054 = vmatprep.subr.bf16.mxu0 0
      %1055 = vmatpush1.bf16.xpose.msra.mxu0 0
      %1056 = vmatprep.subr.bf16.mxu0 0
      %1057 = vmatpush1.bf16.xpose.msra.mxu0 0
      %1058 = vmatprep.subr.bf16.mxu0 0
      %1059 = vmatpush1.bf16.xpose.msra.mxu0 %v1042
      %1060 = vmatprep.subr.bf16.mxu0 0
      %1061 = vmatpush2.bf16.xpose.msra.mxu0 0
      %1062 = vmatprep.subr.bf16.mxu0 0
      %1063 = vmatpush2.bf16.xpose.msra.mxu0 0
      %1064 = vmatprep.subr.bf16.mxu0 0
      %1065 = vmatpush2.bf16.xpose.msra.mxu0 0
      %1066 = vmatprep.subr.bf16.mxu0 0
      %1067 = vmatpush2.bf16.xpose.msra.mxu0 0
      %1068 = vmatprep.subr.bf16.mxu0 0
      %1069 = vmatpush2.bf16.xpose.msra.mxu0 0
      %1070 = vmatprep.subr.bf16.mxu0 0
      %1071 = vmatpush2.bf16.xpose.msra.mxu0 0
      %1072 = vmatprep.subr.bf16.mxu0 0
      %1073 = vmatpush2.bf16.xpose.msra.mxu0 0
      %1074 = vmatprep.subr.bf16.mxu0 0
      %1075 = vmatpush2.bf16.xpose.msra.mxu0 0
      %1076 = vmatprep.mubr.bf16.mxu0 0
      %1077 = vmatmul.mubr.bf16.gmra.mxu0 %v1039
      %v1078 = vpop.f32.mrf.mxu0
      %v1079 = vadd.f32 0.0, %v1078
      %v1080 = vpop.f32.mrf.mxu0
      %v1081 = vpop.f32.mrf.mxu0
      %v1082 = vadd.f32 0.0, %v1081
      %v1083 = vpop.f32.mrf.mxu0
      %1084 = vdwg.mxu0
      %v1086 = vsel %vm426, %v328, 0
      %v1089 = vsel %vm426, %v376, 0
      %1091 = vmatprep.subr.bf16.mxu0 0
      %1092 = vmatpush1.bf16.xpose.msra.mxu0 0
      %1093 = vmatprep.subr.bf16.mxu0 0
      %1094 = vmatpush1.bf16.xpose.msra.mxu0 0
      %1095 = vmatprep.subr.bf16.mxu0 0
      %1096 = vmatpush1.bf16.xpose.msra.mxu0 0
      %1097 = vmatprep.subr.bf16.mxu0 0
      %1098 = vmatpush1.bf16.xpose.msra.mxu0 0
      %1099 = vmatprep.subr.bf16.mxu0 0
      %1100 = vmatpush1.bf16.xpose.msra.mxu0 0
      %1101 = vmatprep.subr.bf16.mxu0 0
      %1102 = vmatpush1.bf16.xpose.msra.mxu0 0
      %1103 = vmatprep.subr.bf16.mxu0 0
      %1104 = vmatpush1.bf16.xpose.msra.mxu0 0
      %1105 = vmatprep.subr.bf16.mxu0 0
      %1106 = vmatpush1.bf16.xpose.msra.mxu0 %v1089
      %1107 = vmatprep.subr.bf16.mxu0 0
      %1108 = vmatpush2.bf16.xpose.msra.mxu0 0
      %1109 = vmatprep.subr.bf16.mxu0 0
      %1110 = vmatpush2.bf16.xpose.msra.mxu0 0
      %1111 = vmatprep.subr.bf16.mxu0 0
      %1112 = vmatpush2.bf16.xpose.msra.mxu0 0
      %1113 = vmatprep.subr.bf16.mxu0 0
      %1114 = vmatpush2.bf16.xpose.msra.mxu0 0
      %1115 = vmatprep.subr.bf16.mxu0 0
      %1116 = vmatpush2.bf16.xpose.msra.mxu0 0
      %1117 = vmatprep.subr.bf16.mxu0 0
      %1118 = vmatpush2.bf16.xpose.msra.mxu0 0
      %1119 = vmatprep.subr.bf16.mxu0 0
      %1120 = vmatpush2.bf16.xpose.msra.mxu0 0
      %1121 = vmatprep.subr.bf16.mxu0 0
      %1122 = vmatpush2.bf16.xpose.msra.mxu0 0
      %1123 = vmatprep.mubr.bf16.mxu0 0
      %1124 = vmatmul.mubr.bf16.gmra.mxu0 %v1086
      %v1125 = vpop.f32.mrf.mxu0
      %v1126 = vadd.f32 0.0, %v1125
      %v1127 = vpop.f32.mrf.mxu0
      %v1128 = vpop.f32.mrf.mxu0
      %v1129 = vadd.f32 0.0, %v1128
      %v1130 = vpop.f32.mrf.mxu0
      %1131 = vdwg.mxu0
      %v1133 = vsel %vm426, %v329, 0
      %v1136 = vsel %vm426, %v377, 0
      %1138 = vmatprep.subr.bf16.mxu0 0
      %1139 = vmatpush1.bf16.xpose.msra.mxu0 0
      %1140 = vmatprep.subr.bf16.mxu0 0
      %1141 = vmatpush1.bf16.xpose.msra.mxu0 0
      %1142 = vmatprep.subr.bf16.mxu0 0
      %1143 = vmatpush1.bf16.xpose.msra.mxu0 0
      %1144 = vmatprep.subr.bf16.mxu0 0
      %1145 = vmatpush1.bf16.xpose.msra.mxu0 0
      %1146 = vmatprep.subr.bf16.mxu0 0
      %1147 = vmatpush1.bf16.xpose.msra.mxu0 0
      %1148 = vmatprep.subr.bf16.mxu0 0
      %1149 = vmatpush1.bf16.xpose.msra.mxu0 0
      %1150 = vmatprep.subr.bf16.mxu0 0
      %1151 = vmatpush1.bf16.xpose.msra.mxu0 0
      %1152 = vmatprep.subr.bf16.mxu0 0
      %1153 = vmatpush1.bf16.xpose.msra.mxu0 %v1136
      %1154 = vmatprep.subr.bf16.mxu0 0
      %1155 = vmatpush2.bf16.xpose.msra.mxu0 0
      %1156 = vmatprep.subr.bf16.mxu0 0
      %1157 = vmatpush2.bf16.xpose.msra.mxu0 0
      %1158 = vmatprep.subr.bf16.mxu0 0
      %1159 = vmatpush2.bf16.xpose.msra.mxu0 0
      %1160 = vmatprep.subr.bf16.mxu0 0
      %1161 = vmatpush2.bf16.xpose.msra.mxu0 0
      %1162 = vmatprep.subr.bf16.mxu0 0
      %1163 = vmatpush2.bf16.xpose.msra.mxu0 0
      %1164 = vmatprep.subr.bf16.mxu0 0
      %1165 = vmatpush2.bf16.xpose.msra.mxu0 0
      %1166 = vmatprep.subr.bf16.mxu0 0
      %1167 = vmatpush2.bf16.xpose.msra.mxu0 0
      %1168 = vmatprep.subr.bf16.mxu0 0
      %1169 = vmatpush2.bf16.xpose.msra.mxu0 0
      %1170 = vmatprep.mubr.bf16.mxu0 0
      %1171 = vmatmul.mubr.bf16.gmra.mxu0 %v1133
      %v1172 = vpop.f32.mrf.mxu0
      %v1173 = vadd.f32 0.0, %v1172
      %v1174 = vpop.f32.mrf.mxu0
      %v1175 = vpop.f32.mrf.mxu0
      %v1176 = vadd.f32 0.0, %v1175
      %v1177 = vpop.f32.mrf.mxu0
      %1178 = vdwg.mxu0
      %v1179 = vmul.f32 %v468, 0.35355338
      %v1180 = vmul.f32 %v471, 0.35355338
      %v1181 = vmul.f32 %v515, 0.35355338
      %v1182 = vmul.f32 %v518, 0.35355338
      %v1183 = vmul.f32 %v562, 0.35355338
      %v1184 = vmul.f32 %v565, 0.35355338
      %v1185 = vmul.f32 %v609, 0.35355338
      %v1186 = vmul.f32 %v612, 0.35355338
      %v1187 = vmul.f32 %v656, 0.35355338
      %v1188 = vmul.f32 %v659, 0.35355338
      %v1189 = vmul.f32 %v703, 0.35355338
      %v1190 = vmul.f32 %v706, 0.35355338
      %v1191 = vmul.f32 %v750, 0.35355338
      %v1192 = vmul.f32 %v753, 0.35355338
      %v1193 = vmul.f32 %v797, 0.35355338
      %v1194 = vmul.f32 %v800, 0.35355338
      %v1195 = vmul.f32 %v844, 0.35355338
      %v1196 = vmul.f32 %v847, 0.35355338
      %v1197 = vmul.f32 %v891, 0.35355338
      %v1198 = vmul.f32 %v894, 0.35355338
      %v1199 = vmul.f32 %v938, 0.35355338
      %v1200 = vmul.f32 %v941, 0.35355338
      %v1201 = vmul.f32 %v985, 0.35355338
      %v1202 = vmul.f32 %v988, 0.35355338
      %v1203 = vmul.f32 %v1032, 0.35355338
      %v1204 = vmul.f32 %v1035, 0.35355338
      %v1205 = vmul.f32 %v1079, 0.35355338
      %v1206 = vmul.f32 %v1082, 0.35355338
      %v1207 = vmul.f32 %v1126, 0.35355338
      %v1208 = vmul.f32 %v1129, 0.35355338
      %v1209 = vmul.f32 %v1173, 0.35355338
      %v1210 = vmul.f32 %v1176, 0.35355338
      %v1211 = vld [vmem:[%s272] sm:$0xff]
      %v1212 = vld [vmem:[%s272 + $0x8] sm:$0xff]
      %v1213 = vld [vmem:[%s272 + $0x10] sm:$0xff]
      %v1214 = vld [vmem:[%s272 + $0x18] sm:$0xff]
      %v1215 = vld [vmem:[%s272 + $0x20] sm:$0xff]
      %v1216 = vld [vmem:[%s272 + $0x28] sm:$0xff]
      %v1217 = vld [vmem:[%s272 + $0x30] sm:$0xff]
      %v1218 = vld [vmem:[%s272 + $0x38] sm:$0xff]
      %v1219 = vld [vmem:[%s272 + $0x40] sm:$0xff]
      %v1220 = vld [vmem:[%s272 + $0x48] sm:$0xff]
      %v1221 = vld [vmem:[%s272 + $0x50] sm:$0xff]
      %v1222 = vld [vmem:[%s272 + $0x58] sm:$0xff]
      %v1223 = vld [vmem:[%s272 + $0x60] sm:$0xff]
      %v1224 = vld [vmem:[%s272 + $0x68] sm:$0xff]
      %v1225 = vld [vmem:[%s272 + $0x70] sm:$0xff]
      %v1226 = vld [vmem:[%s272 + $0x78] sm:$0xff]
      %v1227 = vld [vmem:[%s272 + $0x80] sm:$0xff]
      %v1228 = vld [vmem:[%s272 + $0x88] sm:$0xff]
      %v1229 = vld [vmem:[%s272 + $0x90] sm:$0xff]
      %v1230 = vld [vmem:[%s272 + $0x98] sm:$0xff]
      %v1231 = vld [vmem:[%s272 + $0xa0] sm:$0xff]
      %v1232 = vld [vmem:[%s272 + $0xa8] sm:$0xff]
      %v1233 = vld [vmem:[%s272 + $0xb0] sm:$0xff]
      %v1234 = vld [vmem:[%s272 + $0xb8] sm:$0xff]
      %v1235 = vld [vmem:[%s272 + $0xc0] sm:$0xff]
      %v1236 = vld [vmem:[%s272 + $0xc8] sm:$0xff]
      %v1237 = vld [vmem:[%s272 + $0xd0] sm:$0xff]
      %v1238 = vld [vmem:[%s272 + $0xd8] sm:$0xff]
      %v1239 = vld [vmem:[%s272 + $0xe0] sm:$0xff]
      %v1240 = vld [vmem:[%s272 + $0xe8] sm:$0xff]
      %v1241 = vld [vmem:[%s272 + $0xf0] sm:$0xff]
      %v1242 = vld [vmem:[%s272 + $0xf8] sm:$0xff]
      %v1243 = vadd.f32 %v1179, %v1211
      %v1244 = vadd.f32 %v1180, %v1212
      %v1245 = vadd.f32 %v1181, %v1213
      %v1246 = vadd.f32 %v1182, %v1214
      %v1247 = vadd.f32 %v1183, %v1215
      %v1248 = vadd.f32 %v1184, %v1216
      %v1249 = vadd.f32 %v1185, %v1217
      %v1250 = vadd.f32 %v1186, %v1218
      %v1251 = vadd.f32 %v1187, %v1219
      %v1252 = vadd.f32 %v1188, %v1220
      %v1253 = vadd.f32 %v1189, %v1221
      %v1254 = vadd.f32 %v1190, %v1222
      %v1255 = vadd.f32 %v1191, %v1223
      %v1256 = vadd.f32 %v1192, %v1224
      %v1257 = vadd.f32 %v1193, %v1225
      %v1258 = vadd.f32 %v1194, %v1226
      %v1259 = vadd.f32 %v1195, %v1227
      %v1260 = vadd.f32 %v1196, %v1228
      %v1261 = vadd.f32 %v1197, %v1229
      %v1262 = vadd.f32 %v1198, %v1230
      %v1263 = vadd.f32 %v1199, %v1231
      %v1264 = vadd.f32 %v1200, %v1232
      %v1265 = vadd.f32 %v1201, %v1233
      %v1266 = vadd.f32 %v1202, %v1234
      %v1267 = vadd.f32 %v1203, %v1235
      %v1268 = vadd.f32 %v1204, %v1236
      %v1269 = vadd.f32 %v1205, %v1237
      %v1270 = vadd.f32 %v1206, %v1238
      %v1271 = vadd.f32 %v1207, %v1239
      %v1272 = vadd.f32 %v1208, %v1240
      %v1273 = vadd.f32 %v1209, %v1241
      %v1274 = vadd.f32 %v1210, %v1242
      %vm1275 = vcmask 130048
      %v1276 = vsel %vm1275, %v1243, -inf
      %1277 = vmax.xlane.f32.xlu0 %v1276
      %v1278 = vpop.xlane.xlu0 %1277
      %v1279 = vsel %vm1275, %v1244, -inf
      %1280 = vmax.xlane.f32.xlu0 %v1279
      %v1281 = vpop.xlane.xlu0 %1280
      %v1282 = vsel %vm1275, %v1245, -inf
      %1283 = vmax.xlane.f32.xlu0 %v1282
      %v1284 = vpop.xlane.xlu0 %1283
      %v1285 = vsel %vm1275, %v1246, -inf
      %1286 = vmax.xlane.f32.xlu0 %v1285
      %v1287 = vpop.xlane.xlu0 %1286
      %v1288 = vsel %vm1275, %v1247, -inf
      %1289 = vmax.xlane.f32.xlu0 %v1288
      %v1290 = vpop.xlane.xlu0 %1289
      %v1291 = vsel %vm1275, %v1248, -inf
      %1292 = vmax.xlane.f32.xlu0 %v1291
      %v1293 = vpop.xlane.xlu0 %1292
      %v1294 = vsel %vm1275, %v1249, -inf
      %1295 = vmax.xlane.f32.xlu0 %v1294
      %v1296 = vpop.xlane.xlu0 %1295
      %v1297 = vsel %vm1275, %v1250, -inf
      %1298 = vmax.xlane.f32.xlu0 %v1297
      %v1299 = vpop.xlane.xlu0 %1298
      %v1300 = vsel %vm1275, %v1251, -inf
      %1301 = vmax.xlane.f32.xlu0 %v1300
      %v1302 = vpop.xlane.xlu0 %1301
      %v1303 = vsel %vm1275, %v1252, -inf
      %1304 = vmax.xlane.f32.xlu0 %v1303
      %v1305 = vpop.xlane.xlu0 %1304
      %v1306 = vsel %vm1275, %v1253, -inf
      %1307 = vmax.xlane.f32.xlu0 %v1306
      %v1308 = vpop.xlane.xlu0 %1307
      %v1309 = vsel %vm1275, %v1254, -inf
      %1310 = vmax.xlane.f32.xlu0 %v1309
      %v1311 = vpop.xlane.xlu0 %1310
      %v1312 = vsel %vm1275, %v1255, -inf
      %1313 = vmax.xlane.f32.xlu0 %v1312
      %v1314 = vpop.xlane.xlu0 %1313
      %v1315 = vsel %vm1275, %v1256, -inf
      %1316 = vmax.xlane.f32.xlu0 %v1315
      %v1317 = vpop.xlane.xlu0 %1316
      %v1318 = vsel %vm1275, %v1257, -inf
      %1319 = vmax.xlane.f32.xlu0 %v1318
      %v1320 = vpop.xlane.xlu0 %1319
      %v1321 = vsel %vm1275, %v1258, -inf
      %1322 = vmax.xlane.f32.xlu0 %v1321
      %v1323 = vpop.xlane.xlu0 %1322
      %v1324 = vsel %vm1275, %v1259, -inf
      %1325 = vmax.xlane.f32.xlu0 %v1324
      %v1326 = vpop.xlane.xlu0 %1325
      %v1327 = vsel %vm1275, %v1260, -inf
      %1328 = vmax.xlane.f32.xlu0 %v1327
      %v1329 = vpop.xlane.xlu0 %1328
      %v1330 = vsel %vm1275, %v1261, -inf
      %1331 = vmax.xlane.f32.xlu0 %v1330
      %v1332 = vpop.xlane.xlu0 %1331
      %v1333 = vsel %vm1275, %v1262, -inf
      %1334 = vmax.xlane.f32.xlu0 %v1333
      %v1335 = vpop.xlane.xlu0 %1334
      %v1336 = vsel %vm1275, %v1263, -inf
      %1337 = vmax.xlane.f32.xlu0 %v1336
      %v1338 = vpop.xlane.xlu0 %1337
      %v1339 = vsel %vm1275, %v1264, -inf
      %1340 = vmax.xlane.f32.xlu0 %v1339
      %v1341 = vpop.xlane.xlu0 %1340
      %v1342 = vsel %vm1275, %v1265, -inf
      %1343 = vmax.xlane.f32.xlu0 %v1342
      %v1344 = vpop.xlane.xlu0 %1343
      %v1345 = vsel %vm1275, %v1266, -inf
      %1346 = vmax.xlane.f32.xlu0 %v1345
      %v1347 = vpop.xlane.xlu0 %1346
      %v1348 = vsel %vm1275, %v1267, -inf
      %1349 = vmax.xlane.f32.xlu0 %v1348
      %v1350 = vpop.xlane.xlu0 %1349
      %v1351 = vsel %vm1275, %v1268, -inf
      %1352 = vmax.xlane.f32.xlu0 %v1351
      %v1353 = vpop.xlane.xlu0 %1352
      %v1354 = vsel %vm1275, %v1269, -inf
      %1355 = vmax.xlane.f32.xlu0 %v1354
      %v1356 = vpop.xlane.xlu0 %1355
      %v1357 = vsel %vm1275, %v1270, -inf
      %1358 = vmax.xlane.f32.xlu0 %v1357
      %v1359 = vpop.xlane.xlu0 %1358
      %v1360 = vsel %vm1275, %v1271, -inf
      %1361 = vmax.xlane.f32.xlu0 %v1360
      %v1362 = vpop.xlane.xlu0 %1361
      %v1363 = vsel %vm1275, %v1272, -inf
      %1364 = vmax.xlane.f32.xlu0 %v1363
      %v1365 = vpop.xlane.xlu0 %1364
      %v1366 = vsel %vm1275, %v1273, -inf
      %1367 = vmax.xlane.f32.xlu0 %v1366
      %v1368 = vpop.xlane.xlu0 %1367
      %v1369 = vsel %vm1275, %v1274, -inf
      %1370 = vmax.xlane.f32.xlu0 %v1369
      %v1371 = vpop.xlane.xlu0 %1370
      %v1372 = vsub.f32 %v1243, %v1278
      %v1373 = vsub.f32 %v1244, %v1281
      %v1374 = vsub.f32 %v1245, %v1284
      %v1375 = vsub.f32 %v1246, %v1287
      %v1376 = vsub.f32 %v1247, %v1290
      %v1377 = vsub.f32 %v1248, %v1293
      %v1378 = vsub.f32 %v1249, %v1296
      %v1379 = vsub.f32 %v1250, %v1299
      %v1380 = vsub.f32 %v1251, %v1302
      %v1381 = vsub.f32 %v1252, %v1305
      %v1382 = vsub.f32 %v1253, %v1308
      %v1383 = vsub.f32 %v1254, %v1311
      %v1384 = vsub.f32 %v1255, %v1314
      %v1385 = vsub.f32 %v1256, %v1317
      %v1386 = vsub.f32 %v1257, %v1320
      %v1387 = vsub.f32 %v1258, %v1323
      %v1388 = vsub.f32 %v1259, %v1326
      %v1389 = vsub.f32 %v1260, %v1329
      %v1390 = vsub.f32 %v1261, %v1332
      %v1391 = vsub.f32 %v1262, %v1335
      %v1392 = vsub.f32 %v1263, %v1338
      %v1393 = vsub.f32 %v1264, %v1341
      %v1394 = vsub.f32 %v1265, %v1344
      %v1395 = vsub.f32 %v1266, %v1347
      %v1396 = vsub.f32 %v1267, %v1350
      %v1397 = vsub.f32 %v1268, %v1353
      %v1398 = vsub.f32 %v1269, %v1356
      %v1399 = vsub.f32 %v1270, %v1359
      %v1400 = vsub.f32 %v1271, %v1362
      %v1401 = vsub.f32 %v1272, %v1365
      %v1402 = vsub.f32 %v1273, %v1368
      %v1403 = vsub.f32 %v1274, %v1371
      %v1404 = vmul.f32 %v1372, 1.442695
      %v1405 = vpow.pop %v1404
      %v1406 = vmul.f32 %v1373, 1.442695
      %v1407 = vpow.pop %v1406
      %v1408 = vmul.f32 %v1374, 1.442695
      %v1409 = vpow.pop %v1408
      %v1410 = vmul.f32 %v1375, 1.442695
      %v1411 = vpow.pop %v1410
      %v1412 = vmul.f32 %v1376, 1.442695
      %v1413 = vpow.pop %v1412
      %v1414 = vmul.f32 %v1377, 1.442695
      %v1415 = vpow.pop %v1414
      %v1416 = vmul.f32 %v1378, 1.442695
      %v1417 = vpow.pop %v1416
      %v1418 = vmul.f32 %v1379, 1.442695
      %v1419 = vpow.pop %v1418
      %v1420 = vmul.f32 %v1380, 1.442695
      %v1421 = vpow.pop %v1420
      %v1422 = vmul.f32 %v1381, 1.442695
      %v1423 = vpow.pop %v1422
      %v1424 = vmul.f32 %v1382, 1.442695
      %v1425 = vpow.pop %v1424
      %v1426 = vmul.f32 %v1383, 1.442695
      %v1427 = vpow.pop %v1426
      %v1428 = vmul.f32 %v1384, 1.442695
      %v1429 = vpow.pop %v1428
      %v1430 = vmul.f32 %v1385, 1.442695
      %v1431 = vpow.pop %v1430
      %v1432 = vmul.f32 %v1386, 1.442695
      %v1433 = vpow.pop %v1432
      %v1434 = vmul.f32 %v1387, 1.442695
      %v1435 = vpow.pop %v1434
      %v1436 = vmul.f32 %v1388, 1.442695
      %v1437 = vpow.pop %v1436
      %v1438 = vmul.f32 %v1389, 1.442695
      %v1439 = vpow.pop %v1438
      %v1440 = vmul.f32 %v1390, 1.442695
      %v1441 = vpow.pop %v1440
      %v1442 = vmul.f32 %v1391, 1.442695
      %v1443 = vpow.pop %v1442
      %v1444 = vmul.f32 %v1392, 1.442695
      %v1445 = vpow.pop %v1444
      %v1446 = vmul.f32 %v1393, 1.442695
      %v1447 = vpow.pop %v1446
      %v1448 = vmul.f32 %v1394, 1.442695
      %v1449 = vpow.pop %v1448
      %v1450 = vmul.f32 %v1395, 1.442695
      %v1451 = vpow.pop %v1450
      %v1452 = vmul.f32 %v1396, 1.442695
      %v1453 = vpow.pop %v1452
      %v1454 = vmul.f32 %v1397, 1.442695
      %v1455 = vpow.pop %v1454
      %v1456 = vmul.f32 %v1398, 1.442695
      %v1457 = vpow.pop %v1456
      %v1458 = vmul.f32 %v1399, 1.442695
      %v1459 = vpow.pop %v1458
      %v1460 = vmul.f32 %v1400, 1.442695
      %v1461 = vpow.pop %v1460
      %v1462 = vmul.f32 %v1401, 1.442695
      %v1463 = vpow.pop %v1462
      %v1464 = vmul.f32 %v1402, 1.442695
      %v1465 = vpow.pop %v1464
      %v1466 = vmul.f32 %v1403, 1.442695
      %v1467 = vpow.pop %v1466
      %v1468 = vsel %vm1275, %v1405, 0.0
      %1469 = vadd.xlane.f32.xlu0 %v1468
      %v1470 = vpop.xlane.xlu0 %1469
      %v1471 = vsel %vm1275, %v1407, 0.0
      %1472 = vadd.xlane.f32.xlu0 %v1471
      %v1473 = vpop.xlane.xlu0 %1472
      %v1474 = vsel %vm1275, %v1409, 0.0
      %1475 = vadd.xlane.f32.xlu0 %v1474
      %v1476 = vpop.xlane.xlu0 %1475
      %v1477 = vsel %vm1275, %v1411, 0.0
      %1478 = vadd.xlane.f32.xlu0 %v1477
      %v1479 = vpop.xlane.xlu0 %1478
      %v1480 = vsel %vm1275, %v1413, 0.0
      %1481 = vadd.xlane.f32.xlu0 %v1480
      %v1482 = vpop.xlane.xlu0 %1481
      %v1483 = vsel %vm1275, %v1415, 0.0
      %1484 = vadd.xlane.f32.xlu0 %v1483
      %v1485 = vpop.xlane.xlu0 %1484
      %v1486 = vsel %vm1275, %v1417, 0.0
      %1487 = vadd.xlane.f32.xlu0 %v1486
      %v1488 = vpop.xlane.xlu0 %1487
      %v1489 = vsel %vm1275, %v1419, 0.0
      %1490 = vadd.xlane.f32.xlu0 %v1489
      %v1491 = vpop.xlane.xlu0 %1490
      %v1492 = vsel %vm1275, %v1421, 0.0
      %1493 = vadd.xlane.f32.xlu0 %v1492
      %v1494 = vpop.xlane.xlu0 %1493
      %v1495 = vsel %vm1275, %v1423, 0.0
      %1496 = vadd.xlane.f32.xlu0 %v1495
      %v1497 = vpop.xlane.xlu0 %1496
      %v1498 = vsel %vm1275, %v1425, 0.0
      %1499 = vadd.xlane.f32.xlu0 %v1498
      %v1500 = vpop.xlane.xlu0 %1499
      %v1501 = vsel %vm1275, %v1427, 0.0
      %1502 = vadd.xlane.f32.xlu0 %v1501
      %v1503 = vpop.xlane.xlu0 %1502
      %v1504 = vsel %vm1275, %v1429, 0.0
      %1505 = vadd.xlane.f32.xlu0 %v1504
      %v1506 = vpop.xlane.xlu0 %1505
      %v1507 = vsel %vm1275, %v1431, 0.0
      %1508 = vadd.xlane.f32.xlu0 %v1507
      %v1509 = vpop.xlane.xlu0 %1508
      %v1510 = vsel %vm1275, %v1433, 0.0
      %1511 = vadd.xlane.f32.xlu0 %v1510
      %v1512 = vpop.xlane.xlu0 %1511
      %v1513 = vsel %vm1275, %v1435, 0.0
      %1514 = vadd.xlane.f32.xlu0 %v1513
      %v1515 = vpop.xlane.xlu0 %1514
      %v1516 = vsel %vm1275, %v1437, 0.0
      %1517 = vadd.xlane.f32.xlu0 %v1516
      %v1518 = vpop.xlane.xlu0 %1517
      %v1519 = vsel %vm1275, %v1439, 0.0
      %1520 = vadd.xlane.f32.xlu0 %v1519
      %v1521 = vpop.xlane.xlu0 %1520
      %v1522 = vsel %vm1275, %v1441, 0.0
      %1523 = vadd.xlane.f32.xlu0 %v1522
      %v1524 = vpop.xlane.xlu0 %1523
      %v1525 = vsel %vm1275, %v1443, 0.0
      %1526 = vadd.xlane.f32.xlu0 %v1525
      %v1527 = vpop.xlane.xlu0 %1526
      %v1528 = vsel %vm1275, %v1445, 0.0
      %1529 = vadd.xlane.f32.xlu0 %v1528
      %v1530 = vpop.xlane.xlu0 %1529
      %v1531 = vsel %vm1275, %v1447, 0.0
      %1532 = vadd.xlane.f32.xlu0 %v1531
      %v1533 = vpop.xlane.xlu0 %1532
      %v1534 = vsel %vm1275, %v1449, 0.0
      %1535 = vadd.xlane.f32.xlu0 %v1534
      %v1536 = vpop.xlane.xlu0 %1535
      %v1537 = vsel %vm1275, %v1451, 0.0
      %1538 = vadd.xlane.f32.xlu0 %v1537
      %v1539 = vpop.xlane.xlu0 %1538
      %v1540 = vsel %vm1275, %v1453, 0.0
      %1541 = vadd.xlane.f32.xlu0 %v1540
      %v1542 = vpop.xlane.xlu0 %1541
      %v1543 = vsel %vm1275, %v1455, 0.0
      %1544 = vadd.xlane.f32.xlu0 %v1543
      %v1545 = vpop.xlane.xlu0 %1544
      %v1546 = vsel %vm1275, %v1457, 0.0
      %1547 = vadd.xlane.f32.xlu0 %v1546
      %v1548 = vpop.xlane.xlu0 %1547
      %v1549 = vsel %vm1275, %v1459, 0.0
      %1550 = vadd.xlane.f32.xlu0 %v1549
      %v1551 = vpop.xlane.xlu0 %1550
      %v1552 = vsel %vm1275, %v1461, 0.0
      %1553 = vadd.xlane.f32.xlu0 %v1552
      %v1554 = vpop.xlane.xlu0 %1553
      %v1555 = vsel %vm1275, %v1463, 0.0
      %1556 = vadd.xlane.f32.xlu0 %v1555
      %v1557 = vpop.xlane.xlu0 %1556
      %v1558 = vsel %vm1275, %v1465, 0.0
      %1559 = vadd.xlane.f32.xlu0 %v1558
      %v1560 = vpop.xlane.xlu0 %1559
      %v1561 = vsel %vm1275, %v1467, 0.0
      %1562 = vadd.xlane.f32.xlu0 %v1561
      %v1563 = vpop.xlane.xlu0 %1562
      %v1564 = vpack.c.bf16 %v1407, %v1405
      %v1565 = vpack.c.bf16 %v1411, %v1409
      %v1566 = vpack.c.bf16 %v1415, %v1413
      %v1567 = vpack.c.bf16 %v1419, %v1417
      %v1568 = vpack.c.bf16 %v1423, %v1421
      %v1569 = vpack.c.bf16 %v1427, %v1425
      %v1570 = vpack.c.bf16 %v1431, %v1429
      %v1571 = vpack.c.bf16 %v1435, %v1433
      %v1572 = vpack.c.bf16 %v1439, %v1437
      %v1573 = vpack.c.bf16 %v1443, %v1441
      %v1574 = vpack.c.bf16 %v1447, %v1445
      %v1575 = vpack.c.bf16 %v1451, %v1449
      %v1576 = vpack.c.bf16 %v1455, %v1453
      %v1577 = vpack.c.bf16 %v1459, %v1457
      %v1578 = vpack.c.bf16 %v1463, %v1461
      %v1579 = vpack.c.bf16 %v1467, %v1465
      %v1581 = vsel %vm1275, %v1564, 0
      %1583 = vmatprep.subr.bf16.mxu0 0
      %1584 = vmatpush1.bf16.msra.mxu0 0
      %1585 = vmatprep.subr.bf16.mxu0 0
      %1586 = vmatpush1.bf16.msra.mxu0 0
      %1587 = vmatprep.subr.bf16.mxu0 0
      %1588 = vmatpush1.bf16.msra.mxu0 0
      %1589 = vmatprep.subr.bf16.mxu0 0
      %1590 = vmatpush1.bf16.msra.mxu0 0
      %1591 = vmatprep.subr.bf16.mxu0 0
      %1592 = vmatpush1.bf16.msra.mxu0 0
      %1593 = vmatprep.subr.bf16.mxu0 0
      %1594 = vmatpush1.bf16.msra.mxu0 0
      %1595 = vmatprep.subr.bf16.mxu0 0
      %1596 = vmatpush1.bf16.msra.mxu0 0
      %1597 = vmatprep.subr.bf16.mxu0 0
      %1598 = vmatpush1.bf16.msra.mxu0 %v410
      %1599 = vmatprep.subr.bf16.mxu0 0
      %1600 = vmatpush2.bf16.msra.mxu0 0
      %1601 = vmatprep.subr.bf16.mxu0 0
      %1602 = vmatpush2.bf16.msra.mxu0 0
      %1603 = vmatprep.subr.bf16.mxu0 0
      %1604 = vmatpush2.bf16.msra.mxu0 0
      %1605 = vmatprep.subr.bf16.mxu0 0
      %1606 = vmatpush2.bf16.msra.mxu0 0
      %1607 = vmatprep.subr.bf16.mxu0 0
      %1608 = vmatpush2.bf16.msra.mxu0 0
      %1609 = vmatprep.subr.bf16.mxu0 0
      %1610 = vmatpush2.bf16.msra.mxu0 0
      %1611 = vmatprep.subr.bf16.mxu0 0
      %1612 = vmatpush2.bf16.msra.mxu0 0
      %1613 = vmatprep.subr.bf16.mxu0 0
      %1614 = vmatpush2.bf16.msra.mxu0 0
      %1615 = vmatprep.mubr.bf16.mxu0 0
      %1616 = vmatmul.mubr.bf16.gmra.mxu0 %v1581
      %v1617 = vpop.f32.mrf.mxu0
      %v1618 = vadd.f32 0.0, %v1617
      %v1619 = vpop.f32.mrf.mxu0
      %v1620 = vpop.f32.mrf.mxu0
      %v1621 = vadd.f32 0.0, %v1620
      %v1622 = vpop.f32.mrf.mxu0
      %1623 = vdwg.mxu0
      %v1625 = vsel %vm1275, %v1565, 0
      %1627 = vmatprep.subr.bf16.mxu0 0
      %1628 = vmatpush1.bf16.msra.mxu0 0
      %1629 = vmatprep.subr.bf16.mxu0 0
      %1630 = vmatpush1.bf16.msra.mxu0 0
      %1631 = vmatprep.subr.bf16.mxu0 0
      %1632 = vmatpush1.bf16.msra.mxu0 0
      %1633 = vmatprep.subr.bf16.mxu0 0
      %1634 = vmatpush1.bf16.msra.mxu0 0
      %1635 = vmatprep.subr.bf16.mxu0 0
      %1636 = vmatpush1.bf16.msra.mxu0 0
      %1637 = vmatprep.subr.bf16.mxu0 0
      %1638 = vmatpush1.bf16.msra.mxu0 0
      %1639 = vmatprep.subr.bf16.mxu0 0
      %1640 = vmatpush1.bf16.msra.mxu0 0
      %1641 = vmatprep.subr.bf16.mxu0 0
      %1642 = vmatpush1.bf16.msra.mxu0 %v411
      %1643 = vmatprep.subr.bf16.mxu0 0
      %1644 = vmatpush2.bf16.msra.mxu0 0
      %1645 = vmatprep.subr.bf16.mxu0 0
      %1646 = vmatpush2.bf16.msra.mxu0 0
      %1647 = vmatprep.subr.bf16.mxu0 0
      %1648 = vmatpush2.bf16.msra.mxu0 0
      %1649 = vmatprep.subr.bf16.mxu0 0
      %1650 = vmatpush2.bf16.msra.mxu0 0
      %1651 = vmatprep.subr.bf16.mxu0 0
      %1652 = vmatpush2.bf16.msra.mxu0 0
      %1653 = vmatprep.subr.bf16.mxu0 0
      %1654 = vmatpush2.bf16.msra.mxu0 0
      %1655 = vmatprep.subr.bf16.mxu0 0
      %1656 = vmatpush2.bf16.msra.mxu0 0
      %1657 = vmatprep.subr.bf16.mxu0 0
      %1658 = vmatpush2.bf16.msra.mxu0 0
      %1659 = vmatprep.mubr.bf16.mxu0 0
      %1660 = vmatmul.mubr.bf16.gmra.mxu0 %v1625
      %v1661 = vpop.f32.mrf.mxu0
      %v1662 = vadd.f32 0.0, %v1661
      %v1663 = vpop.f32.mrf.mxu0
      %v1664 = vpop.f32.mrf.mxu0
      %v1665 = vadd.f32 0.0, %v1664
      %v1666 = vpop.f32.mrf.mxu0
      %1667 = vdwg.mxu0
      %v1669 = vsel %vm1275, %v1566, 0
      %1671 = vmatprep.subr.bf16.mxu0 0
      %1672 = vmatpush1.bf16.msra.mxu0 0
      %1673 = vmatprep.subr.bf16.mxu0 0
      %1674 = vmatpush1.bf16.msra.mxu0 0
      %1675 = vmatprep.subr.bf16.mxu0 0
      %1676 = vmatpush1.bf16.msra.mxu0 0
      %1677 = vmatprep.subr.bf16.mxu0 0
      %1678 = vmatpush1.bf16.msra.mxu0 0
      %1679 = vmatprep.subr.bf16.mxu0 0
      %1680 = vmatpush1.bf16.msra.mxu0 0
      %1681 = vmatprep.subr.bf16.mxu0 0
      %1682 = vmatpush1.bf16.msra.mxu0 0
      %1683 = vmatprep.subr.bf16.mxu0 0
      %1684 = vmatpush1.bf16.msra.mxu0 0
      %1685 = vmatprep.subr.bf16.mxu0 0
      %1686 = vmatpush1.bf16.msra.mxu0 %v412
      %1687 = vmatprep.subr.bf16.mxu0 0
      %1688 = vmatpush2.bf16.msra.mxu0 0
      %1689 = vmatprep.subr.bf16.mxu0 0
      %1690 = vmatpush2.bf16.msra.mxu0 0
      %1691 = vmatprep.subr.bf16.mxu0 0
      %1692 = vmatpush2.bf16.msra.mxu0 0
      %1693 = vmatprep.subr.bf16.mxu0 0
      %1694 = vmatpush2.bf16.msra.mxu0 0
      %1695 = vmatprep.subr.bf16.mxu0 0
      %1696 = vmatpush2.bf16.msra.mxu0 0
      %1697 = vmatprep.subr.bf16.mxu0 0
      %1698 = vmatpush2.bf16.msra.mxu0 0
      %1699 = vmatprep.subr.bf16.mxu0 0
      %1700 = vmatpush2.bf16.msra.mxu0 0
      %1701 = vmatprep.subr.bf16.mxu0 0
      %1702 = vmatpush2.bf16.msra.mxu0 0
      %1703 = vmatprep.mubr.bf16.mxu0 0
      %1704 = vmatmul.mubr.bf16.gmra.mxu0 %v1669
      %v1705 = vpop.f32.mrf.mxu0
      %v1706 = vadd.f32 0.0, %v1705
      %v1707 = vpop.f32.mrf.mxu0
      %v1708 = vpop.f32.mrf.mxu0
      %v1709 = vadd.f32 0.0, %v1708
      %v1710 = vpop.f32.mrf.mxu0
      %1711 = vdwg.mxu0
      %v1713 = vsel %vm1275, %v1567, 0
      %1715 = vmatprep.subr.bf16.mxu0 0
      %1716 = vmatpush1.bf16.msra.mxu0 0
      %1717 = vmatprep.subr.bf16.mxu0 0
      %1718 = vmatpush1.bf16.msra.mxu0 0
      %1719 = vmatprep.subr.bf16.mxu0 0
      %1720 = vmatpush1.bf16.msra.mxu0 0
      %1721 = vmatprep.subr.bf16.mxu0 0
      %1722 = vmatpush1.bf16.msra.mxu0 0
      %1723 = vmatprep.subr.bf16.mxu0 0
      %1724 = vmatpush1.bf16.msra.mxu0 0
      %1725 = vmatprep.subr.bf16.mxu0 0
      %1726 = vmatpush1.bf16.msra.mxu0 0
      %1727 = vmatprep.subr.bf16.mxu0 0
      %1728 = vmatpush1.bf16.msra.mxu0 0
      %1729 = vmatprep.subr.bf16.mxu0 0
      %1730 = vmatpush1.bf16.msra.mxu0 %v413
      %1731 = vmatprep.subr.bf16.mxu0 0
      %1732 = vmatpush2.bf16.msra.mxu0 0
      %1733 = vmatprep.subr.bf16.mxu0 0
      %1734 = vmatpush2.bf16.msra.mxu0 0
      %1735 = vmatprep.subr.bf16.mxu0 0
      %1736 = vmatpush2.bf16.msra.mxu0 0
      %1737 = vmatprep.subr.bf16.mxu0 0
      %1738 = vmatpush2.bf16.msra.mxu0 0
      %1739 = vmatprep.subr.bf16.mxu0 0
      %1740 = vmatpush2.bf16.msra.mxu0 0
      %1741 = vmatprep.subr.bf16.mxu0 0
      %1742 = vmatpush2.bf16.msra.mxu0 0
      %1743 = vmatprep.subr.bf16.mxu0 0
      %1744 = vmatpush2.bf16.msra.mxu0 0
      %1745 = vmatprep.subr.bf16.mxu0 0
      %1746 = vmatpush2.bf16.msra.mxu0 0
      %1747 = vmatprep.mubr.bf16.mxu0 0
      %1748 = vmatmul.mubr.bf16.gmra.mxu0 %v1713
      %v1749 = vpop.f32.mrf.mxu0
      %v1750 = vadd.f32 0.0, %v1749
      %v1751 = vpop.f32.mrf.mxu0
      %v1752 = vpop.f32.mrf.mxu0
      %v1753 = vadd.f32 0.0, %v1752
      %v1754 = vpop.f32.mrf.mxu0
      %1755 = vdwg.mxu0
      %v1757 = vsel %vm1275, %v1568, 0
      %1759 = vmatprep.subr.bf16.mxu0 0
      %1760 = vmatpush1.bf16.msra.mxu0 0
      %1761 = vmatprep.subr.bf16.mxu0 0
      %1762 = vmatpush1.bf16.msra.mxu0 0
      %1763 = vmatprep.subr.bf16.mxu0 0
      %1764 = vmatpush1.bf16.msra.mxu0 0
      %1765 = vmatprep.subr.bf16.mxu0 0
      %1766 = vmatpush1.bf16.msra.mxu0 0
      %1767 = vmatprep.subr.bf16.mxu0 0
      %1768 = vmatpush1.bf16.msra.mxu0 0
      %1769 = vmatprep.subr.bf16.mxu0 0
      %1770 = vmatpush1.bf16.msra.mxu0 0
      %1771 = vmatprep.subr.bf16.mxu0 0
      %1772 = vmatpush1.bf16.msra.mxu0 0
      %1773 = vmatprep.subr.bf16.mxu0 0
      %1774 = vmatpush1.bf16.msra.mxu0 %v414
      %1775 = vmatprep.subr.bf16.mxu0 0
      %1776 = vmatpush2.bf16.msra.mxu0 0
      %1777 = vmatprep.subr.bf16.mxu0 0
      %1778 = vmatpush2.bf16.msra.mxu0 0
      %1779 = vmatprep.subr.bf16.mxu0 0
      %1780 = vmatpush2.bf16.msra.mxu0 0
      %1781 = vmatprep.subr.bf16.mxu0 0
      %1782 = vmatpush2.bf16.msra.mxu0 0
      %1783 = vmatprep.subr.bf16.mxu0 0
      %1784 = vmatpush2.bf16.msra.mxu0 0
      %1785 = vmatprep.subr.bf16.mxu0 0
      %1786 = vmatpush2.bf16.msra.mxu0 0
      %1787 = vmatprep.subr.bf16.mxu0 0
      %1788 = vmatpush2.bf16.msra.mxu0 0
      %1789 = vmatprep.subr.bf16.mxu0 0
      %1790 = vmatpush2.bf16.msra.mxu0 0
      %1791 = vmatprep.mubr.bf16.mxu0 0
      %1792 = vmatmul.mubr.bf16.gmra.mxu0 %v1757
      %v1793 = vpop.f32.mrf.mxu0
      %v1794 = vadd.f32 0.0, %v1793
      %v1795 = vpop.f32.mrf.mxu0
      %v1796 = vpop.f32.mrf.mxu0
      %v1797 = vadd.f32 0.0, %v1796
      %v1798 = vpop.f32.mrf.mxu0
      %1799 = vdwg.mxu0
      %v1801 = vsel %vm1275, %v1569, 0
      %1803 = vmatprep.subr.bf16.mxu0 0
      %1804 = vmatpush1.bf16.msra.mxu0 0
      %1805 = vmatprep.subr.bf16.mxu0 0
      %1806 = vmatpush1.bf16.msra.mxu0 0
      %1807 = vmatprep.subr.bf16.mxu0 0
      %1808 = vmatpush1.bf16.msra.mxu0 0
      %1809 = vmatprep.subr.bf16.mxu0 0
      %1810 = vmatpush1.bf16.msra.mxu0 0
      %1811 = vmatprep.subr.bf16.mxu0 0
      %1812 = vmatpush1.bf16.msra.mxu0 0
      %1813 = vmatprep.subr.bf16.mxu0 0
      %1814 = vmatpush1.bf16.msra.mxu0 0
      %1815 = vmatprep.subr.bf16.mxu0 0
      %1816 = vmatpush1.bf16.msra.mxu0 0
      %1817 = vmatprep.subr.bf16.mxu0 0
      %1818 = vmatpush1.bf16.msra.mxu0 %v415
      %1819 = vmatprep.subr.bf16.mxu0 0
      %1820 = vmatpush2.bf16.msra.mxu0 0
      %1821 = vmatprep.subr.bf16.mxu0 0
      %1822 = vmatpush2.bf16.msra.mxu0 0
      %1823 = vmatprep.subr.bf16.mxu0 0
      %1824 = vmatpush2.bf16.msra.mxu0 0
      %1825 = vmatprep.subr.bf16.mxu0 0
      %1826 = vmatpush2.bf16.msra.mxu0 0
      %1827 = vmatprep.subr.bf16.mxu0 0
      %1828 = vmatpush2.bf16.msra.mxu0 0
      %1829 = vmatprep.subr.bf16.mxu0 0
      %1830 = vmatpush2.bf16.msra.mxu0 0
      %1831 = vmatprep.subr.bf16.mxu0 0
      %1832 = vmatpush2.bf16.msra.mxu0 0
      %1833 = vmatprep.subr.bf16.mxu0 0
      %1834 = vmatpush2.bf16.msra.mxu0 0
      %1835 = vmatprep.mubr.bf16.mxu0 0
      %1836 = vmatmul.mubr.bf16.gmra.mxu0 %v1801
      %v1837 = vpop.f32.mrf.mxu0
      %v1838 = vadd.f32 0.0, %v1837
      %v1839 = vpop.f32.mrf.mxu0
      %v1840 = vpop.f32.mrf.mxu0
      %v1841 = vadd.f32 0.0, %v1840
      %v1842 = vpop.f32.mrf.mxu0
      %1843 = vdwg.mxu0
      %v1845 = vsel %vm1275, %v1570, 0
      %1847 = vmatprep.subr.bf16.mxu0 0
      %1848 = vmatpush1.bf16.msra.mxu0 0
      %1849 = vmatprep.subr.bf16.mxu0 0
      %1850 = vmatpush1.bf16.msra.mxu0 0
      %1851 = vmatprep.subr.bf16.mxu0 0
      %1852 = vmatpush1.bf16.msra.mxu0 0
      %1853 = vmatprep.subr.bf16.mxu0 0
      %1854 = vmatpush1.bf16.msra.mxu0 0
      %1855 = vmatprep.subr.bf16.mxu0 0
      %1856 = vmatpush1.bf16.msra.mxu0 0
      %1857 = vmatprep.subr.bf16.mxu0 0
      %1858 = vmatpush1.bf16.msra.mxu0 0
      %1859 = vmatprep.subr.bf16.mxu0 0
      %1860 = vmatpush1.bf16.msra.mxu0 0
      %1861 = vmatprep.subr.bf16.mxu0 0
      %1862 = vmatpush1.bf16.msra.mxu0 %v416
      %1863 = vmatprep.subr.bf16.mxu0 0
      %1864 = vmatpush2.bf16.msra.mxu0 0
      %1865 = vmatprep.subr.bf16.mxu0 0
      %1866 = vmatpush2.bf16.msra.mxu0 0
      %1867 = vmatprep.subr.bf16.mxu0 0
      %1868 = vmatpush2.bf16.msra.mxu0 0
      %1869 = vmatprep.subr.bf16.mxu0 0
      %1870 = vmatpush2.bf16.msra.mxu0 0
      %1871 = vmatprep.subr.bf16.mxu0 0
      %1872 = vmatpush2.bf16.msra.mxu0 0
      %1873 = vmatprep.subr.bf16.mxu0 0
      %1874 = vmatpush2.bf16.msra.mxu0 0
      %1875 = vmatprep.subr.bf16.mxu0 0
      %1876 = vmatpush2.bf16.msra.mxu0 0
      %1877 = vmatprep.subr.bf16.mxu0 0
      %1878 = vmatpush2.bf16.msra.mxu0 0
      %1879 = vmatprep.mubr.bf16.mxu0 0
      %1880 = vmatmul.mubr.bf16.gmra.mxu0 %v1845
      %v1881 = vpop.f32.mrf.mxu0
      %v1882 = vadd.f32 0.0, %v1881
      %v1883 = vpop.f32.mrf.mxu0
      %v1884 = vpop.f32.mrf.mxu0
      %v1885 = vadd.f32 0.0, %v1884
      %v1886 = vpop.f32.mrf.mxu0
      %1887 = vdwg.mxu0
      %v1889 = vsel %vm1275, %v1571, 0
      %1891 = vmatprep.subr.bf16.mxu0 0
      %1892 = vmatpush1.bf16.msra.mxu0 0
      %1893 = vmatprep.subr.bf16.mxu0 0
      %1894 = vmatpush1.bf16.msra.mxu0 0
      %1895 = vmatprep.subr.bf16.mxu0 0
      %1896 = vmatpush1.bf16.msra.mxu0 0
      %1897 = vmatprep.subr.bf16.mxu0 0
      %1898 = vmatpush1.bf16.msra.mxu0 0
      %1899 = vmatprep.subr.bf16.mxu0 0
      %1900 = vmatpush1.bf16.msra.mxu0 0
      %1901 = vmatprep.subr.bf16.mxu0 0
      %1902 = vmatpush1.bf16.msra.mxu0 0
      %1903 = vmatprep.subr.bf16.mxu0 0
      %1904 = vmatpush1.bf16.msra.mxu0 0
      %1905 = vmatprep.subr.bf16.mxu0 0
      %1906 = vmatpush1.bf16.msra.mxu0 %v417
      %1907 = vmatprep.subr.bf16.mxu0 0
      %1908 = vmatpush2.bf16.msra.mxu0 0
      %1909 = vmatprep.subr.bf16.mxu0 0
      %1910 = vmatpush2.bf16.msra.mxu0 0
      %1911 = vmatprep.subr.bf16.mxu0 0
      %1912 = vmatpush2.bf16.msra.mxu0 0
      %1913 = vmatprep.subr.bf16.mxu0 0
      %1914 = vmatpush2.bf16.msra.mxu0 0
      %1915 = vmatprep.subr.bf16.mxu0 0
      %1916 = vmatpush2.bf16.msra.mxu0 0
      %1917 = vmatprep.subr.bf16.mxu0 0
      %1918 = vmatpush2.bf16.msra.mxu0 0
      %1919 = vmatprep.subr.bf16.mxu0 0
      %1920 = vmatpush2.bf16.msra.mxu0 0
      %1921 = vmatprep.subr.bf16.mxu0 0
      %1922 = vmatpush2.bf16.msra.mxu0 0
      %1923 = vmatprep.mubr.bf16.mxu0 0
      %1924 = vmatmul.mubr.bf16.gmra.mxu0 %v1889
      %v1925 = vpop.f32.mrf.mxu0
      %v1926 = vadd.f32 0.0, %v1925
      %v1927 = vpop.f32.mrf.mxu0
      %v1928 = vpop.f32.mrf.mxu0
      %v1929 = vadd.f32 0.0, %v1928
      %v1930 = vpop.f32.mrf.mxu0
      %1931 = vdwg.mxu0
      %v1933 = vsel %vm1275, %v1572, 0
      %1935 = vmatprep.subr.bf16.mxu0 0
      %1936 = vmatpush1.bf16.msra.mxu0 0
      %1937 = vmatprep.subr.bf16.mxu0 0
      %1938 = vmatpush1.bf16.msra.mxu0 0
      %1939 = vmatprep.subr.bf16.mxu0 0
      %1940 = vmatpush1.bf16.msra.mxu0 0
      %1941 = vmatprep.subr.bf16.mxu0 0
      %1942 = vmatpush1.bf16.msra.mxu0 0
      %1943 = vmatprep.subr.bf16.mxu0 0
      %1944 = vmatpush1.bf16.msra.mxu0 0
      %1945 = vmatprep.subr.bf16.mxu0 0
      %1946 = vmatpush1.bf16.msra.mxu0 0
      %1947 = vmatprep.subr.bf16.mxu0 0
      %1948 = vmatpush1.bf16.msra.mxu0 0
      %1949 = vmatprep.subr.bf16.mxu0 0
      %1950 = vmatpush1.bf16.msra.mxu0 %v418
      %1951 = vmatprep.subr.bf16.mxu0 0
      %1952 = vmatpush2.bf16.msra.mxu0 0
      %1953 = vmatprep.subr.bf16.mxu0 0
      %1954 = vmatpush2.bf16.msra.mxu0 0
      %1955 = vmatprep.subr.bf16.mxu0 0
      %1956 = vmatpush2.bf16.msra.mxu0 0
      %1957 = vmatprep.subr.bf16.mxu0 0
      %1958 = vmatpush2.bf16.msra.mxu0 0
      %1959 = vmatprep.subr.bf16.mxu0 0
      %1960 = vmatpush2.bf16.msra.mxu0 0
      %1961 = vmatprep.subr.bf16.mxu0 0
      %1962 = vmatpush2.bf16.msra.mxu0 0
      %1963 = vmatprep.subr.bf16.mxu0 0
      %1964 = vmatpush2.bf16.msra.mxu0 0
      %1965 = vmatprep.subr.bf16.mxu0 0
      %1966 = vmatpush2.bf16.msra.mxu0 0
      %1967 = vmatprep.mubr.bf16.mxu0 0
      %1968 = vmatmul.mubr.bf16.gmra.mxu0 %v1933
      %v1969 = vpop.f32.mrf.mxu0
      %v1970 = vadd.f32 0.0, %v1969
      %v1971 = vpop.f32.mrf.mxu0
      %v1972 = vpop.f32.mrf.mxu0
      %v1973 = vadd.f32 0.0, %v1972
      %v1974 = vpop.f32.mrf.mxu0
      %1975 = vdwg.mxu0
      %v1977 = vsel %vm1275, %v1573, 0
      %1979 = vmatprep.subr.bf16.mxu0 0
      %1980 = vmatpush1.bf16.msra.mxu0 0
      %1981 = vmatprep.subr.bf16.mxu0 0
      %1982 = vmatpush1.bf16.msra.mxu0 0
      %1983 = vmatprep.subr.bf16.mxu0 0
      %1984 = vmatpush1.bf16.msra.mxu0 0
      %1985 = vmatprep.subr.bf16.mxu0 0
      %1986 = vmatpush1.bf16.msra.mxu0 0
      %1987 = vmatprep.subr.bf16.mxu0 0
      %1988 = vmatpush1.bf16.msra.mxu0 0
      %1989 = vmatprep.subr.bf16.mxu0 0
      %1990 = vmatpush1.bf16.msra.mxu0 0
      %1991 = vmatprep.subr.bf16.mxu0 0
      %1992 = vmatpush1.bf16.msra.mxu0 0
      %1993 = vmatprep.subr.bf16.mxu0 0
      %1994 = vmatpush1.bf16.msra.mxu0 %v419
      %1995 = vmatprep.subr.bf16.mxu0 0
      %1996 = vmatpush2.bf16.msra.mxu0 0
      %1997 = vmatprep.subr.bf16.mxu0 0
      %1998 = vmatpush2.bf16.msra.mxu0 0
      %1999 = vmatprep.subr.bf16.mxu0 0
      %2000 = vmatpush2.bf16.msra.mxu0 0
      %2001 = vmatprep.subr.bf16.mxu0 0
      %2002 = vmatpush2.bf16.msra.mxu0 0
      %2003 = vmatprep.subr.bf16.mxu0 0
      %2004 = vmatpush2.bf16.msra.mxu0 0
      %2005 = vmatprep.subr.bf16.mxu0 0
      %2006 = vmatpush2.bf16.msra.mxu0 0
      %2007 = vmatprep.subr.bf16.mxu0 0
      %2008 = vmatpush2.bf16.msra.mxu0 0
      %2009 = vmatprep.subr.bf16.mxu0 0
      %2010 = vmatpush2.bf16.msra.mxu0 0
      %2011 = vmatprep.mubr.bf16.mxu0 0
      %2012 = vmatmul.mubr.bf16.gmra.mxu0 %v1977
      %v2013 = vpop.f32.mrf.mxu0
      %v2014 = vadd.f32 0.0, %v2013
      %v2015 = vpop.f32.mrf.mxu0
      %v2016 = vpop.f32.mrf.mxu0
      %v2017 = vadd.f32 0.0, %v2016
      %v2018 = vpop.f32.mrf.mxu0
      %2019 = vdwg.mxu0
      %v2021 = vsel %vm1275, %v1574, 0
      %2023 = vmatprep.subr.bf16.mxu0 0
      %2024 = vmatpush1.bf16.msra.mxu0 0
      %2025 = vmatprep.subr.bf16.mxu0 0
      %2026 = vmatpush1.bf16.msra.mxu0 0
      %2027 = vmatprep.subr.bf16.mxu0 0
      %2028 = vmatpush1.bf16.msra.mxu0 0
      %2029 = vmatprep.subr.bf16.mxu0 0
      %2030 = vmatpush1.bf16.msra.mxu0 0
      %2031 = vmatprep.subr.bf16.mxu0 0
      %2032 = vmatpush1.bf16.msra.mxu0 0
      %2033 = vmatprep.subr.bf16.mxu0 0
      %2034 = vmatpush1.bf16.msra.mxu0 0
      %2035 = vmatprep.subr.bf16.mxu0 0
      %2036 = vmatpush1.bf16.msra.mxu0 0
      %2037 = vmatprep.subr.bf16.mxu0 0
      %2038 = vmatpush1.bf16.msra.mxu0 %v420
      %2039 = vmatprep.subr.bf16.mxu0 0
      %2040 = vmatpush2.bf16.msra.mxu0 0
      %2041 = vmatprep.subr.bf16.mxu0 0
      %2042 = vmatpush2.bf16.msra.mxu0 0
      %2043 = vmatprep.subr.bf16.mxu0 0
      %2044 = vmatpush2.bf16.msra.mxu0 0
      %2045 = vmatprep.subr.bf16.mxu0 0
      %2046 = vmatpush2.bf16.msra.mxu0 0
      %2047 = vmatprep.subr.bf16.mxu0 0
      %2048 = vmatpush2.bf16.msra.mxu0 0
      %2049 = vmatprep.subr.bf16.mxu0 0
      %2050 = vmatpush2.bf16.msra.mxu0 0
      %2051 = vmatprep.subr.bf16.mxu0 0
      %2052 = vmatpush2.bf16.msra.mxu0 0
      %2053 = vmatprep.subr.bf16.mxu0 0
      %2054 = vmatpush2.bf16.msra.mxu0 0
      %2055 = vmatprep.mubr.bf16.mxu0 0
      %2056 = vmatmul.mubr.bf16.gmra.mxu0 %v2021
      %v2057 = vpop.f32.mrf.mxu0
      %v2058 = vadd.f32 0.0, %v2057
      %v2059 = vpop.f32.mrf.mxu0
      %v2060 = vpop.f32.mrf.mxu0
      %v2061 = vadd.f32 0.0, %v2060
      %v2062 = vpop.f32.mrf.mxu0
      %2063 = vdwg.mxu0
      %v2065 = vsel %vm1275, %v1575, 0
      %2067 = vmatprep.subr.bf16.mxu0 0
      %2068 = vmatpush1.bf16.msra.mxu0 0
      %2069 = vmatprep.subr.bf16.mxu0 0
      %2070 = vmatpush1.bf16.msra.mxu0 0
      %2071 = vmatprep.subr.bf16.mxu0 0
      %2072 = vmatpush1.bf16.msra.mxu0 0
      %2073 = vmatprep.subr.bf16.mxu0 0
      %2074 = vmatpush1.bf16.msra.mxu0 0
      %2075 = vmatprep.subr.bf16.mxu0 0
      %2076 = vmatpush1.bf16.msra.mxu0 0
      %2077 = vmatprep.subr.bf16.mxu0 0
      %2078 = vmatpush1.bf16.msra.mxu0 0
      %2079 = vmatprep.subr.bf16.mxu0 0
      %2080 = vmatpush1.bf16.msra.mxu0 0
      %2081 = vmatprep.subr.bf16.mxu0 0
      %2082 = vmatpush1.bf16.msra.mxu0 %v421
      %2083 = vmatprep.subr.bf16.mxu0 0
      %2084 = vmatpush2.bf16.msra.mxu0 0
      %2085 = vmatprep.subr.bf16.mxu0 0
      %2086 = vmatpush2.bf16.msra.mxu0 0
      %2087 = vmatprep.subr.bf16.mxu0 0
      %2088 = vmatpush2.bf16.msra.mxu0 0
      %2089 = vmatprep.subr.bf16.mxu0 0
      %2090 = vmatpush2.bf16.msra.mxu0 0
      %2091 = vmatprep.subr.bf16.mxu0 0
      %2092 = vmatpush2.bf16.msra.mxu0 0
      %2093 = vmatprep.subr.bf16.mxu0 0
      %2094 = vmatpush2.bf16.msra.mxu0 0
      %2095 = vmatprep.subr.bf16.mxu0 0
      %2096 = vmatpush2.bf16.msra.mxu0 0
      %2097 = vmatprep.subr.bf16.mxu0 0
      %2098 = vmatpush2.bf16.msra.mxu0 0
      %2099 = vmatprep.mubr.bf16.mxu0 0
      %2100 = vmatmul.mubr.bf16.gmra.mxu0 %v2065
      %v2101 = vpop.f32.mrf.mxu0
      %v2102 = vadd.f32 0.0, %v2101
      %v2103 = vpop.f32.mrf.mxu0
      %v2104 = vpop.f32.mrf.mxu0
      %v2105 = vadd.f32 0.0, %v2104
      %v2106 = vpop.f32.mrf.mxu0
      %2107 = vdwg.mxu0
      %v2109 = vsel %vm1275, %v1576, 0
      %2111 = vmatprep.subr.bf16.mxu0 0
      %2112 = vmatpush1.bf16.msra.mxu0 0
      %2113 = vmatprep.subr.bf16.mxu0 0
      %2114 = vmatpush1.bf16.msra.mxu0 0
      %2115 = vmatprep.subr.bf16.mxu0 0
      %2116 = vmatpush1.bf16.msra.mxu0 0
      %2117 = vmatprep.subr.bf16.mxu0 0
      %2118 = vmatpush1.bf16.msra.mxu0 0
      %2119 = vmatprep.subr.bf16.mxu0 0
      %2120 = vmatpush1.bf16.msra.mxu0 0
      %2121 = vmatprep.subr.bf16.mxu0 0
      %2122 = vmatpush1.bf16.msra.mxu0 0
      %2123 = vmatprep.subr.bf16.mxu0 0
      %2124 = vmatpush1.bf16.msra.mxu0 0
      %2125 = vmatprep.subr.bf16.mxu0 0
      %2126 = vmatpush1.bf16.msra.mxu0 %v422
      %2127 = vmatprep.subr.bf16.mxu0 0
      %2128 = vmatpush2.bf16.msra.mxu0 0
      %2129 = vmatprep.subr.bf16.mxu0 0
      %2130 = vmatpush2.bf16.msra.mxu0 0
      %2131 = vmatprep.subr.bf16.mxu0 0
      %2132 = vmatpush2.bf16.msra.mxu0 0
      %2133 = vmatprep.subr.bf16.mxu0 0
      %2134 = vmatpush2.bf16.msra.mxu0 0
      %2135 = vmatprep.subr.bf16.mxu0 0
      %2136 = vmatpush2.bf16.msra.mxu0 0
      %2137 = vmatprep.subr.bf16.mxu0 0
      %2138 = vmatpush2.bf16.msra.mxu0 0
      %2139 = vmatprep.subr.bf16.mxu0 0
      %2140 = vmatpush2.bf16.msra.mxu0 0
      %2141 = vmatprep.subr.bf16.mxu0 0
      %2142 = vmatpush2.bf16.msra.mxu0 0
      %2143 = vmatprep.mubr.bf16.mxu0 0
      %2144 = vmatmul.mubr.bf16.gmra.mxu0 %v2109
      %v2145 = vpop.f32.mrf.mxu0
      %v2146 = vadd.f32 0.0, %v2145
      %v2147 = vpop.f32.mrf.mxu0
      %v2148 = vpop.f32.mrf.mxu0
      %v2149 = vadd.f32 0.0, %v2148
      %v2150 = vpop.f32.mrf.mxu0
      %2151 = vdwg.mxu0
      %v2153 = vsel %vm1275, %v1577, 0
      %2155 = vmatprep.subr.bf16.mxu0 0
      %2156 = vmatpush1.bf16.msra.mxu0 0
      %2157 = vmatprep.subr.bf16.mxu0 0
      %2158 = vmatpush1.bf16.msra.mxu0 0
      %2159 = vmatprep.subr.bf16.mxu0 0
      %2160 = vmatpush1.bf16.msra.mxu0 0
      %2161 = vmatprep.subr.bf16.mxu0 0
      %2162 = vmatpush1.bf16.msra.mxu0 0
      %2163 = vmatprep.subr.bf16.mxu0 0
      %2164 = vmatpush1.bf16.msra.mxu0 0
      %2165 = vmatprep.subr.bf16.mxu0 0
      %2166 = vmatpush1.bf16.msra.mxu0 0
      %2167 = vmatprep.subr.bf16.mxu0 0
      %2168 = vmatpush1.bf16.msra.mxu0 0
      %2169 = vmatprep.subr.bf16.mxu0 0
      %2170 = vmatpush1.bf16.msra.mxu0 %v423
      %2171 = vmatprep.subr.bf16.mxu0 0
      %2172 = vmatpush2.bf16.msra.mxu0 0
      %2173 = vmatprep.subr.bf16.mxu0 0
      %2174 = vmatpush2.bf16.msra.mxu0 0
      %2175 = vmatprep.subr.bf16.mxu0 0
      %2176 = vmatpush2.bf16.msra.mxu0 0
      %2177 = vmatprep.subr.bf16.mxu0 0
      %2178 = vmatpush2.bf16.msra.mxu0 0
      %2179 = vmatprep.subr.bf16.mxu0 0
      %2180 = vmatpush2.bf16.msra.mxu0 0
      %2181 = vmatprep.subr.bf16.mxu0 0
      %2182 = vmatpush2.bf16.msra.mxu0 0
      %2183 = vmatprep.subr.bf16.mxu0 0
      %2184 = vmatpush2.bf16.msra.mxu0 0
      %2185 = vmatprep.subr.bf16.mxu0 0
      %2186 = vmatpush2.bf16.msra.mxu0 0
      %2187 = vmatprep.mubr.bf16.mxu0 0
      %2188 = vmatmul.mubr.bf16.gmra.mxu0 %v2153
      %v2189 = vpop.f32.mrf.mxu0
      %v2190 = vadd.f32 0.0, %v2189
      %v2191 = vpop.f32.mrf.mxu0
      %v2192 = vpop.f32.mrf.mxu0
      %v2193 = vadd.f32 0.0, %v2192
      %v2194 = vpop.f32.mrf.mxu0
      %2195 = vdwg.mxu0
      %v2197 = vsel %vm1275, %v1578, 0
      %2199 = vmatprep.subr.bf16.mxu0 0
      %2200 = vmatpush1.bf16.msra.mxu0 0
      %2201 = vmatprep.subr.bf16.mxu0 0
      %2202 = vmatpush1.bf16.msra.mxu0 0
      %2203 = vmatprep.subr.bf16.mxu0 0
      %2204 = vmatpush1.bf16.msra.mxu0 0
      %2205 = vmatprep.subr.bf16.mxu0 0
      %2206 = vmatpush1.bf16.msra.mxu0 0
      %2207 = vmatprep.subr.bf16.mxu0 0
      %2208 = vmatpush1.bf16.msra.mxu0 0
      %2209 = vmatprep.subr.bf16.mxu0 0
      %2210 = vmatpush1.bf16.msra.mxu0 0
      %2211 = vmatprep.subr.bf16.mxu0 0
      %2212 = vmatpush1.bf16.msra.mxu0 0
      %2213 = vmatprep.subr.bf16.mxu0 0
      %2214 = vmatpush1.bf16.msra.mxu0 %v424
      %2215 = vmatprep.subr.bf16.mxu0 0
      %2216 = vmatpush2.bf16.msra.mxu0 0
      %2217 = vmatprep.subr.bf16.mxu0 0
      %2218 = vmatpush2.bf16.msra.mxu0 0
      %2219 = vmatprep.subr.bf16.mxu0 0
      %2220 = vmatpush2.bf16.msra.mxu0 0
      %2221 = vmatprep.subr.bf16.mxu0 0
      %2222 = vmatpush2.bf16.msra.mxu0 0
      %2223 = vmatprep.subr.bf16.mxu0 0
      %2224 = vmatpush2.bf16.msra.mxu0 0
      %2225 = vmatprep.subr.bf16.mxu0 0
      %2226 = vmatpush2.bf16.msra.mxu0 0
      %2227 = vmatprep.subr.bf16.mxu0 0
      %2228 = vmatpush2.bf16.msra.mxu0 0
      %2229 = vmatprep.subr.bf16.mxu0 0
      %2230 = vmatpush2.bf16.msra.mxu0 0
      %2231 = vmatprep.mubr.bf16.mxu0 0
      %2232 = vmatmul.mubr.bf16.gmra.mxu0 %v2197
      %v2233 = vpop.f32.mrf.mxu0
      %v2234 = vadd.f32 0.0, %v2233
      %v2235 = vpop.f32.mrf.mxu0
      %v2236 = vpop.f32.mrf.mxu0
      %v2237 = vadd.f32 0.0, %v2236
      %v2238 = vpop.f32.mrf.mxu0
      %2239 = vdwg.mxu0
      %v2241 = vsel %vm1275, %v1579, 0
      %2243 = vmatprep.subr.bf16.mxu0 0
      %2244 = vmatpush1.bf16.msra.mxu0 0
      %2245 = vmatprep.subr.bf16.mxu0 0
      %2246 = vmatpush1.bf16.msra.mxu0 0
      %2247 = vmatprep.subr.bf16.mxu0 0
      %2248 = vmatpush1.bf16.msra.mxu0 0
      %2249 = vmatprep.subr.bf16.mxu0 0
      %2250 = vmatpush1.bf16.msra.mxu0 0
      %2251 = vmatprep.subr.bf16.mxu0 0
      %2252 = vmatpush1.bf16.msra.mxu0 0
      %2253 = vmatprep.subr.bf16.mxu0 0
      %2254 = vmatpush1.bf16.msra.mxu0 0
      %2255 = vmatprep.subr.bf16.mxu0 0
      %2256 = vmatpush1.bf16.msra.mxu0 0
      %2257 = vmatprep.subr.bf16.mxu0 0
      %2258 = vmatpush1.bf16.msra.mxu0 %v425
      %2259 = vmatprep.subr.bf16.mxu0 0
      %2260 = vmatpush2.bf16.msra.mxu0 0
      %2261 = vmatprep.subr.bf16.mxu0 0
      %2262 = vmatpush2.bf16.msra.mxu0 0
      %2263 = vmatprep.subr.bf16.mxu0 0
      %2264 = vmatpush2.bf16.msra.mxu0 0
      %2265 = vmatprep.subr.bf16.mxu0 0
      %2266 = vmatpush2.bf16.msra.mxu0 0
      %2267 = vmatprep.subr.bf16.mxu0 0
      %2268 = vmatpush2.bf16.msra.mxu0 0
      %2269 = vmatprep.subr.bf16.mxu0 0
      %2270 = vmatpush2.bf16.msra.mxu0 0
      %2271 = vmatprep.subr.bf16.mxu0 0
      %2272 = vmatpush2.bf16.msra.mxu0 0
      %2273 = vmatprep.subr.bf16.mxu0 0
      %2274 = vmatpush2.bf16.msra.mxu0 0
      %2275 = vmatprep.mubr.bf16.mxu0 0
      %2276 = vmatmul.mubr.bf16.gmra.mxu0 %v2241
      %v2277 = vpop.f32.mrf.mxu0
      %v2278 = vadd.f32 0.0, %v2277
      %v2279 = vpop.f32.mrf.mxu0
      %v2280 = vpop.f32.mrf.mxu0
      %v2281 = vadd.f32 0.0, %v2280
      %v2282 = vpop.f32.mrf.mxu0
      %2283 = vdwg.mxu0
      %v2284 = vrcp.pop %v1470
      %v2285 = vrcp.pop %v1473
      %v2286 = vrcp.pop %v1476
      %v2287 = vrcp.pop %v1479
      %v2288 = vrcp.pop %v1482
      %v2289 = vrcp.pop %v1485
      %v2290 = vrcp.pop %v1488
      %v2291 = vrcp.pop %v1491
      %v2292 = vrcp.pop %v1494
      %v2293 = vrcp.pop %v1497
      %v2294 = vrcp.pop %v1500
      %v2295 = vrcp.pop %v1503
      %v2296 = vrcp.pop %v1506
      %v2297 = vrcp.pop %v1509
      %v2298 = vrcp.pop %v1512
      %v2299 = vrcp.pop %v1515
      %v2300 = vrcp.pop %v1518
      %v2301 = vrcp.pop %v1521
      %v2302 = vrcp.pop %v1524
      %v2303 = vrcp.pop %v1527
      %v2304 = vrcp.pop %v1530
      %v2305 = vrcp.pop %v1533
      %v2306 = vrcp.pop %v1536
      %v2307 = vrcp.pop %v1539
      %v2308 = vrcp.pop %v1542
      %v2309 = vrcp.pop %v1545
      %v2310 = vrcp.pop %v1548
      %v2311 = vrcp.pop %v1551
      %v2312 = vrcp.pop %v1554
      %v2313 = vrcp.pop %v1557
      %v2314 = vrcp.pop %v1560
      %v2315 = vrcp.pop %v1563
      %v2316 = vmul.f32 %v1618, %v2284
      %v2317 = vmul.f32 %v1621, %v2285
      %v2318 = vmul.f32 %v1662, %v2286
      %v2319 = vmul.f32 %v1665, %v2287
      %v2320 = vmul.f32 %v1706, %v2288
      %v2321 = vmul.f32 %v1709, %v2289
      %v2322 = vmul.f32 %v1750, %v2290
      %v2323 = vmul.f32 %v1753, %v2291
      %v2324 = vmul.f32 %v1794, %v2292
      %v2325 = vmul.f32 %v1797, %v2293
      %v2326 = vmul.f32 %v1838, %v2294
      %v2327 = vmul.f32 %v1841, %v2295
      %v2328 = vmul.f32 %v1882, %v2296
      %v2329 = vmul.f32 %v1885, %v2297
      %v2330 = vmul.f32 %v1926, %v2298
      %v2331 = vmul.f32 %v1929, %v2299
      %v2332 = vmul.f32 %v1970, %v2300
      %v2333 = vmul.f32 %v1973, %v2301
      %v2334 = vmul.f32 %v2014, %v2302
      %v2335 = vmul.f32 %v2017, %v2303
      %v2336 = vmul.f32 %v2058, %v2304
      %v2337 = vmul.f32 %v2061, %v2305
      %v2338 = vmul.f32 %v2102, %v2306
      %v2339 = vmul.f32 %v2105, %v2307
      %v2340 = vmul.f32 %v2146, %v2308
      %v2341 = vmul.f32 %v2149, %v2309
      %v2342 = vmul.f32 %v2190, %v2310
      %v2343 = vmul.f32 %v2193, %v2311
      %v2344 = vmul.f32 %v2234, %v2312
      %v2345 = vmul.f32 %v2237, %v2313
      %v2346 = vmul.f32 %v2278, %v2314
      %v2347 = vmul.f32 %v2281, %v2315
      %2348 = vst.msk [vmem:[%s279] sm:$0xff] %vm426, %v2316
      %2349 = vst.msk [vmem:[%s279 + $0x8] sm:$0xff] %vm426, %v2317
      %2350 = vst.msk [vmem:[%s279 + $0x10] sm:$0xff] %vm426, %v2318
      %2351 = vst.msk [vmem:[%s279 + $0x18] sm:$0xff] %vm426, %v2319
      %2352 = vst.msk [vmem:[%s279 + $0x20] sm:$0xff] %vm426, %v2320
      %2353 = vst.msk [vmem:[%s279 + $0x28] sm:$0xff] %vm426, %v2321
      %2354 = vst.msk [vmem:[%s279 + $0x30] sm:$0xff] %vm426, %v2322
      %2355 = vst.msk [vmem:[%s279 + $0x38] sm:$0xff] %vm426, %v2323
      %2356 = vst.msk [vmem:[%s279 + $0x40] sm:$0xff] %vm426, %v2324
      %2357 = vst.msk [vmem:[%s279 + $0x48] sm:$0xff] %vm426, %v2325
      %2358 = vst.msk [vmem:[%s279 + $0x50] sm:$0xff] %vm426, %v2326
      %2359 = vst.msk [vmem:[%s279 + $0x58] sm:$0xff] %vm426, %v2327
      %2360 = vst.msk [vmem:[%s279 + $0x60] sm:$0xff] %vm426, %v2328
      %2361 = vst.msk [vmem:[%s279 + $0x68] sm:$0xff] %vm426, %v2329
      %2362 = vst.msk [vmem:[%s279 + $0x70] sm:$0xff] %vm426, %v2330
      %2363 = vst.msk [vmem:[%s279 + $0x78] sm:$0xff] %vm426, %v2331
      %2364 = vst.msk [vmem:[%s279 + $0x80] sm:$0xff] %vm426, %v2332
      %2365 = vst.msk [vmem:[%s279 + $0x88] sm:$0xff] %vm426, %v2333
      %2366 = vst.msk [vmem:[%s279 + $0x90] sm:$0xff] %vm426, %v2334
      %2367 = vst.msk [vmem:[%s279 + $0x98] sm:$0xff] %vm426, %v2335
      %2368 = vst.msk [vmem:[%s279 + $0xa0] sm:$0xff] %vm426, %v2336
      %2369 = vst.msk [vmem:[%s279 + $0xa8] sm:$0xff] %vm426, %v2337
      %2370 = vst.msk [vmem:[%s279 + $0xb0] sm:$0xff] %vm426, %v2338
      %2371 = vst.msk [vmem:[%s279 + $0xb8] sm:$0xff] %vm426, %v2339
      %2372 = vst.msk [vmem:[%s279 + $0xc0] sm:$0xff] %vm426, %v2340
      %2373 = vst.msk [vmem:[%s279 + $0xc8] sm:$0xff] %vm426, %v2341
      %2374 = vst.msk [vmem:[%s279 + $0xd0] sm:$0xff] %vm426, %v2342
      %2375 = vst.msk [vmem:[%s279 + $0xd8] sm:$0xff] %vm426, %v2343
      %2376 = vst.msk [vmem:[%s279 + $0xe0] sm:$0xff] %vm426, %v2344
      %2377 = vst.msk [vmem:[%s279 + $0xe8] sm:$0xff] %vm426, %v2345
      %2378 = vst.msk [vmem:[%s279 + $0xf0] sm:$0xff] %vm426, %v2346
      %2379 = vst.msk [vmem:[%s279 + $0xf8] sm:$0xff] %vm426, %v2347
      %s2380 = smul.u32 16, %s15
      %p2381 = scmp.lt.s32.totalorder %s2380, 31
      %s2382 = scalar_select %p2381, %s2380, 31
      %s2383 = smul.addr %s2382, 2
      %s2384 = smul.addr %s2383, 8
      %s2385 = scalar_lea.vmem %s4, %s2384
      // Predicated region
      $region37: #{uninext_forward.11} parent=35 // pred_check
        %p2386 = pneg %p137
      $region38: #{uninext_forward.11} parent=35 // pred_check_branch
        %2388 = sbr.rel (%p2386) target = $region40
      $region39: #{uninext_forward.11} parent=35 // pred_region
        %s2389 = smul.u32 16, %s15
      $region40: #{uninext_forward.11} parent=35 // pred_fallthru
        _
    $region36: #{uninext_forward.11} parent=5 // pred_fallthru
      _
    %p2390 = scmp.le.s32.totalorder 2, %s10
    // Predicated region
    $region41: #{uninext_forward.11} parent=5 // pred_check
      %p2391 = pneg %p2390
    $region42: #{uninext_forward.11} parent=5 // pred_check_branch
      %2393 = sbr.rel (%p2391) target = $region44
    $region43: #{uninext_forward.11} parent=5 // pred_region
      %s2394 = ssub.s32 %s10, 2
      // Predicated region
      $region45: #{uninext_forward.11} parent=43 // pred_check
        %p2395 = pneg %p143
      $region46: #{uninext_forward.11} parent=43 // pred_check_branch
        %2397 = sbr.rel (%p2395) target = $region48
      $region47: #{uninext_forward.11} parent=43 // pred_region
        %s2398 = smul.u32 16, %s16
        %p2399 = scmp.lt.s32.totalorder %s2398, 31
        %s2400 = scalar_select %p2399, %s2398, 31
        %s2401 = smul.addr %s2400, 2
        %s2402 = smul.addr %s2401, 8
        %s2403 = scalar_lea.vmem %s4, %s2402
      $region48: #{uninext_forward.11} parent=43 // pred_fallthru
        _
    $region44: #{uninext_forward.11} parent=5 // pred_fallthru
      _
  $region6: #{uninext_forward.11} parent=0 // loop_footer
    %s14 = sadd.s32 1, %s10
  $region7: #{uninext_forward.11} parent=0 // loop_footer_branch
    %9 = sbr.rel target = $region3
  $region8: #{uninext_forward.11} parent=0 // loop_exit
    _

// kernel: uninext_forward.13
$region0: #{uninext_forward.13}
  #allocation0 [shape = 'u32[]', space=smem, size = 0x4, offset = 0x4, fixed_abs, tag = 'smem constant byte address 0x4 - core index']
  #allocation1 [shape = 'u32[144,128]{1,0:T(1,128)}', space=vmem, size = 0x12000, scoped, tag = 'internal scratch']
  %s0 = inlined_call_operand.vmem [shape: f32[128,32], index: 0, kind: input, shape index: {}]
  %s1 = inlined_call_operand.vmem [shape: f32[1,32], index: 1, kind: input, shape index: {}]
  %s2 = inlined_call_operand.vmem [shape: f32[1,32], index: 2, kind: input, shape index: {}]
  %s3 = inlined_call_operand.vmem [shape: bf16[32,128], index: 3, kind: input, shape index: {}]
  %s4 = inlined_call_operand.vmem [shape: f32[1,128], index: 4, kind: input, shape index: {}]
  %s5 = inlined_call_operand.vmem [shape: bf16[128,32], index: 5, kind: input, shape index: {}]
  %s6 = inlined_call_operand.vmem [shape: f32[1,32], index: 6, kind: input, shape index: {}]
  %s7 = inlined_call_operand.vmem [shape: f32[128,32], index: 7, kind: output, shape index: {}]
  %s8 = sld [smem:[#allocation0]]
  $region61: #{uninext_forward.13} parent=0
    _
  %s10 = ssub.s32 1, %s8
  %s11 = scalar_select 0, %s10, %s8
  loop: start=0, step=1, limit=4
  $region2: #{uninext_forward.13} parent=0 // loop_pre_header
    _
  $region3: #{uninext_forward.13} parent=0 // loop_header
    %s13 = sphi 0, %s17
    %p14 = scmp.ge.s32.totalorder %s13, 4
    %s23 = sphi 0, %s25
    %s26 = sphi 0, %s23
    %s27 = sphi 0, %s26
    %s43 = sphi 0, %s27
    %s47 = sphi 0, %s47
    %s49 = sphi 0, %s47
    %s50 = sphi 0, %s49
    %s64 = sphi 0, %s50
    %s68 = sphi 0, %s68
    %s70 = sphi 0, %s68
    %s71 = sphi 0, %s70
    %s85 = sphi 0, %s71
    %s89 = sphi 0, %s89
    %s91 = sphi 0, %s89
    %s92 = sphi 0, %s91
    %s106 = sphi 0, %s92
    %s110 = sphi 0, %s110
    %s112 = sphi 0, %s110
    %s113 = sphi 0, %s112
    %s127 = sphi 0, %s113
    %s131 = sphi 0, %s131
    %s133 = sphi 0, %s131
    %s134 = sphi 0, %s133
    %s148 = sphi 0, %s134
    %s152 = sphi 0, %s152
    %s154 = sphi 0, %s152
    %s155 = sphi 0, %s154
    %s169 = sphi 0, %s155
    %s175 = sphi 0, %s177
    %s178 = sphi 0, %s175
    %s179 = sphi 0, %s178
    %s195 = sphi 0, %s179
  $region4: #{uninext_forward.13} parent=0 // loop_header_branch
    %16 = sbr.rel (%p14) target = $region8
  $region5: #{uninext_forward.13} parent=0 // loop_body
    %s18 = ssub.s32 %s13, 1
    %s19 = ssub.s32 %s13, 2
    %s20 = sadd.s32 %s13, 1
    %s21 = ssub.s32 %s13, %s20
    %p22 = scmp.eq.s32.totalorder %s21, 0
    %s24 = sadd.s32 %s23, 1
    %s25 = scalar_select %p22, %s23, %s24
    %p28 = pneg %p22
    %p29 = scmp.eq.s32.totalorder %s13, 1
    %p30 = por %p28, %p29
    %p31 = scmp.ne.s32.totalorder %s23, %s26
    %p32 = scmp.eq.s32.totalorder %s13, 0
    %p33 = por %p31, %p32
    %p34 = scmp.ne.s32.totalorder %s23, %s26
    %p35 = scmp.eq.s32.totalorder %s18, 1
    %p36 = por %p34, %p35
    %p37 = scmp.ne.s32.totalorder %s26, %s27
    %p38 = scmp.eq.s32.totalorder %s18, 0
    %p39 = por %p37, %p38
    %p40 = scmp.ne.s32.totalorder %s26, %s27
    %p41 = scmp.eq.s32.totalorder %s19, 1
    %p42 = por %p40, %p41
    %p44 = scmp.ne.s32.totalorder %s27, %s43
    %p45 = scmp.eq.s32.totalorder %s19, 0
    %p46 = por %p44, %p45
    %s48 = sadd.s32 %s47, 1
    %p51 = scmp.eq.s32.totalorder %s13, 1
    %p52 = scmp.ne.s32.totalorder %s47, %s49
    %p53 = scmp.eq.s32.totalorder %s13, 0
    %p54 = por %p52, %p53
    %p55 = scmp.ne.s32.totalorder %s47, %s49
    %p56 = scmp.eq.s32.totalorder %s18, 1
    %p57 = por %p55, %p56
    %p58 = scmp.ne.s32.totalorder %s49, %s50
    %p59 = scmp.eq.s32.totalorder %s18, 0
    %p60 = por %p58, %p59
    %p61 = scmp.ne.s32.totalorder %s49, %s50
    %p62 = scmp.eq.s32.totalorder %s19, 1
    %p63 = por %p61, %p62
    %p65 = scmp.ne.s32.totalorder %s50, %s64
    %p66 = scmp.eq.s32.totalorder %s19, 0
    %p67 = por %p65, %p66
    %s69 = sadd.s32 %s68, 1
    %p72 = scmp.eq.s32.totalorder %s13, 1
    %p73 = scmp.ne.s32.totalorder %s68, %s70
    %p74 = scmp.eq.s32.totalorder %s13, 0
    %p75 = por %p73, %p74
    %p76 = scmp.ne.s32.totalorder %s68, %s70
    %p77 = scmp.eq.s32.totalorder %s18, 1
    %p78 = por %p76, %p77
    %p79 = scmp.ne.s32.totalorder %s70, %s71
    %p80 = scmp.eq.s32.totalorder %s18, 0
    %p81 = por %p79, %p80
    %p82 = scmp.ne.s32.totalorder %s70, %s71
    %p83 = scmp.eq.s32.totalorder %s19, 1
    %p84 = por %p82, %p83
    %p86 = scmp.ne.s32.totalorder %s71, %s85
    %p87 = scmp.eq.s32.totalorder %s19, 0
    %p88 = por %p86, %p87
    %s90 = sadd.s32 %s89, 1
    %p93 = scmp.eq.s32.totalorder %s13, 1
    %p94 = scmp.ne.s32.totalorder %s89, %s91
    %p95 = scmp.eq.s32.totalorder %s13, 0
    %p96 = por %p94, %p95
    %p97 = scmp.ne.s32.totalorder %s89, %s91
    %p98 = scmp.eq.s32.totalorder %s18, 1
    %p99 = por %p97, %p98
    %p100 = scmp.ne.s32.totalorder %s91, %s92
    %p101 = scmp.eq.s32.totalorder %s18, 0
    %p102 = por %p100, %p101
    %p103 = scmp.ne.s32.totalorder %s91, %s92
    %p104 = scmp.eq.s32.totalorder %s19, 1
    %p105 = por %p103, %p104
    %p107 = scmp.ne.s32.totalorder %s92, %s106
    %p108 = scmp.eq.s32.totalorder %s19, 0
    %p109 = por %p107, %p108
    %s111 = sadd.s32 %s110, 1
    %p114 = scmp.eq.s32.totalorder %s13, 1
    %p115 = scmp.ne.s32.totalorder %s110, %s112
    %p116 = scmp.eq.s32.totalorder %s13, 0
    %p117 = por %p115, %p116
    %p118 = scmp.ne.s32.totalorder %s110, %s112
    %p119 = scmp.eq.s32.totalorder %s18, 1
    %p120 = por %p118, %p119
    %p121 = scmp.ne.s32.totalorder %s112, %s113
    %p122 = scmp.eq.s32.totalorder %s18, 0
    %p123 = por %p121, %p122
    %p124 = scmp.ne.s32.totalorder %s112, %s113
    %p125 = scmp.eq.s32.totalorder %s19, 1
    %p126 = por %p124, %p125
    %p128 = scmp.ne.s32.totalorder %s113, %s127
    %p129 = scmp.eq.s32.totalorder %s19, 0
    %p130 = por %p128, %p129
    %s132 = sadd.s32 %s131, 1
    %p135 = scmp.eq.s32.totalorder %s13, 1
    %p136 = scmp.ne.s32.totalorder %s131, %s133
    %p137 = scmp.eq.s32.totalorder %s13, 0
    %p138 = por %p136, %p137
    %p139 = scmp.ne.s32.totalorder %s131, %s133
    %p140 = scmp.eq.s32.totalorder %s18, 1
    %p141 = por %p139, %p140
    %p142 = scmp.ne.s32.totalorder %s133, %s134
    %p143 = scmp.eq.s32.totalorder %s18, 0
    %p144 = por %p142, %p143
    %p145 = scmp.ne.s32.totalorder %s133, %s134
    %p146 = scmp.eq.s32.totalorder %s19, 1
    %p147 = por %p145, %p146
    %p149 = scmp.ne.s32.totalorder %s134, %s148
    %p150 = scmp.eq.s32.totalorder %s19, 0
    %p151 = por %p149, %p150
    %s153 = sadd.s32 %s152, 1
    %p156 = scmp.eq.s32.totalorder %s13, 1
    %p157 = scmp.ne.s32.totalorder %s152, %s154
    %p158 = scmp.eq.s32.totalorder %s13, 0
    %p159 = por %p157, %p158
    %p160 = scmp.ne.s32.totalorder %s152, %s154
    %p161 = scmp.eq.s32.totalorder %s18, 1
    %p162 = por %p160, %p161
    %p163 = scmp.ne.s32.totalorder %s154, %s155
    %p164 = scmp.eq.s32.totalorder %s18, 0
    %p165 = por %p163, %p164
    %p166 = scmp.ne.s32.totalorder %s154, %s155
    %p167 = scmp.eq.s32.totalorder %s19, 1
    %p168 = por %p166, %p167
    %p170 = scmp.ne.s32.totalorder %s155, %s169
    %p171 = scmp.eq.s32.totalorder %s19, 0
    %p172 = por %p170, %p171
    %s173 = ssub.s32 %s13, %s20
    %p174 = scmp.eq.s32.totalorder %s173, 0
    %s176 = sadd.s32 %s175, 1
    %s177 = scalar_select %p174, %s175, %s176
    %p180 = pneg %p174
    %p181 = scmp.eq.s32.totalorder %s13, 1
    %p182 = por %p180, %p181
    %p183 = scmp.ne.s32.totalorder %s175, %s178
    %p184 = scmp.eq.s32.totalorder %s13, 0
    %p185 = por %p183, %p184
    %p186 = scmp.ne.s32.totalorder %s175, %s178
    %p187 = scmp.eq.s32.totalorder %s18, 1
    %p188 = por %p186, %p187
    %p189 = scmp.ne.s32.totalorder %s178, %s179
    %p190 = scmp.eq.s32.totalorder %s18, 0
    %p191 = por %p189, %p190
    %p192 = scmp.ne.s32.totalorder %s178, %s179
    %p193 = scmp.eq.s32.totalorder %s19, 1
    %p194 = por %p192, %p193
    %p196 = scmp.ne.s32.totalorder %s179, %s195
    %p197 = scmp.eq.s32.totalorder %s19, 0
    %p198 = por %p196, %p197
    %p199 = scmp.le.s32.totalorder 1, %s13
    %p200 = scmp.lt.s32.totalorder %s13, 3
    %p201 = pnand %p199, %p200
    %p202 = pneg %p201
    // Predicated region
    $region9: #{uninext_forward.13} parent=5 // pred_check
      _
    $region10: #{uninext_forward.13} parent=5 // pred_check_branch
      %204 = sbr.rel (%p201) target = $region12
    $region11: #{uninext_forward.13} parent=5 // pred_region
      %s205 = ssub.s32 %s13, 1
      // Predicated region
      $region13: #{uninext_forward.13} parent=11 // pred_check
        %p206 = pneg %p60
      $region14: #{uninext_forward.13} parent=11 // pred_check_branch
        %208 = sbr.rel (%p206) target = $region16
      $region15: #{uninext_forward.13} parent=11 // pred_region
        _
      $region16: #{uninext_forward.13} parent=11 // pred_fallthru
        _
      // Predicated region
      $region17: #{uninext_forward.13} parent=11 // pred_check
        %p209 = pneg %p81
      $region18: #{uninext_forward.13} parent=11 // pred_check_branch
        %211 = sbr.rel (%p209) target = $region20
      $region19: #{uninext_forward.13} parent=11 // pred_region
        _
      $region20: #{uninext_forward.13} parent=11 // pred_fallthru
        _
      // Predicated region
      $region21: #{uninext_forward.13} parent=11 // pred_check
        %p212 = pneg %p102
      $region22: #{uninext_forward.13} parent=11 // pred_check_branch
        %214 = sbr.rel (%p212) target = $region24
      $region23: #{uninext_forward.13} parent=11 // pred_region
        _
      $region24: #{uninext_forward.13} parent=11 // pred_fallthru
        _
      // Predicated region
      $region25: #{uninext_forward.13} parent=11 // pred_check
        %p215 = pneg %p123
      $region26: #{uninext_forward.13} parent=11 // pred_check_branch
        %217 = sbr.rel (%p215) target = $region28
      $region27: #{uninext_forward.13} parent=11 // pred_region
        _
      $region28: #{uninext_forward.13} parent=11 // pred_fallthru
        _
      // Predicated region
      $region29: #{uninext_forward.13} parent=11 // pred_check
        %p218 = pneg %p144
      $region30: #{uninext_forward.13} parent=11 // pred_check_branch
        %220 = sbr.rel (%p218) target = $region32
      $region31: #{uninext_forward.13} parent=11 // pred_region
        _
      $region32: #{uninext_forward.13} parent=11 // pred_fallthru
        _
      // Predicated region
      $region33: #{uninext_forward.13} parent=11 // pred_check
        %p221 = pneg %p165
      $region34: #{uninext_forward.13} parent=11 // pred_check_branch
        %223 = sbr.rel (%p221) target = $region36
      $region35: #{uninext_forward.13} parent=11 // pred_region
        _
      $region36: #{uninext_forward.13} parent=11 // pred_fallthru
        _
    $region12: #{uninext_forward.13} parent=5 // pred_fallthru
      _
    %p224 = scmp.lt.s32.totalorder %s13, 2
    // Predicated region
    $region37: #{uninext_forward.13} parent=5 // pred_check
      %p225 = pneg %p224
    $region38: #{uninext_forward.13} parent=5 // pred_check_branch
      %227 = sbr.rel (%p225) target = $region40
    $region39: #{uninext_forward.13} parent=5 // pred_region
      // Predicated region
      $region41: #{uninext_forward.13} parent=39 // pred_check
        %p228 = pneg %p33
      $region42: #{uninext_forward.13} parent=39 // pred_check_branch
        %230 = sbr.rel (%p228) target = $region44
      $region43: #{uninext_forward.13} parent=39 // pred_region
        %s231 = smul.u32 8, %s13
        %p232 = scmp.lt.s32.totalorder %s231, 15
        %s233 = scalar_select %p232, %s231, 15
        %s234 = smul.addr %s233, 8
        %s235 = scalar_lea.vmem %s0, %s234
        %s236 = smul.u32 8, %s13
      $region44: #{uninext_forward.13} parent=39 // pred_fallthru
        _
    $region40: #{uninext_forward.13} parent=5 // pred_fallthru
      _
    %p237 = scmp.le.s32.totalorder 1, %s13
    %p238 = scmp.lt.s32.totalorder %s13, 3
    %p239 = pnand %p237, %p238
    %p240 = pneg %p239
    // Predicated region
    $region45: #{uninext_forward.13} parent=5 // pred_check
      _
    $region46: #{uninext_forward.13} parent=5 // pred_check_branch
      %242 = sbr.rel (%p239) target = $region48
    $region47: #{uninext_forward.13} parent=5 // pred_region
      %s243 = ssub.s32 %s13, 1
      %s244 = smul.u32 8, %s18
      %p245 = scmp.lt.s32.totalorder %s244, 15
      %s246 = scalar_select %p245, %s244, 15
      %s247 = smul.addr %s246, 8
      %s248 = scalar_lea.vmem %s0, %s247
      %p249 = pneg %p39
      %p250 = pneg %p36
      %p251 = pneg %p60
      %p252 = pneg %p57
      %p253 = pneg %p81
      %p254 = pneg %p78
      %p255 = pneg %p102
      %p256 = pneg %p99
      %p257 = pneg %p123
      %p258 = pneg %p120
      %p259 = pneg %p144
      %p260 = pneg %p141
      %p261 = pneg %p165
      %p262 = pneg %p162
      %p263 = pneg %p191
      %p264 = pneg %p188
      %s265 = smul.u32 8, %s18
      %p266 = scmp.lt.s32.totalorder %s265, 15
      %s267 = scalar_select %p266, %s265, 15
      %s268 = smul.addr %s267, 8
      %s269 = scalar_lea.vmem %s7, %s268
      %s270 = smul.u32 8, %s18
      %p271 = scmp.lt.s32.totalorder %s270, 15
      %s272 = scalar_select %p271, %s270, 15
      %s273 = smul.addr %s272, 8
      %s274 = scalar_lea.vmem %s0, %s273
      %s275 = smul.u32 8, %s18
      %s276 = smul.u32 8, %s18
      %p277 = scmp.lt.s32.totalorder %s276, 15
      %s278 = scalar_select %p277, %s276, 15
      %s279 = smul.addr %s278, 8
      %s280 = scalar_lea.vmem %s7, %s279
      %s281 = smul.u32 8, %s18
      %v283 = vld [vmem:[%s274] sm:$0xff]
      %v284 = vld [vmem:[%s274 + $0x8] sm:$0xff]
      %v285 = vld [vmem:[%s274 + $0x10] sm:$0xff]
      %v286 = vld [vmem:[%s274 + $0x18] sm:$0xff]
      %v287 = vld [vmem:[%s274 + $0x20] sm:$0xff]
      %v288 = vld [vmem:[%s274 + $0x28] sm:$0xff]
      %v289 = vld [vmem:[%s274 + $0x30] sm:$0xff]
      %v290 = vld [vmem:[%s274 + $0x38] sm:$0xff]
      %vm291 = vcmask 261120
      %v292 = vsel %vm291, %v283, 0.0
      %293 = vadd.xlane.f32.xlu0 %v292
      %v294 = vpop.xlane.xlu0 %293
      %v295 = vsel %vm291, %v284, 0.0
      %296 = vadd.xlane.f32.xlu0 %v295
      %v297 = vpop.xlane.xlu0 %296
      %v298 = vsel %vm291, %v285, 0.0
      %299 = vadd.xlane.f32.xlu0 %v298
      %v300 = vpop.xlane.xlu0 %299
      %v301 = vsel %vm291, %v286, 0.0
      %302 = vadd.xlane.f32.xlu0 %v301
      %v303 = vpop.xlane.xlu0 %302
      %v304 = vsel %vm291, %v287, 0.0
      %305 = vadd.xlane.f32.xlu0 %v304
      %v306 = vpop.xlane.xlu0 %305
      %v307 = vsel %vm291, %v288, 0.0
      %308 = vadd.xlane.f32.xlu0 %v307
      %v309 = vpop.xlane.xlu0 %308
      %v310 = vsel %vm291, %v289, 0.0
      %311 = vadd.xlane.f32.xlu0 %v310
      %v312 = vpop.xlane.xlu0 %311
      %v313 = vsel %vm291, %v290, 0.0
      %314 = vadd.xlane.f32.xlu0 %v313
      %v315 = vpop.xlane.xlu0 %314
      %v316 = vrcp.pop 32.0
      %v317 = vmul.f32 %v294, %v316
      %v318 = vmul.f32 %v297, %v316
      %v319 = vmul.f32 %v300, %v316
      %v320 = vmul.f32 %v303, %v316
      %v321 = vmul.f32 %v306, %v316
      %v322 = vmul.f32 %v309, %v316
      %v323 = vmul.f32 %v312, %v316
      %v324 = vmul.f32 %v315, %v316
      %v325 = vsub.f32 %v283, %v317
      %v326 = vsub.f32 %v284, %v318
      %v327 = vsub.f32 %v285, %v319
      %v328 = vsub.f32 %v286, %v320
      %v329 = vsub.f32 %v287, %v321
      %v330 = vsub.f32 %v288, %v322
      %v331 = vsub.f32 %v289, %v323
      %v332 = vsub.f32 %v290, %v324
      %v333 = vmul.f32 %v325, %v325
      %v334 = vmul.f32 %v326, %v326
      %v335 = vmul.f32 %v327, %v327
      %v336 = vmul.f32 %v328, %v328
      %v337 = vmul.f32 %v329, %v329
      %v338 = vmul.f32 %v330, %v330
      %v339 = vmul.f32 %v331, %v331
      %v340 = vmul.f32 %v332, %v332
      %v341 = vsel %vm291, %v333, 0.0
      %342 = vadd.xlane.f32.xlu0 %v341
      %v343 = vpop.xlane.xlu0 %342
      %v344 = vsel %vm291, %v334, 0.0
      %345 = vadd.xlane.f32.xlu0 %v344
      %v346 = vpop.xlane.xlu0 %345
      %v347 = vsel %vm291, %v335, 0.0
      %348 = vadd.xlane.f32.xlu0 %v347
      %v349 = vpop.xlane.xlu0 %348
      %v350 = vsel %vm291, %v336, 0.0
      %351 = vadd.xlane.f32.xlu0 %v350
      %v352 = vpop.xlane.xlu0 %351
      %v353 = vsel %vm291, %v337, 0.0
      %354 = vadd.xlane.f32.xlu0 %v353
      %v355 = vpop.xlane.xlu0 %354
      %v356 = vsel %vm291, %v338, 0.0
      %357 = vadd.xlane.f32.xlu0 %v356
      %v358 = vpop.xlane.xlu0 %357
      %v359 = vsel %vm291, %v339, 0.0
      %360 = vadd.xlane.f32.xlu0 %v359
      %v361 = vpop.xlane.xlu0 %360
      %v362 = vsel %vm291, %v340, 0.0
      %363 = vadd.xlane.f32.xlu0 %v362
      %v364 = vpop.xlane.xlu0 %363
      %v365 = vmul.f32 %v343, %v316
      %v366 = vmul.f32 %v346, %v316
      %v367 = vmul.f32 %v349, %v316
      %v368 = vmul.f32 %v352, %v316
      %v369 = vmul.f32 %v355, %v316
      %v370 = vmul.f32 %v358, %v316
      %v371 = vmul.f32 %v361, %v316
      %v372 = vmul.f32 %v364, %v316
      %v373 = vadd.f32 %v365, 1e-06
      %v374 = vadd.f32 %v366, 1e-06
      %v375 = vadd.f32 %v367, 1e-06
      %v376 = vadd.f32 %v368, 1e-06
      %v377 = vadd.f32 %v369, 1e-06
      %v378 = vadd.f32 %v370, 1e-06
      %v379 = vadd.f32 %v371, 1e-06
      %v380 = vadd.f32 %v372, 1e-06
      %v381 = vrsqrt.pop %v373
      %v382 = vrsqrt.pop %v374
      %v383 = vrsqrt.pop %v375
      %v384 = vrsqrt.pop %v376
      %v385 = vrsqrt.pop %v377
      %v386 = vrsqrt.pop %v378
      %v387 = vrsqrt.pop %v379
      %v388 = vrsqrt.pop %v380
      %v389 = vmul.f32 %v325, %v381
      %v390 = vmul.f32 %v326, %v382
      %v391 = vmul.f32 %v327, %v383
      %v392 = vmul.f32 %v328, %v384
      %v393 = vmul.f32 %v329, %v385
      %v394 = vmul.f32 %v330, %v386
      %v395 = vmul.f32 %v331, %v387
      %v396 = vmul.f32 %v332, %v388
      %v397 = vld [vmem:[%s1] sm:$0x1]
      %v399 = vlaneseq
      %v400 = vshrl.u32 %v399, 7
      %v401 = vsub.s32 0, %v400
      %v402 = vrot.slane %v397, %v401
      %v404 = vmul.f32 %v389, %v402
      %v405 = vmul.f32 %v390, %v402
      %v406 = vmul.f32 %v391, %v402
      %v407 = vmul.f32 %v392, %v402
      %v408 = vmul.f32 %v393, %v402
      %v409 = vmul.f32 %v394, %v402
      %v410 = vmul.f32 %v395, %v402
      %v411 = vmul.f32 %v396, %v402
      %v412 = vld [vmem:[%s2] sm:$0x1]
      %v414 = vlaneseq
      %v415 = vshrl.u32 %v414, 7
      %v416 = vsub.s32 0, %v415
      %v417 = vrot.slane %v412, %v416
      %v419 = vadd.f32 %v404, %v417
      %v420 = vadd.f32 %v405, %v417
      %v421 = vadd.f32 %v406, %v417
      %v422 = vadd.f32 %v407, %v417
      %v423 = vadd.f32 %v408, %v417
      %v424 = vadd.f32 %v409, %v417
      %v425 = vadd.f32 %v410, %v417
      %v426 = vadd.f32 %v411, %v417
      %v427 = vpack.c.bf16 %v420, %v419
      %v428 = vpack.c.bf16 %v422, %v421
      %v429 = vpack.c.bf16 %v424, %v423
      %v430 = vpack.c.bf16 %v426, %v425
      %v431 = vld [vmem:[%s3] sm:$0xf]
      %v432 = vld [vmem:[%s3 + $0x4] sm:$0xf]
      %v433 = vld [vmem:[%s3 + $0x8] sm:$0xf]
      %v434 = vld [vmem:[%s3 + $0xc] sm:$0xf]
      %v435 = vld [vmem:[%s4] sm:$0x1]
      %v437 = vlaneseq
      %v438 = vshrl.u32 %v437, 7
      %v439 = vsub.s32 0, %v438
      %v440 = vrot.slane %v435, %v439
      %v446 = vunpack.c.l.b16 %v431
      %v447 = vunpack.c.l.b16 %v432
      %v448 = vunpack.c.l.b16 %v433
      %v449 = vunpack.c.l.b16 %v434
      %v450 = vpack.c.b16 %v447, %v446
      %v451 = vpack.c.b16 %v449, %v448
      %v455 = vsel %vm291, %v427, 0
      %v458 = vsel %vm291, %v428, 0
      %v461 = vsel %vm291, %v429, 0
      %v464 = vsel %vm291, %v430, 0
      %466 = vmatprep.subr.bf16.mxu0 0
      %467 = vmatpush1.bf16.msra.mxu0 0
      %468 = vmatprep.subr.bf16.mxu0 0
      %469 = vmatpush1.bf16.msra.mxu0 0
      %470 = vmatprep.subr.bf16.mxu0 0
      %471 = vmatpush1.bf16.msra.mxu0 0
      %472 = vmatprep.subr.bf16.mxu0 0
      %473 = vmatpush1.bf16.msra.mxu0 0
      %474 = vmatprep.subr.bf16.mxu0 0
      %475 = vmatpush1.bf16.msra.mxu0 0
      %476 = vmatprep.subr.bf16.mxu0 0
      %477 = vmatpush1.bf16.msra.mxu0 0
      %478 = vmatprep.subr.bf16.mxu0 0
      %479 = vmatpush1.bf16.msra.mxu0 %v451
      %480 = vmatprep.subr.bf16.mxu0 0
      %481 = vmatpush1.bf16.msra.mxu0 %v450
      %482 = vmatprep.subr.bf16.mxu0 0
      %483 = vmatpush2.bf16.msra.mxu0 0
      %484 = vmatprep.subr.bf16.mxu0 0
      %485 = vmatpush2.bf16.msra.mxu0 0
      %486 = vmatprep.subr.bf16.mxu0 0
      %487 = vmatpush2.bf16.msra.mxu0 0
      %488 = vmatprep.subr.bf16.mxu0 0
      %489 = vmatpush2.bf16.msra.mxu0 0
      %490 = vmatprep.subr.bf16.mxu0 0
      %491 = vmatpush2.bf16.msra.mxu0 0
      %492 = vmatprep.subr.bf16.mxu0 0
      %493 = vmatpush2.bf16.msra.mxu0 0
      %494 = vmatprep.subr.bf16.mxu0 0
      %495 = vmatpush2.bf16.msra.mxu0 0
      %496 = vmatprep.subr.bf16.mxu0 0
      %497 = vmatpush2.bf16.msra.mxu0 0
      %498 = vmatprep.mubr.bf16.mxu0 0
      %499 = vmatmul.mubr.bf16.gmra.mxu0 %v455
      %v500 = vpop.f32.mrf.mxu0
      %v501 = vadd.f32 %v440, %v500
      %v502 = vpop.f32.mrf.mxu0
      %v503 = vpop.f32.mrf.mxu0
      %v504 = vadd.f32 %v440, %v503
      %v505 = vpop.f32.mrf.mxu0
      %506 = vmatprep.mubr.bf16.mxu0 0
      %507 = vmatmul.mubr.bf16.gmra.mxu0 %v458
      %v508 = vpop.f32.mrf.mxu0
      %v509 = vadd.f32 %v440, %v508
      %v510 = vpop.f32.mrf.mxu0
      %v511 = vpop.f32.mrf.mxu0
      %v512 = vadd.f32 %v440, %v511
      %v513 = vpop.f32.mrf.mxu0
      %514 = vmatprep.mubr.bf16.mxu0 0
      %515 = vmatmul.mubr.bf16.gmra.mxu0 %v461
      %v516 = vpop.f32.mrf.mxu0
      %v517 = vadd.f32 %v440, %v516
      %v518 = vpop.f32.mrf.mxu0
      %v519 = vpop.f32.mrf.mxu0
      %v520 = vadd.f32 %v440, %v519
      %v521 = vpop.f32.mrf.mxu0
      %522 = vmatprep.mubr.bf16.mxu0 0
      %523 = vmatmul.mubr.bf16.gmra.mxu0 %v464
      %v524 = vpop.f32.mrf.mxu0
      %v525 = vadd.f32 %v440, %v524
      %v526 = vpop.f32.mrf.mxu0
      %v527 = vpop.f32.mrf.mxu0
      %v528 = vadd.f32 %v440, %v527
      %v529 = vpop.f32.mrf.mxu0
      %530 = vdwg.mxu0
      %v531 = vmul.f32 %v501, %v501
      %v532 = vmul.f32 %v504, %v504
      %v533 = vmul.f32 %v509, %v509
      %v534 = vmul.f32 %v512, %v512
      %v535 = vmul.f32 %v517, %v517
      %v536 = vmul.f32 %v520, %v520
      %v537 = vmul.f32 %v525, %v525
      %v538 = vmul.f32 %v528, %v528
      %v539 = vmul.f32 %v501, %v531
      %v540 = vmul.f32 %v504, %v532
      %v541 = vmul.f32 %v509, %v533
      %v542 = vmul.f32 %v512, %v534
      %v543 = vmul.f32 %v517, %v535
      %v544 = vmul.f32 %v520, %v536
      %v545 = vmul.f32 %v525, %v537
      %v546 = vmul.f32 %v528, %v538
      %v547 = vmul.f32 %v539, 0.044715
      %v548 = vmul.f32 %v540, 0.044715
      %v549 = vmul.f32 %v541, 0.044715
      %v550 = vmul.f32 %v542, 0.044715
      %v551 = vmul.f32 %v543, 0.044715
      %v552 = vmul.f32 %v544, 0.044715
      %v553 = vmul.f32 %v545, 0.044715
      %v554 = vmul.f32 %v546, 0.044715
      %v555 = vadd.f32 %v501, %v547
      %v556 = vadd.f32 %v504, %v548
      %v557 = vadd.f32 %v509, %v549
      %v558 = vadd.f32 %v512, %v550
      %v559 = vadd.f32 %v517, %v551
      %v560 = vadd.f32 %v520, %v552
      %v561 = vadd.f32 %v525, %v553
      %v562 = vadd.f32 %v528, %v554
      %v563 = vmul.f32 %v555, 0.7978846
      %v564 = vmul.f32 %v556, 0.7978846
      %v565 = vmul.f32 %v557, 0.7978846
      %v566 = vmul.f32 %v558, 0.7978846
      %v567 = vmul.f32 %v559, 0.7978846
      %v568 = vmul.f32 %v560, 0.7978846
      %v569 = vmul.f32 %v561, 0.7978846
      %v570 = vmul.f32 %v562, 0.7978846
      %v571 = vtanh.pop %v563
      %v572 = vtanh.pop %v564
      %v573 = vtanh.pop %v565
      %v574 = vtanh.pop %v566
      %v575 = vtanh.pop %v567
      %v576 = vtanh.pop %v568
      %v577 = vtanh.pop %v569
      %v578 = vtanh.pop %v570
      %v579 = vadd.f32 %v571, 1.0
      %v580 = vadd.f32 %v572, 1.0
      %v581 = vadd.f32 %v573, 1.0
      %v582 = vadd.f32 %v574, 1.0
      %v583 = vadd.f32 %v575, 1.0
      %v584 = vadd.f32 %v576, 1.0
      %v585 = vadd.f32 %v577, 1.0
      %v586 = vadd.f32 %v578, 1.0
      %v587 = vmul.f32 %v579, 0.5
      %v588 = vmul.f32 %v580, 0.5
      %v589 = vmul.f32 %v581, 0.5
      %v590 = vmul.f32 %v582, 0.5
      %v591 = vmul.f32 %v583, 0.5
      %v592 = vmul.f32 %v584, 0.5
      %v593 = vmul.f32 %v585, 0.5
      %v594 = vmul.f32 %v586, 0.5
      %v595 = vmul.f32 %v501, %v587
      %v596 = vmul.f32 %v504, %v588
      %v597 = vmul.f32 %v509, %v589
      %v598 = vmul.f32 %v512, %v590
      %v599 = vmul.f32 %v517, %v591
      %v600 = vmul.f32 %v520, %v592
      %v601 = vmul.f32 %v525, %v593
      %v602 = vmul.f32 %v528, %v594
      %v603 = vpack.c.bf16 %v596, %v595
      %v604 = vpack.c.bf16 %v598, %v597
      %v605 = vpack.c.bf16 %v600, %v599
      %v606 = vpack.c.bf16 %v602, %v601
      %v607 = vld [vmem:[%s5] sm:$0xf]
      %v608 = vld [vmem:[%s5 + $0x4] sm:$0xf]
      %v609 = vld [vmem:[%s5 + $0x8] sm:$0xf]
      %v610 = vld [vmem:[%s5 + $0xc] sm:$0xf]
      %v611 = vld [vmem:[%s5 + $0x10] sm:$0xf]
      %v612 = vld [vmem:[%s5 + $0x14] sm:$0xf]
      %v613 = vld [vmem:[%s5 + $0x18] sm:$0xf]
      %v614 = vld [vmem:[%s5 + $0x1c] sm:$0xf]
      %v615 = vld [vmem:[%s5 + $0x20] sm:$0xf]
      %v616 = vld [vmem:[%s5 + $0x24] sm:$0xf]
      %v617 = vld [vmem:[%s5 + $0x28] sm:$0xf]
      %v618 = vld [vmem:[%s5 + $0x2c] sm:$0xf]
      %v619 = vld [vmem:[%s5 + $0x30] sm:$0xf]
      %v620 = vld [vmem:[%s5 + $0x34] sm:$0xf]
      %v621 = vld [vmem:[%s5 + $0x38] sm:$0xf]
      %v622 = vld [vmem:[%s5 + $0x3c] sm:$0xf]
      %v623 = vld [vmem:[%s6] sm:$0x1]
      %v625 = vlaneseq
      %v626 = vshrl.u32 %v625, 7
      %v627 = vsub.s32 0, %v626
      %v628 = vrot.slane %v623, %v627
      %v646 = vunpack.c.l.b16 %v607
      %v647 = vunpack.c.l.b16 %v608
      %v648 = vunpack.c.l.b16 %v609
      %v649 = vunpack.c.l.b16 %v610
      %v650 = vunpack.c.l.b16 %v611
      %v651 = vunpack.c.l.b16 %v612
      %v652 = vunpack.c.l.b16 %v613
      %v653 = vunpack.c.l.b16 %v614
      %v654 = vunpack.c.l.b16 %v615
      %v655 = vunpack.c.l.b16 %v616
      %v656 = vunpack.c.l.b16 %v617
      %v657 = vunpack.c.l.b16 %v618
      %v658 = vunpack.c.l.b16 %v619
      %v659 = vunpack.c.l.b16 %v620
      %v660 = vunpack.c.l.b16 %v621
      %v661 = vunpack.c.l.b16 %v622
      %v662 = vpack.c.b16 %v647, %v646
      %v663 = vpack.c.b16 %v649, %v648
      %v664 = vpack.c.b16 %v651, %v650
      %v665 = vpack.c.b16 %v653, %v652
      %v666 = vpack.c.b16 %v655, %v654
      %v667 = vpack.c.b16 %v657, %v656
      %v668 = vpack.c.b16 %v659, %v658
      %v669 = vpack.c.b16 %v661, %v660
      %678 = vmatprep.subr.bf16.mxu0 0
      %679 = vmatpush1.bf16.msra.mxu0 %v669
      %680 = vmatprep.subr.bf16.mxu0 0
      %681 = vmatpush1.bf16.msra.mxu0 %v668
      %682 = vmatprep.subr.bf16.mxu0 0
      %683 = vmatpush1.bf16.msra.mxu0 %v667
      %684 = vmatprep.subr.bf16.mxu0 0
      %685 = vmatpush1.bf16.msra.mxu0 %v666
      %686 = vmatprep.subr.bf16.mxu0 0
      %687 = vmatpush1.bf16.msra.mxu0 %v665
      %688 = vmatprep.subr.bf16.mxu0 0
      %689 = vmatpush1.bf16.msra.mxu0 %v664
      %690 = vmatprep.subr.bf16.mxu0 0
      %691 = vmatpush1.bf16.msra.mxu0 %v663
      %692 = vmatprep.subr.bf16.mxu0 0
      %693 = vmatpush1.bf16.msra.mxu0 %v662
      %694 = vmatprep.subr.bf16.mxu0 0
      %695 = vmatpush2.bf16.msra.mxu0 0
      %696 = vmatprep.subr.bf16.mxu0 0
      %697 = vmatpush2.bf16.msra.mxu0 0
      %698 = vmatprep.subr.bf16.mxu0 0
      %699 = vmatpush2.bf16.msra.mxu0 0
      %700 = vmatprep.subr.bf16.mxu0 0
      %701 = vmatpush2.bf16.msra.mxu0 0
      %702 = vmatprep.subr.bf16.mxu0 0
      %703 = vmatpush2.bf16.msra.mxu0 0
      %704 = vmatprep.subr.bf16.mxu0 0
      %705 = vmatpush2.bf16.msra.mxu0 0
      %706 = vmatprep.subr.bf16.mxu0 0
      %707 = vmatpush2.bf16.msra.mxu0 0
      %708 = vmatprep.subr.bf16.mxu0 0
      %709 = vmatpush2.bf16.msra.mxu0 0
      %710 = vmatprep.mubr.bf16.mxu0 0
      %711 = vmatmul.mubr.bf16.gmra.mxu0 %v603
      %v712 = vpop.f32.mrf.mxu0
      %v713 = vadd.f32 %v628, %v712
      %v714 = vpop.f32.mrf.mxu0
      %v715 = vpop.f32.mrf.mxu0
      %v716 = vadd.f32 %v628, %v715
      %v717 = vpop.f32.mrf.mxu0
      %718 = vmatprep.mubr.bf16.mxu0 0
      %719 = vmatmul.mubr.bf16.gmra.mxu0 %v604
      %v720 = vpop.f32.mrf.mxu0
      %v721 = vadd.f32 %v628, %v720
      %v722 = vpop.f32.mrf.mxu0
      %v723 = vpop.f32.mrf.mxu0
      %v724 = vadd.f32 %v628, %v723
      %v725 = vpop.f32.mrf.mxu0
      %726 = vmatprep.mubr.bf16.mxu0 0
      %727 = vmatmul.mubr.bf16.gmra.mxu0 %v605
      %v728 = vpop.f32.mrf.mxu0
      %v729 = vadd.f32 %v628, %v728
      %v730 = vpop.f32.mrf.mxu0
      %v731 = vpop.f32.mrf.mxu0
      %v732 = vadd.f32 %v628, %v731
      %v733 = vpop.f32.mrf.mxu0
      %734 = vmatprep.mubr.bf16.mxu0 0
      %735 = vmatmul.mubr.bf16.gmra.mxu0 %v606
      %v736 = vpop.f32.mrf.mxu0
      %v737 = vadd.f32 %v628, %v736
      %v738 = vpop.f32.mrf.mxu0
      %v739 = vpop.f32.mrf.mxu0
      %v740 = vadd.f32 %v628, %v739
      %v741 = vpop.f32.mrf.mxu0
      %742 = vdwg.mxu0
      %v743 = vadd.f32 %v283, %v713
      %v744 = vadd.f32 %v284, %v716
      %v745 = vadd.f32 %v285, %v721
      %v746 = vadd.f32 %v286, %v724
      %v747 = vadd.f32 %v287, %v729
      %v748 = vadd.f32 %v288, %v732
      %v749 = vadd.f32 %v289, %v737
      %v750 = vadd.f32 %v290, %v740
      %751 = vst.msk [vmem:[%s280] sm:$0xff] %vm291, %v743
      %752 = vst.msk [vmem:[%s280 + $0x8] sm:$0xff] %vm291, %v744
      %753 = vst.msk [vmem:[%s280 + $0x10] sm:$0xff] %vm291, %v745
      %754 = vst.msk [vmem:[%s280 + $0x18] sm:$0xff] %vm291, %v746
      %755 = vst.msk [vmem:[%s280 + $0x20] sm:$0xff] %vm291, %v747
      %756 = vst.msk [vmem:[%s280 + $0x28] sm:$0xff] %vm291, %v748
      %757 = vst.msk [vmem:[%s280 + $0x30] sm:$0xff] %vm291, %v749
      %758 = vst.msk [vmem:[%s280 + $0x38] sm:$0xff] %vm291, %v750
      %s759 = smul.u32 8, %s18
      %p760 = scmp.lt.s32.totalorder %s759, 15
      %s761 = scalar_select %p760, %s759, 15
      %s762 = smul.addr %s761, 8
      %s763 = scalar_lea.vmem %s7, %s762
      // Predicated region
      $region49: #{uninext_forward.13} parent=47 // pred_check
        %p764 = pneg %p188
      $region50: #{uninext_forward.13} parent=47 // pred_check_branch
        %766 = sbr.rel (%p764) target = $region52
      $region51: #{uninext_forward.13} parent=47 // pred_region
        %s767 = smul.u32 8, %s18
      $region52: #{uninext_forward.13} parent=47 // pred_fallthru
        _
    $region48: #{uninext_forward.13} parent=5 // pred_fallthru
      _
    %p768 = scmp.le.s32.totalorder 2, %s13
    // Predicated region
    $region53: #{uninext_forward.13} parent=5 // pred_check
      %p769 = pneg %p768
    $region54: #{uninext_forward.13} parent=5 // pred_check_branch
      %771 = sbr.rel (%p769) target = $region56
    $region55: #{uninext_forward.13} parent=5 // pred_region
      %s772 = ssub.s32 %s13, 2
      // Predicated region
      $region57: #{uninext_forward.13} parent=55 // pred_check
        %p773 = pneg %p194
      $region58: #{uninext_forward.13} parent=55 // pred_check_branch
        %775 = sbr.rel (%p773) target = $region60
      $region59: #{uninext_forward.13} parent=55 // pred_region
        %s776 = smul.u32 8, %s19
        %p777 = scmp.lt.s32.totalorder %s776, 15
        %s778 = scalar_select %p777, %s776, 15
        %s779 = smul.addr %s778, 8
        %s780 = scalar_lea.vmem %s7, %s779
      $region60: #{uninext_forward.13} parent=55 // pred_fallthru
        _
    $region56: #{uninext_forward.13} parent=5 // pred_fallthru
      _
  $region6: #{uninext_forward.13} parent=0 // loop_footer
    %s17 = sadd.s32 1, %s13
  $region7: #{uninext_forward.13} parent=0 // loop_footer_branch
    %12 = sbr.rel target = $region3
  $region8: #{uninext_forward.13} parent=0 // loop_exit
    _

// kernel: uninext_forward.15
$region0: #{uninext_forward.15}
  #allocation0 [shape = 'u32[]', space=smem, size = 0x4, offset = 0x4, fixed_abs, tag = 'smem constant byte address 0x4 - core index']
  #allocation1 [shape = 'u32[144,128]{1,0:T(1,128)}', space=vmem, size = 0x12000, scoped, tag = 'internal scratch']
  %s0 = inlined_call_operand.vmem [shape: f32[8,64,8], index: 0, kind: input, shape index: {}]
  %s1 = inlined_call_operand.vmem [shape: f32[8,64,8], index: 1, kind: input, shape index: {}]
  %s2 = inlined_call_operand.vmem [shape: f32[8,64,8], index: 2, kind: input, shape index: {}]
  %s3 = inlined_call_operand.vmem [shape: f32[8,64,64], index: 3, kind: input, shape index: {}]
  %s4 = inlined_call_operand.vmem [shape: f32[8,64,8], index: 4, kind: output, shape index: {}]
  %s5 = sld [smem:[#allocation0]]
  $region49: #{uninext_forward.15} parent=0
    _
  %s7 = ssub.s32 1, %s5
  %s8 = scalar_select 0, %s7, %s5
  loop: start=0, step=1, limit=4
  $region2: #{uninext_forward.15} parent=0 // loop_pre_header
    _
  $region3: #{uninext_forward.15} parent=0 // loop_header
    %s10 = sphi 0, %s14
    %p11 = scmp.ge.s32.totalorder %s10, 4
    %s20 = sphi 0, %s22
    %s23 = sphi 0, %s20
    %s24 = sphi 0, %s23
    %s40 = sphi 0, %s24
    %s46 = sphi 0, %s48
    %s49 = sphi 0, %s46
    %s50 = sphi 0, %s49
    %s66 = sphi 0, %s50
    %s72 = sphi 0, %s74
    %s75 = sphi 0, %s72
    %s76 = sphi 0, %s75
    %s92 = sphi 0, %s76
    %s98 = sphi 0, %s100
    %s101 = sphi 0, %s98
    %s102 = sphi 0, %s101
    %s118 = sphi 0, %s102
    %s124 = sphi 0, %s126
    %s127 = sphi 0, %s124
    %s128 = sphi 0, %s127
    %s144 = sphi 0, %s128
  $region4: #{uninext_forward.15} parent=0 // loop_header_branch
    %13 = sbr.rel (%p11) target = $region8
  $region5: #{uninext_forward.15} parent=0 // loop_body
    %s15 = ssub.s32 %s10, 1
    %s16 = ssub.s32 %s10, 2
    %s17 = sadd.s32 %s10, 1
    %s18 = ssub.s32 %s10, %s17
    %p19 = scmp.eq.s32.totalorder %s18, 0
    %s21 = sadd.s32 %s20, 1
    %s22 = scalar_select %p19, %s20, %s21
    %p25 = pneg %p19
    %p26 = scmp.eq.s32.totalorder %s10, 1
    %p27 = por %p25, %p26
    %p28 = scmp.ne.s32.totalorder %s20, %s23
    %p29 = scmp.eq.s32.totalorder %s10, 0
    %p30 = por %p28, %p29
    %p31 = scmp.ne.s32.totalorder %s20, %s23
    %p32 = scmp.eq.s32.totalorder %s15, 1
    %p33 = por %p31, %p32
    %p34 = scmp.ne.s32.totalorder %s23, %s24
    %p35 = scmp.eq.s32.totalorder %s15, 0
    %p36 = por %p34, %p35
    %p37 = scmp.ne.s32.totalorder %s23, %s24
    %p38 = scmp.eq.s32.totalorder %s16, 1
    %p39 = por %p37, %p38
    %p41 = scmp.ne.s32.totalorder %s24, %s40
    %p42 = scmp.eq.s32.totalorder %s16, 0
    %p43 = por %p41, %p42
    %s44 = ssub.s32 %s10, %s17
    %p45 = scmp.eq.s32.totalorder %s44, 0
    %s47 = sadd.s32 %s46, 1
    %s48 = scalar_select %p45, %s46, %s47
    %p51 = pneg %p45
    %p52 = scmp.eq.s32.totalorder %s10, 1
    %p53 = por %p51, %p52
    %p54 = scmp.ne.s32.totalorder %s46, %s49
    %p55 = scmp.eq.s32.totalorder %s10, 0
    %p56 = por %p54, %p55
    %p57 = scmp.ne.s32.totalorder %s46, %s49
    %p58 = scmp.eq.s32.totalorder %s15, 1
    %p59 = por %p57, %p58
    %p60 = scmp.ne.s32.totalorder %s49, %s50
    %p61 = scmp.eq.s32.totalorder %s15, 0
    %p62 = por %p60, %p61
    %p63 = scmp.ne.s32.totalorder %s49, %s50
    %p64 = scmp.eq.s32.totalorder %s16, 1
    %p65 = por %p63, %p64
    %p67 = scmp.ne.s32.totalorder %s50, %s66
    %p68 = scmp.eq.s32.totalorder %s16, 0
    %p69 = por %p67, %p68
    %s70 = ssub.s32 %s10, %s17
    %p71 = scmp.eq.s32.totalorder %s70, 0
    %s73 = sadd.s32 %s72, 1
    %s74 = scalar_select %p71, %s72, %s73
    %p77 = pneg %p71
    %p78 = scmp.eq.s32.totalorder %s10, 1
    %p79 = por %p77, %p78
    %p80 = scmp.ne.s32.totalorder %s72, %s75
    %p81 = scmp.eq.s32.totalorder %s10, 0
    %p82 = por %p80, %p81
    %p83 = scmp.ne.s32.totalorder %s72, %s75
    %p84 = scmp.eq.s32.totalorder %s15, 1
    %p85 = por %p83, %p84
    %p86 = scmp.ne.s32.totalorder %s75, %s76
    %p87 = scmp.eq.s32.totalorder %s15, 0
    %p88 = por %p86, %p87
    %p89 = scmp.ne.s32.totalorder %s75, %s76
    %p90 = scmp.eq.s32.totalorder %s16, 1
    %p91 = por %p89, %p90
    %p93 = scmp.ne.s32.totalorder %s76, %s92
    %p94 = scmp.eq.s32.totalorder %s16, 0
    %p95 = por %p93, %p94
    %s96 = ssub.s32 %s10, %s17
    %p97 = scmp.eq.s32.totalorder %s96, 0
    %s99 = sadd.s32 %s98, 1
    %s100 = scalar_select %p97, %s98, %s99
    %p103 = pneg %p97
    %p104 = scmp.eq.s32.totalorder %s10, 1
    %p105 = por %p103, %p104
    %p106 = scmp.ne.s32.totalorder %s98, %s101
    %p107 = scmp.eq.s32.totalorder %s10, 0
    %p108 = por %p106, %p107
    %p109 = scmp.ne.s32.totalorder %s98, %s101
    %p110 = scmp.eq.s32.totalorder %s15, 1
    %p111 = por %p109, %p110
    %p112 = scmp.ne.s32.totalorder %s101, %s102
    %p113 = scmp.eq.s32.totalorder %s15, 0
    %p114 = por %p112, %p113
    %p115 = scmp.ne.s32.totalorder %s101, %s102
    %p116 = scmp.eq.s32.totalorder %s16, 1
    %p117 = por %p115, %p116
    %p119 = scmp.ne.s32.totalorder %s102, %s118
    %p120 = scmp.eq.s32.totalorder %s16, 0
    %p121 = por %p119, %p120
    %s122 = ssub.s32 %s10, %s17
    %p123 = scmp.eq.s32.totalorder %s122, 0
    %s125 = sadd.s32 %s124, 1
    %s126 = scalar_select %p123, %s124, %s125
    %p129 = pneg %p123
    %p130 = scmp.eq.s32.totalorder %s10, 1
    %p131 = por %p129, %p130
    %p132 = scmp.ne.s32.totalorder %s124, %s127
    %p133 = scmp.eq.s32.totalorder %s10, 0
    %p134 = por %p132, %p133
    %p135 = scmp.ne.s32.totalorder %s124, %s127
    %p136 = scmp.eq.s32.totalorder %s15, 1
    %p137 = por %p135, %p136
    %p138 = scmp.ne.s32.totalorder %s127, %s128
    %p139 = scmp.eq.s32.totalorder %s15, 0
    %p140 = por %p138, %p139
    %p141 = scmp.ne.s32.totalorder %s127, %s128
    %p142 = scmp.eq.s32.totalorder %s16, 1
    %p143 = por %p141, %p142
    %p145 = scmp.ne.s32.totalorder %s128, %s144
    %p146 = scmp.eq.s32.totalorder %s16, 0
    %p147 = por %p145, %p146
    %p148 = scmp.le.s32.totalorder 1, %s10
    %p149 = scmp.lt.s32.totalorder %s10, 3
    %p150 = pnand %p148, %p149
    %p151 = pneg %p150
    // Predicated region
    $region9: #{uninext_forward.15} parent=5 // pred_check
      _
    $region10: #{uninext_forward.15} parent=5 // pred_check_branch
      %153 = sbr.rel (%p150) target = $region12
    $region11: #{uninext_forward.15} parent=5 // pred_region
      %s154 = ssub.s32 %s10, 1
    $region12: #{uninext_forward.15} parent=5 // pred_fallthru
      _
    %p155 = scmp.lt.s32.totalorder %s10, 2
    // Predicated region
    $region13: #{uninext_forward.15} parent=5 // pred_check
      %p156 = pneg %p155
    $region14: #{uninext_forward.15} parent=5 // pred_check_branch
      %158 = sbr.rel (%p156) target = $region16
    $region15: #{uninext_forward.15} parent=5 // pred_region
      // Predicated region
      $region17: #{uninext_forward.15} parent=15 // pred_check
        %p159 = pneg %p30
      $region18: #{uninext_forward.15} parent=15 // pred_check_branch
        %161 = sbr.rel (%p159) target = $region20
      $region19: #{uninext_forward.15} parent=15 // pred_region
        %s162 = smul.u32 4, %s10
        %p163 = scmp.lt.s32.totalorder %s162, 7
        %s164 = scalar_select %p163, %s162, 7
        %s165 = smul.addr %s164, 8
        %s166 = smul.addr %s165, 8
        %s167 = scalar_lea.vmem %s0, %s166
        %s168 = smul.u32 4, %s10
      $region20: #{uninext_forward.15} parent=15 // pred_fallthru
        _
      // Predicated region
      $region21: #{uninext_forward.15} parent=15 // pred_check
        %p169 = pneg %p56
      $region22: #{uninext_forward.15} parent=15 // pred_check_branch
        %171 = sbr.rel (%p169) target = $region24
      $region23: #{uninext_forward.15} parent=15 // pred_region
        %s172 = smul.u32 4, %s10
        %p173 = scmp.lt.s32.totalorder %s172, 7
        %s174 = scalar_select %p173, %s172, 7
        %s175 = smul.addr %s174, 8
        %s176 = smul.addr %s175, 8
        %s177 = scalar_lea.vmem %s1, %s176
        %s178 = smul.u32 4, %s10
      $region24: #{uninext_forward.15} parent=15 // pred_fallthru
        _
      // Predicated region
      $region25: #{uninext_forward.15} parent=15 // pred_check
        %p179 = pneg %p82
      $region26: #{uninext_forward.15} parent=15 // pred_check_branch
        %181 = sbr.rel (%p179) target = $region28
      $region27: #{uninext_forward.15} parent=15 // pred_region
        %s182 = smul.u32 4, %s10
        %p183 = scmp.lt.s32.totalorder %s182, 7
        %s184 = scalar_select %p183, %s182, 7
        %s185 = smul.addr %s184, 8
        %s186 = smul.addr %s185, 8
        %s187 = scalar_lea.vmem %s2, %s186
        %s188 = smul.u32 4, %s10
      $region28: #{uninext_forward.15} parent=15 // pred_fallthru
        _
      // Predicated region
      $region29: #{uninext_forward.15} parent=15 // pred_check
        %p189 = pneg %p108
      $region30: #{uninext_forward.15} parent=15 // pred_check_branch
        %191 = sbr.rel (%p189) target = $region32
      $region31: #{uninext_forward.15} parent=15 // pred_region
        %s192 = smul.u32 4, %s10
        %p193 = scmp.lt.s32.totalorder %s192, 7
        %s194 = scalar_select %p193, %s192, 7
        %s195 = smul.addr %s194, 8
        %s196 = smul.addr %s195, 8
        %s197 = scalar_lea.vmem %s3, %s196
        %s198 = smul.u32 4, %s10
      $region32: #{uninext_forward.15} parent=15 // pred_fallthru
        _
    $region16: #{uninext_forward.15} parent=5 // pred_fallthru
      _
    %p199 = scmp.le.s32.totalorder 1, %s10
    %p200 = scmp.lt.s32.totalorder %s10, 3
    %p201 = pnand %p199, %p200
    %p202 = pneg %p201
    // Predicated region
    $region33: #{uninext_forward.15} parent=5 // pred_check
      _
    $region34: #{uninext_forward.15} parent=5 // pred_check_branch
      %204 = sbr.rel (%p201) target = $region36
    $region35: #{uninext_forward.15} parent=5 // pred_region
      %s205 = ssub.s32 %s10, 1
      %s206 = smul.u32 4, %s15
      %p207 = scmp.lt.s32.totalorder %s206, 7
      %s208 = scalar_select %p207, %s206, 7
      %s209 = smul.addr %s208, 8
      %s210 = smul.addr %s209, 8
      %s211 = scalar_lea.vmem %s0, %s210
      %p212 = pneg %p36
      %p213 = pneg %p33
      %s214 = smul.u32 4, %s15
      %p215 = scmp.lt.s32.totalorder %s214, 7
      %s216 = scalar_select %p215, %s214, 7
      %s217 = smul.addr %s216, 8
      %s218 = smul.addr %s217, 8
      %s219 = scalar_lea.vmem %s1, %s218
      %p220 = pneg %p62
      %p221 = pneg %p59
      %s222 = smul.u32 4, %s15
      %p223 = scmp.lt.s32.totalorder %s222, 7
      %s224 = scalar_select %p223, %s222, 7
      %s225 = smul.addr %s224, 8
      %s226 = smul.addr %s225, 8
      %s227 = scalar_lea.vmem %s2, %s226
      %p228 = pneg %p88
      %p229 = pneg %p85
      %s230 = smul.u32 4, %s15
      %p231 = scmp.lt.s32.totalorder %s230, 7
      %s232 = scalar_select %p231, %s230, 7
      %s233 = smul.addr %s232, 8
      %s234 = smul.addr %s233, 8
      %s235 = scalar_lea.vmem %s3, %s234
      %p236 = pneg %p114
      %p237 = pneg %p111
      %p238 = pneg %p140
      %p239 = pneg %p137
      %s240 = smul.u32 4, %s15
      %p241 = scmp.lt.s32.totalorder %s240, 7
      %s242 = scalar_select %p241, %s240, 7
      %s243 = smul.addr %s242, 8
      %s244 = smul.addr %s243, 8
      %s245 = scalar_lea.vmem %s4, %s244
      %s246 = smul.u32 4, %s15
      %p247 = scmp.lt.s32.totalorder %s246, 7
      %s248 = scalar_select %p247, %s246, 7
      %s249 = smul.addr %s248, 8
      %s250 = smul.addr %s249, 8
      %s251 = scalar_lea.vmem %s0, %s250
      %s252 = smul.u32 4, %s15
      %s253 = smul.u32 4, %s15
      %p254 = scmp.lt.s32.totalorder %s253, 7
      %s255 = scalar_select %p254, %s253, 7
      %s256 = smul.addr %s255, 8
      %s257 = smul.addr %s256, 8
      %s258 = scalar_lea.vmem %s1, %s257
      %s259 = smul.u32 4, %s15
      %s260 = smul.u32 4, %s15
      %p261 = scmp.lt.s32.totalorder %s260, 7
      %s262 = scalar_select %p261, %s260, 7
      %s263 = smul.addr %s262, 8
      %s264 = smul.addr %s263, 8
      %s265 = scalar_lea.vmem %s2, %s264
      %s266 = smul.u32 4, %s15
      %s267 = smul.u32 4, %s15
      %p268 = scmp.lt.s32.totalorder %s267, 7
      %s269 = scalar_select %p268, %s267, 7
      %s270 = smul.addr %s269, 8
      %s271 = smul.addr %s270, 8
      %s272 = scalar_lea.vmem %s3, %s271
      %s273 = smul.u32 4, %s15
      %s274 = smul.u32 4, %s15
      %p275 = scmp.lt.s32.totalorder %s274, 7
      %s276 = scalar_select %p275, %s274, 7
      %s277 = smul.addr %s276, 8
      %s278 = smul.addr %s277, 8
      %s279 = scalar_lea.vmem %s4, %s278
      %s280 = smul.u32 4, %s15
      %v282 = vld [vmem:[%s251] sm:$0xff]
      %v283 = vld [vmem:[%s251 + $0x8] sm:$0xff]
      %v284 = vld [vmem:[%s251 + $0x10] sm:$0xff]
      %v285 = vld [vmem:[%s251 + $0x18] sm:$0xff]
      %v286 = vld [vmem:[%s251 + $0x20] sm:$0xff]
      %v287 = vld [vmem:[%s251 + $0x28] sm:$0xff]
      %v288 = vld [vmem:[%s251 + $0x30] sm:$0xff]
      %v289 = vld [vmem:[%s251 + $0x38] sm:$0xff]
      %v290 = vld [vmem:[%s251 + $0x40] sm:$0xff]
      %v291 = vld [vmem:[%s251 + $0x48] sm:$0xff]
      %v292 = vld [vmem:[%s251 + $0x50] sm:$0xff]
      %v293 = vld [vmem:[%s251 + $0x58] sm:$0xff]
      %v294 = vld [vmem:[%s251 + $0x60] sm:$0xff]
      %v295 = vld [vmem:[%s251 + $0x68] sm:$0xff]
      %v296 = vld [vmem:[%s251 + $0x70] sm:$0xff]
      %v297 = vld [vmem:[%s251 + $0x78] sm:$0xff]
      %v298 = vld [vmem:[%s251 + $0x80] sm:$0xff]
      %v299 = vld [vmem:[%s251 + $0x88] sm:$0xff]
      %v300 = vld [vmem:[%s251 + $0x90] sm:$0xff]
      %v301 = vld [vmem:[%s251 + $0x98] sm:$0xff]
      %v302 = vld [vmem:[%s251 + $0xa0] sm:$0xff]
      %v303 = vld [vmem:[%s251 + $0xa8] sm:$0xff]
      %v304 = vld [vmem:[%s251 + $0xb0] sm:$0xff]
      %v305 = vld [vmem:[%s251 + $0xb8] sm:$0xff]
      %v306 = vld [vmem:[%s251 + $0xc0] sm:$0xff]
      %v307 = vld [vmem:[%s251 + $0xc8] sm:$0xff]
      %v308 = vld [vmem:[%s251 + $0xd0] sm:$0xff]
      %v309 = vld [vmem:[%s251 + $0xd8] sm:$0xff]
      %v310 = vld [vmem:[%s251 + $0xe0] sm:$0xff]
      %v311 = vld [vmem:[%s251 + $0xe8] sm:$0xff]
      %v312 = vld [vmem:[%s251 + $0xf0] sm:$0xff]
      %v313 = vld [vmem:[%s251 + $0xf8] sm:$0xff]
      %v314 = vpack.c.bf16 %v283, %v282
      %v315 = vpack.c.bf16 %v285, %v284
      %v316 = vpack.c.bf16 %v287, %v286
      %v317 = vpack.c.bf16 %v289, %v288
      %v318 = vpack.c.bf16 %v291, %v290
      %v319 = vpack.c.bf16 %v293, %v292
      %v320 = vpack.c.bf16 %v295, %v294
      %v321 = vpack.c.bf16 %v297, %v296
      %v322 = vpack.c.bf16 %v299, %v298
      %v323 = vpack.c.bf16 %v301, %v300
      %v324 = vpack.c.bf16 %v303, %v302
      %v325 = vpack.c.bf16 %v305, %v304
      %v326 = vpack.c.bf16 %v307, %v306
      %v327 = vpack.c.bf16 %v309, %v308
      %v328 = vpack.c.bf16 %v311, %v310
      %v329 = vpack.c.bf16 %v313, %v312
      %v330 = vld [vmem:[%s258] sm:$0xff]
      %v331 = vld [vmem:[%s258 + $0x8] sm:$0xff]
      %v332 = vld [vmem:[%s258 + $0x10] sm:$0xff]
      %v333 = vld [vmem:[%s258 + $0x18] sm:$0xff]
      %v334 = vld [vmem:[%s258 + $0x20] sm:$0xff]
      %v335 = vld [vmem:[%s258 + $0x28] sm:$0xff]
      %v336 = vld [vmem:[%s258 + $0x30] sm:$0xff]
      %v337 = vld [vmem:[%s258 + $0x38] sm:$0xff]
      %v338 = vld [vmem:[%s258 + $0x40] sm:$0xff]
      %v339 = vld [vmem:[%s258 + $0x48] sm:$0xff]
      %v340 = vld [vmem:[%s258 + $0x50] sm:$0xff]
      %v341 = vld [vmem:[%s258 + $0x58] sm:$0xff]
      %v342 = vld [vmem:[%s258 + $0x60] sm:$0xff]
      %v343 = vld [vmem:[%s258 + $0x68] sm:$0xff]
      %v344 = vld [vmem:[%s258 + $0x70] sm:$0xff]
      %v345 = vld [vmem:[%s258 + $0x78] sm:$0xff]
      %v346 = vld [vmem:[%s258 + $0x80] sm:$0xff]
      %v347 = vld [vmem:[%s258 + $0x88] sm:$0xff]
      %v348 = vld [vmem:[%s258 + $0x90] sm:$0xff]
      %v349 = vld [vmem:[%s258 + $0x98] sm:$0xff]
      %v350 = vld [vmem:[%s258 + $0xa0] sm:$0xff]
      %v351 = vld [vmem:[%s258 + $0xa8] sm:$0xff]
      %v352 = vld [vmem:[%s258 + $0xb0] sm:$0xff]
      %v353 = vld [vmem:[%s258 + $0xb8] sm:$0xff]
      %v354 = vld [vmem:[%s258 + $0xc0] sm:$0xff]
      %v355 = vld [vmem:[%s258 + $0xc8] sm:$0xff]
      %v356 = vld [vmem:[%s258 + $0xd0] sm:$0xff]
      %v357 = vld [vmem:[%s258 + $0xd8] sm:$0xff]
      %v358 = vld [vmem:[%s258 + $0xe0] sm:$0xff]
      %v359 = vld [vmem:[%s258 + $0xe8] sm:$0xff]
      %v360 = vld [vmem:[%s258 + $0xf0] sm:$0xff]
      %v361 = vld [vmem:[%s258 + $0xf8] sm:$0xff]
      %v362 = vpack.c.bf16 %v331, %v330
      %v363 = vpack.c.bf16 %v333, %v332
      %v364 = vpack.c.bf16 %v335, %v334
      %v365 = vpack.c.bf16 %v337, %v336
      %v366 = vpack.c.bf16 %v339, %v338
      %v367 = vpack.c.bf16 %v341, %v340
      %v368 = vpack.c.bf16 %v343, %v342
      %v369 = vpack.c.bf16 %v345, %v344
      %v370 = vpack.c.bf16 %v347, %v346
      %v371 = vpack.c.bf16 %v349, %v348
      %v372 = vpack.c.bf16 %v351, %v350
      %v373 = vpack.c.bf16 %v353, %v352
      %v374 = vpack.c.bf16 %v355, %v354
      %v375 = vpack.c.bf16 %v357, %v356
      %v376 = vpack.c.bf16 %v359, %v358
      %v377 = vpack.c.bf16 %v361, %v360
      %v378 = vld [vmem:[%s265] sm:$0xff]
      %v379 = vld [vmem:[%s265 + $0x8] sm:$0xff]
      %v380 = vld [vmem:[%s265 + $0x10] sm:$0xff]
      %v381 = vld [vmem:[%s265 + $0x18] sm:$0xff]
      %v382 = vld [vmem:[%s265 + $0x20] sm:$0xff]
      %v383 = vld [vmem:[%s265 + $0x28] sm:$0xff]
      %v384 = vld [vmem:[%s265 + $0x30] sm:$0xff]
      %v385 = vld [vmem:[%s265 + $0x38] sm:$0xff]
      %v386 = vld [vmem:[%s265 + $0x40] sm:$0xff]
      %v387 = vld [vmem:[%s265 + $0x48] sm:$0xff]
      %v388 = vld [vmem:[%s265 + $0x50] sm:$0xff]
      %v389 = vld [vmem:[%s265 + $0x58] sm:$0xff]
      %v390 = vld [vmem:[%s265 + $0x60] sm:$0xff]
      %v391 = vld [vmem:[%s265 + $0x68] sm:$0xff]
      %v392 = vld [vmem:[%s265 + $0x70] sm:$0xff]
      %v393 = vld [vmem:[%s265 + $0x78] sm:$0xff]
      %v394 = vld [vmem:[%s265 + $0x80] sm:$0xff]
      %v395 = vld [vmem:[%s265 + $0x88] sm:$0xff]
      %v396 = vld [vmem:[%s265 + $0x90] sm:$0xff]
      %v397 = vld [vmem:[%s265 + $0x98] sm:$0xff]
      %v398 = vld [vmem:[%s265 + $0xa0] sm:$0xff]
      %v399 = vld [vmem:[%s265 + $0xa8] sm:$0xff]
      %v400 = vld [vmem:[%s265 + $0xb0] sm:$0xff]
      %v401 = vld [vmem:[%s265 + $0xb8] sm:$0xff]
      %v402 = vld [vmem:[%s265 + $0xc0] sm:$0xff]
      %v403 = vld [vmem:[%s265 + $0xc8] sm:$0xff]
      %v404 = vld [vmem:[%s265 + $0xd0] sm:$0xff]
      %v405 = vld [vmem:[%s265 + $0xd8] sm:$0xff]
      %v406 = vld [vmem:[%s265 + $0xe0] sm:$0xff]
      %v407 = vld [vmem:[%s265 + $0xe8] sm:$0xff]
      %v408 = vld [vmem:[%s265 + $0xf0] sm:$0xff]
      %v409 = vld [vmem:[%s265 + $0xf8] sm:$0xff]
      %v410 = vpack.c.bf16 %v379, %v378
      %v411 = vpack.c.bf16 %v381, %v380
      %v412 = vpack.c.bf16 %v383, %v382
      %v413 = vpack.c.bf16 %v385, %v384
      %v414 = vpack.c.bf16 %v387, %v386
      %v415 = vpack.c.bf16 %v389, %v388
      %v416 = vpack.c.bf16 %v391, %v390
      %v417 = vpack.c.bf16 %v393, %v392
      %v418 = vpack.c.bf16 %v395, %v394
      %v419 = vpack.c.bf16 %v397, %v396
      %v420 = vpack.c.bf16 %v399, %v398
      %v421 = vpack.c.bf16 %v401, %v400
      %v422 = vpack.c.bf16 %v403, %v402
      %v423 = vpack.c.bf16 %v405, %v404
      %v424 = vpack.c.bf16 %v407, %v406
      %v425 = vpack.c.bf16 %v409, %v408
      %vm426 = vcmask 64512
      %v428 = vsel %vm426, %v314, 0
      %v431 = vsel %vm426, %v315, 0
      %v434 = vsel %vm426, %v316, 0
      %v437 = vsel %vm426, %v317, 0
      %v440 = vsel %vm426, %v362, 0
      %v443 = vsel %vm426, %v363, 0
      %v446 = vsel %vm426, %v364, 0
      %v449 = vsel %vm426, %v365, 0
      %451 = vmatprep.subr.bf16.mxu0 0
      %452 = vmatpush1.bf16.xpose.msra.mxu0 0
      %453 = vmatprep.subr.bf16.mxu0 0
      %454 = vmatpush1.bf16.xpose.msra.mxu0 0
      %455 = vmatprep.subr.bf16.mxu0 0
      %456 = vmatpush1.bf16.xpose.msra.mxu0 0
      %457 = vmatprep.subr.bf16.mxu0 0
      %458 = vmatpush1.bf16.xpose.msra.mxu0 0
      %459 = vmatprep.subr.bf16.mxu0 0
      %460 = vmatpush1.bf16.xpose.msra.mxu0 %v449
      %461 = vmatprep.subr.bf16.mxu0 0
      %462 = vmatpush1.bf16.xpose.msra.mxu0 %v446
      %463 = vmatprep.subr.bf16.mxu0 0
      %464 = vmatpush1.bf16.xpose.msra.mxu0 %v443
      %465 = vmatprep.subr.bf16.mxu0 0
      %466 = vmatpush1.bf16.xpose.msra.mxu0 %v440
      %467 = vmatprep.subr.bf16.mxu0 0
      %468 = vmatpush2.bf16.xpose.msra.mxu0 0
      %469 = vmatprep.subr.bf16.mxu0 0
      %470 = vmatpush2.bf16.xpose.msra.mxu0 0
      %471 = vmatprep.subr.bf16.mxu0 0
      %472 = vmatpush2.bf16.xpose.msra.mxu0 0
      %473 = vmatprep.subr.bf16.mxu0 0
      %474 = vmatpush2.bf16.xpose.msra.mxu0 0
      %475 = vmatprep.subr.bf16.mxu0 0
      %476 = vmatpush2.bf16.xpose.msra.mxu0 0
      %477 = vmatprep.subr.bf16.mxu0 0
      %478 = vmatpush2.bf16.xpose.msra.mxu0 0
      %479 = vmatprep.subr.bf16.mxu0 0
      %480 = vmatpush2.bf16.xpose.msra.mxu0 0
      %481 = vmatprep.subr.bf16.mxu0 0
      %482 = vmatpush2.bf16.xpose.msra.mxu0 0
      %483 = vmatprep.mubr.bf16.mxu0 0
      %484 = vmatmul.mubr.bf16.gmra.mxu0 %v428
      %v485 = vpop.f32.mrf.mxu0
      %v486 = vadd.f32 0.0, %v485
      %v487 = vpop.f32.mrf.mxu0
      %v488 = vpop.f32.mrf.mxu0
      %v489 = vadd.f32 0.0, %v488
      %v490 = vpop.f32.mrf.mxu0
      %491 = vmatprep.mubr.bf16.mxu0 0
      %492 = vmatmul.mubr.bf16.gmra.mxu0 %v431
      %v493 = vpop.f32.mrf.mxu0
      %v494 = vadd.f32 0.0, %v493
      %v495 = vpop.f32.mrf.mxu0
      %v496 = vpop.f32.mrf.mxu0
      %v497 = vadd.f32 0.0, %v496
      %v498 = vpop.f32.mrf.mxu0
      %499 = vmatprep.mubr.bf16.mxu0 0
      %500 = vmatmul.mubr.bf16.gmra.mxu0 %v434
      %v501 = vpop.f32.mrf.mxu0
      %v502 = vadd.f32 0.0, %v501
      %v503 = vpop.f32.mrf.mxu0
      %v504 = vpop.f32.mrf.mxu0
      %v505 = vadd.f32 0.0, %v504
      %v506 = vpop.f32.mrf.mxu0
      %507 = vmatprep.mubr.bf16.mxu0 0
      %508 = vmatmul.mubr.bf16.gmra.mxu0 %v437
      %v509 = vpop.f32.mrf.mxu0
      %v510 = vadd.f32 0.0, %v509
      %v511 = vpop.f32.mrf.mxu0
      %v512 = vpop.f32.mrf.mxu0
      %v513 = vadd.f32 0.0, %v512
      %v514 = vpop.f32.mrf.mxu0
      %515 = vdwg.mxu0
      %v517 = vsel %vm426, %v318, 0
      %v520 = vsel %vm426, %v319, 0
      %v523 = vsel %vm426, %v320, 0
      %v526 = vsel %vm426, %v321, 0
      %v529 = vsel %vm426, %v366, 0
      %v532 = vsel %vm426, %v367, 0
      %v535 = vsel %vm426, %v368, 0
      %v538 = vsel %vm426, %v369, 0
      %540 = vmatprep.subr.bf16.mxu0 0
      %541 = vmatpush1.bf16.xpose.msra.mxu0 0
      %542 = vmatprep.subr.bf16.mxu0 0
      %543 = vmatpush1.bf16.xpose.msra.mxu0 0
      %544 = vmatprep.subr.bf16.mxu0 0
      %545 = vmatpush1.bf16.xpose.msra.mxu0 0
      %546 = vmatprep.subr.bf16.mxu0 0
      %547 = vmatpush1.bf16.xpose.msra.mxu0 0
      %548 = vmatprep.subr.bf16.mxu0 0
      %549 = vmatpush1.bf16.xpose.msra.mxu0 %v538
      %550 = vmatprep.subr.bf16.mxu0 0
      %551 = vmatpush1.bf16.xpose.msra.mxu0 %v535
      %552 = vmatprep.subr.bf16.mxu0 0
      %553 = vmatpush1.bf16.xpose.msra.mxu0 %v532
      %554 = vmatprep.subr.bf16.mxu0 0
      %555 = vmatpush1.bf16.xpose.msra.mxu0 %v529
      %556 = vmatprep.subr.bf16.mxu0 0
      %557 = vmatpush2.bf16.xpose.msra.mxu0 0
      %558 = vmatprep.subr.bf16.mxu0 0
      %559 = vmatpush2.bf16.xpose.msra.mxu0 0
      %560 = vmatprep.subr.bf16.mxu0 0
      %561 = vmatpush2.bf16.xpose.msra.mxu0 0
      %562 = vmatprep.subr.bf16.mxu0 0
      %563 = vmatpush2.bf16.xpose.msra.mxu0 0
      %564 = vmatprep.subr.bf16.mxu0 0
      %565 = vmatpush2.bf16.xpose.msra.mxu0 0
      %566 = vmatprep.subr.bf16.mxu0 0
      %567 = vmatpush2.bf16.xpose.msra.mxu0 0
      %568 = vmatprep.subr.bf16.mxu0 0
      %569 = vmatpush2.bf16.xpose.msra.mxu0 0
      %570 = vmatprep.subr.bf16.mxu0 0
      %571 = vmatpush2.bf16.xpose.msra.mxu0 0
      %572 = vmatprep.mubr.bf16.mxu0 0
      %573 = vmatmul.mubr.bf16.gmra.mxu0 %v517
      %v574 = vpop.f32.mrf.mxu0
      %v575 = vadd.f32 0.0, %v574
      %v576 = vpop.f32.mrf.mxu0
      %v577 = vpop.f32.mrf.mxu0
      %v578 = vadd.f32 0.0, %v577
      %v579 = vpop.f32.mrf.mxu0
      %580 = vmatprep.mubr.bf16.mxu0 0
      %581 = vmatmul.mubr.bf16.gmra.mxu0 %v520
      %v582 = vpop.f32.mrf.mxu0
      %v583 = vadd.f32 0.0, %v582
      %v584 = vpop.f32.mrf.mxu0
      %v585 = vpop.f32.mrf.mxu0
      %v586 = vadd.f32 0.0, %v585
      %v587 = vpop.f32.mrf.mxu0
      %588 = vmatprep.mubr.bf16.mxu0 0
      %589 = vmatmul.mubr.bf16.gmra.mxu0 %v523
      %v590 = vpop.f32.mrf.mxu0
      %v591 = vadd.f32 0.0, %v590
      %v592 = vpop.f32.mrf.mxu0
      %v593 = vpop.f32.mrf.mxu0
      %v594 = vadd.f32 0.0, %v593
      %v595 = vpop.f32.mrf.mxu0
      %596 = vmatprep.mubr.bf16.mxu0 0
      %597 = vmatmul.mubr.bf16.gmra.mxu0 %v526
      %v598 = vpop.f32.mrf.mxu0
      %v599 = vadd.f32 0.0, %v598
      %v600 = vpop.f32.mrf.mxu0
      %v601 = vpop.f32.mrf.mxu0
      %v602 = vadd.f32 0.0, %v601
      %v603 = vpop.f32.mrf.mxu0
      %604 = vdwg.mxu0
      %v606 = vsel %vm426, %v322, 0
      %v609 = vsel %vm426, %v323, 0
      %v612 = vsel %vm426, %v324, 0
      %v615 = vsel %vm426, %v325, 0
      %v618 = vsel %vm426, %v370, 0
      %v621 = vsel %vm426, %v371, 0
      %v624 = vsel %vm426, %v372, 0
      %v627 = vsel %vm426, %v373, 0
      %629 = vmatprep.subr.bf16.mxu0 0
      %630 = vmatpush1.bf16.xpose.msra.mxu0 0
      %631 = vmatprep.subr.bf16.mxu0 0
      %632 = vmatpush1.bf16.xpose.msra.mxu0 0
      %633 = vmatprep.subr.bf16.mxu0 0
      %634 = vmatpush1.bf16.xpose.msra.mxu0 0
      %635 = vmatprep.subr.bf16.mxu0 0
      %636 = vmatpush1.bf16.xpose.msra.mxu0 0
      %637 = vmatprep.subr.bf16.mxu0 0
      %638 = vmatpush1.bf16.xpose.msra.mxu0 %v627
      %639 = vmatprep.subr.bf16.mxu0 0
      %640 = vmatpush1.bf16.xpose.msra.mxu0 %v624
      %641 = vmatprep.subr.bf16.mxu0 0
      %642 = vmatpush1.bf16.xpose.msra.mxu0 %v621
      %643 = vmatprep.subr.bf16.mxu0 0
      %644 = vmatpush1.bf16.xpose.msra.mxu0 %v618
      %645 = vmatprep.subr.bf16.mxu0 0
      %646 = vmatpush2.bf16.xpose.msra.mxu0 0
      %647 = vmatprep.subr.bf16.mxu0 0
      %648 = vmatpush2.bf16.xpose.msra.mxu0 0
      %649 = vmatprep.subr.bf16.mxu0 0
      %650 = vmatpush2.bf16.xpose.msra.mxu0 0
      %651 = vmatprep.subr.bf16.mxu0 0
      %652 = vmatpush2.bf16.xpose.msra.mxu0 0
      %653 = vmatprep.subr.bf16.mxu0 0
      %654 = vmatpush2.bf16.xpose.msra.mxu0 0
      %655 = vmatprep.subr.bf16.mxu0 0
      %656 = vmatpush2.bf16.xpose.msra.mxu0 0
      %657 = vmatprep.subr.bf16.mxu0 0
      %658 = vmatpush2.bf16.xpose.msra.mxu0 0
      %659 = vmatprep.subr.bf16.mxu0 0
      %660 = vmatpush2.bf16.xpose.msra.mxu0 0
      %661 = vmatprep.mubr.bf16.mxu0 0
      %662 = vmatmul.mubr.bf16.gmra.mxu0 %v606
      %v663 = vpop.f32.mrf.mxu0
      %v664 = vadd.f32 0.0, %v663
      %v665 = vpop.f32.mrf.mxu0
      %v666 = vpop.f32.mrf.mxu0
      %v667 = vadd.f32 0.0, %v666
      %v668 = vpop.f32.mrf.mxu0
      %669 = vmatprep.mubr.bf16.mxu0 0
      %670 = vmatmul.mubr.bf16.gmra.mxu0 %v609
      %v671 = vpop.f32.mrf.mxu0
      %v672 = vadd.f32 0.0, %v671
      %v673 = vpop.f32.mrf.mxu0
      %v674 = vpop.f32.mrf.mxu0
      %v675 = vadd.f32 0.0, %v674
      %v676 = vpop.f32.mrf.mxu0
      %677 = vmatprep.mubr.bf16.mxu0 0
      %678 = vmatmul.mubr.bf16.gmra.mxu0 %v612
      %v679 = vpop.f32.mrf.mxu0
      %v680 = vadd.f32 0.0, %v679
      %v681 = vpop.f32.mrf.mxu0
      %v682 = vpop.f32.mrf.mxu0
      %v683 = vadd.f32 0.0, %v682
      %v684 = vpop.f32.mrf.mxu0
      %685 = vmatprep.mubr.bf16.mxu0 0
      %686 = vmatmul.mubr.bf16.gmra.mxu0 %v615
      %v687 = vpop.f32.mrf.mxu0
      %v688 = vadd.f32 0.0, %v687
      %v689 = vpop.f32.mrf.mxu0
      %v690 = vpop.f32.mrf.mxu0
      %v691 = vadd.f32 0.0, %v690
      %v692 = vpop.f32.mrf.mxu0
      %693 = vdwg.mxu0
      %v695 = vsel %vm426, %v326, 0
      %v698 = vsel %vm426, %v327, 0
      %v701 = vsel %vm426, %v328, 0
      %v704 = vsel %vm426, %v329, 0
      %v707 = vsel %vm426, %v374, 0
      %v710 = vsel %vm426, %v375, 0
      %v713 = vsel %vm426, %v376, 0
      %v716 = vsel %vm426, %v377, 0
      %718 = vmatprep.subr.bf16.mxu0 0
      %719 = vmatpush1.bf16.xpose.msra.mxu0 0
      %720 = vmatprep.subr.bf16.mxu0 0
      %721 = vmatpush1.bf16.xpose.msra.mxu0 0
      %722 = vmatprep.subr.bf16.mxu0 0
      %723 = vmatpush1.bf16.xpose.msra.mxu0 0
      %724 = vmatprep.subr.bf16.mxu0 0
      %725 = vmatpush1.bf16.xpose.msra.mxu0 0
      %726 = vmatprep.subr.bf16.mxu0 0
      %727 = vmatpush1.bf16.xpose.msra.mxu0 %v716
      %728 = vmatprep.subr.bf16.mxu0 0
      %729 = vmatpush1.bf16.xpose.msra.mxu0 %v713
      %730 = vmatprep.subr.bf16.mxu0 0
      %731 = vmatpush1.bf16.xpose.msra.mxu0 %v710
      %732 = vmatprep.subr.bf16.mxu0 0
      %733 = vmatpush1.bf16.xpose.msra.mxu0 %v707
      %734 = vmatprep.subr.bf16.mxu0 0
      %735 = vmatpush2.bf16.xpose.msra.mxu0 0
      %736 = vmatprep.subr.bf16.mxu0 0
      %737 = vmatpush2.bf16.xpose.msra.mxu0 0
      %738 = vmatprep.subr.bf16.mxu0 0
      %739 = vmatpush2.bf16.xpose.msra.mxu0 0
      %740 = vmatprep.subr.bf16.mxu0 0
      %741 = vmatpush2.bf16.xpose.msra.mxu0 0
      %742 = vmatprep.subr.bf16.mxu0 0
      %743 = vmatpush2.bf16.xpose.msra.mxu0 0
      %744 = vmatprep.subr.bf16.mxu0 0
      %745 = vmatpush2.bf16.xpose.msra.mxu0 0
      %746 = vmatprep.subr.bf16.mxu0 0
      %747 = vmatpush2.bf16.xpose.msra.mxu0 0
      %748 = vmatprep.subr.bf16.mxu0 0
      %749 = vmatpush2.bf16.xpose.msra.mxu0 0
      %750 = vmatprep.mubr.bf16.mxu0 0
      %751 = vmatmul.mubr.bf16.gmra.mxu0 %v695
      %v752 = vpop.f32.mrf.mxu0
      %v753 = vadd.f32 0.0, %v752
      %v754 = vpop.f32.mrf.mxu0
      %v755 = vpop.f32.mrf.mxu0
      %v756 = vadd.f32 0.0, %v755
      %v757 = vpop.f32.mrf.mxu0
      %758 = vmatprep.mubr.bf16.mxu0 0
      %759 = vmatmul.mubr.bf16.gmra.mxu0 %v698
      %v760 = vpop.f32.mrf.mxu0
      %v761 = vadd.f32 0.0, %v760
      %v762 = vpop.f32.mrf.mxu0
      %v763 = vpop.f32.mrf.mxu0
      %v764 = vadd.f32 0.0, %v763
      %v765 = vpop.f32.mrf.mxu0
      %766 = vmatprep.mubr.bf16.mxu0 0
      %767 = vmatmul.mubr.bf16.gmra.mxu0 %v701
      %v768 = vpop.f32.mrf.mxu0
      %v769 = vadd.f32 0.0, %v768
      %v770 = vpop.f32.mrf.mxu0
      %v771 = vpop.f32.mrf.mxu0
      %v772 = vadd.f32 0.0, %v771
      %v773 = vpop.f32.mrf.mxu0
      %774 = vmatprep.mubr.bf16.mxu0 0
      %775 = vmatmul.mubr.bf16.gmra.mxu0 %v704
      %v776 = vpop.f32.mrf.mxu0
      %v777 = vadd.f32 0.0, %v776
      %v778 = vpop.f32.mrf.mxu0
      %v779 = vpop.f32.mrf.mxu0
      %v780 = vadd.f32 0.0, %v779
      %v781 = vpop.f32.mrf.mxu0
      %782 = vdwg.mxu0
      %v783 = vmul.f32 %v486, 0.35355338
      %v784 = vmul.f32 %v489, 0.35355338
      %v785 = vmul.f32 %v494, 0.35355338
      %v786 = vmul.f32 %v497, 0.35355338
      %v787 = vmul.f32 %v502, 0.35355338
      %v788 = vmul.f32 %v505, 0.35355338
      %v789 = vmul.f32 %v510, 0.35355338
      %v790 = vmul.f32 %v513, 0.35355338
      %v791 = vmul.f32 %v575, 0.35355338
      %v792 = vmul.f32 %v578, 0.35355338
      %v793 = vmul.f32 %v583, 0.35355338
      %v794 = vmul.f32 %v586, 0.35355338
      %v795 = vmul.f32 %v591, 0.35355338
      %v796 = vmul.f32 %v594, 0.35355338
      %v797 = vmul.f32 %v599, 0.35355338
      %v798 = vmul.f32 %v602, 0.35355338
      %v799 = vmul.f32 %v664, 0.35355338
      %v800 = vmul.f32 %v667, 0.35355338
      %v801 = vmul.f32 %v672, 0.35355338
      %v802 = vmul.f32 %v675, 0.35355338
      %v803 = vmul.f32 %v680, 0.35355338
      %v804 = vmul.f32 %v683, 0.35355338
      %v805 = vmul.f32 %v688, 0.35355338
      %v806 = vmul.f32 %v691, 0.35355338
      %v807 = vmul.f32 %v753, 0.35355338
      %v808 = vmul.f32 %v756, 0.35355338
      %v809 = vmul.f32 %v761, 0.35355338
      %v810 = vmul.f32 %v764, 0.35355338
      %v811 = vmul.f32 %v769, 0.35355338
      %v812 = vmul.f32 %v772, 0.35355338
      %v813 = vmul.f32 %v777, 0.35355338
      %v814 = vmul.f32 %v780, 0.35355338
      %v815 = vld [vmem:[%s272] sm:$0xff]
      %v816 = vld [vmem:[%s272 + $0x8] sm:$0xff]
      %v817 = vld [vmem:[%s272 + $0x10] sm:$0xff]
      %v818 = vld [vmem:[%s272 + $0x18] sm:$0xff]
      %v819 = vld [vmem:[%s272 + $0x20] sm:$0xff]
      %v820 = vld [vmem:[%s272 + $0x28] sm:$0xff]
      %v821 = vld [vmem:[%s272 + $0x30] sm:$0xff]
      %v822 = vld [vmem:[%s272 + $0x38] sm:$0xff]
      %v823 = vld [vmem:[%s272 + $0x40] sm:$0xff]
      %v824 = vld [vmem:[%s272 + $0x48] sm:$0xff]
      %v825 = vld [vmem:[%s272 + $0x50] sm:$0xff]
      %v826 = vld [vmem:[%s272 + $0x58] sm:$0xff]
      %v827 = vld [vmem:[%s272 + $0x60] sm:$0xff]
      %v828 = vld [vmem:[%s272 + $0x68] sm:$0xff]
      %v829 = vld [vmem:[%s272 + $0x70] sm:$0xff]
      %v830 = vld [vmem:[%s272 + $0x78] sm:$0xff]
      %v831 = vld [vmem:[%s272 + $0x80] sm:$0xff]
      %v832 = vld [vmem:[%s272 + $0x88] sm:$0xff]
      %v833 = vld [vmem:[%s272 + $0x90] sm:$0xff]
      %v834 = vld [vmem:[%s272 + $0x98] sm:$0xff]
      %v835 = vld [vmem:[%s272 + $0xa0] sm:$0xff]
      %v836 = vld [vmem:[%s272 + $0xa8] sm:$0xff]
      %v837 = vld [vmem:[%s272 + $0xb0] sm:$0xff]
      %v838 = vld [vmem:[%s272 + $0xb8] sm:$0xff]
      %v839 = vld [vmem:[%s272 + $0xc0] sm:$0xff]
      %v840 = vld [vmem:[%s272 + $0xc8] sm:$0xff]
      %v841 = vld [vmem:[%s272 + $0xd0] sm:$0xff]
      %v842 = vld [vmem:[%s272 + $0xd8] sm:$0xff]
      %v843 = vld [vmem:[%s272 + $0xe0] sm:$0xff]
      %v844 = vld [vmem:[%s272 + $0xe8] sm:$0xff]
      %v845 = vld [vmem:[%s272 + $0xf0] sm:$0xff]
      %v846 = vld [vmem:[%s272 + $0xf8] sm:$0xff]
      %v847 = vadd.f32 %v783, %v815
      %v848 = vadd.f32 %v784, %v816
      %v849 = vadd.f32 %v785, %v817
      %v850 = vadd.f32 %v786, %v818
      %v851 = vadd.f32 %v787, %v819
      %v852 = vadd.f32 %v788, %v820
      %v853 = vadd.f32 %v789, %v821
      %v854 = vadd.f32 %v790, %v822
      %v855 = vadd.f32 %v791, %v823
      %v856 = vadd.f32 %v792, %v824
      %v857 = vadd.f32 %v793, %v825
      %v858 = vadd.f32 %v794, %v826
      %v859 = vadd.f32 %v795, %v827
      %v860 = vadd.f32 %v796, %v828
      %v861 = vadd.f32 %v797, %v829
      %v862 = vadd.f32 %v798, %v830
      %v863 = vadd.f32 %v799, %v831
      %v864 = vadd.f32 %v800, %v832
      %v865 = vadd.f32 %v801, %v833
      %v866 = vadd.f32 %v802, %v834
      %v867 = vadd.f32 %v803, %v835
      %v868 = vadd.f32 %v804, %v836
      %v869 = vadd.f32 %v805, %v837
      %v870 = vadd.f32 %v806, %v838
      %v871 = vadd.f32 %v807, %v839
      %v872 = vadd.f32 %v808, %v840
      %v873 = vadd.f32 %v809, %v841
      %v874 = vadd.f32 %v810, %v842
      %v875 = vadd.f32 %v811, %v843
      %v876 = vadd.f32 %v812, %v844
      %v877 = vadd.f32 %v813, %v845
      %v878 = vadd.f32 %v814, %v846
      %vm879 = vcmask 523264
      %v880 = vsel %vm879, %v847, -inf
      %881 = vmax.xlane.f32.xlu0 %v880
      %v882 = vpop.xlane.xlu0 %881
      %v883 = vsel %vm879, %v848, -inf
      %884 = vmax.xlane.f32.xlu0 %v883
      %v885 = vpop.xlane.xlu0 %884
      %v886 = vsel %vm879, %v849, -inf
      %887 = vmax.xlane.f32.xlu0 %v886
      %v888 = vpop.xlane.xlu0 %887
      %v889 = vsel %vm879, %v850, -inf
      %890 = vmax.xlane.f32.xlu0 %v889
      %v891 = vpop.xlane.xlu0 %890
      %v892 = vsel %vm879, %v851, -inf
      %893 = vmax.xlane.f32.xlu0 %v892
      %v894 = vpop.xlane.xlu0 %893
      %v895 = vsel %vm879, %v852, -inf
      %896 = vmax.xlane.f32.xlu0 %v895
      %v897 = vpop.xlane.xlu0 %896
      %v898 = vsel %vm879, %v853, -inf
      %899 = vmax.xlane.f32.xlu0 %v898
      %v900 = vpop.xlane.xlu0 %899
      %v901 = vsel %vm879, %v854, -inf
      %902 = vmax.xlane.f32.xlu0 %v901
      %v903 = vpop.xlane.xlu0 %902
      %v904 = vsel %vm879, %v855, -inf
      %905 = vmax.xlane.f32.xlu0 %v904
      %v906 = vpop.xlane.xlu0 %905
      %v907 = vsel %vm879, %v856, -inf
      %908 = vmax.xlane.f32.xlu0 %v907
      %v909 = vpop.xlane.xlu0 %908
      %v910 = vsel %vm879, %v857, -inf
      %911 = vmax.xlane.f32.xlu0 %v910
      %v912 = vpop.xlane.xlu0 %911
      %v913 = vsel %vm879, %v858, -inf
      %914 = vmax.xlane.f32.xlu0 %v913
      %v915 = vpop.xlane.xlu0 %914
      %v916 = vsel %vm879, %v859, -inf
      %917 = vmax.xlane.f32.xlu0 %v916
      %v918 = vpop.xlane.xlu0 %917
      %v919 = vsel %vm879, %v860, -inf
      %920 = vmax.xlane.f32.xlu0 %v919
      %v921 = vpop.xlane.xlu0 %920
      %v922 = vsel %vm879, %v861, -inf
      %923 = vmax.xlane.f32.xlu0 %v922
      %v924 = vpop.xlane.xlu0 %923
      %v925 = vsel %vm879, %v862, -inf
      %926 = vmax.xlane.f32.xlu0 %v925
      %v927 = vpop.xlane.xlu0 %926
      %v928 = vsel %vm879, %v863, -inf
      %929 = vmax.xlane.f32.xlu0 %v928
      %v930 = vpop.xlane.xlu0 %929
      %v931 = vsel %vm879, %v864, -inf
      %932 = vmax.xlane.f32.xlu0 %v931
      %v933 = vpop.xlane.xlu0 %932
      %v934 = vsel %vm879, %v865, -inf
      %935 = vmax.xlane.f32.xlu0 %v934
      %v936 = vpop.xlane.xlu0 %935
      %v937 = vsel %vm879, %v866, -inf
      %938 = vmax.xlane.f32.xlu0 %v937
      %v939 = vpop.xlane.xlu0 %938
      %v940 = vsel %vm879, %v867, -inf
      %941 = vmax.xlane.f32.xlu0 %v940
      %v942 = vpop.xlane.xlu0 %941
      %v943 = vsel %vm879, %v868, -inf
      %944 = vmax.xlane.f32.xlu0 %v943
      %v945 = vpop.xlane.xlu0 %944
      %v946 = vsel %vm879, %v869, -inf
      %947 = vmax.xlane.f32.xlu0 %v946
      %v948 = vpop.xlane.xlu0 %947
      %v949 = vsel %vm879, %v870, -inf
      %950 = vmax.xlane.f32.xlu0 %v949
      %v951 = vpop.xlane.xlu0 %950
      %v952 = vsel %vm879, %v871, -inf
      %953 = vmax.xlane.f32.xlu0 %v952
      %v954 = vpop.xlane.xlu0 %953
      %v955 = vsel %vm879, %v872, -inf
      %956 = vmax.xlane.f32.xlu0 %v955
      %v957 = vpop.xlane.xlu0 %956
      %v958 = vsel %vm879, %v873, -inf
      %959 = vmax.xlane.f32.xlu0 %v958
      %v960 = vpop.xlane.xlu0 %959
      %v961 = vsel %vm879, %v874, -inf
      %962 = vmax.xlane.f32.xlu0 %v961
      %v963 = vpop.xlane.xlu0 %962
      %v964 = vsel %vm879, %v875, -inf
      %965 = vmax.xlane.f32.xlu0 %v964
      %v966 = vpop.xlane.xlu0 %965
      %v967 = vsel %vm879, %v876, -inf
      %968 = vmax.xlane.f32.xlu0 %v967
      %v969 = vpop.xlane.xlu0 %968
      %v970 = vsel %vm879, %v877, -inf
      %971 = vmax.xlane.f32.xlu0 %v970
      %v972 = vpop.xlane.xlu0 %971
      %v973 = vsel %vm879, %v878, -inf
      %974 = vmax.xlane.f32.xlu0 %v973
      %v975 = vpop.xlane.xlu0 %974
      %v976 = vsub.f32 %v847, %v882
      %v977 = vsub.f32 %v848, %v885
      %v978 = vsub.f32 %v849, %v888
      %v979 = vsub.f32 %v850, %v891
      %v980 = vsub.f32 %v851, %v894
      %v981 = vsub.f32 %v852, %v897
      %v982 = vsub.f32 %v853, %v900
      %v983 = vsub.f32 %v854, %v903
      %v984 = vsub.f32 %v855, %v906
      %v985 = vsub.f32 %v856, %v909
      %v986 = vsub.f32 %v857, %v912
      %v987 = vsub.f32 %v858, %v915
      %v988 = vsub.f32 %v859, %v918
      %v989 = vsub.f32 %v860, %v921
      %v990 = vsub.f32 %v861, %v924
      %v991 = vsub.f32 %v862, %v927
      %v992 = vsub.f32 %v863, %v930
      %v993 = vsub.f32 %v864, %v933
      %v994 = vsub.f32 %v865, %v936
      %v995 = vsub.f32 %v866, %v939
      %v996 = vsub.f32 %v867, %v942
      %v997 = vsub.f32 %v868, %v945
      %v998 = vsub.f32 %v869, %v948
      %v999 = vsub.f32 %v870, %v951
      %v1000 = vsub.f32 %v871, %v954
      %v1001 = vsub.f32 %v872, %v957
      %v1002 = vsub.f32 %v873, %v960
      %v1003 = vsub.f32 %v874, %v963
      %v1004 = vsub.f32 %v875, %v966
      %v1005 = vsub.f32 %v876, %v969
      %v1006 = vsub.f32 %v877, %v972
      %v1007 = vsub.f32 %v878, %v975
      %v1008 = vmul.f32 %v976, 1.442695
      %v1009 = vpow.pop %v1008
      %v1010 = vmul.f32 %v977, 1.442695
      %v1011 = vpow.pop %v1010
      %v1012 = vmul.f32 %v978, 1.442695
      %v1013 = vpow.pop %v1012
      %v1014 = vmul.f32 %v979, 1.442695
      %v1015 = vpow.pop %v1014
      %v1016 = vmul.f32 %v980, 1.442695
      %v1017 = vpow.pop %v1016
      %v1018 = vmul.f32 %v981, 1.442695
      %v1019 = vpow.pop %v1018
      %v1020 = vmul.f32 %v982, 1.442695
      %v1021 = vpow.pop %v1020
      %v1022 = vmul.f32 %v983, 1.442695
      %v1023 = vpow.pop %v1022
      %v1024 = vmul.f32 %v984, 1.442695
      %v1025 = vpow.pop %v1024
      %v1026 = vmul.f32 %v985, 1.442695
      %v1027 = vpow.pop %v1026
      %v1028 = vmul.f32 %v986, 1.442695
      %v1029 = vpow.pop %v1028
      %v1030 = vmul.f32 %v987, 1.442695
      %v1031 = vpow.pop %v1030
      %v1032 = vmul.f32 %v988, 1.442695
      %v1033 = vpow.pop %v1032
      %v1034 = vmul.f32 %v989, 1.442695
      %v1035 = vpow.pop %v1034
      %v1036 = vmul.f32 %v990, 1.442695
      %v1037 = vpow.pop %v1036
      %v1038 = vmul.f32 %v991, 1.442695
      %v1039 = vpow.pop %v1038
      %v1040 = vmul.f32 %v992, 1.442695
      %v1041 = vpow.pop %v1040
      %v1042 = vmul.f32 %v993, 1.442695
      %v1043 = vpow.pop %v1042
      %v1044 = vmul.f32 %v994, 1.442695
      %v1045 = vpow.pop %v1044
      %v1046 = vmul.f32 %v995, 1.442695
      %v1047 = vpow.pop %v1046
      %v1048 = vmul.f32 %v996, 1.442695
      %v1049 = vpow.pop %v1048
      %v1050 = vmul.f32 %v997, 1.442695
      %v1051 = vpow.pop %v1050
      %v1052 = vmul.f32 %v998, 1.442695
      %v1053 = vpow.pop %v1052
      %v1054 = vmul.f32 %v999, 1.442695
      %v1055 = vpow.pop %v1054
      %v1056 = vmul.f32 %v1000, 1.442695
      %v1057 = vpow.pop %v1056
      %v1058 = vmul.f32 %v1001, 1.442695
      %v1059 = vpow.pop %v1058
      %v1060 = vmul.f32 %v1002, 1.442695
      %v1061 = vpow.pop %v1060
      %v1062 = vmul.f32 %v1003, 1.442695
      %v1063 = vpow.pop %v1062
      %v1064 = vmul.f32 %v1004, 1.442695
      %v1065 = vpow.pop %v1064
      %v1066 = vmul.f32 %v1005, 1.442695
      %v1067 = vpow.pop %v1066
      %v1068 = vmul.f32 %v1006, 1.442695
      %v1069 = vpow.pop %v1068
      %v1070 = vmul.f32 %v1007, 1.442695
      %v1071 = vpow.pop %v1070
      %v1072 = vsel %vm879, %v1009, 0.0
      %1073 = vadd.xlane.f32.xlu0 %v1072
      %v1074 = vpop.xlane.xlu0 %1073
      %v1075 = vsel %vm879, %v1011, 0.0
      %1076 = vadd.xlane.f32.xlu0 %v1075
      %v1077 = vpop.xlane.xlu0 %1076
      %v1078 = vsel %vm879, %v1013, 0.0
      %1079 = vadd.xlane.f32.xlu0 %v1078
      %v1080 = vpop.xlane.xlu0 %1079
      %v1081 = vsel %vm879, %v1015, 0.0
      %1082 = vadd.xlane.f32.xlu0 %v1081
      %v1083 = vpop.xlane.xlu0 %1082
      %v1084 = vsel %vm879, %v1017, 0.0
      %1085 = vadd.xlane.f32.xlu0 %v1084
      %v1086 = vpop.xlane.xlu0 %1085
      %v1087 = vsel %vm879, %v1019, 0.0
      %1088 = vadd.xlane.f32.xlu0 %v1087
      %v1089 = vpop.xlane.xlu0 %1088
      %v1090 = vsel %vm879, %v1021, 0.0
      %1091 = vadd.xlane.f32.xlu0 %v1090
      %v1092 = vpop.xlane.xlu0 %1091
      %v1093 = vsel %vm879, %v1023, 0.0
      %1094 = vadd.xlane.f32.xlu0 %v1093
      %v1095 = vpop.xlane.xlu0 %1094
      %v1096 = vsel %vm879, %v1025, 0.0
      %1097 = vadd.xlane.f32.xlu0 %v1096
      %v1098 = vpop.xlane.xlu0 %1097
      %v1099 = vsel %vm879, %v1027, 0.0
      %1100 = vadd.xlane.f32.xlu0 %v1099
      %v1101 = vpop.xlane.xlu0 %1100
      %v1102 = vsel %vm879, %v1029, 0.0
      %1103 = vadd.xlane.f32.xlu0 %v1102
      %v1104 = vpop.xlane.xlu0 %1103
      %v1105 = vsel %vm879, %v1031, 0.0
      %1106 = vadd.xlane.f32.xlu0 %v1105
      %v1107 = vpop.xlane.xlu0 %1106
      %v1108 = vsel %vm879, %v1033, 0.0
      %1109 = vadd.xlane.f32.xlu0 %v1108
      %v1110 = vpop.xlane.xlu0 %1109
      %v1111 = vsel %vm879, %v1035, 0.0
      %1112 = vadd.xlane.f32.xlu0 %v1111
      %v1113 = vpop.xlane.xlu0 %1112
      %v1114 = vsel %vm879, %v1037, 0.0
      %1115 = vadd.xlane.f32.xlu0 %v1114
      %v1116 = vpop.xlane.xlu0 %1115
      %v1117 = vsel %vm879, %v1039, 0.0
      %1118 = vadd.xlane.f32.xlu0 %v1117
      %v1119 = vpop.xlane.xlu0 %1118
      %v1120 = vsel %vm879, %v1041, 0.0
      %1121 = vadd.xlane.f32.xlu0 %v1120
      %v1122 = vpop.xlane.xlu0 %1121
      %v1123 = vsel %vm879, %v1043, 0.0
      %1124 = vadd.xlane.f32.xlu0 %v1123
      %v1125 = vpop.xlane.xlu0 %1124
      %v1126 = vsel %vm879, %v1045, 0.0
      %1127 = vadd.xlane.f32.xlu0 %v1126
      %v1128 = vpop.xlane.xlu0 %1127
      %v1129 = vsel %vm879, %v1047, 0.0
      %1130 = vadd.xlane.f32.xlu0 %v1129
      %v1131 = vpop.xlane.xlu0 %1130
      %v1132 = vsel %vm879, %v1049, 0.0
      %1133 = vadd.xlane.f32.xlu0 %v1132
      %v1134 = vpop.xlane.xlu0 %1133
      %v1135 = vsel %vm879, %v1051, 0.0
      %1136 = vadd.xlane.f32.xlu0 %v1135
      %v1137 = vpop.xlane.xlu0 %1136
      %v1138 = vsel %vm879, %v1053, 0.0
      %1139 = vadd.xlane.f32.xlu0 %v1138
      %v1140 = vpop.xlane.xlu0 %1139
      %v1141 = vsel %vm879, %v1055, 0.0
      %1142 = vadd.xlane.f32.xlu0 %v1141
      %v1143 = vpop.xlane.xlu0 %1142
      %v1144 = vsel %vm879, %v1057, 0.0
      %1145 = vadd.xlane.f32.xlu0 %v1144
      %v1146 = vpop.xlane.xlu0 %1145
      %v1147 = vsel %vm879, %v1059, 0.0
      %1148 = vadd.xlane.f32.xlu0 %v1147
      %v1149 = vpop.xlane.xlu0 %1148
      %v1150 = vsel %vm879, %v1061, 0.0
      %1151 = vadd.xlane.f32.xlu0 %v1150
      %v1152 = vpop.xlane.xlu0 %1151
      %v1153 = vsel %vm879, %v1063, 0.0
      %1154 = vadd.xlane.f32.xlu0 %v1153
      %v1155 = vpop.xlane.xlu0 %1154
      %v1156 = vsel %vm879, %v1065, 0.0
      %1157 = vadd.xlane.f32.xlu0 %v1156
      %v1158 = vpop.xlane.xlu0 %1157
      %v1159 = vsel %vm879, %v1067, 0.0
      %1160 = vadd.xlane.f32.xlu0 %v1159
      %v1161 = vpop.xlane.xlu0 %1160
      %v1162 = vsel %vm879, %v1069, 0.0
      %1163 = vadd.xlane.f32.xlu0 %v1162
      %v1164 = vpop.xlane.xlu0 %1163
      %v1165 = vsel %vm879, %v1071, 0.0
      %1166 = vadd.xlane.f32.xlu0 %v1165
      %v1167 = vpop.xlane.xlu0 %1166
      %v1168 = vpack.c.bf16 %v1011, %v1009
      %v1169 = vpack.c.bf16 %v1015, %v1013
      %v1170 = vpack.c.bf16 %v1019, %v1017
      %v1171 = vpack.c.bf16 %v1023, %v1021
      %v1172 = vpack.c.bf16 %v1027, %v1025
      %v1173 = vpack.c.bf16 %v1031, %v1029
      %v1174 = vpack.c.bf16 %v1035, %v1033
      %v1175 = vpack.c.bf16 %v1039, %v1037
      %v1176 = vpack.c.bf16 %v1043, %v1041
      %v1177 = vpack.c.bf16 %v1047, %v1045
      %v1178 = vpack.c.bf16 %v1051, %v1049
      %v1179 = vpack.c.bf16 %v1055, %v1053
      %v1180 = vpack.c.bf16 %v1059, %v1057
      %v1181 = vpack.c.bf16 %v1063, %v1061
      %v1182 = vpack.c.bf16 %v1067, %v1065
      %v1183 = vpack.c.bf16 %v1071, %v1069
      %v1185 = vsel %vm879, %v1168, 0
      %v1188 = vsel %vm879, %v1169, 0
      %v1191 = vsel %vm879, %v1170, 0
      %v1194 = vsel %vm879, %v1171, 0
      %1196 = vmatprep.subr.bf16.mxu0 0
      %1197 = vmatpush1.bf16.msra.mxu0 0
      %1198 = vmatprep.subr.bf16.mxu0 0
      %1199 = vmatpush1.bf16.msra.mxu0 0
      %1200 = vmatprep.subr.bf16.mxu0 0
      %1201 = vmatpush1.bf16.msra.mxu0 0
      %1202 = vmatprep.subr.bf16.mxu0 0
      %1203 = vmatpush1.bf16.msra.mxu0 0
      %1204 = vmatprep.subr.bf16.mxu0 0
      %1205 = vmatpush1.bf16.msra.mxu0 %v413
      %1206 = vmatprep.subr.bf16.mxu0 0
      %1207 = vmatpush1.bf16.msra.mxu0 %v412
      %1208 = vmatprep.subr.bf16.mxu0 0
      %1209 = vmatpush1.bf16.msra.mxu0 %v411
      %1210 = vmatprep.subr.bf16.mxu0 0
      %1211 = vmatpush1.bf16.msra.mxu0 %v410
      %1212 = vmatprep.subr.bf16.mxu0 0
      %1213 = vmatpush2.bf16.msra.mxu0 0
      %1214 = vmatprep.subr.bf16.mxu0 0
      %1215 = vmatpush2.bf16.msra.mxu0 0
      %1216 = vmatprep.subr.bf16.mxu0 0
      %1217 = vmatpush2.bf16.msra.mxu0 0
      %1218 = vmatprep.subr.bf16.mxu0 0
      %1219 = vmatpush2.bf16.msra.mxu0 0
      %1220 = vmatprep.subr.bf16.mxu0 0
      %1221 = vmatpush2.bf16.msra.mxu0 0
      %1222 = vmatprep.subr.bf16.mxu0 0
      %1223 = vmatpush2.bf16.msra.mxu0 0
      %1224 = vmatprep.subr.bf16.mxu0 0
      %1225 = vmatpush2.bf16.msra.mxu0 0
      %1226 = vmatprep.subr.bf16.mxu0 0
      %1227 = vmatpush2.bf16.msra.mxu0 0
      %1228 = vmatprep.mubr.bf16.mxu0 0
      %1229 = vmatmul.mubr.bf16.gmra.mxu0 %v1185
      %v1230 = vpop.f32.mrf.mxu0
      %v1231 = vadd.f32 0.0, %v1230
      %v1232 = vpop.f32.mrf.mxu0
      %v1233 = vpop.f32.mrf.mxu0
      %v1234 = vadd.f32 0.0, %v1233
      %v1235 = vpop.f32.mrf.mxu0
      %1236 = vmatprep.mubr.bf16.mxu0 0
      %1237 = vmatmul.mubr.bf16.gmra.mxu0 %v1188
      %v1238 = vpop.f32.mrf.mxu0
      %v1239 = vadd.f32 0.0, %v1238
      %v1240 = vpop.f32.mrf.mxu0
      %v1241 = vpop.f32.mrf.mxu0
      %v1242 = vadd.f32 0.0, %v1241
      %v1243 = vpop.f32.mrf.mxu0
      %1244 = vmatprep.mubr.bf16.mxu0 0
      %1245 = vmatmul.mubr.bf16.gmra.mxu0 %v1191
      %v1246 = vpop.f32.mrf.mxu0
      %v1247 = vadd.f32 0.0, %v1246
      %v1248 = vpop.f32.mrf.mxu0
      %v1249 = vpop.f32.mrf.mxu0
      %v1250 = vadd.f32 0.0, %v1249
      %v1251 = vpop.f32.mrf.mxu0
      %1252 = vmatprep.mubr.bf16.mxu0 0
      %1253 = vmatmul.mubr.bf16.gmra.mxu0 %v1194
      %v1254 = vpop.f32.mrf.mxu0
      %v1255 = vadd.f32 0.0, %v1254
      %v1256 = vpop.f32.mrf.mxu0
      %v1257 = vpop.f32.mrf.mxu0
      %v1258 = vadd.f32 0.0, %v1257
      %v1259 = vpop.f32.mrf.mxu0
      %1260 = vdwg.mxu0
      %v1262 = vsel %vm879, %v1172, 0
      %v1265 = vsel %vm879, %v1173, 0
      %v1268 = vsel %vm879, %v1174, 0
      %v1271 = vsel %vm879, %v1175, 0
      %1273 = vmatprep.subr.bf16.mxu0 0
      %1274 = vmatpush1.bf16.msra.mxu0 0
      %1275 = vmatprep.subr.bf16.mxu0 0
      %1276 = vmatpush1.bf16.msra.mxu0 0
      %1277 = vmatprep.subr.bf16.mxu0 0
      %1278 = vmatpush1.bf16.msra.mxu0 0
      %1279 = vmatprep.subr.bf16.mxu0 0
      %1280 = vmatpush1.bf16.msra.mxu0 0
      %1281 = vmatprep.subr.bf16.mxu0 0
      %1282 = vmatpush1.bf16.msra.mxu0 %v417
      %1283 = vmatprep.subr.bf16.mxu0 0
      %1284 = vmatpush1.bf16.msra.mxu0 %v416
      %1285 = vmatprep.subr.bf16.mxu0 0
      %1286 = vmatpush1.bf16.msra.mxu0 %v415
      %1287 = vmatprep.subr.bf16.mxu0 0
      %1288 = vmatpush1.bf16.msra.mxu0 %v414
      %1289 = vmatprep.subr.bf16.mxu0 0
      %1290 = vmatpush2.bf16.msra.mxu0 0
      %1291 = vmatprep.subr.bf16.mxu0 0
      %1292 = vmatpush2.bf16.msra.mxu0 0
      %1293 = vmatprep.subr.bf16.mxu0 0
      %1294 = vmatpush2.bf16.msra.mxu0 0
      %1295 = vmatprep.subr.bf16.mxu0 0
      %1296 = vmatpush2.bf16.msra.mxu0 0
      %1297 = vmatprep.subr.bf16.mxu0 0
      %1298 = vmatpush2.bf16.msra.mxu0 0
      %1299 = vmatprep.subr.bf16.mxu0 0
      %1300 = vmatpush2.bf16.msra.mxu0 0
      %1301 = vmatprep.subr.bf16.mxu0 0
      %1302 = vmatpush2.bf16.msra.mxu0 0
      %1303 = vmatprep.subr.bf16.mxu0 0
      %1304 = vmatpush2.bf16.msra.mxu0 0
      %1305 = vmatprep.mubr.bf16.mxu0 0
      %1306 = vmatmul.mubr.bf16.gmra.mxu0 %v1262
      %v1307 = vpop.f32.mrf.mxu0
      %v1308 = vadd.f32 0.0, %v1307
      %v1309 = vpop.f32.mrf.mxu0
      %v1310 = vpop.f32.mrf.mxu0
      %v1311 = vadd.f32 0.0, %v1310
      %v1312 = vpop.f32.mrf.mxu0
      %1313 = vmatprep.mubr.bf16.mxu0 0
      %1314 = vmatmul.mubr.bf16.gmra.mxu0 %v1265
      %v1315 = vpop.f32.mrf.mxu0
      %v1316 = vadd.f32 0.0, %v1315
      %v1317 = vpop.f32.mrf.mxu0
      %v1318 = vpop.f32.mrf.mxu0
      %v1319 = vadd.f32 0.0, %v1318
      %v1320 = vpop.f32.mrf.mxu0
      %1321 = vmatprep.mubr.bf16.mxu0 0
      %1322 = vmatmul.mubr.bf16.gmra.mxu0 %v1268
      %v1323 = vpop.f32.mrf.mxu0
      %v1324 = vadd.f32 0.0, %v1323
      %v1325 = vpop.f32.mrf.mxu0
      %v1326 = vpop.f32.mrf.mxu0
      %v1327 = vadd.f32 0.0, %v1326
      %v1328 = vpop.f32.mrf.mxu0
      %1329 = vmatprep.mubr.bf16.mxu0 0
      %1330 = vmatmul.mubr.bf16.gmra.mxu0 %v1271
      %v1331 = vpop.f32.mrf.mxu0
      %v1332 = vadd.f32 0.0, %v1331
      %v1333 = vpop.f32.mrf.mxu0
      %v1334 = vpop.f32.mrf.mxu0
      %v1335 = vadd.f32 0.0, %v1334
      %v1336 = vpop.f32.mrf.mxu0
      %1337 = vdwg.mxu0
      %v1339 = vsel %vm879, %v1176, 0
      %v1342 = vsel %vm879, %v1177, 0
      %v1345 = vsel %vm879, %v1178, 0
      %v1348 = vsel %vm879, %v1179, 0
      %1350 = vmatprep.subr.bf16.mxu0 0
      %1351 = vmatpush1.bf16.msra.mxu0 0
      %1352 = vmatprep.subr.bf16.mxu0 0
      %1353 = vmatpush1.bf16.msra.mxu0 0
      %1354 = vmatprep.subr.bf16.mxu0 0
      %1355 = vmatpush1.bf16.msra.mxu0 0
      %1356 = vmatprep.subr.bf16.mxu0 0
      %1357 = vmatpush1.bf16.msra.mxu0 0
      %1358 = vmatprep.subr.bf16.mxu0 0
      %1359 = vmatpush1.bf16.msra.mxu0 %v421
      %1360 = vmatprep.subr.bf16.mxu0 0
      %1361 = vmatpush1.bf16.msra.mxu0 %v420
      %1362 = vmatprep.subr.bf16.mxu0 0
      %1363 = vmatpush1.bf16.msra.mxu0 %v419
      %1364 = vmatprep.subr.bf16.mxu0 0
      %1365 = vmatpush1.bf16.msra.mxu0 %v418
      %1366 = vmatprep.subr.bf16.mxu0 0
      %1367 = vmatpush2.bf16.msra.mxu0 0
      %1368 = vmatprep.subr.bf16.mxu0 0
      %1369 = vmatpush2.bf16.msra.mxu0 0
      %1370 = vmatprep.subr.bf16.mxu0 0
      %1371 = vmatpush2.bf16.msra.mxu0 0
      %1372 = vmatprep.subr.bf16.mxu0 0
      %1373 = vmatpush2.bf16.msra.mxu0 0
      %1374 = vmatprep.subr.bf16.mxu0 0
      %1375 = vmatpush2.bf16.msra.mxu0 0
      %1376 = vmatprep.subr.bf16.mxu0 0
      %1377 = vmatpush2.bf16.msra.mxu0 0
      %1378 = vmatprep.subr.bf16.mxu0 0
      %1379 = vmatpush2.bf16.msra.mxu0 0
      %1380 = vmatprep.subr.bf16.mxu0 0
      %1381 = vmatpush2.bf16.msra.mxu0 0
      %1382 = vmatprep.mubr.bf16.mxu0 0
      %1383 = vmatmul.mubr.bf16.gmra.mxu0 %v1339
      %v1384 = vpop.f32.mrf.mxu0
      %v1385 = vadd.f32 0.0, %v1384
      %v1386 = vpop.f32.mrf.mxu0
      %v1387 = vpop.f32.mrf.mxu0
      %v1388 = vadd.f32 0.0, %v1387
      %v1389 = vpop.f32.mrf.mxu0
      %1390 = vmatprep.mubr.bf16.mxu0 0
      %1391 = vmatmul.mubr.bf16.gmra.mxu0 %v1342
      %v1392 = vpop.f32.mrf.mxu0
      %v1393 = vadd.f32 0.0, %v1392
      %v1394 = vpop.f32.mrf.mxu0
      %v1395 = vpop.f32.mrf.mxu0
      %v1396 = vadd.f32 0.0, %v1395
      %v1397 = vpop.f32.mrf.mxu0
      %1398 = vmatprep.mubr.bf16.mxu0 0
      %1399 = vmatmul.mubr.bf16.gmra.mxu0 %v1345
      %v1400 = vpop.f32.mrf.mxu0
      %v1401 = vadd.f32 0.0, %v1400
      %v1402 = vpop.f32.mrf.mxu0
      %v1403 = vpop.f32.mrf.mxu0
      %v1404 = vadd.f32 0.0, %v1403
      %v1405 = vpop.f32.mrf.mxu0
      %1406 = vmatprep.mubr.bf16.mxu0 0
      %1407 = vmatmul.mubr.bf16.gmra.mxu0 %v1348
      %v1408 = vpop.f32.mrf.mxu0
      %v1409 = vadd.f32 0.0, %v1408
      %v1410 = vpop.f32.mrf.mxu0
      %v1411 = vpop.f32.mrf.mxu0
      %v1412 = vadd.f32 0.0, %v1411
      %v1413 = vpop.f32.mrf.mxu0
      %1414 = vdwg.mxu0
      %v1416 = vsel %vm879, %v1180, 0
      %v1419 = vsel %vm879, %v1181, 0
      %v1422 = vsel %vm879, %v1182, 0
      %v1425 = vsel %vm879, %v1183, 0
      %1427 = vmatprep.subr.bf16.mxu0 0
      %1428 = vmatpush1.bf16.msra.mxu0 0
      %1429 = vmatprep.subr.bf16.mxu0 0
      %1430 = vmatpush1.bf16.msra.mxu0 0
      %1431 = vmatprep.subr.bf16.mxu0 0
      %1432 = vmatpush1.bf16.msra.mxu0 0
      %1433 = vmatprep.subr.bf16.mxu0 0
      %1434 = vmatpush1.bf16.msra.mxu0 0
      %1435 = vmatprep.subr.bf16.mxu0 0
      %1436 = vmatpush1.bf16.msra.mxu0 %v425
      %1437 = vmatprep.subr.bf16.mxu0 0
      %1438 = vmatpush1.bf16.msra.mxu0 %v424
      %1439 = vmatprep.subr.bf16.mxu0 0
      %1440 = vmatpush1.bf16.msra.mxu0 %v423
      %1441 = vmatprep.subr.bf16.mxu0 0
      %1442 = vmatpush1.bf16.msra.mxu0 %v422
      %1443 = vmatprep.subr.bf16.mxu0 0
      %1444 = vmatpush2.bf16.msra.mxu0 0
      %1445 = vmatprep.subr.bf16.mxu0 0
      %1446 = vmatpush2.bf16.msra.mxu0 0
      %1447 = vmatprep.subr.bf16.mxu0 0
      %1448 = vmatpush2.bf16.msra.mxu0 0
      %1449 = vmatprep.subr.bf16.mxu0 0
      %1450 = vmatpush2.bf16.msra.mxu0 0
      %1451 = vmatprep.subr.bf16.mxu0 0
      %1452 = vmatpush2.bf16.msra.mxu0 0
      %1453 = vmatprep.subr.bf16.mxu0 0
      %1454 = vmatpush2.bf16.msra.mxu0 0
      %1455 = vmatprep.subr.bf16.mxu0 0
      %1456 = vmatpush2.bf16.msra.mxu0 0
      %1457 = vmatprep.subr.bf16.mxu0 0
      %1458 = vmatpush2.bf16.msra.mxu0 0
      %1459 = vmatprep.mubr.bf16.mxu0 0
      %1460 = vmatmul.mubr.bf16.gmra.mxu0 %v1416
      %v1461 = vpop.f32.mrf.mxu0
      %v1462 = vadd.f32 0.0, %v1461
      %v1463 = vpop.f32.mrf.mxu0
      %v1464 = vpop.f32.mrf.mxu0
      %v1465 = vadd.f32 0.0, %v1464
      %v1466 = vpop.f32.mrf.mxu0
      %1467 = vmatprep.mubr.bf16.mxu0 0
      %1468 = vmatmul.mubr.bf16.gmra.mxu0 %v1419
      %v1469 = vpop.f32.mrf.mxu0
      %v1470 = vadd.f32 0.0, %v1469
      %v1471 = vpop.f32.mrf.mxu0
      %v1472 = vpop.f32.mrf.mxu0
      %v1473 = vadd.f32 0.0, %v1472
      %v1474 = vpop.f32.mrf.mxu0
      %1475 = vmatprep.mubr.bf16.mxu0 0
      %1476 = vmatmul.mubr.bf16.gmra.mxu0 %v1422
      %v1477 = vpop.f32.mrf.mxu0
      %v1478 = vadd.f32 0.0, %v1477
      %v1479 = vpop.f32.mrf.mxu0
      %v1480 = vpop.f32.mrf.mxu0
      %v1481 = vadd.f32 0.0, %v1480
      %v1482 = vpop.f32.mrf.mxu0
      %1483 = vmatprep.mubr.bf16.mxu0 0
      %1484 = vmatmul.mubr.bf16.gmra.mxu0 %v1425
      %v1485 = vpop.f32.mrf.mxu0
      %v1486 = vadd.f32 0.0, %v1485
      %v1487 = vpop.f32.mrf.mxu0
      %v1488 = vpop.f32.mrf.mxu0
      %v1489 = vadd.f32 0.0, %v1488
      %v1490 = vpop.f32.mrf.mxu0
      %1491 = vdwg.mxu0
      %v1492 = vrcp.pop %v1074
      %v1493 = vrcp.pop %v1077
      %v1494 = vrcp.pop %v1080
      %v1495 = vrcp.pop %v1083
      %v1496 = vrcp.pop %v1086
      %v1497 = vrcp.pop %v1089
      %v1498 = vrcp.pop %v1092
      %v1499 = vrcp.pop %v1095
      %v1500 = vrcp.pop %v1098
      %v1501 = vrcp.pop %v1101
      %v1502 = vrcp.pop %v1104
      %v1503 = vrcp.pop %v1107
      %v1504 = vrcp.pop %v1110
      %v1505 = vrcp.pop %v1113
      %v1506 = vrcp.pop %v1116
      %v1507 = vrcp.pop %v1119
      %v1508 = vrcp.pop %v1122
      %v1509 = vrcp.pop %v1125
      %v1510 = vrcp.pop %v1128
      %v1511 = vrcp.pop %v1131
      %v1512 = vrcp.pop %v1134
      %v1513 = vrcp.pop %v1137
      %v1514 = vrcp.pop %v1140
      %v1515 = vrcp.pop %v1143
      %v1516 = vrcp.pop %v1146
      %v1517 = vrcp.pop %v1149
      %v1518 = vrcp.pop %v1152
      %v1519 = vrcp.pop %v1155
      %v1520 = vrcp.pop %v1158
      %v1521 = vrcp.pop %v1161
      %v1522 = vrcp.pop %v1164
      %v1523 = vrcp.pop %v1167
      %v1524 = vmul.f32 %v1231, %v1492
      %v1525 = vmul.f32 %v1234, %v1493
      %v1526 = vmul.f32 %v1239, %v1494
      %v1527 = vmul.f32 %v1242, %v1495
      %v1528 = vmul.f32 %v1247, %v1496
      %v1529 = vmul.f32 %v1250, %v1497
      %v1530 = vmul.f32 %v1255, %v1498
      %v1531 = vmul.f32 %v1258, %v1499
      %v1532 = vmul.f32 %v1308, %v1500
      %v1533 = vmul.f32 %v1311, %v1501
      %v1534 = vmul.f32 %v1316, %v1502
      %v1535 = vmul.f32 %v1319, %v1503
      %v1536 = vmul.f32 %v1324, %v1504
      %v1537 = vmul.f32 %v1327, %v1505
      %v1538 = vmul.f32 %v1332, %v1506
      %v1539 = vmul.f32 %v1335, %v1507
      %v1540 = vmul.f32 %v1385, %v1508
      %v1541 = vmul.f32 %v1388, %v1509
      %v1542 = vmul.f32 %v1393, %v1510
      %v1543 = vmul.f32 %v1396, %v1511
      %v1544 = vmul.f32 %v1401, %v1512
      %v1545 = vmul.f32 %v1404, %v1513
      %v1546 = vmul.f32 %v1409, %v1514
      %v1547 = vmul.f32 %v1412, %v1515
      %v1548 = vmul.f32 %v1462, %v1516
      %v1549 = vmul.f32 %v1465, %v1517
      %v1550 = vmul.f32 %v1470, %v1518
      %v1551 = vmul.f32 %v1473, %v1519
      %v1552 = vmul.f32 %v1478, %v1520
      %v1553 = vmul.f32 %v1481, %v1521
      %v1554 = vmul.f32 %v1486, %v1522
      %v1555 = vmul.f32 %v1489, %v1523
      %1556 = vst.msk [vmem:[%s279] sm:$0xff] %vm426, %v1524
      %1557 = vst.msk [vmem:[%s279 + $0x8] sm:$0xff] %vm426, %v1525
      %1558 = vst.msk [vmem:[%s279 + $0x10] sm:$0xff] %vm426, %v1526
      %1559 = vst.msk [vmem:[%s279 + $0x18] sm:$0xff] %vm426, %v1527
      %1560 = vst.msk [vmem:[%s279 + $0x20] sm:$0xff] %vm426, %v1528
      %1561 = vst.msk [vmem:[%s279 + $0x28] sm:$0xff] %vm426, %v1529
      %1562 = vst.msk [vmem:[%s279 + $0x30] sm:$0xff] %vm426, %v1530
      %1563 = vst.msk [vmem:[%s279 + $0x38] sm:$0xff] %vm426, %v1531
      %1564 = vst.msk [vmem:[%s279 + $0x40] sm:$0xff] %vm426, %v1532
      %1565 = vst.msk [vmem:[%s279 + $0x48] sm:$0xff] %vm426, %v1533
      %1566 = vst.msk [vmem:[%s279 + $0x50] sm:$0xff] %vm426, %v1534
      %1567 = vst.msk [vmem:[%s279 + $0x58] sm:$0xff] %vm426, %v1535
      %1568 = vst.msk [vmem:[%s279 + $0x60] sm:$0xff] %vm426, %v1536
      %1569 = vst.msk [vmem:[%s279 + $0x68] sm:$0xff] %vm426, %v1537
      %1570 = vst.msk [vmem:[%s279 + $0x70] sm:$0xff] %vm426, %v1538
      %1571 = vst.msk [vmem:[%s279 + $0x78] sm:$0xff] %vm426, %v1539
      %1572 = vst.msk [vmem:[%s279 + $0x80] sm:$0xff] %vm426, %v1540
      %1573 = vst.msk [vmem:[%s279 + $0x88] sm:$0xff] %vm426, %v1541
      %1574 = vst.msk [vmem:[%s279 + $0x90] sm:$0xff] %vm426, %v1542
      %1575 = vst.msk [vmem:[%s279 + $0x98] sm:$0xff] %vm426, %v1543
      %1576 = vst.msk [vmem:[%s279 + $0xa0] sm:$0xff] %vm426, %v1544
      %1577 = vst.msk [vmem:[%s279 + $0xa8] sm:$0xff] %vm426, %v1545
      %1578 = vst.msk [vmem:[%s279 + $0xb0] sm:$0xff] %vm426, %v1546
      %1579 = vst.msk [vmem:[%s279 + $0xb8] sm:$0xff] %vm426, %v1547
      %1580 = vst.msk [vmem:[%s279 + $0xc0] sm:$0xff] %vm426, %v1548
      %1581 = vst.msk [vmem:[%s279 + $0xc8] sm:$0xff] %vm426, %v1549
      %1582 = vst.msk [vmem:[%s279 + $0xd0] sm:$0xff] %vm426, %v1550
      %1583 = vst.msk [vmem:[%s279 + $0xd8] sm:$0xff] %vm426, %v1551
      %1584 = vst.msk [vmem:[%s279 + $0xe0] sm:$0xff] %vm426, %v1552
      %1585 = vst.msk [vmem:[%s279 + $0xe8] sm:$0xff] %vm426, %v1553
      %1586 = vst.msk [vmem:[%s279 + $0xf0] sm:$0xff] %vm426, %v1554
      %1587 = vst.msk [vmem:[%s279 + $0xf8] sm:$0xff] %vm426, %v1555
      %s1588 = smul.u32 4, %s15
      %p1589 = scmp.lt.s32.totalorder %s1588, 7
      %s1590 = scalar_select %p1589, %s1588, 7
      %s1591 = smul.addr %s1590, 8
      %s1592 = smul.addr %s1591, 8
      %s1593 = scalar_lea.vmem %s4, %s1592
      // Predicated region
      $region37: #{uninext_forward.15} parent=35 // pred_check
        %p1594 = pneg %p137
      $region38: #{uninext_forward.15} parent=35 // pred_check_branch
        %1596 = sbr.rel (%p1594) target = $region40
      $region39: #{uninext_forward.15} parent=35 // pred_region
        %s1597 = smul.u32 4, %s15
      $region40: #{uninext_forward.15} parent=35 // pred_fallthru
        _
    $region36: #{uninext_forward.15} parent=5 // pred_fallthru
      _
    %p1598 = scmp.le.s32.totalorder 2, %s10
    // Predicated region
    $region41: #{uninext_forward.15} parent=5 // pred_check
      %p1599 = pneg %p1598
    $region42: #{uninext_forward.15} parent=5 // pred_check_branch
      %1601 = sbr.rel (%p1599) target = $region44
    $region43: #{uninext_forward.15} parent=5 // pred_region
      %s1602 = ssub.s32 %s10, 2
      // Predicated region
      $region45: #{uninext_forward.15} parent=43 // pred_check
        %p1603 = pneg %p143
      $region46: #{uninext_forward.15} parent=43 // pred_check_branch
        %1605 = sbr.rel (%p1603) target = $region48
      $region47: #{uninext_forward.15} parent=43 // pred_region
        %s1606 = smul.u32 4, %s16
        %p1607 = scmp.lt.s32.totalorder %s1606, 7
        %s1608 = scalar_select %p1607, %s1606, 7
        %s1609 = smul.addr %s1608, 8
        %s1610 = smul.addr %s1609, 8
        %s1611 = scalar_lea.vmem %s4, %s1610
      $region48: #{uninext_forward.15} parent=43 // pred_fallthru
        _
    $region44: #{uninext_forward.15} parent=5 // pred_fallthru
      _
  $region6: #{uninext_forward.15} parent=0 // loop_footer
    %s14 = sadd.s32 1, %s10
  $region7: #{uninext_forward.15} parent=0 // loop_footer_branch
    %9 = sbr.rel target = $region3
  $region8: #{uninext_forward.15} parent=0 // loop_exit
    _

// kernel: uninext_forward.17
$region0: #{uninext_forward.17}
  #allocation0 [shape = 'u32[]', space=smem, size = 0x4, offset = 0x4, fixed_abs, tag = 'smem constant byte address 0x4 - core index']
  #allocation1 [shape = 'u32[144,128]{1,0:T(1,128)}', space=vmem, size = 0x12000, scoped, tag = 'internal scratch']
  %s0 = inlined_call_operand.vmem [shape: f32[128,32], index: 0, kind: input, shape index: {}]
  %s1 = inlined_call_operand.vmem [shape: f32[1,32], index: 1, kind: input, shape index: {}]
  %s2 = inlined_call_operand.vmem [shape: f32[1,32], index: 2, kind: input, shape index: {}]
  %s3 = inlined_call_operand.vmem [shape: bf16[32,128], index: 3, kind: input, shape index: {}]
  %s4 = inlined_call_operand.vmem [shape: f32[1,128], index: 4, kind: input, shape index: {}]
  %s5 = inlined_call_operand.vmem [shape: bf16[128,32], index: 5, kind: input, shape index: {}]
  %s6 = inlined_call_operand.vmem [shape: f32[1,32], index: 6, kind: input, shape index: {}]
  %s7 = inlined_call_operand.hbm [shape: f32[128,32], index: 7, kind: output, shape index: {}]
  %s8 = sld [smem:[#allocation0]]
  $region61: #{uninext_forward.17} parent=0
    _
  %s10 = ssub.s32 1, %s8
  %s11 = scalar_select 0, %s10, %s8
  $region1: #{uninext_forward.17} parent=0
    #allocation2 [shape = 'u8[65536]{0}', space=vmem, size = 0x10000, scoped, tag = 'output window, operand 0']
    #allocation3 [shape = 's32[2]{0}', space=sflag, size = 0x8, scoped, tag = 'scoped memory for uninext_forward.17']
    %12 = vsyncpa [#allocation3], 0
    %s13 = scalar_lea.sflag [#allocation3], 1
    %14 = vsyncpa %s13, 0
    loop: start=0, step=1, limit=4
    $region2: #{uninext_forward.17} parent=1 // loop_pre_header
      _
    $region3: #{uninext_forward.17} parent=1 // loop_header
      %s16 = sphi 0, %s20
      %p17 = scmp.ge.s32.totalorder %s16, 4
      %s26 = sphi 0, %s28
      %s29 = sphi 0, %s26
      %s30 = sphi 0, %s29
      %s46 = sphi 0, %s30
      %s50 = sphi 0, %s50
      %s52 = sphi 0, %s50
      %s53 = sphi 0, %s52
      %s67 = sphi 0, %s53
      %s71 = sphi 0, %s71
      %s73 = sphi 0, %s71
      %s74 = sphi 0, %s73
      %s88 = sphi 0, %s74
      %s92 = sphi 0, %s92
      %s94 = sphi 0, %s92
      %s95 = sphi 0, %s94
      %s109 = sphi 0, %s95
      %s113 = sphi 0, %s113
      %s115 = sphi 0, %s113
      %s116 = sphi 0, %s115
      %s130 = sphi 0, %s116
      %s134 = sphi 0, %s134
      %s136 = sphi 0, %s134
      %s137 = sphi 0, %s136
      %s151 = sphi 0, %s137
      %s155 = sphi 0, %s155
      %s157 = sphi 0, %s155
      %s158 = sphi 0, %s157
      %s172 = sphi 0, %s158
      %s178 = sphi 0, %s180
      %s181 = sphi 0, %s178
      %s182 = sphi 0, %s181
      %s198 = sphi 0, %s182
    $region4: #{uninext_forward.17} parent=1 // loop_header_branch
      %19 = sbr.rel (%p17) target = $region8
    $region5: #{uninext_forward.17} parent=1 // loop_body
      %s21 = ssub.s32 %s16, 1
      %s22 = ssub.s32 %s16, 2
      %s23 = sadd.s32 %s16, 1
      %s24 = ssub.s32 %s16, %s23
      %p25 = scmp.eq.s32.totalorder %s24, 0
      %s27 = sadd.s32 %s26, 1
      %s28 = scalar_select %p25, %s26, %s27
      %p31 = pneg %p25
      %p32 = scmp.eq.s32.totalorder %s16, 1
      %p33 = por %p31, %p32
      %p34 = scmp.ne.s32.totalorder %s26, %s29
      %p35 = scmp.eq.s32.totalorder %s16, 0
      %p36 = por %p34, %p35
      %p37 = scmp.ne.s32.totalorder %s26, %s29
      %p38 = scmp.eq.s32.totalorder %s21, 1
      %p39 = por %p37, %p38
      %p40 = scmp.ne.s32.totalorder %s29, %s30
      %p41 = scmp.eq.s32.totalorder %s21, 0
      %p42 = por %p40, %p41
      %p43 = scmp.ne.s32.totalorder %s29, %s30
      %p44 = scmp.eq.s32.totalorder %s22, 1
      %p45 = por %p43, %p44
      %p47 = scmp.ne.s32.totalorder %s30, %s46
      %p48 = scmp.eq.s32.totalorder %s22, 0
      %p49 = por %p47, %p48
      %s51 = sadd.s32 %s50, 1
      %p54 = scmp.eq.s32.totalorder %s16, 1
      %p55 = scmp.ne.s32.totalorder %s50, %s52
      %p56 = scmp.eq.s32.totalorder %s16, 0
      %p57 = por %p55, %p56
      %p58 = scmp.ne.s32.totalorder %s50, %s52
      %p59 = scmp.eq.s32.totalorder %s21, 1
      %p60 = por %p58, %p59
      %p61 = scmp.ne.s32.totalorder %s52, %s53
      %p62 = scmp.eq.s32.totalorder %s21, 0
      %p63 = por %p61, %p62
      %p64 = scmp.ne.s32.totalorder %s52, %s53
      %p65 = scmp.eq.s32.totalorder %s22, 1
      %p66 = por %p64, %p65
      %p68 = scmp.ne.s32.totalorder %s53, %s67
      %p69 = scmp.eq.s32.totalorder %s22, 0
      %p70 = por %p68, %p69
      %s72 = sadd.s32 %s71, 1
      %p75 = scmp.eq.s32.totalorder %s16, 1
      %p76 = scmp.ne.s32.totalorder %s71, %s73
      %p77 = scmp.eq.s32.totalorder %s16, 0
      %p78 = por %p76, %p77
      %p79 = scmp.ne.s32.totalorder %s71, %s73
      %p80 = scmp.eq.s32.totalorder %s21, 1
      %p81 = por %p79, %p80
      %p82 = scmp.ne.s32.totalorder %s73, %s74
      %p83 = scmp.eq.s32.totalorder %s21, 0
      %p84 = por %p82, %p83
      %p85 = scmp.ne.s32.totalorder %s73, %s74
      %p86 = scmp.eq.s32.totalorder %s22, 1
      %p87 = por %p85, %p86
      %p89 = scmp.ne.s32.totalorder %s74, %s88
      %p90 = scmp.eq.s32.totalorder %s22, 0
      %p91 = por %p89, %p90
      %s93 = sadd.s32 %s92, 1
      %p96 = scmp.eq.s32.totalorder %s16, 1
      %p97 = scmp.ne.s32.totalorder %s92, %s94
      %p98 = scmp.eq.s32.totalorder %s16, 0
      %p99 = por %p97, %p98
      %p100 = scmp.ne.s32.totalorder %s92, %s94
      %p101 = scmp.eq.s32.totalorder %s21, 1
      %p102 = por %p100, %p101
      %p103 = scmp.ne.s32.totalorder %s94, %s95
      %p104 = scmp.eq.s32.totalorder %s21, 0
      %p105 = por %p103, %p104
      %p106 = scmp.ne.s32.totalorder %s94, %s95
      %p107 = scmp.eq.s32.totalorder %s22, 1
      %p108 = por %p106, %p107
      %p110 = scmp.ne.s32.totalorder %s95, %s109
      %p111 = scmp.eq.s32.totalorder %s22, 0
      %p112 = por %p110, %p111
      %s114 = sadd.s32 %s113, 1
      %p117 = scmp.eq.s32.totalorder %s16, 1
      %p118 = scmp.ne.s32.totalorder %s113, %s115
      %p119 = scmp.eq.s32.totalorder %s16, 0
      %p120 = por %p118, %p119
      %p121 = scmp.ne.s32.totalorder %s113, %s115
      %p122 = scmp.eq.s32.totalorder %s21, 1
      %p123 = por %p121, %p122
      %p124 = scmp.ne.s32.totalorder %s115, %s116
      %p125 = scmp.eq.s32.totalorder %s21, 0
      %p126 = por %p124, %p125
      %p127 = scmp.ne.s32.totalorder %s115, %s116
      %p128 = scmp.eq.s32.totalorder %s22, 1
      %p129 = por %p127, %p128
      %p131 = scmp.ne.s32.totalorder %s116, %s130
      %p132 = scmp.eq.s32.totalorder %s22, 0
      %p133 = por %p131, %p132
      %s135 = sadd.s32 %s134, 1
      %p138 = scmp.eq.s32.totalorder %s16, 1
      %p139 = scmp.ne.s32.totalorder %s134, %s136
      %p140 = scmp.eq.s32.totalorder %s16, 0
      %p141 = por %p139, %p140
      %p142 = scmp.ne.s32.totalorder %s134, %s136
      %p143 = scmp.eq.s32.totalorder %s21, 1
      %p144 = por %p142, %p143
      %p145 = scmp.ne.s32.totalorder %s136, %s137
      %p146 = scmp.eq.s32.totalorder %s21, 0
      %p147 = por %p145, %p146
      %p148 = scmp.ne.s32.totalorder %s136, %s137
      %p149 = scmp.eq.s32.totalorder %s22, 1
      %p150 = por %p148, %p149
      %p152 = scmp.ne.s32.totalorder %s137, %s151
      %p153 = scmp.eq.s32.totalorder %s22, 0
      %p154 = por %p152, %p153
      %s156 = sadd.s32 %s155, 1
      %p159 = scmp.eq.s32.totalorder %s16, 1
      %p160 = scmp.ne.s32.totalorder %s155, %s157
      %p161 = scmp.eq.s32.totalorder %s16, 0
      %p162 = por %p160, %p161
      %p163 = scmp.ne.s32.totalorder %s155, %s157
      %p164 = scmp.eq.s32.totalorder %s21, 1
      %p165 = por %p163, %p164
      %p166 = scmp.ne.s32.totalorder %s157, %s158
      %p167 = scmp.eq.s32.totalorder %s21, 0
      %p168 = por %p166, %p167
      %p169 = scmp.ne.s32.totalorder %s157, %s158
      %p170 = scmp.eq.s32.totalorder %s22, 1
      %p171 = por %p169, %p170
      %p173 = scmp.ne.s32.totalorder %s158, %s172
      %p174 = scmp.eq.s32.totalorder %s22, 0
      %p175 = por %p173, %p174
      %s176 = ssub.s32 %s16, %s23
      %p177 = scmp.eq.s32.totalorder %s176, 0
      %s179 = sadd.s32 %s178, 1
      %s180 = scalar_select %p177, %s178, %s179
      %p183 = pneg %p177
      %p184 = scmp.eq.s32.totalorder %s16, 1
      %p185 = por %p183, %p184
      %p186 = scmp.ne.s32.totalorder %s178, %s181
      %p187 = scmp.eq.s32.totalorder %s16, 0
      %p188 = por %p186, %p187
      %p189 = scmp.ne.s32.totalorder %s178, %s181
      %p190 = scmp.eq.s32.totalorder %s21, 1
      %p191 = por %p189, %p190
      %p192 = scmp.ne.s32.totalorder %s181, %s182
      %p193 = scmp.eq.s32.totalorder %s21, 0
      %p194 = por %p192, %p193
      %p195 = scmp.ne.s32.totalorder %s181, %s182
      %p196 = scmp.eq.s32.totalorder %s22, 1
      %p197 = por %p195, %p196
      %p199 = scmp.ne.s32.totalorder %s182, %s198
      %p200 = scmp.eq.s32.totalorder %s22, 0
      %p201 = por %p199, %p200
      %p202 = scmp.le.s32.totalorder 1, %s16
      %p203 = scmp.lt.s32.totalorder %s16, 3
      %p204 = pnand %p202, %p203
      %p205 = pneg %p204
      // Predicated region
      $region9: #{uninext_forward.17} parent=5 // pred_check
        _
      $region10: #{uninext_forward.17} parent=5 // pred_check_branch
        %207 = sbr.rel (%p204) target = $region12
      $region11: #{uninext_forward.17} parent=5 // pred_region
        %s208 = ssub.s32 %s16, 1
        // Predicated region
        $region13: #{uninext_forward.17} parent=11 // pred_check
          %p209 = pneg %p63
        $region14: #{uninext_forward.17} parent=11 // pred_check_branch
          %211 = sbr.rel (%p209) target = $region16
        $region15: #{uninext_forward.17} parent=11 // pred_region
          _
        $region16: #{uninext_forward.17} parent=11 // pred_fallthru
          _
        // Predicated region
        $region17: #{uninext_forward.17} parent=11 // pred_check
          %p212 = pneg %p84
        $region18: #{uninext_forward.17} parent=11 // pred_check_branch
          %214 = sbr.rel (%p212) target = $region20
        $region19: #{uninext_forward.17} parent=11 // pred_region
          _
        $region20: #{uninext_forward.17} parent=11 // pred_fallthru
          _
        // Predicated region
        $region21: #{uninext_forward.17} parent=11 // pred_check
          %p215 = pneg %p105
        $region22: #{uninext_forward.17} parent=11 // pred_check_branch
          %217 = sbr.rel (%p215) target = $region24
        $region23: #{uninext_forward.17} parent=11 // pred_region
          _
        $region24: #{uninext_forward.17} parent=11 // pred_fallthru
          _
        // Predicated region
        $region25: #{uninext_forward.17} parent=11 // pred_check
          %p218 = pneg %p126
        $region26: #{uninext_forward.17} parent=11 // pred_check_branch
          %220 = sbr.rel (%p218) target = $region28
        $region27: #{uninext_forward.17} parent=11 // pred_region
          _
        $region28: #{uninext_forward.17} parent=11 // pred_fallthru
          _
        // Predicated region
        $region29: #{uninext_forward.17} parent=11 // pred_check
          %p221 = pneg %p147
        $region30: #{uninext_forward.17} parent=11 // pred_check_branch
          %223 = sbr.rel (%p221) target = $region32
        $region31: #{uninext_forward.17} parent=11 // pred_region
          _
        $region32: #{uninext_forward.17} parent=11 // pred_fallthru
          _
        // Predicated region
        $region33: #{uninext_forward.17} parent=11 // pred_check
          %p224 = pneg %p168
        $region34: #{uninext_forward.17} parent=11 // pred_check_branch
          %226 = sbr.rel (%p224) target = $region36
        $region35: #{uninext_forward.17} parent=11 // pred_region
          _
        $region36: #{uninext_forward.17} parent=11 // pred_fallthru
          _
      $region12: #{uninext_forward.17} parent=5 // pred_fallthru
        _
      %p227 = scmp.lt.s32.totalorder %s16, 2
      // Predicated region
      $region37: #{uninext_forward.17} parent=5 // pred_check
        %p228 = pneg %p227
      $region38: #{uninext_forward.17} parent=5 // pred_check_branch
        %230 = sbr.rel (%p228) target = $region40
      $region39: #{uninext_forward.17} parent=5 // pred_region
        // Predicated region
        $region41: #{uninext_forward.17} parent=39 // pred_check
          %p231 = pneg %p36
        $region42: #{uninext_forward.17} parent=39 // pred_check_branch
          %233 = sbr.rel (%p231) target = $region44
        $region43: #{uninext_forward.17} parent=39 // pred_region
          %s234 = smul.u32 8, %s16
          %p235 = scmp.lt.s32.totalorder %s234, 15
          %s236 = scalar_select %p235, %s234, 15
          %s237 = smul.addr %s236, 8
          %s238 = scalar_lea.vmem %s0, %s237
          %s239 = smul.u32 8, %s16
        $region44: #{uninext_forward.17} parent=39 // pred_fallthru
          _
      $region40: #{uninext_forward.17} parent=5 // pred_fallthru
        _
      %p240 = scmp.le.s32.totalorder 1, %s16
      %p241 = scmp.lt.s32.totalorder %s16, 3
      %p242 = pnand %p240, %p241
      %p243 = pneg %p242
      // Predicated region
      $region45: #{uninext_forward.17} parent=5 // pred_check
        _
      $region46: #{uninext_forward.17} parent=5 // pred_check_branch
        %245 = sbr.rel (%p242) target = $region48
      $region47: #{uninext_forward.17} parent=5 // pred_region
        %s246 = ssub.s32 %s16, 1
        %s247 = smul.u32 8, %s21
        %p248 = scmp.lt.s32.totalorder %s247, 15
        %s249 = scalar_select %p248, %s247, 15
        %s250 = smul.addr %s249, 8
        %s251 = scalar_lea.vmem %s0, %s250
        %p252 = pneg %p42
        %p253 = pneg %p39
        %p254 = pneg %p63
        %p255 = pneg %p60
        %p256 = pneg %p84
        %p257 = pneg %p81
        %p258 = pneg %p105
        %p259 = pneg %p102
        %p260 = pneg %p126
        %p261 = pneg %p123
        %p262 = pneg %p147
        %p263 = pneg %p144
        %p264 = pneg %p168
        %p265 = pneg %p165
        %p266 = pneg %p194
        %p267 = pneg %p191
        %s268 = sand.u32 %s181, 1
        %s269 = scalar_lea.sflag [#allocation3], %s268
        %s270 = sand.u32 %s181, 1
        %s271 = smul.addr %s270, 64
        %s272 = scalar_lea.vmem [#allocation2], %s271
        %s273 = smul.u32 8, %s21
        %p274 = scmp.lt.s32.totalorder %s273, 15
        %s275 = scalar_select %p274, %s273, 15
        %s276 = smul.addr %s275, 8
        %s277 = scalar_lea.vmem %s0, %s276
        %s278 = smul.u32 8, %s21
        %s279 = smul.u32 8, %s21
        %v281 = vld [vmem:[%s277] sm:$0xff]
        %v282 = vld [vmem:[%s277 + $0x8] sm:$0xff]
        %v283 = vld [vmem:[%s277 + $0x10] sm:$0xff]
        %v284 = vld [vmem:[%s277 + $0x18] sm:$0xff]
        %v285 = vld [vmem:[%s277 + $0x20] sm:$0xff]
        %v286 = vld [vmem:[%s277 + $0x28] sm:$0xff]
        %v287 = vld [vmem:[%s277 + $0x30] sm:$0xff]
        %v288 = vld [vmem:[%s277 + $0x38] sm:$0xff]
        %vm289 = vcmask 261120
        %v290 = vsel %vm289, %v281, 0.0
        %291 = vadd.xlane.f32.xlu0 %v290
        %v292 = vpop.xlane.xlu0 %291
        %v293 = vsel %vm289, %v282, 0.0
        %294 = vadd.xlane.f32.xlu0 %v293
        %v295 = vpop.xlane.xlu0 %294
        %v296 = vsel %vm289, %v283, 0.0
        %297 = vadd.xlane.f32.xlu0 %v296
        %v298 = vpop.xlane.xlu0 %297
        %v299 = vsel %vm289, %v284, 0.0
        %300 = vadd.xlane.f32.xlu0 %v299
        %v301 = vpop.xlane.xlu0 %300
        %v302 = vsel %vm289, %v285, 0.0
        %303 = vadd.xlane.f32.xlu0 %v302
        %v304 = vpop.xlane.xlu0 %303
        %v305 = vsel %vm289, %v286, 0.0
        %306 = vadd.xlane.f32.xlu0 %v305
        %v307 = vpop.xlane.xlu0 %306
        %v308 = vsel %vm289, %v287, 0.0
        %309 = vadd.xlane.f32.xlu0 %v308
        %v310 = vpop.xlane.xlu0 %309
        %v311 = vsel %vm289, %v288, 0.0
        %312 = vadd.xlane.f32.xlu0 %v311
        %v313 = vpop.xlane.xlu0 %312
        %v314 = vrcp.pop 32.0
        %v315 = vmul.f32 %v292, %v314
        %v316 = vmul.f32 %v295, %v314
        %v317 = vmul.f32 %v298, %v314
        %v318 = vmul.f32 %v301, %v314
        %v319 = vmul.f32 %v304, %v314
        %v320 = vmul.f32 %v307, %v314
        %v321 = vmul.f32 %v310, %v314
        %v322 = vmul.f32 %v313, %v314
        %v323 = vsub.f32 %v281, %v315
        %v324 = vsub.f32 %v282, %v316
        %v325 = vsub.f32 %v283, %v317
        %v326 = vsub.f32 %v284, %v318
        %v327 = vsub.f32 %v285, %v319
        %v328 = vsub.f32 %v286, %v320
        %v329 = vsub.f32 %v287, %v321
        %v330 = vsub.f32 %v288, %v322
        %v331 = vmul.f32 %v323, %v323
        %v332 = vmul.f32 %v324, %v324
        %v333 = vmul.f32 %v325, %v325
        %v334 = vmul.f32 %v326, %v326
        %v335 = vmul.f32 %v327, %v327
        %v336 = vmul.f32 %v328, %v328
        %v337 = vmul.f32 %v329, %v329
        %v338 = vmul.f32 %v330, %v330
        %v339 = vsel %vm289, %v331, 0.0
        %340 = vadd.xlane.f32.xlu0 %v339
        %v341 = vpop.xlane.xlu0 %340
        %v342 = vsel %vm289, %v332, 0.0
        %343 = vadd.xlane.f32.xlu0 %v342
        %v344 = vpop.xlane.xlu0 %343
        %v345 = vsel %vm289, %v333, 0.0
        %346 = vadd.xlane.f32.xlu0 %v345
        %v347 = vpop.xlane.xlu0 %346
        %v348 = vsel %vm289, %v334, 0.0
        %349 = vadd.xlane.f32.xlu0 %v348
        %v350 = vpop.xlane.xlu0 %349
        %v351 = vsel %vm289, %v335, 0.0
        %352 = vadd.xlane.f32.xlu0 %v351
        %v353 = vpop.xlane.xlu0 %352
        %v354 = vsel %vm289, %v336, 0.0
        %355 = vadd.xlane.f32.xlu0 %v354
        %v356 = vpop.xlane.xlu0 %355
        %v357 = vsel %vm289, %v337, 0.0
        %358 = vadd.xlane.f32.xlu0 %v357
        %v359 = vpop.xlane.xlu0 %358
        %v360 = vsel %vm289, %v338, 0.0
        %361 = vadd.xlane.f32.xlu0 %v360
        %v362 = vpop.xlane.xlu0 %361
        %v363 = vmul.f32 %v341, %v314
        %v364 = vmul.f32 %v344, %v314
        %v365 = vmul.f32 %v347, %v314
        %v366 = vmul.f32 %v350, %v314
        %v367 = vmul.f32 %v353, %v314
        %v368 = vmul.f32 %v356, %v314
        %v369 = vmul.f32 %v359, %v314
        %v370 = vmul.f32 %v362, %v314
        %v371 = vadd.f32 %v363, 1e-06
        %v372 = vadd.f32 %v364, 1e-06
        %v373 = vadd.f32 %v365, 1e-06
        %v374 = vadd.f32 %v366, 1e-06
        %v375 = vadd.f32 %v367, 1e-06
        %v376 = vadd.f32 %v368, 1e-06
        %v377 = vadd.f32 %v369, 1e-06
        %v378 = vadd.f32 %v370, 1e-06
        %v379 = vrsqrt.pop %v371
        %v380 = vrsqrt.pop %v372
        %v381 = vrsqrt.pop %v373
        %v382 = vrsqrt.pop %v374
        %v383 = vrsqrt.pop %v375
        %v384 = vrsqrt.pop %v376
        %v385 = vrsqrt.pop %v377
        %v386 = vrsqrt.pop %v378
        %v387 = vmul.f32 %v323, %v379
        %v388 = vmul.f32 %v324, %v380
        %v389 = vmul.f32 %v325, %v381
        %v390 = vmul.f32 %v326, %v382
        %v391 = vmul.f32 %v327, %v383
        %v392 = vmul.f32 %v328, %v384
        %v393 = vmul.f32 %v329, %v385
        %v394 = vmul.f32 %v330, %v386
        %v395 = vld [vmem:[%s1] sm:$0x1]
        %v397 = vlaneseq
        %v398 = vshrl.u32 %v397, 7
        %v399 = vsub.s32 0, %v398
        %v400 = vrot.slane %v395, %v399
        %v402 = vmul.f32 %v387, %v400
        %v403 = vmul.f32 %v388, %v400
        %v404 = vmul.f32 %v389, %v400
        %v405 = vmul.f32 %v390, %v400
        %v406 = vmul.f32 %v391, %v400
        %v407 = vmul.f32 %v392, %v400
        %v408 = vmul.f32 %v393, %v400
        %v409 = vmul.f32 %v394, %v400
        %v410 = vld [vmem:[%s2] sm:$0x1]
        %v412 = vlaneseq
        %v413 = vshrl.u32 %v412, 7
        %v414 = vsub.s32 0, %v413
        %v415 = vrot.slane %v410, %v414
        %v417 = vadd.f32 %v402, %v415
        %v418 = vadd.f32 %v403, %v415
        %v419 = vadd.f32 %v404, %v415
        %v420 = vadd.f32 %v405, %v415
        %v421 = vadd.f32 %v406, %v415
        %v422 = vadd.f32 %v407, %v415
        %v423 = vadd.f32 %v408, %v415
        %v424 = vadd.f32 %v409, %v415
        %v425 = vpack.c.bf16 %v418, %v417
        %v426 = vpack.c.bf16 %v420, %v419
        %v427 = vpack.c.bf16 %v422, %v421
        %v428 = vpack.c.bf16 %v424, %v423
        %v429 = vld [vmem:[%s3] sm:$0xf]
        %v430 = vld [vmem:[%s3 + $0x4] sm:$0xf]
        %v431 = vld [vmem:[%s3 + $0x8] sm:$0xf]
        %v432 = vld [vmem:[%s3 + $0xc] sm:$0xf]
        %v433 = vld [vmem:[%s4] sm:$0x1]
        %v435 = vlaneseq
        %v436 = vshrl.u32 %v435, 7
        %v437 = vsub.s32 0, %v436
        %v438 = vrot.slane %v433, %v437
        %v444 = vunpack.c.l.b16 %v429
        %v445 = vunpack.c.l.b16 %v430
        %v446 = vunpack.c.l.b16 %v431
        %v447 = vunpack.c.l.b16 %v432
        %v448 = vpack.c.b16 %v445, %v444
        %v449 = vpack.c.b16 %v447, %v446
        %v453 = vsel %vm289, %v425, 0
        %v456 = vsel %vm289, %v426, 0
        %v459 = vsel %vm289, %v427, 0
        %v462 = vsel %vm289, %v428, 0
        %464 = vmatprep.subr.bf16.mxu0 0
        %465 = vmatpush1.bf16.msra.mxu0 0
        %466 = vmatprep.subr.bf16.mxu0 0
        %467 = vmatpush1.bf16.msra.mxu0 0
        %468 = vmatprep.subr.bf16.mxu0 0
        %469 = vmatpush1.bf16.msra.mxu0 0
        %470 = vmatprep.subr.bf16.mxu0 0
        %471 = vmatpush1.bf16.msra.mxu0 0
        %472 = vmatprep.subr.bf16.mxu0 0
        %473 = vmatpush1.bf16.msra.mxu0 0
        %474 = vmatprep.subr.bf16.mxu0 0
        %475 = vmatpush1.bf16.msra.mxu0 0
        %476 = vmatprep.subr.bf16.mxu0 0
        %477 = vmatpush1.bf16.msra.mxu0 %v449
        %478 = vmatprep.subr.bf16.mxu0 0
        %479 = vmatpush1.bf16.msra.mxu0 %v448
        %480 = vmatprep.subr.bf16.mxu0 0
        %481 = vmatpush2.bf16.msra.mxu0 0
        %482 = vmatprep.subr.bf16.mxu0 0
        %483 = vmatpush2.bf16.msra.mxu0 0
        %484 = vmatprep.subr.bf16.mxu0 0
        %485 = vmatpush2.bf16.msra.mxu0 0
        %486 = vmatprep.subr.bf16.mxu0 0
        %487 = vmatpush2.bf16.msra.mxu0 0
        %488 = vmatprep.subr.bf16.mxu0 0
        %489 = vmatpush2.bf16.msra.mxu0 0
        %490 = vmatprep.subr.bf16.mxu0 0
        %491 = vmatpush2.bf16.msra.mxu0 0
        %492 = vmatprep.subr.bf16.mxu0 0
        %493 = vmatpush2.bf16.msra.mxu0 0
        %494 = vmatprep.subr.bf16.mxu0 0
        %495 = vmatpush2.bf16.msra.mxu0 0
        %496 = vmatprep.mubr.bf16.mxu0 0
        %497 = vmatmul.mubr.bf16.gmra.mxu0 %v453
        %v498 = vpop.f32.mrf.mxu0
        %v499 = vadd.f32 %v438, %v498
        %v500 = vpop.f32.mrf.mxu0
        %v501 = vpop.f32.mrf.mxu0
        %v502 = vadd.f32 %v438, %v501
        %v503 = vpop.f32.mrf.mxu0
        %504 = vmatprep.mubr.bf16.mxu0 0
        %505 = vmatmul.mubr.bf16.gmra.mxu0 %v456
        %v506 = vpop.f32.mrf.mxu0
        %v507 = vadd.f32 %v438, %v506
        %v508 = vpop.f32.mrf.mxu0
        %v509 = vpop.f32.mrf.mxu0
        %v510 = vadd.f32 %v438, %v509
        %v511 = vpop.f32.mrf.mxu0
        %512 = vmatprep.mubr.bf16.mxu0 0
        %513 = vmatmul.mubr.bf16.gmra.mxu0 %v459
        %v514 = vpop.f32.mrf.mxu0
        %v515 = vadd.f32 %v438, %v514
        %v516 = vpop.f32.mrf.mxu0
        %v517 = vpop.f32.mrf.mxu0
        %v518 = vadd.f32 %v438, %v517
        %v519 = vpop.f32.mrf.mxu0
        %520 = vmatprep.mubr.bf16.mxu0 0
        %521 = vmatmul.mubr.bf16.gmra.mxu0 %v462
        %v522 = vpop.f32.mrf.mxu0
        %v523 = vadd.f32 %v438, %v522
        %v524 = vpop.f32.mrf.mxu0
        %v525 = vpop.f32.mrf.mxu0
        %v526 = vadd.f32 %v438, %v525
        %v527 = vpop.f32.mrf.mxu0
        %528 = vdwg.mxu0
        %v529 = vmul.f32 %v499, %v499
        %v530 = vmul.f32 %v502, %v502
        %v531 = vmul.f32 %v507, %v507
        %v532 = vmul.f32 %v510, %v510
        %v533 = vmul.f32 %v515, %v515
        %v534 = vmul.f32 %v518, %v518
        %v535 = vmul.f32 %v523, %v523
        %v536 = vmul.f32 %v526, %v526
        %v537 = vmul.f32 %v499, %v529
        %v538 = vmul.f32 %v502, %v530
        %v539 = vmul.f32 %v507, %v531
        %v540 = vmul.f32 %v510, %v532
        %v541 = vmul.f32 %v515, %v533
        %v542 = vmul.f32 %v518, %v534
        %v543 = vmul.f32 %v523, %v535
        %v544 = vmul.f32 %v526, %v536
        %v545 = vmul.f32 %v537, 0.044715
        %v546 = vmul.f32 %v538, 0.044715
        %v547 = vmul.f32 %v539, 0.044715
        %v548 = vmul.f32 %v540, 0.044715
        %v549 = vmul.f32 %v541, 0.044715
        %v550 = vmul.f32 %v542, 0.044715
        %v551 = vmul.f32 %v543, 0.044715
        %v552 = vmul.f32 %v544, 0.044715
        %v553 = vadd.f32 %v499, %v545
        %v554 = vadd.f32 %v502, %v546
        %v555 = vadd.f32 %v507, %v547
        %v556 = vadd.f32 %v510, %v548
        %v557 = vadd.f32 %v515, %v549
        %v558 = vadd.f32 %v518, %v550
        %v559 = vadd.f32 %v523, %v551
        %v560 = vadd.f32 %v526, %v552
        %v561 = vmul.f32 %v553, 0.7978846
        %v562 = vmul.f32 %v554, 0.7978846
        %v563 = vmul.f32 %v555, 0.7978846
        %v564 = vmul.f32 %v556, 0.7978846
        %v565 = vmul.f32 %v557, 0.7978846
        %v566 = vmul.f32 %v558, 0.7978846
        %v567 = vmul.f32 %v559, 0.7978846
        %v568 = vmul.f32 %v560, 0.7978846
        %v569 = vtanh.pop %v561
        %v570 = vtanh.pop %v562
        %v571 = vtanh.pop %v563
        %v572 = vtanh.pop %v564
        %v573 = vtanh.pop %v565
        %v574 = vtanh.pop %v566
        %v575 = vtanh.pop %v567
        %v576 = vtanh.pop %v568
        %v577 = vadd.f32 %v569, 1.0
        %v578 = vadd.f32 %v570, 1.0
        %v579 = vadd.f32 %v571, 1.0
        %v580 = vadd.f32 %v572, 1.0
        %v581 = vadd.f32 %v573, 1.0
        %v582 = vadd.f32 %v574, 1.0
        %v583 = vadd.f32 %v575, 1.0
        %v584 = vadd.f32 %v576, 1.0
        %v585 = vmul.f32 %v577, 0.5
        %v586 = vmul.f32 %v578, 0.5
        %v587 = vmul.f32 %v579, 0.5
        %v588 = vmul.f32 %v580, 0.5
        %v589 = vmul.f32 %v581, 0.5
        %v590 = vmul.f32 %v582, 0.5
        %v591 = vmul.f32 %v583, 0.5
        %v592 = vmul.f32 %v584, 0.5
        %v593 = vmul.f32 %v499, %v585
        %v594 = vmul.f32 %v502, %v586
        %v595 = vmul.f32 %v507, %v587
        %v596 = vmul.f32 %v510, %v588
        %v597 = vmul.f32 %v515, %v589
        %v598 = vmul.f32 %v518, %v590
        %v599 = vmul.f32 %v523, %v591
        %v600 = vmul.f32 %v526, %v592
        %v601 = vpack.c.bf16 %v594, %v593
        %v602 = vpack.c.bf16 %v596, %v595
        %v603 = vpack.c.bf16 %v598, %v597
        %v604 = vpack.c.bf16 %v600, %v599
        %v605 = vld [vmem:[%s5] sm:$0xf]
        %v606 = vld [vmem:[%s5 + $0x4] sm:$0xf]
        %v607 = vld [vmem:[%s5 + $0x8] sm:$0xf]
        %v608 = vld [vmem:[%s5 + $0xc] sm:$0xf]
        %v609 = vld [vmem:[%s5 + $0x10] sm:$0xf]
        %v610 = vld [vmem:[%s5 + $0x14] sm:$0xf]
        %v611 = vld [vmem:[%s5 + $0x18] sm:$0xf]
        %v612 = vld [vmem:[%s5 + $0x1c] sm:$0xf]
        %v613 = vld [vmem:[%s5 + $0x20] sm:$0xf]
        %v614 = vld [vmem:[%s5 + $0x24] sm:$0xf]
        %v615 = vld [vmem:[%s5 + $0x28] sm:$0xf]
        %v616 = vld [vmem:[%s5 + $0x2c] sm:$0xf]
        %v617 = vld [vmem:[%s5 + $0x30] sm:$0xf]
        %v618 = vld [vmem:[%s5 + $0x34] sm:$0xf]
        %v619 = vld [vmem:[%s5 + $0x38] sm:$0xf]
        %v620 = vld [vmem:[%s5 + $0x3c] sm:$0xf]
        %v621 = vld [vmem:[%s6] sm:$0x1]
        %v623 = vlaneseq
        %v624 = vshrl.u32 %v623, 7
        %v625 = vsub.s32 0, %v624
        %v626 = vrot.slane %v621, %v625
        %v644 = vunpack.c.l.b16 %v605
        %v645 = vunpack.c.l.b16 %v606
        %v646 = vunpack.c.l.b16 %v607
        %v647 = vunpack.c.l.b16 %v608
        %v648 = vunpack.c.l.b16 %v609
        %v649 = vunpack.c.l.b16 %v610
        %v650 = vunpack.c.l.b16 %v611
        %v651 = vunpack.c.l.b16 %v612
        %v652 = vunpack.c.l.b16 %v613
        %v653 = vunpack.c.l.b16 %v614
        %v654 = vunpack.c.l.b16 %v615
        %v655 = vunpack.c.l.b16 %v616
        %v656 = vunpack.c.l.b16 %v617
        %v657 = vunpack.c.l.b16 %v618
        %v658 = vunpack.c.l.b16 %v619
        %v659 = vunpack.c.l.b16 %v620
        %v660 = vpack.c.b16 %v645, %v644
        %v661 = vpack.c.b16 %v647, %v646
        %v662 = vpack.c.b16 %v649, %v648
        %v663 = vpack.c.b16 %v651, %v650
        %v664 = vpack.c.b16 %v653, %v652
        %v665 = vpack.c.b16 %v655, %v654
        %v666 = vpack.c.b16 %v657, %v656
        %v667 = vpack.c.b16 %v659, %v658
        %676 = vmatprep.subr.bf16.mxu0 0
        %677 = vmatpush1.bf16.msra.mxu0 %v667
        %678 = vmatprep.subr.bf16.mxu0 0
        %679 = vmatpush1.bf16.msra.mxu0 %v666
        %680 = vmatprep.subr.bf16.mxu0 0
        %681 = vmatpush1.bf16.msra.mxu0 %v665
        %682 = vmatprep.subr.bf16.mxu0 0
        %683 = vmatpush1.bf16.msra.mxu0 %v664
        %684 = vmatprep.subr.bf16.mxu0 0
        %685 = vmatpush1.bf16.msra.mxu0 %v663
        %686 = vmatprep.subr.bf16.mxu0 0
        %687 = vmatpush1.bf16.msra.mxu0 %v662
        %688 = vmatprep.subr.bf16.mxu0 0
        %689 = vmatpush1.bf16.msra.mxu0 %v661
        %690 = vmatprep.subr.bf16.mxu0 0
        %691 = vmatpush1.bf16.msra.mxu0 %v660
        %692 = vmatprep.subr.bf16.mxu0 0
        %693 = vmatpush2.bf16.msra.mxu0 0
        %694 = vmatprep.subr.bf16.mxu0 0
        %695 = vmatpush2.bf16.msra.mxu0 0
        %696 = vmatprep.subr.bf16.mxu0 0
        %697 = vmatpush2.bf16.msra.mxu0 0
        %698 = vmatprep.subr.bf16.mxu0 0
        %699 = vmatpush2.bf16.msra.mxu0 0
        %700 = vmatprep.subr.bf16.mxu0 0
        %701 = vmatpush2.bf16.msra.mxu0 0
        %702 = vmatprep.subr.bf16.mxu0 0
        %703 = vmatpush2.bf16.msra.mxu0 0
        %704 = vmatprep.subr.bf16.mxu0 0
        %705 = vmatpush2.bf16.msra.mxu0 0
        %706 = vmatprep.subr.bf16.mxu0 0
        %707 = vmatpush2.bf16.msra.mxu0 0
        %708 = vmatprep.mubr.bf16.mxu0 0
        %709 = vmatmul.mubr.bf16.gmra.mxu0 %v601
        %v710 = vpop.f32.mrf.mxu0
        %v711 = vadd.f32 %v626, %v710
        %v712 = vpop.f32.mrf.mxu0
        %v713 = vpop.f32.mrf.mxu0
        %v714 = vadd.f32 %v626, %v713
        %v715 = vpop.f32.mrf.mxu0
        %716 = vmatprep.mubr.bf16.mxu0 0
        %717 = vmatmul.mubr.bf16.gmra.mxu0 %v602
        %v718 = vpop.f32.mrf.mxu0
        %v719 = vadd.f32 %v626, %v718
        %v720 = vpop.f32.mrf.mxu0
        %v721 = vpop.f32.mrf.mxu0
        %v722 = vadd.f32 %v626, %v721
        %v723 = vpop.f32.mrf.mxu0
        %724 = vmatprep.mubr.bf16.mxu0 0
        %725 = vmatmul.mubr.bf16.gmra.mxu0 %v603
        %v726 = vpop.f32.mrf.mxu0
        %v727 = vadd.f32 %v626, %v726
        %v728 = vpop.f32.mrf.mxu0
        %v729 = vpop.f32.mrf.mxu0
        %v730 = vadd.f32 %v626, %v729
        %v731 = vpop.f32.mrf.mxu0
        %732 = vmatprep.mubr.bf16.mxu0 0
        %733 = vmatmul.mubr.bf16.gmra.mxu0 %v604
        %v734 = vpop.f32.mrf.mxu0
        %v735 = vadd.f32 %v626, %v734
        %v736 = vpop.f32.mrf.mxu0
        %v737 = vpop.f32.mrf.mxu0
        %v738 = vadd.f32 %v626, %v737
        %v739 = vpop.f32.mrf.mxu0
        %740 = vdwg.mxu0
        %v741 = vadd.f32 %v281, %v711
        %v742 = vadd.f32 %v282, %v714
        %v743 = vadd.f32 %v283, %v719
        %v744 = vadd.f32 %v284, %v722
        %v745 = vadd.f32 %v285, %v727
        %v746 = vadd.f32 %v286, %v730
        %v747 = vadd.f32 %v287, %v735
        %v748 = vadd.f32 %v288, %v738
        %749 = vst.msk [vmem:[%s272] sm:$0xff] %vm289, %v741
        %750 = vst.msk [vmem:[%s272 + $0x8] sm:$0xff] %vm289, %v742
        %751 = vst.msk [vmem:[%s272 + $0x10] sm:$0xff] %vm289, %v743
        %752 = vst.msk [vmem:[%s272 + $0x18] sm:$0xff] %vm289, %v744
        %753 = vst.msk [vmem:[%s272 + $0x20] sm:$0xff] %vm289, %v745
        %754 = vst.msk [vmem:[%s272 + $0x28] sm:$0xff] %vm289, %v746
        %755 = vst.msk [vmem:[%s272 + $0x30] sm:$0xff] %vm289, %v747
        %756 = vst.msk [vmem:[%s272 + $0x38] sm:$0xff] %vm289, %v748
        %s757 = sand.u32 %s181, 1
        %s758 = scalar_lea.sflag [#allocation3], %s757
        %s759 = sand.u32 %s181, 1
        %s760 = smul.addr %s759, 64
        %s761 = scalar_lea.vmem [#allocation2], %s760
        // Predicated region
        $region49: #{uninext_forward.17} parent=47 // pred_check
          %p762 = pneg %p191
        $region50: #{uninext_forward.17} parent=47 // pred_check_branch
          %764 = sbr.rel (%p762) target = $region52
        $region51: #{uninext_forward.17} parent=47 // pred_region
          %s765 = smul.u32 8, %s21
          %s767 = ssub.s32 1024, 1024
          %768 = vsyncadd %s758, %s767
          %s769 = smul.addr %s765, 128
          %s770 = scalar_lea.hbm %s7, %s769
          %s771 = sshll.u32 %s761, 4
          %s772 = int_to_ptr.vmem [resolvable:$true] %s771
          %777 = dma.vmem_to_hbm [thread:$0]  %s772, 1024, %s770, %s758, 128, 128, 8
        $region52: #{uninext_forward.17} parent=47 // pred_fallthru
          _
      $region48: #{uninext_forward.17} parent=5 // pred_fallthru
        _
      %p778 = scmp.le.s32.totalorder 2, %s16
      // Predicated region
      $region53: #{uninext_forward.17} parent=5 // pred_check
        %p779 = pneg %p778
      $region54: #{uninext_forward.17} parent=5 // pred_check_branch
        %781 = sbr.rel (%p779) target = $region56
      $region55: #{uninext_forward.17} parent=5 // pred_region
        %s782 = ssub.s32 %s16, 2
        // Predicated region
        $region57: #{uninext_forward.17} parent=55 // pred_check
          %p783 = pneg %p197
        $region58: #{uninext_forward.17} parent=55 // pred_check_branch
          %785 = sbr.rel (%p783) target = $region60
        $region59: #{uninext_forward.17} parent=55 // pred_region
          %s786 = sand.u32 %s182, 1
          %s787 = scalar_lea.sflag [#allocation3], %s786
          %s788 = sand.u32 %s182, 1
          %s789 = smul.addr %s788, 64
          %s790 = scalar_lea.vmem [#allocation2], %s789
          %791 = dma.done %s787, 1024
        $region60: #{uninext_forward.17} parent=55 // pred_fallthru
          _
      $region56: #{uninext_forward.17} parent=5 // pred_fallthru
        _
    $region6: #{uninext_forward.17} parent=1 // loop_footer
      %s20 = sadd.s32 1, %s16
    $region7: #{uninext_forward.17} parent=1 // loop_footer_branch
      %15 = sbr.rel target = $region3
    $region8: #{uninext_forward.17} parent=1 // loop_exit
      _
    %792 = vsyncpa [#allocation3], 1
    %s793 = scalar_lea.sflag [#allocation3], 1
    %794 = vsyncpa %s793, 1

</llo_original>
